<compile_context>
chip_gen: v7x
topology: tpu7x:2x2x1
jax: 0.10.0
libtpu: 0.0.40
codegen_flags: <defaults>
</compile_context>

<pallas_src>
import functools

import jax
import jax.numpy as jnp
from jax.experimental import pallas as pl
from jax.experimental.pallas import tpu as pltpu

LEAKY_SLOPE = 0.2
BN_EPS = 1e-5
LANE = 128
MAX_M = 1024                     # target rows fed to each MXU pass
MAX_BN_ROWS = 2048               # rows per BN-apply tile
VMEM_LIMIT = 48 * 1024 * 1024    # explicit scoped-VMEM limit (safe on v5e/v6e/v7x)


def _round_up(x, m):
    return ((x + m - 1) // m) * m


def _largest_divisor(x, cap):
    cap = max(1, min(x, cap))
    for d in range(cap, 0, -1):
        if x % d == 0:
            return d
    return 1


def _pick_tiles(n, ho, wo):
    """Return (G images per step, TR output rows per step); either G==1 or TR==ho."""
    m_img = ho * wo
    if m_img >= MAX_M or n == 1:
        return 1, _largest_divisor(ho, max(1, MAX_M // max(wo, 1)))
    return _largest_divisor(n, max(1, MAX_M // m_img)), ho


def _cout_tile(cout_pad):
    return 256 if cout_pad % 256 == 0 else 128


# ---------------------------------------------------------------------------
# Kernel bodies
# ---------------------------------------------------------------------------

def _conv_taps(ph_ref, w_ref, b_ref, *, g, tr, wo):
    """4x4/stride-2 conv on a (G images x TR output rows) tile as 16 tap matmuls.

    ph_ref : (4*G, TR+1, WO+1, cin_pad) bf16   (dim0 ordered phase*G + g)
    w_ref  : (16, cin_pad, TCO)         bf16   (tap-major)
    b_ref  : (1, TCO)                   f32
    returns (G*TR*WO, TCO) f32 (bias included)
    """
    cin = ph_ref.shape[-1]
    tco = w_ref.shape[-1]
    m = g * tr * wo
    acc = jnp.zeros((m, tco), jnp.float32)
    for kh in range(4):
        for kw in range(4):
            phase = (kh % 2) * 2 + (kw % 2)
            oh, ow = kh // 2, kw // 2
            xt = ph_ref[phase * g:(phase + 1) * g, oh:oh + tr, ow:ow + wo, :]
            acc = acc + jnp.dot(xt.reshape(m, cin), w_ref[kh * 4 + kw],
                                preferred_element_type=jnp.float32)
    return acc + b_ref[...]


def _conv_act_kernel(ph_ref, w_ref, b_ref, y_ref, *, g, tr, wo, slope):
    """Conv + bias + LeakyReLU (blocks without BatchNorm)."""
    acc = _conv_taps(ph_ref, w_ref, b_ref, g=g, tr=tr, wo=wo)
    act = jnp.where(acc > 0, acc, slope * acc)
    y_ref[...] = act.reshape(y_ref.shape).astype(y_ref.dtype)


def _conv_stats_kernel(ph_ref, w_ref, b_ref, y_ref, sum_ref, ssq_ref, *, g, tr, wo):
    """Conv + bias; also emit per-step per-channel sum / sum-of-squares (f32)."""
    acc = _conv_taps(ph_ref, w_ref, b_ref, g=g, tr=tr, wo=wo)
    y_ref[...] = acc.reshape(y_ref.shape).astype(y_ref.dtype)
    sum_ref[...] = jnp.sum(acc, axis=0, keepdims=True)
    ssq_ref[...] = jnp.sum(acc * acc, axis=0, keepdims=True)


def _mm_act_kernel(x_ref, w_ref, b_ref, y_ref, *, slope):
    """First-block path: im2col patches (K packed to 128) -> matmul + LeakyReLU."""
    tr, wo, kpad = x_ref.shape
    acc = jnp.dot(x_ref[...].reshape(tr * wo, kpad), w_ref[...],
                  preferred_element_type=jnp.float32) + b_ref[...]
    act = jnp.where(acc > 0, acc, slope * acc)
    y_ref[...] = act.reshape(y_ref.shape).astype(y_ref.dtype)


def _bn_act_kernel(y_ref, mean_ref, inv_ref, o_ref, *, slope):
    """(x - mean) * rsqrt(var + eps), then LeakyReLU (bf16 in / bf16 out)."""
    x = (y_ref[...].astype(jnp.float32) - mean_ref[...]) * inv_ref[...]
    o_ref[...] = jnp.where(x > 0, x, slope * x).astype(o_ref.dtype)


# ---------------------------------------------------------------------------
# JAX glue (layout only; all hot math happens in the kernels above)
# ---------------------------------------------------------------------------

def _phase_split_tiled(x, cin_pad, g, tr):
    """bf16 zero-pad + 2x2 space-to-depth + (batch-group, row-tile-with-halo) layout.

    x (N, H, W, C) -> (num_groups*row_tiles, 4*G, TR+1, WO+1, cin_pad) bf16,
    dim1 ordered phase*G + g with phase = ph_h*2 + ph_w.
    """
    n, h, w, c = x.shape
    ho, wo = h // 2, w // 2
    hh, wh = ho + 1, wo + 1
    row_tiles = ho // tr
    num_groups = n // g
    xb = x.astype(jnp.bfloat16)
    if c < cin_pad:
        xb = jnp.pad(xb, ((0, 0), (0, 0), (0, 0), (0, cin_pad - c)))
    xp = jnp.pad(xb, ((0, 0), (1, 1), (1, 1), (0, 0)))
    xr = xp.reshape(n, hh, 2, wh, 2, cin_pad)
    xt = xr.transpose(2, 4, 0, 1, 3, 5).reshape(4, num_groups, g, hh, wh, cin_pad)
    tiles = [xt[:, :, :, j * tr:j * tr + tr + 1] for j in range(row_tiles)]
    st = jnp.stack(tiles, axis=2)                    # (4, ng, rt, G, TR+1, wh, c)
    st = st.transpose(1, 2, 0, 3, 4, 5, 6)           # (ng, rt, 4, G, TR+1, wh, c)
    return st.reshape(num_groups * row_tiles, 4 * g, tr + 1, wh, cin_pad)


def _down_conv_block(x, w, b, *, cout, normalize):
    """One DownConv4x4 block on channel-padded NHWC bf16 activations."""
    n, h, wdt, _ = x.shape
    assert h % 2 == 0 and wdt % 2 == 0, "spatial dims must be even"
    cin_pad, cout_pad = w.shape[1], w.shape[2]
    ho, wo = h // 2, wdt // 2
    wh = wo + 1
    g, tr = _pick_tiles(n, ho, wo)
    row_tiles = ho // tr
    num_groups = n // g
    tco = _cout_tile(cout_pad)
    grid = (num_groups, row_tiles, cout_pad // tco)

    phases = _phase_split_tiled(x, cin_pad, g, tr)

    in_specs = [
        pl.BlockSpec((None, 4 * g, tr + 1, wh, cin_pad),
                     lambda i, j, k: (i * row_tiles + j, 0, 0, 0, 0)),
        pl.BlockSpec((16, cin_pad, tco), lambda i, j, k: (0, 0, k)),
        pl.BlockSpec((1, tco), lambda i, j, k: (0, k)),
    ]
    y_spec = pl.BlockSpec((g, tr, wo, tco), lambda i, j, k: (i, j, 0, k))
    cparams = pltpu.CompilerParams(
        dimension_semantics=("parallel", "parallel", "parallel"),
        vmem_limit_bytes=VMEM_LIMIT)

    if not normalize:
        return pl.pallas_call(
            functools.partial(_conv_act_kernel, g=g, tr=tr, wo=wo, slope=LEAKY_SLOPE),
            grid=grid, in_specs=in_specs, out_specs=y_spec,
            out_shape=jax.ShapeDtypeStruct((n, ho, wo, cout_pad), jnp.bfloat16),
            compiler_params=cparams,
        )(phases, w, b)

    y_raw, psum, pssq = pl.pallas_call(
        functools.partial(_conv_stats_kernel, g=g, tr=tr, wo=wo),
        grid=grid, in_specs=in_specs,
        out_specs=(
            y_spec,
            pl.BlockSpec((None, None, 1, tco), lambda i, j, k: (i, j, 0, k)),
            pl.BlockSpec((None, None, 1, tco), lambda i, j, k: (i, j, 0, k)),
        ),
        out_shape=(
            jax.ShapeDtypeStruct((n, ho, wo, cout_pad), jnp.bfloat16),
            jax.ShapeDtypeStruct((num_groups, row_tiles, 1, cout_pad), jnp.float32),
            jax.ShapeDtypeStruct((num_groups, row_tiles, 1, cout_pad), jnp.float32),
        ),
        compiler_params=cparams,
    )(phases, w, b)

    # Tiny cross-step reduction (Chan/parallel combine, f32): more stable than
    # a single global E[x^2] - mean^2.  Biased variance, eps=1e-5 -> matches
    # PyTorch BatchNorm2d(track_running_stats=False, affine=False) in forward.
    cm = jnp.float32(g * tr * wo)
    total = jnp.float32(n * ho * wo)
    s = psum[:, :, 0, :]
    q = pssq[:, :, 0, :]
    mean_s = s / cm
    m2_s = q - s * mean_s
    mean = jnp.sum(s, axis=(0, 1)) / total
    m2 = jnp.sum(m2_s, axis=(0, 1)) + cm * jnp.sum((mean_s - mean) ** 2, axis=(0, 1))
    var = m2 / total
    inv = jax.lax.rsqrt(var + jnp.float32(BN_EPS))
    ch = jnp.arange(cout_pad)
    inv = jnp.where(ch < cout, inv, 0.0)      # padded lanes can never be amplified
    mean = jnp.where(ch < cout, mean, 0.0)

    # BN apply + LeakyReLU: purely elementwise, bf16 in / bf16 out, row-tiled.
    y2 = y_raw.reshape(n * ho, wo, cout_pad)
    trb = _largest_divisor(n * ho, max(1, MAX_BN_ROWS // max(wo, 1)))
    yk = pl.pallas_call(
        functools.partial(_bn_act_kernel, slope=LEAKY_SLOPE),
        grid=(n * ho // trb,),
        in_specs=[
            pl.BlockSpec((trb, wo, cout_pad), lambda i: (i, 0, 0)),
            pl.BlockSpec((1, 1, cout_pad), lambda i: (0, 0, 0)),
            pl.BlockSpec((1, 1, cout_pad), lambda i: (0, 0, 0)),
        ],
        out_specs=pl.BlockSpec((trb, wo, cout_pad), lambda i: (i, 0, 0)),
        out_shape=jax.ShapeDtypeStruct((n * ho, wo, cout_pad), jnp.bfloat16),
        compiler_params=pltpu.CompilerParams(
            dimension_semantics=("parallel",), vmem_limit_bytes=VMEM_LIMIT),
    )(y2, mean.reshape(1, 1, cout_pad).astype(jnp.float32),
      inv.reshape(1, 1, cout_pad).astype(jnp.float32))
    return yk.reshape(n, ho, wo, cout_pad)


def _first_block_im2col(x, w_mat, b):
    """First block (tiny Cin): pack all 16 taps into K so the MXU sees K=128."""
    n, h, wdt, _ = x.shape
    assert h % 2 == 0 and wdt % 2 == 0, "spatial dims must be even"
    ho, wo = h // 2, wdt // 2
    kpad, cout_pad = w_mat.shape
    xp = jnp.pad(x.astype(jnp.bfloat16), ((0, 0), (1, 1), (1, 1), (0, 0)))
    cols = [xp[:, kh:kh + 2 * ho:2, kw:kw + 2 * wo:2, :]
            for kh in range(4) for kw in range(4)]
    patches = jnp.concatenate(cols, axis=-1)                    # (N, Ho, Wo, 16*Cin)
    if patches.shape[-1] < kpad:
        patches = jnp.pad(patches, ((0, 0), (0, 0), (0, 0),
                                    (0, kpad - patches.shape[-1])))
    tr = _largest_divisor(ho, max(1, MAX_M // max(wo, 1)))
    tco = _cout_tile(cout_pad)
    grid = (n, ho // tr, cout_pad // tco)
    return pl.pallas_call(
        functools.partial(_mm_act_kernel, slope=LEAKY_SLOPE),
        grid=grid,
        in_specs=[
            pl.BlockSpec((None, tr, wo, kpad), lambda i, j, k: (i, j, 0, 0)),
            pl.BlockSpec((kpad, tco), lambda i, j, k: (0, k)),
            pl.BlockSpec((1, tco), lambda i, j, k: (0, k)),
        ],
        out_specs=pl.BlockSpec((None, tr, wo, tco), lambda i, j, k: (i, j, 0, k)),
        out_shape=jax.ShapeDtypeStruct((n, ho, wo, cout_pad), jnp.bfloat16),
        compiler_params=pltpu.CompilerParams(
            dimension_semantics=("parallel", "parallel", "parallel"),
            vmem_limit_bytes=VMEM_LIMIT),
    )(patches, w_mat, b)


# ---------------------------------------------------------------------------
# Encoder: parameter construction + forward pass
# ---------------------------------------------------------------------------

def encoder_init(key, cin, n_blocks=8, min_dim=64, max_dim=512):
    """Mirror PyTorch Encoder.__init__; weights channel-padded for lane density."""
    plan = [(cin, min_dim, False)]                      # first block: normalize=False
    for i in range(n_blocks - 1):
        din = min(2 ** i * min_dim, max_dim)
        dout = min(2 * din, max_dim)
        plan.append((din, dout, i < 6))

    params = []
    prev_cout_pad = None
    for idx, (bcin, bcout, norm) in enumerate(plan):
        key, kw, kb = jax.random.split(key, 3)
        cout_pad = _round_up(bcout, LANE)
        bound = 1.0 / float((bcin * 16) ** 0.5)
        wc = jax.random.uniform(kw, (4, 4, bcin, bcout), jnp.float32, -bound, bound)
        bc = jax.random.uniform(kb, (bcout,), jnp.float32, -bound, bound)
        b_pad = jnp.zeros((1, cout_pad), jnp.float32).at[0, :bcout].set(bc)
        if idx == 0 and (not norm) and 16 * bcin <= LANE:
            kpad = LANE
            w_mat = jnp.zeros((kpad, cout_pad), jnp.float32)
            w_mat = w_mat.at[:16 * bcin, :bcout].set(wc.reshape(16 * bcin, bcout))
            params.append(dict(path="im2col", w=w_mat.astype(jnp.bfloat16), b=b_pad,
                               cout=bcout, normalize=norm))
        else:
            cin_pad = prev_cout_pad if idx > 0 else _round_up(max(bcin, 8), 8)
            w_pad = jnp.zeros((16, cin_pad, cout_pad), jnp.float32)
            w_pad = w_pad.at[:, :bcin, :bcout].set(wc.reshape(16, bcin, bcout))
            params.append(dict(path="phase", w=w_pad.astype(jnp.bfloat16), b=b_pad,
                               cout=bcout, normalize=norm))
        prev_cout_pad = cout_pad
    return params


def encoder_apply(params, x_nchw):
    """Forward pass. x_nchw: (N, Cin, H, W) f32. Returns list of NCHW f32 features."""
    x = jnp.transpose(x_nchw, (0, 2, 3, 1)).astype(jnp.bfloat16)   # NHWC bf16
    features = []
    for p in params:
        if p["path"] == "im2col":
            x = _first_block_im2col(x, p["w"], p["b"])
        else:
            x = _down_conv_block(x, p["w"], p["b"], cout=p["cout"],
                                 normalize=p["normalize"])
        features.append(
            jnp.transpose(x[..., :p["cout"]], (0, 3, 1, 2)).astype(jnp.float32))
    return features


if __name__ == "__main__":
    key = jax.random.PRNGKey(0)
    kx1, kp1, kx2, kp2 = jax.random.split(key, 4)

    # Test 1: small config consistent with the module (3 blocks C32-C64-C64),
    # input (2, 3, 16, 16) -> features at 8x8, 4x4, 2x2.
    x1 = jax.random.normal(kx1, (2, 3, 16, 16), jnp.float32)
    params1 = encoder_init(kp1, cin=3, n_blocks=3, min_dim=32, max_dim=64)
    feats1 = jax.block_until_ready(
        jax.jit(functools.partial(encoder_apply, params1))(x1))
    expect1 = [(2, 32, 8, 8), (2, 64, 4, 4), (2, 64, 2, 2)]
    got1 = [tuple(f.shape) for f in feats1]
    assert got1 == expect1, f"shape mismatch: {got1} vs {expect1}"
    assert all(bool(jnp.all(jnp.isfinite(f))) for f in feats1)

    # Test 2: deeper/tiny-channel config exercising row tiling, batch grouping
    # and the un-normalized phase path (last block).
    x2 = jax.random.normal(kx2, (2, 3, 256, 256), jnp.float32)
    params2 = encoder_init(kp2, cin=3, n_blocks=8, min_dim=8, max_dim=16)
    feats2 = jax.block_until_ready(
        jax.jit(functools.partial(encoder_apply, params2))(x2))
    expect2 = [(2, 8, 128, 128), (2, 16, 64, 64), (2, 16, 32, 32),
               (2, 16, 16, 16), (2, 16, 8, 8), (2, 16, 4, 4),
               (2, 16, 2, 2), (2, 16, 1, 1)]
    got2 = [tuple(f.shape) for f in feats2]
    assert got2 == expect2, f"shape mismatch: {got2} vs {expect2}"
    assert all(bool(jnp.all(jnp.isfinite(f))) for f in feats2)

    print("KERNEL_OK")
</pallas_src>

<mosaic_0001>
module attributes {stable_mosaic.version = 11 : i64} {
  func.func @_mm_act_kernel(%arg0: i32, %arg1: i32, %arg2: i32, %arg3: memref<1x8x8x128xbf16, #tpu.memory_space<vmem>>, %arg4: memref<128x128xbf16, #tpu.memory_space<vmem>>, %arg5: memref<1x128xf32, #tpu.memory_space<vmem>>, %arg6: memref<1x8x8x128xbf16, #tpu.memory_space<vmem>>) attributes {dimension_semantics = [#tpu.dimension_semantics<parallel>, #tpu.dimension_semantics<parallel>, #tpu.dimension_semantics<parallel>], iteration_bounds = array<i64: 2, 1, 1>, scalar_prefetch = 0 : i64, scratch_operands = 0 : i64, tpu.core_type = #tpu.core_type<tc>, window_params = [{transform_indices = @transform_0, window_bounds = array<i64: 1, 8, 8, 128>}, {transform_indices = @transform_1, window_bounds = array<i64: 128, 128>}, {transform_indices = @transform_2, window_bounds = array<i64: 1, 128>}, {transform_indices = @transform_3, window_bounds = array<i64: 1, 8, 8, 128>}]} {
    %c0 = arith.constant 0 : index
    %c0_0 = arith.constant 0 : index
    %c0_1 = arith.constant 0 : index
    %c0_2 = arith.constant 0 : index
    %0 = vector.load %arg3[%c0, %c0_0, %c0_1, %c0_2] : memref<1x8x8x128xbf16, #tpu.memory_space<vmem>>, vector<1x8x8x128xbf16>
    %1 = vector.shape_cast %0 : vector<1x8x8x128xbf16> to vector<8x8x128xbf16>
    %2 = vector.shape_cast %1 : vector<8x8x128xbf16> to vector<64x128xbf16>
    %c0_3 = arith.constant 0 : index
    %c0_4 = arith.constant 0 : index
    %3 = vector.load %arg4[%c0_3, %c0_4] : memref<128x128xbf16, #tpu.memory_space<vmem>>, vector<128x128xbf16>
    %cst = arith.constant dense<0.000000e+00> : vector<64x128xf32>
    %4 = tpu.matmul %2, %3, %cst {dimension_numbers = #tpu.dot_dimension_numbers<[1], [0], [0], [1], [0, 0, 1, 1], [], []>} : vector<64x128xbf16>, vector<128x128xbf16>, vector<64x128xf32> -> vector<64x128xf32>
    %c0_5 = arith.constant 0 : index
    %c0_6 = arith.constant 0 : index
    %5 = vector.load %arg5[%c0_5, %c0_6] : memref<1x128xf32, #tpu.memory_space<vmem>>, vector<1x128xf32>
    %6 = vector.broadcast %5 : vector<1x128xf32> to vector<64x128xf32>
    %7 = arith.addf %4, %6 : vector<64x128xf32>
    %cst_7 = arith.constant 0.000000e+00 : f32
    %8 = vector.broadcast %cst_7 : f32 to vector<64x128xf32>
    %9 = arith.cmpf ogt, %7, %8 : vector<64x128xf32>
    %cst_8 = arith.constant 2.000000e-01 : f32
    %10 = vector.broadcast %cst_8 : f32 to vector<64x128xf32>
    %11 = arith.mulf %10, %7 : vector<64x128xf32>
    %12 = arith.select %9, %7, %11 : vector<64x128xi1>, vector<64x128xf32>
    %13 = vector.shape_cast %12 : vector<64x128xf32> to vector<8x8x128xf32>
    %14 = arith.truncf %13 : vector<8x8x128xf32> to vector<8x8x128xbf16>
    %c0_9 = arith.constant 0 : index
    %c0_10 = arith.constant 0 : index
    %c0_11 = arith.constant 0 : index
    %c0_12 = arith.constant 0 : index
    %15 = vector.load %arg6[%c0_9, %c0_10, %c0_11, %c0_12] : memref<1x8x8x128xbf16, #tpu.memory_space<vmem>>, vector<1x8x8x128xbf16>
    %16 = vector.shape_cast %15 : vector<1x8x8x128xbf16> to vector<8x8x128xbf16>
    %17 = vector.shape_cast %14 : vector<8x8x128xbf16> to vector<1x8x8x128xbf16>
    tpu.vector_store %arg6[%c0_9, %c0_10, %c0_11, %c0_12], %17 {strides = array<i32>} : memref<1x8x8x128xbf16, #tpu.memory_space<vmem>>, vector<1x8x8x128xbf16>,
    return
  }
  func.func @transform_0(%arg0: i32, %arg1: i32, %arg2: i32) -> (i32, i32, i32, i32) {
    %c0_i32 = arith.constant 0 : i32
    %c0_i32_0 = arith.constant 0 : i32
    %c0_i32_1 = arith.constant 0 : i32
    return %arg0, %arg1, %c0_i32, %c0_i32_0 : i32, i32, i32, i32
  }
  func.func @transform_1(%arg0: i32, %arg1: i32, %arg2: i32) -> (i32, i32) {
    %c0_i32 = arith.constant 0 : i32
    %c0_i32_0 = arith.constant 0 : i32
    return %c0_i32, %arg2 : i32, i32
  }
  func.func @transform_2(%arg0: i32, %arg1: i32, %arg2: i32) -> (i32, i32) {
    %c0_i32 = arith.constant 0 : i32
    %c0_i32_0 = arith.constant 0 : i32
    return %c0_i32, %arg2 : i32, i32
  }
  func.func @transform_3(%arg0: i32, %arg1: i32, %arg2: i32) -> (i32, i32, i32, i32) {
    %c0_i32 = arith.constant 0 : i32
    %c0_i32_0 = arith.constant 0 : i32
    return %arg0, %arg1, %c0_i32, %arg2 : i32, i32, i32, i32
  }
}

module attributes {stable_mosaic.version = 11 : i64} {
  func.func @_bn_act_kernel(%arg0: i32, %arg1: memref<8x4x128xbf16, #tpu.memory_space<vmem>>, %arg2: memref<1x1x128xf32, #tpu.memory_space<vmem>>, %arg3: memref<1x1x128xf32, #tpu.memory_space<vmem>>, %arg4: memref<8x4x128xbf16, #tpu.memory_space<vmem>>) attributes {dimension_semantics = [#tpu.dimension_semantics<parallel>], iteration_bounds = array<i64: 1>, scalar_prefetch = 0 : i64, scratch_operands = 0 : i64, tpu.core_type = #tpu.core_type<tc>, window_params = [{transform_indices = @transform_0, window_bounds = array<i64: 8, 4, 128>}, {pipeline_mode = #tpu.pipeline_mode<synchronous>, transform_indices = @transform_1, window_bounds = array<i64: 1, 1, 128>}, {pipeline_mode = #tpu.pipeline_mode<synchronous>, transform_indices = @transform_2, window_bounds = array<i64: 1, 1, 128>}, {transform_indices = @transform_3, window_bounds = array<i64: 8, 4, 128>}]} {
    %c0 = arith.constant 0 : index
    %c0_0 = arith.constant 0 : index
    %c0_1 = arith.constant 0 : index
    %0 = vector.load %arg1[%c0, %c0_0, %c0_1] : memref<8x4x128xbf16, #tpu.memory_space<vmem>>, vector<8x4x128xbf16>
    %1 = arith.extf %0 : vector<8x4x128xbf16> to vector<8x4x128xf32>
    %c0_2 = arith.constant 0 : index
    %c0_3 = arith.constant 0 : index
    %c0_4 = arith.constant 0 : index
    %2 = vector.load %arg2[%c0_2, %c0_3, %c0_4] : memref<1x1x128xf32, #tpu.memory_space<vmem>>, vector<1x1x128xf32>
    %3 = vector.broadcast %2 : vector<1x1x128xf32> to vector<8x4x128xf32>
    %4 = arith.subf %1, %3 : vector<8x4x128xf32>
    %c0_5 = arith.constant 0 : index
    %c0_6 = arith.constant 0 : index
    %c0_7 = arith.constant 0 : index
    %5 = vector.load %arg3[%c0_5, %c0_6, %c0_7] : memref<1x1x128xf32, #tpu.memory_space<vmem>>, vector<1x1x128xf32>
    %6 = vector.broadcast %5 : vector<1x1x128xf32> to vector<8x4x128xf32>
    %7 = arith.mulf %4, %6 : vector<8x4x128xf32>
    %cst = arith.constant 0.000000e+00 : f32
    %8 = vector.broadcast %cst : f32 to vector<8x4x128xf32>
    %9 = arith.cmpf ogt, %7, %8 : vector<8x4x128xf32>
    %cst_8 = arith.constant 2.000000e-01 : f32
    %10 = vector.broadcast %cst_8 : f32 to vector<8x4x128xf32>
    %11 = arith.mulf %10, %7 : vector<8x4x128xf32>
    %12 = arith.select %9, %7, %11 : vector<8x4x128xi1>, vector<8x4x128xf32>
    %13 = arith.truncf %12 : vector<8x4x128xf32> to vector<8x4x128xbf16>
    %c0_9 = arith.constant 0 : index
    %c0_10 = arith.constant 0 : index
    %c0_11 = arith.constant 0 : index
    %14 = vector.load %arg4[%c0_9, %c0_10, %c0_11] : memref<8x4x128xbf16, #tpu.memory_space<vmem>>, vector<8x4x128xbf16>
    tpu.vector_store %arg4[%c0_9, %c0_10, %c0_11], %13 {strides = array<i32>} : memref<8x4x128xbf16, #tpu.memory_space<vmem>>, vector<8x4x128xbf16>,
    return
  }
  func.func @transform_0(%arg0: i32) -> (i32, i32, i32) {
    %c0_i32 = arith.constant 0 : i32
    %c0_i32_0 = arith.constant 0 : i32
    %c0_i32_1 = arith.constant 0 : i32
    return %arg0, %c0_i32, %c0_i32_0 : i32, i32, i32
  }
  func.func @transform_1(%arg0: i32) -> (i32, i32, i32) {
    %c0_i32 = arith.constant 0 : i32
    %c0_i32_0 = arith.constant 0 : i32
    %c0_i32_1 = arith.constant 0 : i32
    %c0_i32_2 = arith.constant 0 : i32
    return %c0_i32, %c0_i32_0, %c0_i32_1 : i32, i32, i32
  }
  func.func @transform_2(%arg0: i32) -> (i32, i32, i32) {
    %c0_i32 = arith.constant 0 : i32
    %c0_i32_0 = arith.constant 0 : i32
    %c0_i32_1 = arith.constant 0 : i32
    %c0_i32_2 = arith.constant 0 : i32
    return %c0_i32, %c0_i32_0, %c0_i32_1 : i32, i32, i32
  }
  func.func @transform_3(%arg0: i32) -> (i32, i32, i32) {
    %c0_i32 = arith.constant 0 : i32
    %c0_i32_0 = arith.constant 0 : i32
    %c0_i32_1 = arith.constant 0 : i32
    return %arg0, %c0_i32, %c0_i32_0 : i32, i32, i32
  }
}

module attributes {stable_mosaic.version = 11 : i64} {
  func.func @_conv_stats_kernel(%arg0: i32, %arg1: i32, %arg2: i32, %arg3: memref<1x8x5x5x128xbf16, #tpu.memory_space<vmem>>, %arg4: memref<16x128x128xbf16, #tpu.memory_space<vmem>>, %arg5: memref<1x128xf32, #tpu.memory_space<vmem>>, %arg6: memref<2x4x4x128xbf16, #tpu.memory_space<vmem>>, %arg7: memref<1x1x1x128xf32, #tpu.memory_space<vmem>>, %arg8: memref<1x1x1x128xf32, #tpu.memory_space<vmem>>) attributes {dimension_semantics = [#tpu.dimension_semantics<parallel>, #tpu.dimension_semantics<parallel>, #tpu.dimension_semantics<parallel>], iteration_bounds = array<i64: 1, 1, 1>, scalar_prefetch = 0 : i64, scratch_operands = 0 : i64, tpu.core_type = #tpu.core_type<tc>, window_params = [{transform_indices = @transform_0, window_bounds = array<i64: 1, 8, 5, 5, 128>}, {transform_indices = @transform_1, window_bounds = array<i64: 16, 128, 128>}, {transform_indices = @transform_2, window_bounds = array<i64: 1, 128>}, {transform_indices = @transform_3, window_bounds = array<i64: 2, 4, 4, 128>}, {transform_indices = @transform_4, window_bounds = array<i64: 1, 1, 1, 128>}, {transform_indices = @transform_5, window_bounds = array<i64: 1, 1, 1, 128>}]} {
    %cst = arith.constant 0.000000e+00 : f32
    %0 = vector.broadcast %cst : f32 to vector<32x128xf32>
    %c0 = arith.constant 0 : index
    %c0_0 = arith.constant 0 : index
    %c0_1 = arith.constant 0 : index
    %c0_2 = arith.constant 0 : index
    %c0_3 = arith.constant 0 : index
    %1 = vector.load %arg3[%c0, %c0_0, %c0_1, %c0_2, %c0_3] : memref<1x8x5x5x128xbf16, #tpu.memory_space<vmem>>, vector<1x2x4x4x128xbf16>
    %2 = vector.shape_cast %1 : vector<1x2x4x4x128xbf16> to vector<2x4x4x128xbf16>
    %3 = vector.shape_cast %2 : vector<2x4x4x128xbf16> to vector<32x128xbf16>
    %c0_4 = arith.constant 0 : index
    %c0_5 = arith.constant 0 : index
    %c0_6 = arith.constant 0 : index
    %4 = vector.load %arg4[%c0_4, %c0_5, %c0_6] : memref<16x128x128xbf16, #tpu.memory_space<vmem>>, vector<1x128x128xbf16>
    %5 = vector.shape_cast %4 : vector<1x128x128xbf16> to vector<128x128xbf16>
    %cst_7 = arith.constant dense<0.000000e+00> : vector<32x128xf32>
    %6 = tpu.matmul %3, %5, %cst_7 {dimension_numbers = #tpu.dot_dimension_numbers<[1], [0], [0], [1], [0, 0, 1, 1], [], []>} : vector<32x128xbf16>, vector<128x128xbf16>, vector<32x128xf32> -> vector<32x128xf32>
    %7 = arith.addf %0, %6 : vector<32x128xf32>
    %c0_8 = arith.constant 0 : index
    %c2 = arith.constant 2 : index
    %c0_9 = arith.constant 0 : index
    %c0_10 = arith.constant 0 : index
    %c0_11 = arith.constant 0 : index
    %8 = vector.load %arg3[%c0_8, %c2, %c0_9, %c0_10, %c0_11] : memref<1x8x5x5x128xbf16, #tpu.memory_space<vmem>>, vector<1x2x4x4x128xbf16>
    %9 = vector.shape_cast %8 : vector<1x2x4x4x128xbf16> to vector<2x4x4x128xbf16>
    %10 = vector.shape_cast %9 : vector<2x4x4x128xbf16> to vector<32x128xbf16>
    %c1 = arith.constant 1 : index
    %c0_12 = arith.constant 0 : index
    %c0_13 = arith.constant 0 : index
    %11 = vector.load %arg4[%c1, %c0_12, %c0_13] : memref<16x128x128xbf16, #tpu.memory_space<vmem>>, vector<1x128x128xbf16>
    %12 = vector.shape_cast %11 : vector<1x128x128xbf16> to vector<128x128xbf16>
    %cst_14 = arith.constant dense<0.000000e+00> : vector<32x128xf32>
    %13 = tpu.matmul %10, %12, %cst_14 {dimension_numbers = #tpu.dot_dimension_numbers<[1], [0], [0], [1], [0, 0, 1, 1], [], []>} : vector<32x128xbf16>, vector<128x128xbf16>, vector<32x128xf32> -> vector<32x128xf32>
    %14 = arith.addf %7, %13 : vector<32x128xf32>
    %c0_15 = arith.constant 0 : index
    %c0_16 = arith.constant 0 : index
    %c0_17 = arith.constant 0 : index
    %c1_18 = arith.constant 1 : index
    %c0_19 = arith.constant 0 : index
    %15 = vector.load %arg3[%c0_15, %c0_16, %c0_17, %c1_18, %c0_19] : memref<1x8x5x5x128xbf16, #tpu.memory_space<vmem>>, vector<1x2x4x4x128xbf16>
    %16 = vector.shape_cast %15 : vector<1x2x4x4x128xbf16> to vector<2x4x4x128xbf16>
    %17 = vector.shape_cast %16 : vector<2x4x4x128xbf16> to vector<32x128xbf16>
    %c2_20 = arith.constant 2 : index
    %c0_21 = arith.constant 0 : index
    %c0_22 = arith.constant 0 : index
    %18 = vector.load %arg4[%c2_20, %c0_21, %c0_22] : memref<16x128x128xbf16, #tpu.memory_space<vmem>>, vector<1x128x128xbf16>
    %19 = vector.shape_cast %18 : vector<1x128x128xbf16> to vector<128x128xbf16>
    %cst_23 = arith.constant dense<0.000000e+00> : vector<32x128xf32>
    %20 = tpu.matmul %17, %19, %cst_23 {dimension_numbers = #tpu.dot_dimension_numbers<[1], [0], [0], [1], [0, 0, 1, 1], [], []>} : vector<32x128xbf16>, vector<128x128xbf16>, vector<32x128xf32> -> vector<32x128xf32>
    %21 = arith.addf %14, %20 : vector<32x128xf32>
    %c0_24 = arith.constant 0 : index
    %c2_25 = arith.constant 2 : index
    %c0_26 = arith.constant 0 : index
    %c1_27 = arith.constant 1 : index
    %c0_28 = arith.constant 0 : index
    %22 = vector.load %arg3[%c0_24, %c2_25, %c0_26, %c1_27, %c0_28] : memref<1x8x5x5x128xbf16, #tpu.memory_space<vmem>>, vector<1x2x4x4x128xbf16>
    %23 = vector.shape_cast %22 : vector<1x2x4x4x128xbf16> to vector<2x4x4x128xbf16>
    %24 = vector.shape_cast %23 : vector<2x4x4x128xbf16> to vector<32x128xbf16>
    %c3 = arith.constant 3 : index
    %c0_29 = arith.constant 0 : index
    %c0_30 = arith.constant 0 : index
    %25 = vector.load %arg4[%c3, %c0_29, %c0_30] : memref<16x128x128xbf16, #tpu.memory_space<vmem>>, vector<1x128x128xbf16>
    %26 = vector.shape_cast %25 : vector<1x128x128xbf16> to vector<128x128xbf16>
    %cst_31 = arith.constant dense<0.000000e+00> : vector<32x128xf32>
    %27 = tpu.matmul %24, %26, %cst_31 {dimension_numbers = #tpu.dot_dimension_numbers<[1], [0], [0], [1], [0, 0, 1, 1], [], []>} : vector<32x128xbf16>, vector<128x128xbf16>, vector<32x128xf32> -> vector<32x128xf32>
    %28 = arith.addf %21, %27 : vector<32x128xf32>
    %c0_32 = arith.constant 0 : index
    %c4 = arith.constant 4 : index
    %c0_33 = arith.constant 0 : index
    %c0_34 = arith.constant 0 : index
    %c0_35 = arith.constant 0 : index
    %29 = vector.load %arg3[%c0_32, %c4, %c0_33, %c0_34, %c0_35] : memref<1x8x5x5x128xbf16, #tpu.memory_space<vmem>>, vector<1x2x4x4x128xbf16>
    %30 = vector.shape_cast %29 : vector<1x2x4x4x128xbf16> to vector<2x4x4x128xbf16>
    %31 = vector.shape_cast %30 : vector<2x4x4x128xbf16> to vector<32x128xbf16>
    %c4_36 = arith.constant 4 : index
    %c0_37 = arith.constant 0 : index
    %c0_38 = arith.constant 0 : index
    %32 = vector.load %arg4[%c4_36, %c0_37, %c0_38] : memref<16x128x128xbf16, #tpu.memory_space<vmem>>, vector<1x128x128xbf16>
    %33 = vector.shape_cast %32 : vector<1x128x128xbf16> to vector<128x128xbf16>
    %cst_39 = arith.constant dense<0.000000e+00> : vector<32x128xf32>
    %34 = tpu.matmul %31, %33, %cst_39 {dimension_numbers = #tpu.dot_dimension_numbers<[1], [0], [0], [1], [0, 0, 1, 1], [], []>} : vector<32x128xbf16>, vector<128x128xbf16>, vector<32x128xf32> -> vector<32x128xf32>
    %35 = arith.addf %28, %34 : vector<32x128xf32>
    %c0_40 = arith.constant 0 : index
    %c6 = arith.constant 6 : index
    %c0_41 = arith.constant 0 : index
    %c0_42 = arith.constant 0 : index
    %c0_43 = arith.constant 0 : index
    %36 = vector.load %arg3[%c0_40, %c6, %c0_41, %c0_42, %c0_43] : memref<1x8x5x5x128xbf16, #tpu.memory_space<vmem>>, vector<1x2x4x4x128xbf16>
    %37 = vector.shape_cast %36 : vector<1x2x4x4x128xbf16> to vector<2x4x4x128xbf16>
    %38 = vector.shape_cast %37 : vector<2x4x4x128xbf16> to vector<32x128xbf16>
    %c5 = arith.constant 5 : index
    %c0_44 = arith.constant 0 : index
    %c0_45 = arith.constant 0 : index
    %39 = vector.load %arg4[%c5, %c0_44, %c0_45] : memref<16x128x128xbf16, #tpu.memory_space<vmem>>, vector<1x128x128xbf16>
    %40 = vector.shape_cast %39 : vector<1x128x128xbf16> to vector<128x128xbf16>
    %cst_46 = arith.constant dense<0.000000e+00> : vector<32x128xf32>
    %41 = tpu.matmul %38, %40, %cst_46 {dimension_numbers = #tpu.dot_dimension_numbers<[1], [0], [0], [1], [0, 0, 1, 1], [], []>} : vector<32x128xbf16>, vector<128x128xbf16>, vector<32x128xf32> -> vector<32x128xf32>
    %42 = arith.addf %35, %41 : vector<32x128xf32>
    %c0_47 = arith.constant 0 : index
    %c4_48 = arith.constant 4 : index
    %c0_49 = arith.constant 0 : index
    %c1_50 = arith.constant 1 : index
    %c0_51 = arith.constant 0 : index
    %43 = vector.load %arg3[%c0_47, %c4_48, %c0_49, %c1_50, %c0_51] : memref<1x8x5x5x128xbf16, #tpu.memory_space<vmem>>, vector<1x2x4x4x128xbf16>
    %44 = vector.shape_cast %43 : vector<1x2x4x4x128xbf16> to vector<2x4x4x128xbf16>
    %45 = vector.shape_cast %44 : vector<2x4x4x128xbf16> to vector<32x128xbf16>
    %c6_52 = arith.constant 6 : index
    %c0_53 = arith.constant 0 : index
    %c0_54 = arith.constant 0 : index
    %46 = vector.load %arg4[%c6_52, %c0_53, %c0_54] : memref<16x128x128xbf16, #tpu.memory_space<vmem>>, vector<1x128x128xbf16>
    %47 = vector.shape_cast %46 : vector<1x128x128xbf16> to vector<128x128xbf16>
    %cst_55 = arith.constant dense<0.000000e+00> : vector<32x128xf32>
    %48 = tpu.matmul %45, %47, %cst_55 {dimension_numbers = #tpu.dot_dimension_numbers<[1], [0], [0], [1], [0, 0, 1, 1], [], []>} : vector<32x128xbf16>, vector<128x128xbf16>, vector<32x128xf32> -> vector<32x128xf32>
    %49 = arith.addf %42, %48 : vector<32x128xf32>
    %c0_56 = arith.constant 0 : index
    %c6_57 = arith.constant 6 : index
    %c0_58 = arith.constant 0 : index
    %c1_59 = arith.constant 1 : index
    %c0_60 = arith.constant 0 : index
    %50 = vector.load %arg3[%c0_56, %c6_57, %c0_58, %c1_59, %c0_60] : memref<1x8x5x5x128xbf16, #tpu.memory_space<vmem>>, vector<1x2x4x4x128xbf16>
    %51 = vector.shape_cast %50 : vector<1x2x4x4x128xbf16> to vector<2x4x4x128xbf16>
    %52 = vector.shape_cast %51 : vector<2x4x4x128xbf16> to vector<32x128xbf16>
    %c7 = arith.constant 7 : index
    %c0_61 = arith.constant 0 : index
    %c0_62 = arith.constant 0 : index
    %53 = vector.load %arg4[%c7, %c0_61, %c0_62] : memref<16x128x128xbf16, #tpu.memory_space<vmem>>, vector<1x128x128xbf16>
    %54 = vector.shape_cast %53 : vector<1x128x128xbf16> to vector<128x128xbf16>
    %cst_63 = arith.constant dense<0.000000e+00> : vector<32x128xf32>
    %55 = tpu.matmul %52, %54, %cst_63 {dimension_numbers = #tpu.dot_dimension_numbers<[1], [0], [0], [1], [0, 0, 1, 1], [], []>} : vector<32x128xbf16>, vector<128x128xbf16>, vector<32x128xf32> -> vector<32x128xf32>
    %56 = arith.addf %49, %55 : vector<32x128xf32>
    %c0_64 = arith.constant 0 : index
    %c0_65 = arith.constant 0 : index
    %c1_66 = arith.constant 1 : index
    %c0_67 = arith.constant 0 : index
    %c0_68 = arith.constant 0 : index
    %57 = vector.load %arg3[%c0_64, %c0_65, %c1_66, %c0_67, %c0_68] : memref<1x8x5x5x128xbf16, #tpu.memory_space<vmem>>, vector<1x2x4x4x128xbf16>
    %58 = vector.shape_cast %57 : vector<1x2x4x4x128xbf16> to vector<2x4x4x128xbf16>
    %59 = vector.shape_cast %58 : vector<2x4x4x128xbf16> to vector<32x128xbf16>
    %c8 = arith.constant 8 : index
    %c0_69 = arith.constant 0 : index
    %c0_70 = arith.constant 0 : index
    %60 = vector.load %arg4[%c8, %c0_69, %c0_70] : memref<16x128x128xbf16, #tpu.memory_space<vmem>>, vector<1x128x128xbf16>
    %61 = vector.shape_cast %60 : vector<1x128x128xbf16> to vector<128x128xbf16>
    %cst_71 = arith.constant dense<0.000000e+00> : vector<32x128xf32>
    %62 = tpu.matmul %59, %61, %cst_71 {dimension_numbers = #tpu.dot_dimension_numbers<[1], [0], [0], [1], [0, 0, 1, 1], [], []>} : vector<32x128xbf16>, vector<128x128xbf16>, vector<32x128xf32> -> vector<32x128xf32>
    %63 = arith.addf %56, %62 : vector<32x128xf32>
    %c0_72 = arith.constant 0 : index
    %c2_73 = arith.constant 2 : index
    %c1_74 = arith.constant 1 : index
    %c0_75 = arith.constant 0 : index
    %c0_76 = arith.constant 0 : index
    %64 = vector.load %arg3[%c0_72, %c2_73, %c1_74, %c0_75, %c0_76] : memref<1x8x5x5x128xbf16, #tpu.memory_space<vmem>>, vector<1x2x4x4x128xbf16>
    %65 = vector.shape_cast %64 : vector<1x2x4x4x128xbf16> to vector<2x4x4x128xbf16>
    %66 = vector.shape_cast %65 : vector<2x4x4x128xbf16> to vector<32x128xbf16>
    %c9 = arith.constant 9 : index
    %c0_77 = arith.constant 0 : index
    %c0_78 = arith.constant 0 : index
    %67 = vector.load %arg4[%c9, %c0_77, %c0_78] : memref<16x128x128xbf16, #tpu.memory_space<vmem>>, vector<1x128x128xbf16>
    %68 = vector.shape_cast %67 : vector<1x128x128xbf16> to vector<128x128xbf16>
    %cst_79 = arith.constant dense<0.000000e+00> : vector<32x128xf32>
    %69 = tpu.matmul %66, %68, %cst_79 {dimension_numbers = #tpu.dot_dimension_numbers<[1], [0], [0], [1], [0, 0, 1, 1], [], []>} : vector<32x128xbf16>, vector<128x128xbf16>, vector<32x128xf32> -> vector<32x128xf32>
    %70 = arith.addf %63, %69 : vector<32x128xf32>
    %c0_80 = arith.constant 0 : index
    %c0_81 = arith.constant 0 : index
    %c1_82 = arith.constant 1 : index
    %c1_83 = arith.constant 1 : index
    %c0_84 = arith.constant 0 : index
    %71 = vector.load %arg3[%c0_80, %c0_81, %c1_82, %c1_83, %c0_84] : memref<1x8x5x5x128xbf16, #tpu.memory_space<vmem>>, vector<1x2x4x4x128xbf16>
    %72 = vector.shape_cast %71 : vector<1x2x4x4x128xbf16> to vector<2x4x4x128xbf16>
    %73 = vector.shape_cast %72 : vector<2x4x4x128xbf16> to vector<32x128xbf16>
    %c10 = arith.constant 10 : index
    %c0_85 = arith.constant 0 : index
    %c0_86 = arith.constant 0 : index
    %74 = vector.load %arg4[%c10, %c0_85, %c0_86] : memref<16x128x128xbf16, #tpu.memory_space<vmem>>, vector<1x128x128xbf16>
    %75 = vector.shape_cast %74 : vector<1x128x128xbf16> to vector<128x128xbf16>
    %cst_87 = arith.constant dense<0.000000e+00> : vector<32x128xf32>
    %76 = tpu.matmul %73, %75, %cst_87 {dimension_numbers = #tpu.dot_dimension_numbers<[1], [0], [0], [1], [0, 0, 1, 1], [], []>} : vector<32x128xbf16>, vector<128x128xbf16>, vector<32x128xf32> -> vector<32x128xf32>
    %77 = arith.addf %70, %76 : vector<32x128xf32>
    %c0_88 = arith.constant 0 : index
    %c2_89 = arith.constant 2 : index
    %c1_90 = arith.constant 1 : index
    %c1_91 = arith.constant 1 : index
    %c0_92 = arith.constant 0 : index
    %78 = vector.load %arg3[%c0_88, %c2_89, %c1_90, %c1_91, %c0_92] : memref<1x8x5x5x128xbf16, #tpu.memory_space<vmem>>, vector<1x2x4x4x128xbf16>
    %79 = vector.shape_cast %78 : vector<1x2x4x4x128xbf16> to vector<2x4x4x128xbf16>
    %80 = vector.shape_cast %79 : vector<2x4x4x128xbf16> to vector<32x128xbf16>
    %c11 = arith.constant 11 : index
    %c0_93 = arith.constant 0 : index
    %c0_94 = arith.constant 0 : index
    %81 = vector.load %arg4[%c11, %c0_93, %c0_94] : memref<16x128x128xbf16, #tpu.memory_space<vmem>>, vector<1x128x128xbf16>
    %82 = vector.shape_cast %81 : vector<1x128x128xbf16> to vector<128x128xbf16>
    %cst_95 = arith.constant dense<0.000000e+00> : vector<32x128xf32>
    %83 = tpu.matmul %80, %82, %cst_95 {dimension_numbers = #tpu.dot_dimension_numbers<[1], [0], [0], [1], [0, 0, 1, 1], [], []>} : vector<32x128xbf16>, vector<128x128xbf16>, vector<32x128xf32> -> vector<32x128xf32>
    %84 = arith.addf %77, %83 : vector<32x128xf32>
    %c0_96 = arith.constant 0 : index
    %c4_97 = arith.constant 4 : index
    %c1_98 = arith.constant 1 : index
    %c0_99 = arith.constant 0 : index
    %c0_100 = arith.constant 0 : index
    %85 = vector.load %arg3[%c0_96, %c4_97, %c1_98, %c0_99, %c0_100] : memref<1x8x5x5x128xbf16, #tpu.memory_space<vmem>>, vector<1x2x4x4x128xbf16>
    %86 = vector.shape_cast %85 : vector<1x2x4x4x128xbf16> to vector<2x4x4x128xbf16>
    %87 = vector.shape_cast %86 : vector<2x4x4x128xbf16> to vector<32x128xbf16>
    %c12 = arith.constant 12 : index
    %c0_101 = arith.constant 0 : index
    %c0_102 = arith.constant 0 : index
    %88 = vector.load %arg4[%c12, %c0_101, %c0_102] : memref<16x128x128xbf16, #tpu.memory_space<vmem>>, vector<1x128x128xbf16>
    %89 = vector.shape_cast %88 : vector<1x128x128xbf16> to vector<128x128xbf16>
    %cst_103 = arith.constant dense<0.000000e+00> : vector<32x128xf32>
    %90 = tpu.matmul %87, %89, %cst_103 {dimension_numbers = #tpu.dot_dimension_numbers<[1], [0], [0], [1], [0, 0, 1, 1], [], []>} : vector<32x128xbf16>, vector<128x128xbf16>, vector<32x128xf32> -> vector<32x128xf32>
    %91 = arith.addf %84, %90 : vector<32x128xf32>
    %c0_104 = arith.constant 0 : index
    %c6_105 = arith.constant 6 : index
    %c1_106 = arith.constant 1 : index
    %c0_107 = arith.constant 0 : index
    %c0_108 = arith.constant 0 : index
    %92 = vector.load %arg3[%c0_104, %c6_105, %c1_106, %c0_107, %c0_108] : memref<1x8x5x5x128xbf16, #tpu.memory_space<vmem>>, vector<1x2x4x4x128xbf16>
    %93 = vector.shape_cast %92 : vector<1x2x4x4x128xbf16> to vector<2x4x4x128xbf16>
    %94 = vector.shape_cast %93 : vector<2x4x4x128xbf16> to vector<32x128xbf16>
    %c13 = arith.constant 13 : index
    %c0_109 = arith.constant 0 : index
    %c0_110 = arith.constant 0 : index
    %95 = vector.load %arg4[%c13, %c0_109, %c0_110] : memref<16x128x128xbf16, #tpu.memory_space<vmem>>, vector<1x128x128xbf16>
    %96 = vector.shape_cast %95 : vector<1x128x128xbf16> to vector<128x128xbf16>
    %cst_111 = arith.constant dense<0.000000e+00> : vector<32x128xf32>
    %97 = tpu.matmul %94, %96, %cst_111 {dimension_numbers = #tpu.dot_dimension_numbers<[1], [0], [0], [1], [0, 0, 1, 1], [], []>} : vector<32x128xbf16>, vector<128x128xbf16>, vector<32x128xf32> -> vector<32x128xf32>
    %98 = arith.addf %91, %97 : vector<32x128xf32>
    %c0_112 = arith.constant 0 : index
    %c4_113 = arith.constant 4 : index
    %c1_114 = arith.constant 1 : index
    %c1_115 = arith.constant 1 : index
    %c0_116 = arith.constant 0 : index
    %99 = vector.load %arg3[%c0_112, %c4_113, %c1_114, %c1_115, %c0_116] : memref<1x8x5x5x128xbf16, #tpu.memory_space<vmem>>, vector<1x2x4x4x128xbf16>
    %100 = vector.shape_cast %99 : vector<1x2x4x4x128xbf16> to vector<2x4x4x128xbf16>
    %101 = vector.shape_cast %100 : vector<2x4x4x128xbf16> to vector<32x128xbf16>
    %c14 = arith.constant 14 : index
    %c0_117 = arith.constant 0 : index
    %c0_118 = arith.constant 0 : index
    %102 = vector.load %arg4[%c14, %c0_117, %c0_118] : memref<16x128x128xbf16, #tpu.memory_space<vmem>>, vector<1x128x128xbf16>
    %103 = vector.shape_cast %102 : vector<1x128x128xbf16> to vector<128x128xbf16>
    %cst_119 = arith.constant dense<0.000000e+00> : vector<32x128xf32>
    %104 = tpu.matmul %101, %103, %cst_119 {dimension_numbers = #tpu.dot_dimension_numbers<[1], [0], [0], [1], [0, 0, 1, 1], [], []>} : vector<32x128xbf16>, vector<128x128xbf16>, vector<32x128xf32> -> vector<32x128xf32>
    %105 = arith.addf %98, %104 : vector<32x128xf32>
    %c0_120 = arith.constant 0 : index
    %c6_121 = arith.constant 6 : index
    %c1_122 = arith.constant 1 : index
    %c1_123 = arith.constant 1 : index
    %c0_124 = arith.constant 0 : index
    %106 = vector.load %arg3[%c0_120, %c6_121, %c1_122, %c1_123, %c0_124] : memref<1x8x5x5x128xbf16, #tpu.memory_space<vmem>>, vector<1x2x4x4x128xbf16>
    %107 = vector.shape_cast %106 : vector<1x2x4x4x128xbf16> to vector<2x4x4x128xbf16>
    %108 = vector.shape_cast %107 : vector<2x4x4x128xbf16> to vector<32x128xbf16>
    %c15 = arith.constant 15 : index
    %c0_125 = arith.constant 0 : index
    %c0_126 = arith.constant 0 : index
    %109 = vector.load %arg4[%c15, %c0_125, %c0_126] : memref<16x128x128xbf16, #tpu.memory_space<vmem>>, vector<1x128x128xbf16>
    %110 = vector.shape_cast %109 : vector<1x128x128xbf16> to vector<128x128xbf16>
    %cst_127 = arith.constant dense<0.000000e+00> : vector<32x128xf32>
    %111 = tpu.matmul %108, %110, %cst_127 {dimension_numbers = #tpu.dot_dimension_numbers<[1], [0], [0], [1], [0, 0, 1, 1], [], []>} : vector<32x128xbf16>, vector<128x128xbf16>, vector<32x128xf32> -> vector<32x128xf32>
    %112 = arith.addf %105, %111 : vector<32x128xf32>
    %c0_128 = arith.constant 0 : index
    %c0_129 = arith.constant 0 : index
    %113 = vector.load %arg5[%c0_128, %c0_129] : memref<1x128xf32, #tpu.memory_space<vmem>>, vector<1x128xf32>
    %114 = vector.broadcast %113 : vector<1x128xf32> to vector<32x128xf32>
    %115 = arith.addf %112, %114 : vector<32x128xf32>
    %116 = vector.shape_cast %115 : vector<32x128xf32> to vector<2x4x4x128xf32>
    %117 = arith.truncf %116 : vector<2x4x4x128xf32> to vector<2x4x4x128xbf16>
    %c0_130 = arith.constant 0 : index
    %c0_131 = arith.constant 0 : index
    %c0_132 = arith.constant 0 : index
    %c0_133 = arith.constant 0 : index
    %118 = vector.load %arg6[%c0_130, %c0_131, %c0_132, %c0_133] : memref<2x4x4x128xbf16, #tpu.memory_space<vmem>>, vector<2x4x4x128xbf16>
    tpu.vector_store %arg6[%c0_130, %c0_131, %c0_132, %c0_133], %117 {strides = array<i32>} : memref<2x4x4x128xbf16, #tpu.memory_space<vmem>>, vector<2x4x4x128xbf16>,
    %cst_134 = arith.constant dense<0.000000e+00> : vector<128xf32>
    %119 = vector.multi_reduction <add>, %115, %cst_134 [0] : vector<32x128xf32> to vector<128xf32>
    %120 = vector.shape_cast %119 : vector<128xf32> to vector<1x128xf32>
    %c0_135 = arith.constant 0 : index
    %c0_136 = arith.constant 0 : index
    %c0_137 = arith.constant 0 : index
    %c0_138 = arith.constant 0 : index
    %121 = vector.load %arg7[%c0_135, %c0_136, %c0_137, %c0_138] : memref<1x1x1x128xf32, #tpu.memory_space<vmem>>, vector<1x1x1x128xf32>
    %122 = vector.shape_cast %121 : vector<1x1x1x128xf32> to vector<1x128xf32>
    %123 = vector.shape_cast %120 : vector<1x128xf32> to vector<1x1x1x128xf32>
    tpu.vector_store %arg7[%c0_135, %c0_136, %c0_137, %c0_138], %123 {strides = array<i32>} : memref<1x1x1x128xf32, #tpu.memory_space<vmem>>, vector<1x1x1x128xf32>,
    %124 = arith.mulf %115, %115 : vector<32x128xf32>
    %cst_139 = arith.constant dense<0.000000e+00> : vector<128xf32>
    %125 = vector.multi_reduction <add>, %124, %cst_139 [0] : vector<32x128xf32> to vector<128xf32>
    %126 = vector.shape_cast %125 : vector<128xf32> to vector<1x128xf32>
    %c0_140 = arith.constant 0 : index
    %c0_141 = arith.constant 0 : index
    %c0_142 = arith.constant 0 : index
    %c0_143 = arith.constant 0 : index
    %127 = vector.load %arg8[%c0_140, %c0_141, %c0_142, %c0_143] : memref<1x1x1x128xf32, #tpu.memory_space<vmem>>, vector<1x1x1x128xf32>
    %128 = vector.shape_cast %127 : vector<1x1x1x128xf32> to vector<1x128xf32>
    %129 = vector.shape_cast %126 : vector<1x128xf32> to vector<1x1x1x128xf32>
    tpu.vector_store %arg8[%c0_140, %c0_141, %c0_142, %c0_143], %129 {strides = array<i32>} : memref<1x1x1x128xf32, #tpu.memory_space<vmem>>, vector<1x1x1x128xf32>,
    return
  }
  func.func @transform_0(%arg0: i32, %arg1: i32, %arg2: i32) -> (i32, i32, i32, i32, i32) {
    %c1_i32 = arith.constant 1 : i32
    %0 = arith.muli %arg0, %c1_i32 : i32
    %1 = arith.addi %0, %arg1 : i32
    %c0_i32 = arith.constant 0 : i32
    %c0_i32_0 = arith.constant 0 : i32
    %c0_i32_1 = arith.constant 0 : i32
    %c0_i32_2 = arith.constant 0 : i32
    %c0_i32_3 = arith.constant 0 : i32
    return %1, %c0_i32, %c0_i32_0, %c0_i32_1, %c0_i32_2 : i32, i32, i32, i32, i32
  }
  func.func @transform_1(%arg0: i32, %arg1: i32, %arg2: i32) -> (i32, i32, i32) {
    %c0_i32 = arith.constant 0 : i32
    %c0_i32_0 = arith.constant 0 : i32
    %c0_i32_1 = arith.constant 0 : i32
    return %c0_i32, %c0_i32_0, %arg2 : i32, i32, i32
  }
  func.func @transform_2(%arg0: i32, %arg1: i32, %arg2: i32) -> (i32, i32) {
    %c0_i32 = arith.constant 0 : i32
    %c0_i32_0 = arith.constant 0 : i32
    return %c0_i32, %arg2 : i32, i32
  }
  func.func @transform_3(%arg0: i32, %arg1: i32, %arg2: i32) -> (i32, i32, i32, i32) {
    %c0_i32 = arith.constant 0 : i32
    %c0_i32_0 = arith.constant 0 : i32
    return %arg0, %arg1, %c0_i32, %arg2 : i32, i32, i32, i32
  }
  func.func @transform_4(%arg0: i32, %arg1: i32, %arg2: i32) -> (i32, i32, i32, i32) {
    %c0_i32 = arith.constant 0 : i32
    %c0_i32_0 = arith.constant 0 : i32
    return %arg0, %arg1, %c0_i32, %arg2 : i32, i32, i32, i32
  }
  func.func @transform_5(%arg0: i32, %arg1: i32, %arg2: i32) -> (i32, i32, i32, i32) {
    %c0_i32 = arith.constant 0 : i32
    %c0_i32_0 = arith.constant 0 : i32
    return %arg0, %arg1, %c0_i32, %arg2 : i32, i32, i32, i32
  }
}

module attributes {stable_mosaic.version = 11 : i64} {
  func.func @_conv_stats_kernel(%arg0: i32, %arg1: i32, %arg2: i32, %arg3: memref<1x8x3x3x128xbf16, #tpu.memory_space<vmem>>, %arg4: memref<16x128x128xbf16, #tpu.memory_space<vmem>>, %arg5: memref<1x128xf32, #tpu.memory_space<vmem>>, %arg6: memref<2x2x2x128xbf16, #tpu.memory_space<vmem>>, %arg7: memref<1x1x1x128xf32, #tpu.memory_space<vmem>>, %arg8: memref<1x1x1x128xf32, #tpu.memory_space<vmem>>) attributes {dimension_semantics = [#tpu.dimension_semantics<parallel>, #tpu.dimension_semantics<parallel>, #tpu.dimension_semantics<parallel>], iteration_bounds = array<i64: 1, 1, 1>, scalar_prefetch = 0 : i64, scratch_operands = 0 : i64, tpu.core_type = #tpu.core_type<tc>, window_params = [{transform_indices = @transform_0, window_bounds = array<i64: 1, 8, 3, 3, 128>}, {transform_indices = @transform_1, window_bounds = array<i64: 16, 128, 128>}, {transform_indices = @transform_2, window_bounds = array<i64: 1, 128>}, {transform_indices = @transform_3, window_bounds = array<i64: 2, 2, 2, 128>}, {transform_indices = @transform_4, window_bounds = array<i64: 1, 1, 1, 128>}, {transform_indices = @transform_5, window_bounds = array<i64: 1, 1, 1, 128>}]} {
    %cst = arith.constant 0.000000e+00 : f32
    %0 = vector.broadcast %cst : f32 to vector<8x128xf32>
    %c0 = arith.constant 0 : index
    %c0_0 = arith.constant 0 : index
    %c0_1 = arith.constant 0 : index
    %c0_2 = arith.constant 0 : index
    %c0_3 = arith.constant 0 : index
    %1 = vector.load %arg3[%c0, %c0_0, %c0_1, %c0_2, %c0_3] : memref<1x8x3x3x128xbf16, #tpu.memory_space<vmem>>, vector<1x2x2x2x128xbf16>
    %2 = vector.shape_cast %1 : vector<1x2x2x2x128xbf16> to vector<2x2x2x128xbf16>
    %3 = vector.shape_cast %2 : vector<2x2x2x128xbf16> to vector<8x128xbf16>
    %c0_4 = arith.constant 0 : index
    %c0_5 = arith.constant 0 : index
    %c0_6 = arith.constant 0 : index
    %4 = vector.load %arg4[%c0_4, %c0_5, %c0_6] : memref<16x128x128xbf16, #tpu.memory_space<vmem>>, vector<1x128x128xbf16>
    %5 = vector.shape_cast %4 : vector<1x128x128xbf16> to vector<128x128xbf16>
    %cst_7 = arith.constant dense<0.000000e+00> : vector<8x128xf32>
    %6 = tpu.matmul %3, %5, %cst_7 {dimension_numbers = #tpu.dot_dimension_numbers<[1], [0], [0], [1], [0, 0, 1, 1], [], []>} : vector<8x128xbf16>, vector<128x128xbf16>, vector<8x128xf32> -> vector<8x128xf32>
    %7 = arith.addf %0, %6 : vector<8x128xf32>
    %c0_8 = arith.constant 0 : index
    %c2 = arith.constant 2 : index
    %c0_9 = arith.constant 0 : index
    %c0_10 = arith.constant 0 : index
    %c0_11 = arith.constant 0 : index
    %8 = vector.load %arg3[%c0_8, %c2, %c0_9, %c0_10, %c0_11] : memref<1x8x3x3x128xbf16, #tpu.memory_space<vmem>>, vector<1x2x2x2x128xbf16>
    %9 = vector.shape_cast %8 : vector<1x2x2x2x128xbf16> to vector<2x2x2x128xbf16>
    %10 = vector.shape_cast %9 : vector<2x2x2x128xbf16> to vector<8x128xbf16>
    %c1 = arith.constant 1 : index
    %c0_12 = arith.constant 0 : index
    %c0_13 = arith.constant 0 : index
    %11 = vector.load %arg4[%c1, %c0_12, %c0_13] : memref<16x128x128xbf16, #tpu.memory_space<vmem>>, vector<1x128x128xbf16>
    %12 = vector.shape_cast %11 : vector<1x128x128xbf16> to vector<128x128xbf16>
    %cst_14 = arith.constant dense<0.000000e+00> : vector<8x128xf32>
    %13 = tpu.matmul %10, %12, %cst_14 {dimension_numbers = #tpu.dot_dimension_numbers<[1], [0], [0], [1], [0, 0, 1, 1], [], []>} : vector<8x128xbf16>, vector<128x128xbf16>, vector<8x128xf32> -> vector<8x128xf32>
    %14 = arith.addf %7, %13 : vector<8x128xf32>
    %c0_15 = arith.constant 0 : index
    %c0_16 = arith.constant 0 : index
    %c0_17 = arith.constant 0 : index
    %c1_18 = arith.constant 1 : index
    %c0_19 = arith.constant 0 : index
    %15 = vector.load %arg3[%c0_15, %c0_16, %c0_17, %c1_18, %c0_19] : memref<1x8x3x3x128xbf16, #tpu.memory_space<vmem>>, vector<1x2x2x2x128xbf16>
    %16 = vector.shape_cast %15 : vector<1x2x2x2x128xbf16> to vector<2x2x2x128xbf16>
    %17 = vector.shape_cast %16 : vector<2x2x2x128xbf16> to vector<8x128xbf16>
    %c2_20 = arith.constant 2 : index
    %c0_21 = arith.constant 0 : index
    %c0_22 = arith.constant 0 : index
    %18 = vector.load %arg4[%c2_20, %c0_21, %c0_22] : memref<16x128x128xbf16, #tpu.memory_space<vmem>>, vector<1x128x128xbf16>
    %19 = vector.shape_cast %18 : vector<1x128x128xbf16> to vector<128x128xbf16>
    %cst_23 = arith.constant dense<0.000000e+00> : vector<8x128xf32>
    %20 = tpu.matmul %17, %19, %cst_23 {dimension_numbers = #tpu.dot_dimension_numbers<[1], [0], [0], [1], [0, 0, 1, 1], [], []>} : vector<8x128xbf16>, vector<128x128xbf16>, vector<8x128xf32> -> vector<8x128xf32>
    %21 = arith.addf %14, %20 : vector<8x128xf32>
    %c0_24 = arith.constant 0 : index
    %c2_25 = arith.constant 2 : index
    %c0_26 = arith.constant 0 : index
    %c1_27 = arith.constant 1 : index
    %c0_28 = arith.constant 0 : index
    %22 = vector.load %arg3[%c0_24, %c2_25, %c0_26, %c1_27, %c0_28] : memref<1x8x3x3x128xbf16, #tpu.memory_space<vmem>>, vector<1x2x2x2x128xbf16>
    %23 = vector.shape_cast %22 : vector<1x2x2x2x128xbf16> to vector<2x2x2x128xbf16>
    %24 = vector.shape_cast %23 : vector<2x2x2x128xbf16> to vector<8x128xbf16>
    %c3 = arith.constant 3 : index
    %c0_29 = arith.constant 0 : index
    %c0_30 = arith.constant 0 : index
    %25 = vector.load %arg4[%c3, %c0_29, %c0_30] : memref<16x128x128xbf16, #tpu.memory_space<vmem>>, vector<1x128x128xbf16>
    %26 = vector.shape_cast %25 : vector<1x128x128xbf16> to vector<128x128xbf16>
    %cst_31 = arith.constant dense<0.000000e+00> : vector<8x128xf32>
    %27 = tpu.matmul %24, %26, %cst_31 {dimension_numbers = #tpu.dot_dimension_numbers<[1], [0], [0], [1], [0, 0, 1, 1], [], []>} : vector<8x128xbf16>, vector<128x128xbf16>, vector<8x128xf32> -> vector<8x128xf32>
    %28 = arith.addf %21, %27 : vector<8x128xf32>
    %c0_32 = arith.constant 0 : index
    %c4 = arith.constant 4 : index
    %c0_33 = arith.constant 0 : index
    %c0_34 = arith.constant 0 : index
    %c0_35 = arith.constant 0 : index
    %29 = vector.load %arg3[%c0_32, %c4, %c0_33, %c0_34, %c0_35] : memref<1x8x3x3x128xbf16, #tpu.memory_space<vmem>>, vector<1x2x2x2x128xbf16>
    %30 = vector.shape_cast %29 : vector<1x2x2x2x128xbf16> to vector<2x2x2x128xbf16>
    %31 = vector.shape_cast %30 : vector<2x2x2x128xbf16> to vector<8x128xbf16>
    %c4_36 = arith.constant 4 : index
    %c0_37 = arith.constant 0 : index
    %c0_38 = arith.constant 0 : index
    %32 = vector.load %arg4[%c4_36, %c0_37, %c0_38] : memref<16x128x128xbf16, #tpu.memory_space<vmem>>, vector<1x128x128xbf16>
    %33 = vector.shape_cast %32 : vector<1x128x128xbf16> to vector<128x128xbf16>
    %cst_39 = arith.constant dense<0.000000e+00> : vector<8x128xf32>
    %34 = tpu.matmul %31, %33, %cst_39 {dimension_numbers = #tpu.dot_dimension_numbers<[1], [0], [0], [1], [0, 0, 1, 1], [], []>} : vector<8x128xbf16>, vector<128x128xbf16>, vector<8x128xf32> -> vector<8x128xf32>
    %35 = arith.addf %28, %34 : vector<8x128xf32>
    %c0_40 = arith.constant 0 : index
    %c6 = arith.constant 6 : index
    %c0_41 = arith.constant 0 : index
    %c0_42 = arith.constant 0 : index
    %c0_43 = arith.constant 0 : index
    %36 = vector.load %arg3[%c0_40, %c6, %c0_41, %c0_42, %c0_43] : memref<1x8x3x3x128xbf16, #tpu.memory_space<vmem>>, vector<1x2x2x2x128xbf16>
    %37 = vector.shape_cast %36 : vector<1x2x2x2x128xbf16> to vector<2x2x2x128xbf16>
    %38 = vector.shape_cast %37 : vector<2x2x2x128xbf16> to vector<8x128xbf16>
    %c5 = arith.constant 5 : index
    %c0_44 = arith.constant 0 : index
    %c0_45 = arith.constant 0 : index
    %39 = vector.load %arg4[%c5, %c0_44, %c0_45] : memref<16x128x128xbf16, #tpu.memory_space<vmem>>, vector<1x128x128xbf16>
    %40 = vector.shape_cast %39 : vector<1x128x128xbf16> to vector<128x128xbf16>
    %cst_46 = arith.constant dense<0.000000e+00> : vector<8x128xf32>
    %41 = tpu.matmul %38, %40, %cst_46 {dimension_numbers = #tpu.dot_dimension_numbers<[1], [0], [0], [1], [0, 0, 1, 1], [], []>} : vector<8x128xbf16>, vector<128x128xbf16>, vector<8x128xf32> -> vector<8x128xf32>
    %42 = arith.addf %35, %41 : vector<8x128xf32>
    %c0_47 = arith.constant 0 : index
    %c4_48 = arith.constant 4 : index
    %c0_49 = arith.constant 0 : index
    %c1_50 = arith.constant 1 : index
    %c0_51 = arith.constant 0 : index
    %43 = vector.load %arg3[%c0_47, %c4_48, %c0_49, %c1_50, %c0_51] : memref<1x8x3x3x128xbf16, #tpu.memory_space<vmem>>, vector<1x2x2x2x128xbf16>
    %44 = vector.shape_cast %43 : vector<1x2x2x2x128xbf16> to vector<2x2x2x128xbf16>
    %45 = vector.shape_cast %44 : vector<2x2x2x128xbf16> to vector<8x128xbf16>
    %c6_52 = arith.constant 6 : index
    %c0_53 = arith.constant 0 : index
    %c0_54 = arith.constant 0 : index
    %46 = vector.load %arg4[%c6_52, %c0_53, %c0_54] : memref<16x128x128xbf16, #tpu.memory_space<vmem>>, vector<1x128x128xbf16>
    %47 = vector.shape_cast %46 : vector<1x128x128xbf16> to vector<128x128xbf16>
    %cst_55 = arith.constant dense<0.000000e+00> : vector<8x128xf32>
    %48 = tpu.matmul %45, %47, %cst_55 {dimension_numbers = #tpu.dot_dimension_numbers<[1], [0], [0], [1], [0, 0, 1, 1], [], []>} : vector<8x128xbf16>, vector<128x128xbf16>, vector<8x128xf32> -> vector<8x128xf32>
    %49 = arith.addf %42, %48 : vector<8x128xf32>
    %c0_56 = arith.constant 0 : index
    %c6_57 = arith.constant 6 : index
    %c0_58 = arith.constant 0 : index
    %c1_59 = arith.constant 1 : index
    %c0_60 = arith.constant 0 : index
    %50 = vector.load %arg3[%c0_56, %c6_57, %c0_58, %c1_59, %c0_60] : memref<1x8x3x3x128xbf16, #tpu.memory_space<vmem>>, vector<1x2x2x2x128xbf16>
    %51 = vector.shape_cast %50 : vector<1x2x2x2x128xbf16> to vector<2x2x2x128xbf16>
    %52 = vector.shape_cast %51 : vector<2x2x2x128xbf16> to vector<8x128xbf16>
    %c7 = arith.constant 7 : index
    %c0_61 = arith.constant 0 : index
    %c0_62 = arith.constant 0 : index
    %53 = vector.load %arg4[%c7, %c0_61, %c0_62] : memref<16x128x128xbf16, #tpu.memory_space<vmem>>, vector<1x128x128xbf16>
    %54 = vector.shape_cast %53 : vector<1x128x128xbf16> to vector<128x128xbf16>
    %cst_63 = arith.constant dense<0.000000e+00> : vector<8x128xf32>
    %55 = tpu.matmul %52, %54, %cst_63 {dimension_numbers = #tpu.dot_dimension_numbers<[1], [0], [0], [1], [0, 0, 1, 1], [], []>} : vector<8x128xbf16>, vector<128x128xbf16>, vector<8x128xf32> -> vector<8x128xf32>
    %56 = arith.addf %49, %55 : vector<8x128xf32>
    %c0_64 = arith.constant 0 : index
    %c0_65 = arith.constant 0 : index
    %c1_66 = arith.constant 1 : index
    %c0_67 = arith.constant 0 : index
    %c0_68 = arith.constant 0 : index
    %57 = vector.load %arg3[%c0_64, %c0_65, %c1_66, %c0_67, %c0_68] : memref<1x8x3x3x128xbf16, #tpu.memory_space<vmem>>, vector<1x2x2x2x128xbf16>
    %58 = vector.shape_cast %57 : vector<1x2x2x2x128xbf16> to vector<2x2x2x128xbf16>
    %59 = vector.shape_cast %58 : vector<2x2x2x128xbf16> to vector<8x128xbf16>
    %c8 = arith.constant 8 : index
    %c0_69 = arith.constant 0 : index
    %c0_70 = arith.constant 0 : index
    %60 = vector.load %arg4[%c8, %c0_69, %c0_70] : memref<16x128x128xbf16, #tpu.memory_space<vmem>>, vector<1x128x128xbf16>
    %61 = vector.shape_cast %60 : vector<1x128x128xbf16> to vector<128x128xbf16>
    %cst_71 = arith.constant dense<0.000000e+00> : vector<8x128xf32>
    %62 = tpu.matmul %59, %61, %cst_71 {dimension_numbers = #tpu.dot_dimension_numbers<[1], [0], [0], [1], [0, 0, 1, 1], [], []>} : vector<8x128xbf16>, vector<128x128xbf16>, vector<8x128xf32> -> vector<8x128xf32>
    %63 = arith.addf %56, %62 : vector<8x128xf32>
    %c0_72 = arith.constant 0 : index
    %c2_73 = arith.constant 2 : index
    %c1_74 = arith.constant 1 : index
    %c0_75 = arith.constant 0 : index
    %c0_76 = arith.constant 0 : index
    %64 = vector.load %arg3[%c0_72, %c2_73, %c1_74, %c0_75, %c0_76] : memref<1x8x3x3x128xbf16, #tpu.memory_space<vmem>>, vector<1x2x2x2x128xbf16>
    %65 = vector.shape_cast %64 : vector<1x2x2x2x128xbf16> to vector<2x2x2x128xbf16>
    %66 = vector.shape_cast %65 : vector<2x2x2x128xbf16> to vector<8x128xbf16>
    %c9 = arith.constant 9 : index
    %c0_77 = arith.constant 0 : index
    %c0_78 = arith.constant 0 : index
    %67 = vector.load %arg4[%c9, %c0_77, %c0_78] : memref<16x128x128xbf16, #tpu.memory_space<vmem>>, vector<1x128x128xbf16>
    %68 = vector.shape_cast %67 : vector<1x128x128xbf16> to vector<128x128xbf16>
    %cst_79 = arith.constant dense<0.000000e+00> : vector<8x128xf32>
    %69 = tpu.matmul %66, %68, %cst_79 {dimension_numbers = #tpu.dot_dimension_numbers<[1], [0], [0], [1], [0, 0, 1, 1], [], []>} : vector<8x128xbf16>, vector<128x128xbf16>, vector<8x128xf32> -> vector<8x128xf32>
    %70 = arith.addf %63, %69 : vector<8x128xf32>
    %c0_80 = arith.constant 0 : index
    %c0_81 = arith.constant 0 : index
    %c1_82 = arith.constant 1 : index
    %c1_83 = arith.constant 1 : index
    %c0_84 = arith.constant 0 : index
    %71 = vector.load %arg3[%c0_80, %c0_81, %c1_82, %c1_83, %c0_84] : memref<1x8x3x3x128xbf16, #tpu.memory_space<vmem>>, vector<1x2x2x2x128xbf16>
    %72 = vector.shape_cast %71 : vector<1x2x2x2x128xbf16> to vector<2x2x2x128xbf16>
    %73 = vector.shape_cast %72 : vector<2x2x2x128xbf16> to vector<8x128xbf16>
    %c10 = arith.constant 10 : index
    %c0_85 = arith.constant 0 : index
    %c0_86 = arith.constant 0 : index
    %74 = vector.load %arg4[%c10, %c0_85, %c0_86] : memref<16x128x128xbf16, #tpu.memory_space<vmem>>, vector<1x128x128xbf16>
    %75 = vector.shape_cast %74 : vector<1x128x128xbf16> to vector<128x128xbf16>
    %cst_87 = arith.constant dense<0.000000e+00> : vector<8x128xf32>
    %76 = tpu.matmul %73, %75, %cst_87 {dimension_numbers = #tpu.dot_dimension_numbers<[1], [0], [0], [1], [0, 0, 1, 1], [], []>} : vector<8x128xbf16>, vector<128x128xbf16>, vector<8x128xf32> -> vector<8x128xf32>
    %77 = arith.addf %70, %76 : vector<8x128xf32>
    %c0_88 = arith.constant 0 : index
    %c2_89 = arith.constant 2 : index
    %c1_90 = arith.constant 1 : index
    %c1_91 = arith.constant 1 : index
    %c0_92 = arith.constant 0 : index
    %78 = vector.load %arg3[%c0_88, %c2_89, %c1_90, %c1_91, %c0_92] : memref<1x8x3x3x128xbf16, #tpu.memory_space<vmem>>, vector<1x2x2x2x128xbf16>
    %79 = vector.shape_cast %78 : vector<1x2x2x2x128xbf16> to vector<2x2x2x128xbf16>
    %80 = vector.shape_cast %79 : vector<2x2x2x128xbf16> to vector<8x128xbf16>
    %c11 = arith.constant 11 : index
    %c0_93 = arith.constant 0 : index
    %c0_94 = arith.constant 0 : index
    %81 = vector.load %arg4[%c11, %c0_93, %c0_94] : memref<16x128x128xbf16, #tpu.memory_space<vmem>>, vector<1x128x128xbf16>
    %82 = vector.shape_cast %81 : vector<1x128x128xbf16> to vector<128x128xbf16>
    %cst_95 = arith.constant dense<0.000000e+00> : vector<8x128xf32>
    %83 = tpu.matmul %80, %82, %cst_95 {dimension_numbers = #tpu.dot_dimension_numbers<[1], [0], [0], [1], [0, 0, 1, 1], [], []>} : vector<8x128xbf16>, vector<128x128xbf16>, vector<8x128xf32> -> vector<8x128xf32>
    %84 = arith.addf %77, %83 : vector<8x128xf32>
    %c0_96 = arith.constant 0 : index
    %c4_97 = arith.constant 4 : index
    %c1_98 = arith.constant 1 : index
    %c0_99 = arith.constant 0 : index
    %c0_100 = arith.constant 0 : index
    %85 = vector.load %arg3[%c0_96, %c4_97, %c1_98, %c0_99, %c0_100] : memref<1x8x3x3x128xbf16, #tpu.memory_space<vmem>>, vector<1x2x2x2x128xbf16>
    %86 = vector.shape_cast %85 : vector<1x2x2x2x128xbf16> to vector<2x2x2x128xbf16>
    %87 = vector.shape_cast %86 : vector<2x2x2x128xbf16> to vector<8x128xbf16>
    %c12 = arith.constant 12 : index
    %c0_101 = arith.constant 0 : index
    %c0_102 = arith.constant 0 : index
    %88 = vector.load %arg4[%c12, %c0_101, %c0_102] : memref<16x128x128xbf16, #tpu.memory_space<vmem>>, vector<1x128x128xbf16>
    %89 = vector.shape_cast %88 : vector<1x128x128xbf16> to vector<128x128xbf16>
    %cst_103 = arith.constant dense<0.000000e+00> : vector<8x128xf32>
    %90 = tpu.matmul %87, %89, %cst_103 {dimension_numbers = #tpu.dot_dimension_numbers<[1], [0], [0], [1], [0, 0, 1, 1], [], []>} : vector<8x128xbf16>, vector<128x128xbf16>, vector<8x128xf32> -> vector<8x128xf32>
    %91 = arith.addf %84, %90 : vector<8x128xf32>
    %c0_104 = arith.constant 0 : index
    %c6_105 = arith.constant 6 : index
    %c1_106 = arith.constant 1 : index
    %c0_107 = arith.constant 0 : index
    %c0_108 = arith.constant 0 : index
    %92 = vector.load %arg3[%c0_104, %c6_105, %c1_106, %c0_107, %c0_108] : memref<1x8x3x3x128xbf16, #tpu.memory_space<vmem>>, vector<1x2x2x2x128xbf16>
    %93 = vector.shape_cast %92 : vector<1x2x2x2x128xbf16> to vector<2x2x2x128xbf16>
    %94 = vector.shape_cast %93 : vector<2x2x2x128xbf16> to vector<8x128xbf16>
    %c13 = arith.constant 13 : index
    %c0_109 = arith.constant 0 : index
    %c0_110 = arith.constant 0 : index
    %95 = vector.load %arg4[%c13, %c0_109, %c0_110] : memref<16x128x128xbf16, #tpu.memory_space<vmem>>, vector<1x128x128xbf16>
    %96 = vector.shape_cast %95 : vector<1x128x128xbf16> to vector<128x128xbf16>
    %cst_111 = arith.constant dense<0.000000e+00> : vector<8x128xf32>
    %97 = tpu.matmul %94, %96, %cst_111 {dimension_numbers = #tpu.dot_dimension_numbers<[1], [0], [0], [1], [0, 0, 1, 1], [], []>} : vector<8x128xbf16>, vector<128x128xbf16>, vector<8x128xf32> -> vector<8x128xf32>
    %98 = arith.addf %91, %97 : vector<8x128xf32>
    %c0_112 = arith.constant 0 : index
    %c4_113 = arith.constant 4 : index
    %c1_114 = arith.constant 1 : index
    %c1_115 = arith.constant 1 : index
    %c0_116 = arith.constant 0 : index
    %99 = vector.load %arg3[%c0_112, %c4_113, %c1_114, %c1_115, %c0_116] : memref<1x8x3x3x128xbf16, #tpu.memory_space<vmem>>, vector<1x2x2x2x128xbf16>
    %100 = vector.shape_cast %99 : vector<1x2x2x2x128xbf16> to vector<2x2x2x128xbf16>
    %101 = vector.shape_cast %100 : vector<2x2x2x128xbf16> to vector<8x128xbf16>
    %c14 = arith.constant 14 : index
    %c0_117 = arith.constant 0 : index
    %c0_118 = arith.constant 0 : index
    %102 = vector.load %arg4[%c14, %c0_117, %c0_118] : memref<16x128x128xbf16, #tpu.memory_space<vmem>>, vector<1x128x128xbf16>
    %103 = vector.shape_cast %102 : vector<1x128x128xbf16> to vector<128x128xbf16>
    %cst_119 = arith.constant dense<0.000000e+00> : vector<8x128xf32>
    %104 = tpu.matmul %101, %103, %cst_119 {dimension_numbers = #tpu.dot_dimension_numbers<[1], [0], [0], [1], [0, 0, 1, 1], [], []>} : vector<8x128xbf16>, vector<128x128xbf16>, vector<8x128xf32> -> vector<8x128xf32>
    %105 = arith.addf %98, %104 : vector<8x128xf32>
    %c0_120 = arith.constant 0 : index
    %c6_121 = arith.constant 6 : index
    %c1_122 = arith.constant 1 : index
    %c1_123 = arith.constant 1 : index
    %c0_124 = arith.constant 0 : index
    %106 = vector.load %arg3[%c0_120, %c6_121, %c1_122, %c1_123, %c0_124] : memref<1x8x3x3x128xbf16, #tpu.memory_space<vmem>>, vector<1x2x2x2x128xbf16>
    %107 = vector.shape_cast %106 : vector<1x2x2x2x128xbf16> to vector<2x2x2x128xbf16>
    %108 = vector.shape_cast %107 : vector<2x2x2x128xbf16> to vector<8x128xbf16>
    %c15 = arith.constant 15 : index
    %c0_125 = arith.constant 0 : index
    %c0_126 = arith.constant 0 : index
    %109 = vector.load %arg4[%c15, %c0_125, %c0_126] : memref<16x128x128xbf16, #tpu.memory_space<vmem>>, vector<1x128x128xbf16>
    %110 = vector.shape_cast %109 : vector<1x128x128xbf16> to vector<128x128xbf16>
    %cst_127 = arith.constant dense<0.000000e+00> : vector<8x128xf32>
    %111 = tpu.matmul %108, %110, %cst_127 {dimension_numbers = #tpu.dot_dimension_numbers<[1], [0], [0], [1], [0, 0, 1, 1], [], []>} : vector<8x128xbf16>, vector<128x128xbf16>, vector<8x128xf32> -> vector<8x128xf32>
    %112 = arith.addf %105, %111 : vector<8x128xf32>
    %c0_128 = arith.constant 0 : index
    %c0_129 = arith.constant 0 : index
    %113 = vector.load %arg5[%c0_128, %c0_129] : memref<1x128xf32, #tpu.memory_space<vmem>>, vector<1x128xf32>
    %114 = vector.broadcast %113 : vector<1x128xf32> to vector<8x128xf32>
    %115 = arith.addf %112, %114 : vector<8x128xf32>
    %116 = vector.shape_cast %115 : vector<8x128xf32> to vector<2x2x2x128xf32>
    %117 = arith.truncf %116 : vector<2x2x2x128xf32> to vector<2x2x2x128xbf16>
    %c0_130 = arith.constant 0 : index
    %c0_131 = arith.constant 0 : index
    %c0_132 = arith.constant 0 : index
    %c0_133 = arith.constant 0 : index
    %118 = vector.load %arg6[%c0_130, %c0_131, %c0_132, %c0_133] : memref<2x2x2x128xbf16, #tpu.memory_space<vmem>>, vector<2x2x2x128xbf16>
    tpu.vector_store %arg6[%c0_130, %c0_131, %c0_132, %c0_133], %117 {strides = array<i32>} : memref<2x2x2x128xbf16, #tpu.memory_space<vmem>>, vector<2x2x2x128xbf16>,
    %cst_134 = arith.constant dense<0.000000e+00> : vector<128xf32>
    %119 = vector.multi_reduction <add>, %115, %cst_134 [0] : vector<8x128xf32> to vector<128xf32>
    %120 = vector.shape_cast %119 : vector<128xf32> to vector<1x128xf32>
    %c0_135 = arith.constant 0 : index
    %c0_136 = arith.constant 0 : index
    %c0_137 = arith.constant 0 : index
    %c0_138 = arith.constant 0 : index
    %121 = vector.load %arg7[%c0_135, %c0_136, %c0_137, %c0_138] : memref<1x1x1x128xf32, #tpu.memory_space<vmem>>, vector<1x1x1x128xf32>
    %122 = vector.shape_cast %121 : vector<1x1x1x128xf32> to vector<1x128xf32>
    %123 = vector.shape_cast %120 : vector<1x128xf32> to vector<1x1x1x128xf32>
    tpu.vector_store %arg7[%c0_135, %c0_136, %c0_137, %c0_138], %123 {strides = array<i32>} : memref<1x1x1x128xf32, #tpu.memory_space<vmem>>, vector<1x1x1x128xf32>,
    %124 = arith.mulf %115, %115 : vector<8x128xf32>
    %cst_139 = arith.constant dense<0.000000e+00> : vector<128xf32>
    %125 = vector.multi_reduction <add>, %124, %cst_139 [0] : vector<8x128xf32> to vector<128xf32>
    %126 = vector.shape_cast %125 : vector<128xf32> to vector<1x128xf32>
    %c0_140 = arith.constant 0 : index
    %c0_141 = arith.constant 0 : index
    %c0_142 = arith.constant 0 : index
    %c0_143 = arith.constant 0 : index
    %127 = vector.load %arg8[%c0_140, %c0_141, %c0_142, %c0_143] : memref<1x1x1x128xf32, #tpu.memory_space<vmem>>, vector<1x1x1x128xf32>
    %128 = vector.shape_cast %127 : vector<1x1x1x128xf32> to vector<1x128xf32>
    %129 = vector.shape_cast %126 : vector<1x128xf32> to vector<1x1x1x128xf32>
    tpu.vector_store %arg8[%c0_140, %c0_141, %c0_142, %c0_143], %129 {strides = array<i32>} : memref<1x1x1x128xf32, #tpu.memory_space<vmem>>, vector<1x1x1x128xf32>,
    return
  }
  func.func @transform_0(%arg0: i32, %arg1: i32, %arg2: i32) -> (i32, i32, i32, i32, i32) {
    %c1_i32 = arith.constant 1 : i32
    %0 = arith.muli %arg0, %c1_i32 : i32
    %1 = arith.addi %0, %arg1 : i32
    %c0_i32 = arith.constant 0 : i32
    %c0_i32_0 = arith.constant 0 : i32
    %c0_i32_1 = arith.constant 0 : i32
    %c0_i32_2 = arith.constant 0 : i32
    %c0_i32_3 = arith.constant 0 : i32
    return %1, %c0_i32, %c0_i32_0, %c0_i32_1, %c0_i32_2 : i32, i32, i32, i32, i32
  }
  func.func @transform_1(%arg0: i32, %arg1: i32, %arg2: i32) -> (i32, i32, i32) {
    %c0_i32 = arith.constant 0 : i32
    %c0_i32_0 = arith.constant 0 : i32
    %c0_i32_1 = arith.constant 0 : i32
    return %c0_i32, %c0_i32_0, %arg2 : i32, i32, i32
  }
  func.func @transform_2(%arg0: i32, %arg1: i32, %arg2: i32) -> (i32, i32) {
    %c0_i32 = arith.constant 0 : i32
    %c0_i32_0 = arith.constant 0 : i32
    return %c0_i32, %arg2 : i32, i32
  }
  func.func @transform_3(%arg0: i32, %arg1: i32, %arg2: i32) -> (i32, i32, i32, i32) {
    %c0_i32 = arith.constant 0 : i32
    %c0_i32_0 = arith.constant 0 : i32
    return %arg0, %arg1, %c0_i32, %arg2 : i32, i32, i32, i32
  }
  func.func @transform_4(%arg0: i32, %arg1: i32, %arg2: i32) -> (i32, i32, i32, i32) {
    %c0_i32 = arith.constant 0 : i32
    %c0_i32_0 = arith.constant 0 : i32
    return %arg0, %arg1, %c0_i32, %arg2 : i32, i32, i32, i32
  }
  func.func @transform_5(%arg0: i32, %arg1: i32, %arg2: i32) -> (i32, i32, i32, i32) {
    %c0_i32 = arith.constant 0 : i32
    %c0_i32_0 = arith.constant 0 : i32
    return %arg0, %arg1, %c0_i32, %arg2 : i32, i32, i32, i32
  }
}

module attributes {stable_mosaic.version = 11 : i64} {
  func.func @_bn_act_kernel(%arg0: i32, %arg1: memref<4x2x128xbf16, #tpu.memory_space<vmem>>, %arg2: memref<1x1x128xf32, #tpu.memory_space<vmem>>, %arg3: memref<1x1x128xf32, #tpu.memory_space<vmem>>, %arg4: memref<4x2x128xbf16, #tpu.memory_space<vmem>>) attributes {dimension_semantics = [#tpu.dimension_semantics<parallel>], iteration_bounds = array<i64: 1>, scalar_prefetch = 0 : i64, scratch_operands = 0 : i64, tpu.core_type = #tpu.core_type<tc>, window_params = [{transform_indices = @transform_0, window_bounds = array<i64: 4, 2, 128>}, {pipeline_mode = #tpu.pipeline_mode<synchronous>, transform_indices = @transform_1, window_bounds = array<i64: 1, 1, 128>}, {pipeline_mode = #tpu.pipeline_mode<synchronous>, transform_indices = @transform_2, window_bounds = array<i64: 1, 1, 128>}, {transform_indices = @transform_3, window_bounds = array<i64: 4, 2, 128>}]} {
    %c0 = arith.constant 0 : index
    %c0_0 = arith.constant 0 : index
    %c0_1 = arith.constant 0 : index
    %0 = vector.load %arg1[%c0, %c0_0, %c0_1] : memref<4x2x128xbf16, #tpu.memory_space<vmem>>, vector<4x2x128xbf16>
    %1 = arith.extf %0 : vector<4x2x128xbf16> to vector<4x2x128xf32>
    %c0_2 = arith.constant 0 : index
    %c0_3 = arith.constant 0 : index
    %c0_4 = arith.constant 0 : index
    %2 = vector.load %arg2[%c0_2, %c0_3, %c0_4] : memref<1x1x128xf32, #tpu.memory_space<vmem>>, vector<1x1x128xf32>
    %3 = vector.broadcast %2 : vector<1x1x128xf32> to vector<4x2x128xf32>
    %4 = arith.subf %1, %3 : vector<4x2x128xf32>
    %c0_5 = arith.constant 0 : index
    %c0_6 = arith.constant 0 : index
    %c0_7 = arith.constant 0 : index
    %5 = vector.load %arg3[%c0_5, %c0_6, %c0_7] : memref<1x1x128xf32, #tpu.memory_space<vmem>>, vector<1x1x128xf32>
    %6 = vector.broadcast %5 : vector<1x1x128xf32> to vector<4x2x128xf32>
    %7 = arith.mulf %4, %6 : vector<4x2x128xf32>
    %cst = arith.constant 0.000000e+00 : f32
    %8 = vector.broadcast %cst : f32 to vector<4x2x128xf32>
    %9 = arith.cmpf ogt, %7, %8 : vector<4x2x128xf32>
    %cst_8 = arith.constant 2.000000e-01 : f32
    %10 = vector.broadcast %cst_8 : f32 to vector<4x2x128xf32>
    %11 = arith.mulf %10, %7 : vector<4x2x128xf32>
    %12 = arith.select %9, %7, %11 : vector<4x2x128xi1>, vector<4x2x128xf32>
    %13 = arith.truncf %12 : vector<4x2x128xf32> to vector<4x2x128xbf16>
    %c0_9 = arith.constant 0 : index
    %c0_10 = arith.constant 0 : index
    %c0_11 = arith.constant 0 : index
    %14 = vector.load %arg4[%c0_9, %c0_10, %c0_11] : memref<4x2x128xbf16, #tpu.memory_space<vmem>>, vector<4x2x128xbf16>
    tpu.vector_store %arg4[%c0_9, %c0_10, %c0_11], %13 {strides = array<i32>} : memref<4x2x128xbf16, #tpu.memory_space<vmem>>, vector<4x2x128xbf16>,
    return
  }
  func.func @transform_0(%arg0: i32) -> (i32, i32, i32) {
    %c0_i32 = arith.constant 0 : i32
    %c0_i32_0 = arith.constant 0 : i32
    %c0_i32_1 = arith.constant 0 : i32
    return %arg0, %c0_i32, %c0_i32_0 : i32, i32, i32
  }
  func.func @transform_1(%arg0: i32) -> (i32, i32, i32) {
    %c0_i32 = arith.constant 0 : i32
    %c0_i32_0 = arith.constant 0 : i32
    %c0_i32_1 = arith.constant 0 : i32
    %c0_i32_2 = arith.constant 0 : i32
    return %c0_i32, %c0_i32_0, %c0_i32_1 : i32, i32, i32
  }
  func.func @transform_2(%arg0: i32) -> (i32, i32, i32) {
    %c0_i32 = arith.constant 0 : i32
    %c0_i32_0 = arith.constant 0 : i32
    %c0_i32_1 = arith.constant 0 : i32
    %c0_i32_2 = arith.constant 0 : i32
    return %c0_i32, %c0_i32_0, %c0_i32_1 : i32, i32, i32
  }
  func.func @transform_3(%arg0: i32) -> (i32, i32, i32) {
    %c0_i32 = arith.constant 0 : i32
    %c0_i32_0 = arith.constant 0 : i32
    %c0_i32_1 = arith.constant 0 : i32
    return %arg0, %c0_i32, %c0_i32_0 : i32, i32, i32
  }
}

</mosaic_0001>

<llo_original>
// kernel: encoder_apply.5
$region0: #{encoder_apply.5}
  #allocation0 [shape = 'u32[]', space=smem, size = 0x4, offset = 0x4, fixed_abs, tag = 'smem constant byte address 0x4 - core index']
  #allocation1 [shape = 'u32[144,128]{1,0:T(1,128)}', space=vmem, size = 0x12000, scoped, tag = 'internal scratch']
  %s0 = inlined_call_operand.vmem [shape: bf16[2,8,8,128], index: 0, kind: input, shape index: {}]
  %s1 = inlined_call_operand.vmem [shape: bf16[128,128], index: 1, kind: input, shape index: {}]
  %s2 = inlined_call_operand.vmem [shape: f32[1,128], index: 2, kind: input, shape index: {}]
  %s3 = inlined_call_operand.vmem [shape: bf16[2,8,8,128], index: 3, kind: output, shape index: {}]
  %s4 = sld [smem:[#allocation0]]
  $region45: #{encoder_apply.5} parent=0
    _
  %s6 = ssub.s32 1, %s4
  %s7 = scalar_select 0, %s6, %s4
  loop: start=0, step=1, limit=4
  $region2: #{encoder_apply.5} parent=0 // loop_pre_header
    _
  $region3: #{encoder_apply.5} parent=0 // loop_header
    %s9 = sphi 0, %s13
    %p10 = scmp.ge.s32.totalorder %s9, 4
    %s16 = sphi 0, %s35
    %s17 = sphi 0, %s31
    %s18 = sphi 0, %s27
    %s19 = sphi 0, %s16
    %s20 = sphi 0, %s17
    %s21 = sphi 0, %s18
    %s22 = sphi 0, %s19
    %s23 = sphi 0, %s20
    %s24 = sphi 0, %s21
    %s40 = sphi 0, %s42
    %s43 = sphi 0, %s40
    %s44 = sphi 0, %s43
    %s60 = sphi 0, %s44
    %s66 = sphi 0, %s68
    %s69 = sphi 0, %s66
    %s70 = sphi 0, %s69
    %s86 = sphi 0, %s70
    %s92 = sphi 0, %s94
    %s95 = sphi 0, %s92
    %s96 = sphi 0, %s95
    %s112 = sphi 0, %s96
    %s122 = sphi 0, %s124
    %s125 = sphi 0, %s122
    %s126 = sphi 0, %s125
    %s142 = sphi 0, %s126
  $region4: #{encoder_apply.5} parent=0 // loop_header_branch
    %12 = sbr.rel (%p10) target = $region8
  $region5: #{encoder_apply.5} parent=0 // loop_body
    %s14 = ssub.s32 %s9, 1
    %s15 = ssub.s32 %s9, 2
    %s25 = sadd.s32 1, %s18
    %p26 = scmp.ge.s32.totalorder %s25, 1
    %s27 = scalar_select %p26, 0, %s25
    %s28 = sadd.s32 1, %s17
    %s29 = scalar_select %p26, %s28, %s17
    %p30 = scmp.ge.s32.totalorder %s29, 1
    %s31 = scalar_select %p30, 0, %s29
    %s32 = sadd.s32 1, %s16
    %s33 = scalar_select %p30, %s32, %s16
    %p34 = scmp.ge.s32.totalorder %s33, 2
    %s35 = scalar_select %p34, 0, %s33
    %s36 = ssub.s32 %s16, %s35
    %s37 = ssub.s32 %s17, %s31
    %s38 = sor.u32 %s36, %s37
    %p39 = scmp.eq.s32.totalorder %s38, 0
    %s41 = sadd.s32 %s40, 1
    %s42 = scalar_select %p39, %s40, %s41
    %p45 = pneg %p39
    %p46 = scmp.eq.s32.totalorder %s9, 1
    %p47 = por %p45, %p46
    %p48 = scmp.ne.s32.totalorder %s40, %s43
    %p49 = scmp.eq.s32.totalorder %s9, 0
    %p50 = por %p48, %p49
    %p51 = scmp.ne.s32.totalorder %s40, %s43
    %p52 = scmp.eq.s32.totalorder %s14, 1
    %p53 = por %p51, %p52
    %p54 = scmp.ne.s32.totalorder %s43, %s44
    %p55 = scmp.eq.s32.totalorder %s14, 0
    %p56 = por %p54, %p55
    %p57 = scmp.ne.s32.totalorder %s43, %s44
    %p58 = scmp.eq.s32.totalorder %s15, 1
    %p59 = por %p57, %p58
    %p61 = scmp.ne.s32.totalorder %s44, %s60
    %p62 = scmp.eq.s32.totalorder %s15, 0
    %p63 = por %p61, %p62
    %s64 = ssub.s32 %s18, %s27
    %p65 = scmp.eq.s32.totalorder %s64, 0
    %s67 = sadd.s32 %s66, 1
    %s68 = scalar_select %p65, %s66, %s67
    %p71 = pneg %p65
    %p72 = scmp.eq.s32.totalorder %s9, 1
    %p73 = por %p71, %p72
    %p74 = scmp.ne.s32.totalorder %s66, %s69
    %p75 = scmp.eq.s32.totalorder %s9, 0
    %p76 = por %p74, %p75
    %p77 = scmp.ne.s32.totalorder %s66, %s69
    %p78 = scmp.eq.s32.totalorder %s14, 1
    %p79 = por %p77, %p78
    %p80 = scmp.ne.s32.totalorder %s69, %s70
    %p81 = scmp.eq.s32.totalorder %s14, 0
    %p82 = por %p80, %p81
    %p83 = scmp.ne.s32.totalorder %s69, %s70
    %p84 = scmp.eq.s32.totalorder %s15, 1
    %p85 = por %p83, %p84
    %p87 = scmp.ne.s32.totalorder %s70, %s86
    %p88 = scmp.eq.s32.totalorder %s15, 0
    %p89 = por %p87, %p88
    %s90 = ssub.s32 %s18, %s27
    %p91 = scmp.eq.s32.totalorder %s90, 0
    %s93 = sadd.s32 %s92, 1
    %s94 = scalar_select %p91, %s92, %s93
    %p97 = pneg %p91
    %p98 = scmp.eq.s32.totalorder %s9, 1
    %p99 = por %p97, %p98
    %p100 = scmp.ne.s32.totalorder %s92, %s95
    %p101 = scmp.eq.s32.totalorder %s9, 0
    %p102 = por %p100, %p101
    %p103 = scmp.ne.s32.totalorder %s92, %s95
    %p104 = scmp.eq.s32.totalorder %s14, 1
    %p105 = por %p103, %p104
    %p106 = scmp.ne.s32.totalorder %s95, %s96
    %p107 = scmp.eq.s32.totalorder %s14, 0
    %p108 = por %p106, %p107
    %p109 = scmp.ne.s32.totalorder %s95, %s96
    %p110 = scmp.eq.s32.totalorder %s15, 1
    %p111 = por %p109, %p110
    %p113 = scmp.ne.s32.totalorder %s96, %s112
    %p114 = scmp.eq.s32.totalorder %s15, 0
    %p115 = por %p113, %p114
    %s116 = ssub.s32 %s16, %s35
    %s117 = ssub.s32 %s17, %s31
    %s118 = sor.u32 %s116, %s117
    %s119 = ssub.s32 %s18, %s27
    %s120 = sor.u32 %s118, %s119
    %p121 = scmp.eq.s32.totalorder %s120, 0
    %s123 = sadd.s32 %s122, 1
    %s124 = scalar_select %p121, %s122, %s123
    %p127 = pneg %p121
    %p128 = scmp.eq.s32.totalorder %s9, 1
    %p129 = por %p127, %p128
    %p130 = scmp.ne.s32.totalorder %s122, %s125
    %p131 = scmp.eq.s32.totalorder %s9, 0
    %p132 = por %p130, %p131
    %p133 = scmp.ne.s32.totalorder %s122, %s125
    %p134 = scmp.eq.s32.totalorder %s14, 1
    %p135 = por %p133, %p134
    %p136 = scmp.ne.s32.totalorder %s125, %s126
    %p137 = scmp.eq.s32.totalorder %s14, 0
    %p138 = por %p136, %p137
    %p139 = scmp.ne.s32.totalorder %s125, %s126
    %p140 = scmp.eq.s32.totalorder %s15, 1
    %p141 = por %p139, %p140
    %p143 = scmp.ne.s32.totalorder %s126, %s142
    %p144 = scmp.eq.s32.totalorder %s15, 0
    %p145 = por %p143, %p144
    %p146 = scmp.le.s32.totalorder 1, %s9
    %p147 = scmp.lt.s32.totalorder %s9, 3
    %p148 = pnand %p146, %p147
    %p149 = pneg %p148
    // Predicated region
    $region9: #{encoder_apply.5} parent=5 // pred_check
      _
    $region10: #{encoder_apply.5} parent=5 // pred_check_branch
      %151 = sbr.rel (%p148) target = $region12
    $region11: #{encoder_apply.5} parent=5 // pred_region
      %s152 = ssub.s32 %s9, 1
      // Predicated region
      $region13: #{encoder_apply.5} parent=11 // pred_check
        %p153 = pneg %p82
      $region14: #{encoder_apply.5} parent=11 // pred_check_branch
        %155 = sbr.rel (%p153) target = $region16
      $region15: #{encoder_apply.5} parent=11 // pred_region
        %p156 = scmp.lt.s32.totalorder %s21, 0
        %s157 = scalar_select %p156, %s21, 0
        %s158 = smul.addr %s157, 4
        %s159 = scalar_lea.vmem %s1, %s158
      $region16: #{encoder_apply.5} parent=11 // pred_fallthru
        _
      // Predicated region
      $region17: #{encoder_apply.5} parent=11 // pred_check
        %p160 = pneg %p108
      $region18: #{encoder_apply.5} parent=11 // pred_check_branch
        %162 = sbr.rel (%p160) target = $region20
      $region19: #{encoder_apply.5} parent=11 // pred_region
        %p163 = scmp.lt.s32.totalorder %s21, 0
        %s164 = scalar_select %p163, %s21, 0
        %s165 = scalar_lea.vmem %s2, %s164
      $region20: #{encoder_apply.5} parent=11 // pred_fallthru
        _
    $region12: #{encoder_apply.5} parent=5 // pred_fallthru
      _
    %p166 = scmp.lt.s32.totalorder %s9, 2
    // Predicated region
    $region21: #{encoder_apply.5} parent=5 // pred_check
      %p167 = pneg %p166
    $region22: #{encoder_apply.5} parent=5 // pred_check_branch
      %169 = sbr.rel (%p167) target = $region24
    $region23: #{encoder_apply.5} parent=5 // pred_region
      // Predicated region
      $region25: #{encoder_apply.5} parent=23 // pred_check
        %p170 = pneg %p50
      $region26: #{encoder_apply.5} parent=23 // pred_check_branch
        %172 = sbr.rel (%p170) target = $region28
      $region27: #{encoder_apply.5} parent=23 // pred_region
        %s173 = smul.u32 8, %s17
        %p174 = scmp.lt.s32.totalorder %s16, 1
        %s175 = scalar_select %p174, %s16, 1
        %p176 = scmp.lt.s32.totalorder %s173, 7
        %s177 = scalar_select %p176, %s173, 7
        %s178 = smul.addr %s175, 8
        %s179 = sadd.s32 %s177, %s178
        %s180 = smul.addr %s179, 4
        %s181 = scalar_lea.vmem %s0, %s180
        %s182 = smul.u32 8, %s17
      $region28: #{encoder_apply.5} parent=23 // pred_fallthru
        _
    $region24: #{encoder_apply.5} parent=5 // pred_fallthru
      _
    %p183 = scmp.le.s32.totalorder 1, %s9
    %p184 = scmp.lt.s32.totalorder %s9, 3
    %p185 = pnand %p183, %p184
    %p186 = pneg %p185
    // Predicated region
    $region29: #{encoder_apply.5} parent=5 // pred_check
      _
    $region30: #{encoder_apply.5} parent=5 // pred_check_branch
      %188 = sbr.rel (%p185) target = $region32
    $region31: #{encoder_apply.5} parent=5 // pred_region
      %s189 = ssub.s32 %s9, 1
      %s190 = smul.u32 8, %s20
      %p191 = scmp.lt.s32.totalorder %s19, 1
      %s192 = scalar_select %p191, %s19, 1
      %p193 = scmp.lt.s32.totalorder %s190, 7
      %s194 = scalar_select %p193, %s190, 7
      %s195 = smul.addr %s192, 8
      %s196 = sadd.s32 %s194, %s195
      %s197 = smul.addr %s196, 4
      %s198 = scalar_lea.vmem %s0, %s197
      %p199 = pneg %p56
      %p200 = pneg %p53
      %p201 = scmp.lt.s32.totalorder %s21, 0
      %s202 = scalar_select %p201, %s21, 0
      %s203 = smul.addr %s202, 4
      %s204 = scalar_lea.vmem %s1, %s203
      %p205 = pneg %p82
      %p206 = pneg %p79
      %p207 = scmp.lt.s32.totalorder %s21, 0
      %s208 = scalar_select %p207, %s21, 0
      %s209 = scalar_lea.vmem %s2, %s208
      %p210 = pneg %p108
      %p211 = pneg %p105
      %p212 = pneg %p138
      %p213 = pneg %p135
      %s214 = smul.u32 8, %s20
      %p215 = scmp.lt.s32.totalorder %s19, 1
      %s216 = scalar_select %p215, %s19, 1
      %p217 = scmp.lt.s32.totalorder %s214, 7
      %s218 = scalar_select %p217, %s214, 7
      %p219 = scmp.lt.s32.totalorder %s21, 0
      %s220 = scalar_select %p219, %s21, 0
      %s221 = sadd.s32 %s220, %s218
      %s222 = smul.addr %s216, 8
      %s223 = sadd.s32 %s221, %s222
      %s224 = smul.addr %s223, 4
      %s225 = scalar_lea.vmem %s3, %s224
      %s226 = smul.u32 8, %s20
      %p227 = scmp.lt.s32.totalorder %s19, 1
      %s228 = scalar_select %p227, %s19, 1
      %p229 = scmp.lt.s32.totalorder %s226, 7
      %s230 = scalar_select %p229, %s226, 7
      %s231 = smul.addr %s228, 8
      %s232 = sadd.s32 %s230, %s231
      %s233 = smul.addr %s232, 4
      %s234 = scalar_lea.vmem %s0, %s233
      %s235 = smul.u32 8, %s20
      %p236 = scmp.lt.s32.totalorder %s21, 0
      %s237 = scalar_select %p236, %s21, 0
      %s238 = smul.addr %s237, 4
      %s239 = scalar_lea.vmem %s1, %s238
      %p240 = scmp.lt.s32.totalorder %s21, 0
      %s241 = scalar_select %p240, %s21, 0
      %s242 = scalar_lea.vmem %s2, %s241
      %s243 = smul.u32 8, %s20
      %p244 = scmp.lt.s32.totalorder %s19, 1
      %s245 = scalar_select %p244, %s19, 1
      %p246 = scmp.lt.s32.totalorder %s243, 7
      %s247 = scalar_select %p246, %s243, 7
      %p248 = scmp.lt.s32.totalorder %s21, 0
      %s249 = scalar_select %p248, %s21, 0
      %s250 = sadd.s32 %s249, %s247
      %s251 = smul.addr %s245, 8
      %s252 = sadd.s32 %s250, %s251
      %s253 = smul.addr %s252, 4
      %s254 = scalar_lea.vmem %s3, %s253
      %s255 = smul.u32 8, %s20
      %v257 = vld [vmem:[%s234] sm:$0xf]
      %v258 = vld [vmem:[%s234 + $0x4] sm:$0xf]
      %v259 = vld [vmem:[%s234 + $0x8] sm:$0xf]
      %v260 = vld [vmem:[%s234 + $0xc] sm:$0xf]
      %v261 = vld [vmem:[%s234 + $0x10] sm:$0xf]
      %v262 = vld [vmem:[%s234 + $0x14] sm:$0xf]
      %v263 = vld [vmem:[%s234 + $0x18] sm:$0xf]
      %v264 = vld [vmem:[%s234 + $0x1c] sm:$0xf]
      %v265 = vld [vmem:[%s239] sm:$0xf]
      %v266 = vld [vmem:[%s239 + $0x4] sm:$0xf]
      %v267 = vld [vmem:[%s239 + $0x8] sm:$0xf]
      %v268 = vld [vmem:[%s239 + $0xc] sm:$0xf]
      %v269 = vld [vmem:[%s239 + $0x10] sm:$0xf]
      %v270 = vld [vmem:[%s239 + $0x14] sm:$0xf]
      %v271 = vld [vmem:[%s239 + $0x18] sm:$0xf]
      %v272 = vld [vmem:[%s239 + $0x1c] sm:$0xf]
      %v273 = vld [vmem:[%s239 + $0x20] sm:$0xf]
      %v274 = vld [vmem:[%s239 + $0x24] sm:$0xf]
      %v275 = vld [vmem:[%s239 + $0x28] sm:$0xf]
      %v276 = vld [vmem:[%s239 + $0x2c] sm:$0xf]
      %v277 = vld [vmem:[%s239 + $0x30] sm:$0xf]
      %v278 = vld [vmem:[%s239 + $0x34] sm:$0xf]
      %v279 = vld [vmem:[%s239 + $0x38] sm:$0xf]
      %v280 = vld [vmem:[%s239 + $0x3c] sm:$0xf]
      %v281 = vld [vmem:[%s242] sm:$0x1]
      %v283 = vlaneseq
      %v284 = vshrl.u32 %v283, 7
      %v285 = vsub.s32 0, %v284
      %v286 = vrot.slane %v281, %v285
      %v296 = vunpack.c.l.b16 %v257
      %v297 = vunpack.c.l.b16 %v258
      %v298 = vunpack.c.l.b16 %v259
      %v299 = vunpack.c.l.b16 %v260
      %v300 = vunpack.c.l.b16 %v261
      %v301 = vunpack.c.l.b16 %v262
      %v302 = vunpack.c.l.b16 %v263
      %v303 = vunpack.c.l.b16 %v264
      %v304 = vpack.c.b16 %v297, %v296
      %v305 = vpack.c.b16 %v299, %v298
      %v306 = vpack.c.b16 %v301, %v300
      %v307 = vpack.c.b16 %v303, %v302
      %v328 = vunpack.c.l.b16 %v265
      %v329 = vunpack.c.l.b16 %v266
      %v330 = vunpack.c.l.b16 %v267
      %v331 = vunpack.c.l.b16 %v268
      %v332 = vunpack.c.l.b16 %v269
      %v333 = vunpack.c.l.b16 %v270
      %v334 = vunpack.c.l.b16 %v271
      %v335 = vunpack.c.l.b16 %v272
      %v336 = vunpack.c.l.b16 %v273
      %v337 = vunpack.c.l.b16 %v274
      %v338 = vunpack.c.l.b16 %v275
      %v339 = vunpack.c.l.b16 %v276
      %v340 = vunpack.c.l.b16 %v277
      %v341 = vunpack.c.l.b16 %v278
      %v342 = vunpack.c.l.b16 %v279
      %v343 = vunpack.c.l.b16 %v280
      %v344 = vpack.c.b16 %v329, %v328
      %v345 = vpack.c.b16 %v331, %v330
      %v346 = vpack.c.b16 %v333, %v332
      %v347 = vpack.c.b16 %v335, %v334
      %v348 = vpack.c.b16 %v337, %v336
      %v349 = vpack.c.b16 %v339, %v338
      %v350 = vpack.c.b16 %v341, %v340
      %v351 = vpack.c.b16 %v343, %v342
      %360 = vmatprep.subr.bf16.mxu0 0
      %361 = vmatpush1.bf16.msra.mxu0 %v344
      %362 = vmatprep.subr.bf16.mxu0 0
      %363 = vmatpush1.bf16.msra.mxu0 %v345
      %364 = vmatprep.subr.bf16.mxu0 0
      %365 = vmatpush1.bf16.msra.mxu0 %v346
      %366 = vmatprep.subr.bf16.mxu0 0
      %367 = vmatpush1.bf16.msra.mxu0 %v347
      %368 = vmatprep.subr.bf16.mxu0 0
      %369 = vmatpush1.bf16.msra.mxu0 %v348
      %370 = vmatprep.subr.bf16.mxu0 0
      %371 = vmatpush1.bf16.msra.mxu0 %v349
      %372 = vmatprep.subr.bf16.mxu0 0
      %373 = vmatpush1.bf16.msra.mxu0 %v350
      %374 = vmatprep.subr.bf16.mxu0 0
      %375 = vmatpush1.bf16.msra.mxu0 %v351
      %376 = vmatprep.subr.bf16.mxu0 0
      %377 = vmatpush1.bf16.msra.mxu0 0
      %378 = vmatprep.subr.bf16.mxu0 0
      %379 = vmatpush1.bf16.msra.mxu0 0
      %380 = vmatprep.subr.bf16.mxu0 0
      %381 = vmatpush1.bf16.msra.mxu0 0
      %382 = vmatprep.subr.bf16.mxu0 0
      %383 = vmatpush1.bf16.msra.mxu0 0
      %384 = vmatprep.subr.bf16.mxu0 0
      %385 = vmatpush1.bf16.msra.mxu0 0
      %386 = vmatprep.subr.bf16.mxu0 0
      %387 = vmatpush1.bf16.msra.mxu0 0
      %388 = vmatprep.subr.bf16.mxu0 0
      %389 = vmatpush1.bf16.msra.mxu0 0
      %390 = vmatprep.subr.bf16.mxu0 0
      %391 = vmatpush1.bf16.msra.mxu0 0
      %392 = vmatprep.mubr.bf16.mxu0 0
      %393 = vmatmul.mubr.bf16.gmra.mrb[0].mxu0 %v304
      %v394 = vpop.f32.mrb[0].mxu0
      %v395 = vadd.f32 %v286, %v394
      %v396 = vpop.f32.mrb[0].mxu0
      %v397 = vpop.f32.mrb[0].mxu0
      %v398 = vadd.f32 %v286, %v397
      %v399 = vpop.f32.mrb[0].mxu0
      %400 = vmatprep.mubr.bf16.mxu0 0
      %401 = vmatmul.mubr.bf16.gmra.mrb[0].mxu0 %v305
      %v402 = vpop.f32.mrb[0].mxu0
      %v403 = vadd.f32 %v286, %v402
      %v404 = vpop.f32.mrb[0].mxu0
      %v405 = vpop.f32.mrb[0].mxu0
      %v406 = vadd.f32 %v286, %v405
      %v407 = vpop.f32.mrb[0].mxu0
      %408 = vmatprep.mubr.bf16.mxu0 0
      %409 = vmatmul.mubr.bf16.gmra.mrb[0].mxu0 %v306
      %v410 = vpop.f32.mrb[0].mxu0
      %v411 = vadd.f32 %v286, %v410
      %v412 = vpop.f32.mrb[0].mxu0
      %v413 = vpop.f32.mrb[0].mxu0
      %v414 = vadd.f32 %v286, %v413
      %v415 = vpop.f32.mrb[0].mxu0
      %416 = vmatprep.mubr.bf16.mxu0 0
      %417 = vmatmul.mubr.bf16.gmra.mrb[0].mxu0 %v307
      %v418 = vpop.f32.mrb[0].mxu0
      %v419 = vadd.f32 %v286, %v418
      %v420 = vpop.f32.mrb[0].mxu0
      %v421 = vpop.f32.mrb[0].mxu0
      %v422 = vadd.f32 %v286, %v421
      %v423 = vpop.f32.mrb[0].mxu0
      %424 = vdwg.mxu0
      %vm425 = vcmp.gt.f32.partialorder %v395, 0.0
      %vm426 = vcmp.gt.f32.partialorder %v398, 0.0
      %vm427 = vcmp.gt.f32.partialorder %v403, 0.0
      %vm428 = vcmp.gt.f32.partialorder %v406, 0.0
      %vm429 = vcmp.gt.f32.partialorder %v411, 0.0
      %vm430 = vcmp.gt.f32.partialorder %v414, 0.0
      %vm431 = vcmp.gt.f32.partialorder %v419, 0.0
      %vm432 = vcmp.gt.f32.partialorder %v422, 0.0
      %v433 = vmul.f32 %v395, 0.2
      %v434 = vmul.f32 %v398, 0.2
      %v435 = vmul.f32 %v403, 0.2
      %v436 = vmul.f32 %v406, 0.2
      %v437 = vmul.f32 %v411, 0.2
      %v438 = vmul.f32 %v414, 0.2
      %v439 = vmul.f32 %v419, 0.2
      %v440 = vmul.f32 %v422, 0.2
      %v441 = vsel %vm425, %v395, %v433
      %v442 = vsel %vm426, %v398, %v434
      %v443 = vsel %vm427, %v403, %v435
      %v444 = vsel %vm428, %v406, %v436
      %v445 = vsel %vm429, %v411, %v437
      %v446 = vsel %vm430, %v414, %v438
      %v447 = vsel %vm431, %v419, %v439
      %v448 = vsel %vm432, %v422, %v440
      %v449 = vpack.c.bf16 %v441, %v441
      %v450 = vpack.c.bf16 %v442, %v442
      %v451 = vpack.c.bf16 %v443, %v443
      %v452 = vpack.c.bf16 %v444, %v444
      %v453 = vpack.c.bf16 %v445, %v445
      %v454 = vpack.c.bf16 %v446, %v446
      %v455 = vpack.c.bf16 %v447, %v447
      %v456 = vpack.c.bf16 %v448, %v448
      %457 = vst [vmem:[%s254] sm:$0xf] %v449
      %458 = vst [vmem:[%s254 + $0x4] sm:$0xf] %v450
      %459 = vst [vmem:[%s254 + $0x8] sm:$0xf] %v451
      %460 = vst [vmem:[%s254 + $0xc] sm:$0xf] %v452
      %461 = vst [vmem:[%s254 + $0x10] sm:$0xf] %v453
      %462 = vst [vmem:[%s254 + $0x14] sm:$0xf] %v454
      %463 = vst [vmem:[%s254 + $0x18] sm:$0xf] %v455
      %464 = vst [vmem:[%s254 + $0x1c] sm:$0xf] %v456
      %s465 = smul.u32 8, %s20
      %p466 = scmp.lt.s32.totalorder %s19, 1
      %s467 = scalar_select %p466, %s19, 1
      %p468 = scmp.lt.s32.totalorder %s465, 7
      %s469 = scalar_select %p468, %s465, 7
      %p470 = scmp.lt.s32.totalorder %s21, 0
      %s471 = scalar_select %p470, %s21, 0
      %s472 = sadd.s32 %s471, %s469
      %s473 = smul.addr %s467, 8
      %s474 = sadd.s32 %s472, %s473
      %s475 = smul.addr %s474, 4
      %s476 = scalar_lea.vmem %s3, %s475
      // Predicated region
      $region33: #{encoder_apply.5} parent=31 // pred_check
        %p477 = pneg %p135
      $region34: #{encoder_apply.5} parent=31 // pred_check_branch
        %479 = sbr.rel (%p477) target = $region36
      $region35: #{encoder_apply.5} parent=31 // pred_region
        %s480 = smul.u32 8, %s20
      $region36: #{encoder_apply.5} parent=31 // pred_fallthru
        _
    $region32: #{encoder_apply.5} parent=5 // pred_fallthru
      _
    %p481 = scmp.le.s32.totalorder 2, %s9
    // Predicated region
    $region37: #{encoder_apply.5} parent=5 // pred_check
      %p482 = pneg %p481
    $region38: #{encoder_apply.5} parent=5 // pred_check_branch
      %484 = sbr.rel (%p482) target = $region40
    $region39: #{encoder_apply.5} parent=5 // pred_region
      %s485 = ssub.s32 %s9, 2
      // Predicated region
      $region41: #{encoder_apply.5} parent=39 // pred_check
        %p486 = pneg %p141
      $region42: #{encoder_apply.5} parent=39 // pred_check_branch
        %488 = sbr.rel (%p486) target = $region44
      $region43: #{encoder_apply.5} parent=39 // pred_region
        %s489 = smul.u32 8, %s23
        %p490 = scmp.lt.s32.totalorder %s22, 1
        %s491 = scalar_select %p490, %s22, 1
        %p492 = scmp.lt.s32.totalorder %s489, 7
        %s493 = scalar_select %p492, %s489, 7
        %p494 = scmp.lt.s32.totalorder %s24, 0
        %s495 = scalar_select %p494, %s24, 0
        %s496 = sadd.s32 %s495, %s493
        %s497 = smul.addr %s491, 8
        %s498 = sadd.s32 %s496, %s497
        %s499 = smul.addr %s498, 4
        %s500 = scalar_lea.vmem %s3, %s499
      $region44: #{encoder_apply.5} parent=39 // pred_fallthru
        _
    $region40: #{encoder_apply.5} parent=5 // pred_fallthru
      _
  $region6: #{encoder_apply.5} parent=0 // loop_footer
    %s13 = sadd.s32 1, %s9
  $region7: #{encoder_apply.5} parent=0 // loop_footer_branch
    %8 = sbr.rel target = $region3
  $region8: #{encoder_apply.5} parent=0 // loop_exit
    _

// kernel: encoder_apply.7
$region0: #{encoder_apply.7}
  #allocation0 [shape = 'u32[]', space=smem, size = 0x4, offset = 0x4, fixed_abs, tag = 'smem constant byte address 0x4 - core index']
  #allocation1 [shape = 'u32[144,128]{1,0:T(1,128)}', space=vmem, size = 0x12000, scoped, tag = 'internal scratch']
  %s0 = inlined_call_operand.vmem [shape: bf16[8,4,128], index: 0, kind: input, shape index: {}]
  %s1 = inlined_call_operand.vmem [shape: f32[1,1,128], index: 1, kind: input, shape index: {}]
  %s2 = inlined_call_operand.vmem [shape: f32[1,1,128], index: 2, kind: input, shape index: {}]
  %s3 = inlined_call_operand.vmem [shape: bf16[8,4,128], index: 3, kind: output, shape index: {}]
  %s4 = sld [smem:[#allocation0]]
  $region22: #{encoder_apply.7} parent=0
    _
  %s6 = ssub.s32 1, %s4
  %s7 = scalar_select 0, %s6, %s4
  // Predicated region
  $region2: #{encoder_apply.7} parent=0 // pred_check
    _
  $region3: #{encoder_apply.7} parent=0 // pred_check_branch
    %9 = sbr.rel (0) target = $region5
  $region4: #{encoder_apply.7} parent=0 // pred_region
    _
  $region5: #{encoder_apply.7} parent=0 // pred_fallthru
    _
  // Predicated region
  $region6: #{encoder_apply.7} parent=0 // pred_check
    _
  $region7: #{encoder_apply.7} parent=0 // pred_check_branch
    %11 = sbr.rel (0) target = $region9
  $region8: #{encoder_apply.7} parent=0 // pred_region
    _
  $region9: #{encoder_apply.7} parent=0 // pred_fallthru
    _
  // Predicated region
  $region10: #{encoder_apply.7} parent=0 // pred_check
    _
  $region11: #{encoder_apply.7} parent=0 // pred_check_branch
    %13 = sbr.rel (0) target = $region13
  $region12: #{encoder_apply.7} parent=0 // pred_region
    _
  $region13: #{encoder_apply.7} parent=0 // pred_fallthru
    _
  %v14 = vld [vmem:[%s0] sm:$0x3]
  %v15 = vld [vmem:[%s0 + $0x2] sm:$0x3]
  %v16 = vld [vmem:[%s0 + $0x4] sm:$0x3]
  %v17 = vld [vmem:[%s0 + $0x6] sm:$0x3]
  %v18 = vld [vmem:[%s0 + $0x8] sm:$0x3]
  %v19 = vld [vmem:[%s0 + $0xa] sm:$0x3]
  %v20 = vld [vmem:[%s0 + $0xc] sm:$0x3]
  %v21 = vld [vmem:[%s0 + $0xe] sm:$0x3]
  %v22 = vunpack.c.l.bf16 %v14
  %v23 = vunpack.c.l.bf16 %v15
  %v24 = vunpack.c.l.bf16 %v16
  %v25 = vunpack.c.l.bf16 %v17
  %v26 = vunpack.c.l.bf16 %v18
  %v27 = vunpack.c.l.bf16 %v19
  %v28 = vunpack.c.l.bf16 %v20
  %v29 = vunpack.c.l.bf16 %v21
  %v30 = vld [vmem:[%s1] sm:$0x1]
  %v32 = vlaneseq
  %v33 = vshrl.u32 %v32, 7
  %v34 = vsub.s32 0, %v33
  %v35 = vrot.slane %v30, %v34
  %v37 = vsub.f32 %v22, %v35
  %v38 = vsub.f32 %v23, %v35
  %v39 = vsub.f32 %v24, %v35
  %v40 = vsub.f32 %v25, %v35
  %v41 = vsub.f32 %v26, %v35
  %v42 = vsub.f32 %v27, %v35
  %v43 = vsub.f32 %v28, %v35
  %v44 = vsub.f32 %v29, %v35
  %v45 = vld [vmem:[%s2] sm:$0x1]
  %v47 = vlaneseq
  %v48 = vshrl.u32 %v47, 7
  %v49 = vsub.s32 0, %v48
  %v50 = vrot.slane %v45, %v49
  %v52 = vmul.f32 %v37, %v50
  %v53 = vmul.f32 %v38, %v50
  %v54 = vmul.f32 %v39, %v50
  %v55 = vmul.f32 %v40, %v50
  %v56 = vmul.f32 %v41, %v50
  %v57 = vmul.f32 %v42, %v50
  %v58 = vmul.f32 %v43, %v50
  %v59 = vmul.f32 %v44, %v50
  %vm60 = vcmp.gt.f32.partialorder %v52, 0.0
  %vm61 = vcmp.gt.f32.partialorder %v53, 0.0
  %vm62 = vcmp.gt.f32.partialorder %v54, 0.0
  %vm63 = vcmp.gt.f32.partialorder %v55, 0.0
  %vm64 = vcmp.gt.f32.partialorder %v56, 0.0
  %vm65 = vcmp.gt.f32.partialorder %v57, 0.0
  %vm66 = vcmp.gt.f32.partialorder %v58, 0.0
  %vm67 = vcmp.gt.f32.partialorder %v59, 0.0
  %v68 = vmul.f32 %v52, 0.2
  %v69 = vmul.f32 %v53, 0.2
  %v70 = vmul.f32 %v54, 0.2
  %v71 = vmul.f32 %v55, 0.2
  %v72 = vmul.f32 %v56, 0.2
  %v73 = vmul.f32 %v57, 0.2
  %v74 = vmul.f32 %v58, 0.2
  %v75 = vmul.f32 %v59, 0.2
  %v76 = vsel %vm60, %v52, %v68
  %v77 = vsel %vm61, %v53, %v69
  %v78 = vsel %vm62, %v54, %v70
  %v79 = vsel %vm63, %v55, %v71
  %v80 = vsel %vm64, %v56, %v72
  %v81 = vsel %vm65, %v57, %v73
  %v82 = vsel %vm66, %v58, %v74
  %v83 = vsel %vm67, %v59, %v75
  %v84 = vpack.c.bf16 %v76, %v76
  %v85 = vpack.c.bf16 %v77, %v77
  %v86 = vpack.c.bf16 %v78, %v78
  %v87 = vpack.c.bf16 %v79, %v79
  %v88 = vpack.c.bf16 %v80, %v80
  %v89 = vpack.c.bf16 %v81, %v81
  %v90 = vpack.c.bf16 %v82, %v82
  %v91 = vpack.c.bf16 %v83, %v83
  %92 = vst [vmem:[%s3] sm:$0x3] %v84
  %93 = vst [vmem:[%s3 + $0x2] sm:$0x3] %v85
  %94 = vst [vmem:[%s3 + $0x4] sm:$0x3] %v86
  %95 = vst [vmem:[%s3 + $0x6] sm:$0x3] %v87
  %96 = vst [vmem:[%s3 + $0x8] sm:$0x3] %v88
  %97 = vst [vmem:[%s3 + $0xa] sm:$0x3] %v89
  %98 = vst [vmem:[%s3 + $0xc] sm:$0x3] %v90
  %99 = vst [vmem:[%s3 + $0xe] sm:$0x3] %v91
  // Predicated region
  $region14: #{encoder_apply.7} parent=0 // pred_check
    _
  $region15: #{encoder_apply.7} parent=0 // pred_check_branch
    %101 = sbr.rel (0) target = $region17
  $region16: #{encoder_apply.7} parent=0 // pred_region
    _
  $region17: #{encoder_apply.7} parent=0 // pred_fallthru
    _
  // Predicated region
  $region18: #{encoder_apply.7} parent=0 // pred_check
    _
  $region19: #{encoder_apply.7} parent=0 // pred_check_branch
    %103 = sbr.rel (0) target = $region21
  $region20: #{encoder_apply.7} parent=0 // pred_region
    _
  $region21: #{encoder_apply.7} parent=0 // pred_fallthru
    _

// kernel: encoder_apply.9
$region0: #{encoder_apply.9}
  #allocation0 [shape = 'u32[]', space=smem, size = 0x4, offset = 0x4, fixed_abs, tag = 'smem constant byte address 0x4 - core index']
  #allocation1 [shape = 'u32[144,128]{1,0:T(1,128)}', space=vmem, size = 0x12000, scoped, tag = 'internal scratch']
  %s0 = inlined_call_operand.vmem [shape: bf16[4,2,128], index: 0, kind: input, shape index: {}]
  %s1 = inlined_call_operand.vmem [shape: f32[1,1,128], index: 1, kind: input, shape index: {}]
  %s2 = inlined_call_operand.vmem [shape: f32[1,1,128], index: 2, kind: input, shape index: {}]
  %s3 = inlined_call_operand.vmem [shape: bf16[4,2,128], index: 3, kind: output, shape index: {}]
  %s4 = sld [smem:[#allocation0]]
  $region22: #{encoder_apply.9} parent=0
    _
  %s6 = ssub.s32 1, %s4
  %s7 = scalar_select 0, %s6, %s4
  // Predicated region
  $region2: #{encoder_apply.9} parent=0 // pred_check
    _
  $region3: #{encoder_apply.9} parent=0 // pred_check_branch
    %9 = sbr.rel (0) target = $region5
  $region4: #{encoder_apply.9} parent=0 // pred_region
    _
  $region5: #{encoder_apply.9} parent=0 // pred_fallthru
    _
  // Predicated region
  $region6: #{encoder_apply.9} parent=0 // pred_check
    _
  $region7: #{encoder_apply.9} parent=0 // pred_check_branch
    %11 = sbr.rel (0) target = $region9
  $region8: #{encoder_apply.9} parent=0 // pred_region
    _
  $region9: #{encoder_apply.9} parent=0 // pred_fallthru
    _
  // Predicated region
  $region10: #{encoder_apply.9} parent=0 // pred_check
    _
  $region11: #{encoder_apply.9} parent=0 // pred_check_branch
    %13 = sbr.rel (0) target = $region13
  $region12: #{encoder_apply.9} parent=0 // pred_region
    _
  $region13: #{encoder_apply.9} parent=0 // pred_fallthru
    _
  %v14 = vld [vmem:[%s0] sm:$0x1]
  %v15 = vld [vmem:[%s0 + $0x1] sm:$0x1]
  %v16 = vld [vmem:[%s0 + $0x2] sm:$0x1]
  %v17 = vld [vmem:[%s0 + $0x3] sm:$0x1]
  %v18 = vunpack.c.l.bf16 %v14
  %v19 = vunpack.c.l.bf16 %v15
  %v20 = vunpack.c.l.bf16 %v16
  %v21 = vunpack.c.l.bf16 %v17
  %v22 = vld [vmem:[%s1] sm:$0x1]
  %v24 = vlaneseq
  %v25 = vshrl.u32 %v24, 7
  %v26 = vsub.s32 0, %v25
  %v27 = vrot.slane %v22, %v26
  %v29 = vsub.f32 %v18, %v27
  %v30 = vsub.f32 %v19, %v27
  %v31 = vsub.f32 %v20, %v27
  %v32 = vsub.f32 %v21, %v27
  %v33 = vld [vmem:[%s2] sm:$0x1]
  %v35 = vlaneseq
  %v36 = vshrl.u32 %v35, 7
  %v37 = vsub.s32 0, %v36
  %v38 = vrot.slane %v33, %v37
  %v40 = vmul.f32 %v29, %v38
  %v41 = vmul.f32 %v30, %v38
  %v42 = vmul.f32 %v31, %v38
  %v43 = vmul.f32 %v32, %v38
  %vm44 = vcmp.gt.f32.partialorder %v40, 0.0
  %vm45 = vcmp.gt.f32.partialorder %v41, 0.0
  %vm46 = vcmp.gt.f32.partialorder %v42, 0.0
  %vm47 = vcmp.gt.f32.partialorder %v43, 0.0
  %v48 = vmul.f32 %v40, 0.2
  %v49 = vmul.f32 %v41, 0.2
  %v50 = vmul.f32 %v42, 0.2
  %v51 = vmul.f32 %v43, 0.2
  %v52 = vsel %vm44, %v40, %v48
  %v53 = vsel %vm45, %v41, %v49
  %v54 = vsel %vm46, %v42, %v50
  %v55 = vsel %vm47, %v43, %v51
  %v56 = vpack.c.bf16 %v52, %v52
  %v57 = vpack.c.bf16 %v53, %v53
  %v58 = vpack.c.bf16 %v54, %v54
  %v59 = vpack.c.bf16 %v55, %v55
  %60 = vst [vmem:[%s3] sm:$0x1] %v56
  %61 = vst [vmem:[%s3 + $0x1] sm:$0x1] %v57
  %62 = vst [vmem:[%s3 + $0x2] sm:$0x1] %v58
  %63 = vst [vmem:[%s3 + $0x3] sm:$0x1] %v59
  // Predicated region
  $region14: #{encoder_apply.9} parent=0 // pred_check
    _
  $region15: #{encoder_apply.9} parent=0 // pred_check_branch
    %65 = sbr.rel (0) target = $region17
  $region16: #{encoder_apply.9} parent=0 // pred_region
    _
  $region17: #{encoder_apply.9} parent=0 // pred_fallthru
    _
  // Predicated region
  $region18: #{encoder_apply.9} parent=0 // pred_check
    _
  $region19: #{encoder_apply.9} parent=0 // pred_check_branch
    %67 = sbr.rel (0) target = $region21
  $region20: #{encoder_apply.9} parent=0 // pred_region
    _
  $region21: #{encoder_apply.9} parent=0 // pred_fallthru
    _

// kernel: encoder_apply.6
$region0: #{encoder_apply.6}
  #allocation0 [shape = 'u32[]', space=smem, size = 0x4, offset = 0x4, fixed_abs, tag = 'smem constant byte address 0x4 - core index']
  #allocation1 [shape = 'u32[144,128]{1,0:T(1,128)}', space=vmem, size = 0x12000, scoped, tag = 'internal scratch']
  %s0 = inlined_call_operand.vmem [shape: bf16[1,8,5,5,128], index: 0, kind: input, shape index: {}]
  %s1 = inlined_call_operand.vmem [shape: bf16[16,128,128], index: 1, kind: input, shape index: {}]
  %s2 = inlined_call_operand.vmem [shape: f32[1,128], index: 2, kind: input, shape index: {}]
  %s3 = inlined_call_operand.vmem [shape: bf16[2,4,4,128], index: 3, kind: output, shape index: {0}]
  %s4 = inlined_call_operand.vmem [shape: f32[1,1,1,128], index: 4, kind: output, shape index: {1}]
  %s5 = inlined_call_operand.vmem [shape: f32[1,1,1,128], index: 5, kind: output, shape index: {2}]
  %6 = xla_tuple %s3, %s4, %s5
  %s7 = sld [smem:[#allocation0]]
  $region38: #{encoder_apply.6} parent=0
    _
  %s9 = ssub.s32 1, %s7
  %s10 = scalar_select 0, %s9, %s7
  // Predicated region
  $region2: #{encoder_apply.6} parent=0 // pred_check
    _
  $region3: #{encoder_apply.6} parent=0 // pred_check_branch
    %12 = sbr.rel (0) target = $region5
  $region4: #{encoder_apply.6} parent=0 // pred_region
    %s13 = sadd.s32 0, 0
    %p14 = scmp.lt.s32.totalorder %s13, 0
    %s15 = scalar_select %p14, %s13, 0
    %s16 = smul.addr %s15, 40
    %s17 = smul.addr %s16, 4
    %s18 = scalar_lea.vmem %s0, %s17
    %s19 = sadd.s32 0, 0
  $region5: #{encoder_apply.6} parent=0 // pred_fallthru
    _
  // Predicated region
  $region6: #{encoder_apply.6} parent=0 // pred_check
    _
  $region7: #{encoder_apply.6} parent=0 // pred_check_branch
    %21 = sbr.rel (0) target = $region9
  $region8: #{encoder_apply.6} parent=0 // pred_region
    _
  $region9: #{encoder_apply.6} parent=0 // pred_fallthru
    _
  // Predicated region
  $region10: #{encoder_apply.6} parent=0 // pred_check
    _
  $region11: #{encoder_apply.6} parent=0 // pred_check_branch
    %23 = sbr.rel (0) target = $region13
  $region12: #{encoder_apply.6} parent=0 // pred_region
    _
  $region13: #{encoder_apply.6} parent=0 // pred_fallthru
    _
  %s24 = sadd.s32 0, 0
  %p25 = scmp.lt.s32.totalorder %s24, 0
  %s26 = scalar_select %p25, %s24, 0
  %s27 = smul.addr %s26, 40
  %s28 = smul.addr %s27, 4
  %s29 = scalar_lea.vmem %s0, %s28
  %s30 = sadd.s32 0, 0
  %p31 = scmp.lt.s32.totalorder %s30, 0
  %s32 = scalar_select %p31, %s30, 0
  %s33 = smul.addr %s32, 40
  %s34 = smul.addr %s33, 4
  %s35 = scalar_lea.vmem %s0, %s34
  %s36 = sadd.s32 0, 0
  %v38 = vld [vmem:[%s35] sm:$0x3]
  %v39 = vld [vmem:[%s35 + $0x4] sm:$0x3]
  %v40 = vld [vmem:[%s35 + $0x8] sm:$0x3]
  %v41 = vld [vmem:[%s35 + $0xc] sm:$0x3]
  %v42 = vld [vmem:[%s35 + $0x14] sm:$0x3]
  %v43 = vld [vmem:[%s35 + $0x18] sm:$0x3]
  %v44 = vld [vmem:[%s35 + $0x1c] sm:$0x3]
  %v45 = vld [vmem:[%s35 + $0x20] sm:$0x3]
  %v46 = vld [vmem:[%s1] sm:$0xf]
  %v47 = vld [vmem:[%s1 + $0x4] sm:$0xf]
  %v48 = vld [vmem:[%s1 + $0x8] sm:$0xf]
  %v49 = vld [vmem:[%s1 + $0xc] sm:$0xf]
  %v50 = vld [vmem:[%s1 + $0x10] sm:$0xf]
  %v51 = vld [vmem:[%s1 + $0x14] sm:$0xf]
  %v52 = vld [vmem:[%s1 + $0x18] sm:$0xf]
  %v53 = vld [vmem:[%s1 + $0x1c] sm:$0xf]
  %v54 = vld [vmem:[%s1 + $0x20] sm:$0xf]
  %v55 = vld [vmem:[%s1 + $0x24] sm:$0xf]
  %v56 = vld [vmem:[%s1 + $0x28] sm:$0xf]
  %v57 = vld [vmem:[%s1 + $0x2c] sm:$0xf]
  %v58 = vld [vmem:[%s1 + $0x30] sm:$0xf]
  %v59 = vld [vmem:[%s1 + $0x34] sm:$0xf]
  %v60 = vld [vmem:[%s1 + $0x38] sm:$0xf]
  %v61 = vld [vmem:[%s1 + $0x3c] sm:$0xf]
  %s62 = scalar_lea.vmem %s35, 40
  %v63 = vld [vmem:[%s62] sm:$0x3]
  %v64 = vld [vmem:[%s62 + $0x4] sm:$0x3]
  %v65 = vld [vmem:[%s62 + $0x8] sm:$0x3]
  %v66 = vld [vmem:[%s62 + $0xc] sm:$0x3]
  %v67 = vld [vmem:[%s62 + $0x14] sm:$0x3]
  %v68 = vld [vmem:[%s62 + $0x18] sm:$0x3]
  %v69 = vld [vmem:[%s62 + $0x1c] sm:$0x3]
  %v70 = vld [vmem:[%s62 + $0x20] sm:$0x3]
  %s71 = scalar_lea.vmem %s1, 64
  %v72 = vld [vmem:[%s71] sm:$0xf]
  %v73 = vld [vmem:[%s71 + $0x4] sm:$0xf]
  %v74 = vld [vmem:[%s71 + $0x8] sm:$0xf]
  %v75 = vld [vmem:[%s71 + $0xc] sm:$0xf]
  %v76 = vld [vmem:[%s71 + $0x10] sm:$0xf]
  %v77 = vld [vmem:[%s71 + $0x14] sm:$0xf]
  %v78 = vld [vmem:[%s71 + $0x18] sm:$0xf]
  %v79 = vld [vmem:[%s71 + $0x1c] sm:$0xf]
  %v80 = vld [vmem:[%s71 + $0x20] sm:$0xf]
  %v81 = vld [vmem:[%s71 + $0x24] sm:$0xf]
  %v82 = vld [vmem:[%s71 + $0x28] sm:$0xf]
  %v83 = vld [vmem:[%s71 + $0x2c] sm:$0xf]
  %v84 = vld [vmem:[%s71 + $0x30] sm:$0xf]
  %v85 = vld [vmem:[%s71 + $0x34] sm:$0xf]
  %v86 = vld [vmem:[%s71 + $0x38] sm:$0xf]
  %v87 = vld [vmem:[%s71 + $0x3c] sm:$0xf]
  %v96 = vcombine.low %v63, %v64
  %v97 = vcombine.low %v65, %v66
  %v99 = vunpack.c.l.s4 1983009808
  %v100 = vunpack.c.0.s8 %v99
  %v101 = vlaneseq
  %v102 = vshrl.u32 %v101, 7
  %v103 = vsub.s32 %v100, %v102
  %v104 = vrot.slane %v96, %v103
  %v106 = vunpack.c.l.s4 1983009808
  %v107 = vunpack.c.0.s8 %v106
  %v108 = vlaneseq
  %v109 = vshrl.u32 %v108, 7
  %v110 = vsub.s32 %v107, %v109
  %v111 = vrot.slane %v97, %v110
  %v112 = vcombine.low %v104, %v111
  %v113 = vcombine.low %v67, %v68
  %v114 = vcombine.low %v69, %v70
  %v116 = vunpack.c.l.s4 1983009808
  %v117 = vunpack.c.0.s8 %v116
  %v118 = vlaneseq
  %v119 = vshrl.u32 %v118, 7
  %v120 = vsub.s32 %v117, %v119
  %v121 = vrot.slane %v113, %v120
  %v123 = vunpack.c.l.s4 1983009808
  %v124 = vunpack.c.0.s8 %v123
  %v125 = vlaneseq
  %v126 = vshrl.u32 %v125, 7
  %v127 = vsub.s32 %v124, %v126
  %v128 = vrot.slane %v114, %v127
  %v129 = vcombine.low %v121, %v128
  %v148 = vunpack.c.l.b16 %v72
  %v149 = vunpack.c.l.b16 %v73
  %v150 = vunpack.c.l.b16 %v74
  %v151 = vunpack.c.l.b16 %v75
  %v152 = vunpack.c.l.b16 %v76
  %v153 = vunpack.c.l.b16 %v77
  %v154 = vunpack.c.l.b16 %v78
  %v155 = vunpack.c.l.b16 %v79
  %v156 = vunpack.c.l.b16 %v80
  %v157 = vunpack.c.l.b16 %v81
  %v158 = vunpack.c.l.b16 %v82
  %v159 = vunpack.c.l.b16 %v83
  %v160 = vunpack.c.l.b16 %v84
  %v161 = vunpack.c.l.b16 %v85
  %v162 = vunpack.c.l.b16 %v86
  %v163 = vunpack.c.l.b16 %v87
  %v164 = vpack.c.b16 %v149, %v148
  %v165 = vpack.c.b16 %v151, %v150
  %v166 = vpack.c.b16 %v153, %v152
  %v167 = vpack.c.b16 %v155, %v154
  %v168 = vpack.c.b16 %v157, %v156
  %v169 = vpack.c.b16 %v159, %v158
  %v170 = vpack.c.b16 %v161, %v160
  %v171 = vpack.c.b16 %v163, %v162
  %180 = vmatprep.subr.bf16.mxu0 0
  %181 = vmatpush1.bf16.msra.mxu0 %v164
  %182 = vmatprep.subr.bf16.mxu0 0
  %183 = vmatpush1.bf16.msra.mxu0 %v165
  %184 = vmatprep.subr.bf16.mxu0 0
  %185 = vmatpush1.bf16.msra.mxu0 %v166
  %186 = vmatprep.subr.bf16.mxu0 0
  %187 = vmatpush1.bf16.msra.mxu0 %v167
  %188 = vmatprep.subr.bf16.mxu0 0
  %189 = vmatpush1.bf16.msra.mxu0 %v168
  %190 = vmatprep.subr.bf16.mxu0 0
  %191 = vmatpush1.bf16.msra.mxu0 %v169
  %192 = vmatprep.subr.bf16.mxu0 0
  %193 = vmatpush1.bf16.msra.mxu0 %v170
  %194 = vmatprep.subr.bf16.mxu0 0
  %195 = vmatpush1.bf16.msra.mxu0 %v171
  %196 = vmatprep.subr.bf16.mxu0 0
  %197 = vmatpush1.bf16.msra.mxu0 0
  %198 = vmatprep.subr.bf16.mxu0 0
  %199 = vmatpush1.bf16.msra.mxu0 0
  %200 = vmatprep.subr.bf16.mxu0 0
  %201 = vmatpush1.bf16.msra.mxu0 0
  %202 = vmatprep.subr.bf16.mxu0 0
  %203 = vmatpush1.bf16.msra.mxu0 0
  %204 = vmatprep.subr.bf16.mxu0 0
  %205 = vmatpush1.bf16.msra.mxu0 0
  %206 = vmatprep.subr.bf16.mxu0 0
  %207 = vmatpush1.bf16.msra.mxu0 0
  %208 = vmatprep.subr.bf16.mxu0 0
  %209 = vmatpush1.bf16.msra.mxu0 0
  %210 = vmatprep.subr.bf16.mxu0 0
  %211 = vmatpush1.bf16.msra.mxu0 0
  %212 = vmatprep.mubr.bf16.mxu0 0
  %213 = vmatmul.mubr.bf16.gmra.mrb[0].mxu0 %v112
  %v214 = vpop.f32.mrb[0].mxu0
  %v215 = vadd.f32 0.0, %v214
  %v216 = vpop.f32.mrb[0].mxu0
  %v217 = vpop.f32.mrb[0].mxu0
  %v218 = vadd.f32 0.0, %v217
  %v219 = vpop.f32.mrb[0].mxu0
  %220 = vmatprep.mubr.bf16.mxu0 0
  %221 = vmatmul.mubr.bf16.gmra.mrb[0].mxu0 %v129
  %v222 = vpop.f32.mrb[0].mxu0
  %v223 = vadd.f32 0.0, %v222
  %v224 = vpop.f32.mrb[0].mxu0
  %v225 = vpop.f32.mrb[0].mxu0
  %v226 = vadd.f32 0.0, %v225
  %v227 = vpop.f32.mrb[0].mxu0
  %228 = vdwg.mxu0
  %v237 = vcombine.low %v38, %v39
  %v238 = vcombine.low %v40, %v41
  %v240 = vunpack.c.l.s4 1983009808
  %v241 = vunpack.c.0.s8 %v240
  %v242 = vlaneseq
  %v243 = vshrl.u32 %v242, 7
  %v244 = vsub.s32 %v241, %v243
  %v245 = vrot.slane %v237, %v244
  %v247 = vunpack.c.l.s4 1983009808
  %v248 = vunpack.c.0.s8 %v247
  %v249 = vlaneseq
  %v250 = vshrl.u32 %v249, 7
  %v251 = vsub.s32 %v248, %v250
  %v252 = vrot.slane %v238, %v251
  %v253 = vcombine.low %v245, %v252
  %v254 = vcombine.low %v42, %v43
  %v255 = vcombine.low %v44, %v45
  %v257 = vunpack.c.l.s4 1983009808
  %v258 = vunpack.c.0.s8 %v257
  %v259 = vlaneseq
  %v260 = vshrl.u32 %v259, 7
  %v261 = vsub.s32 %v258, %v260
  %v262 = vrot.slane %v254, %v261
  %v264 = vunpack.c.l.s4 1983009808
  %v265 = vunpack.c.0.s8 %v264
  %v266 = vlaneseq
  %v267 = vshrl.u32 %v266, 7
  %v268 = vsub.s32 %v265, %v267
  %v269 = vrot.slane %v255, %v268
  %v270 = vcombine.low %v262, %v269
  %v289 = vunpack.c.l.b16 %v46
  %v290 = vunpack.c.l.b16 %v47
  %v291 = vunpack.c.l.b16 %v48
  %v292 = vunpack.c.l.b16 %v49
  %v293 = vunpack.c.l.b16 %v50
  %v294 = vunpack.c.l.b16 %v51
  %v295 = vunpack.c.l.b16 %v52
  %v296 = vunpack.c.l.b16 %v53
  %v297 = vunpack.c.l.b16 %v54
  %v298 = vunpack.c.l.b16 %v55
  %v299 = vunpack.c.l.b16 %v56
  %v300 = vunpack.c.l.b16 %v57
  %v301 = vunpack.c.l.b16 %v58
  %v302 = vunpack.c.l.b16 %v59
  %v303 = vunpack.c.l.b16 %v60
  %v304 = vunpack.c.l.b16 %v61
  %v305 = vpack.c.b16 %v290, %v289
  %v306 = vpack.c.b16 %v292, %v291
  %v307 = vpack.c.b16 %v294, %v293
  %v308 = vpack.c.b16 %v296, %v295
  %v309 = vpack.c.b16 %v298, %v297
  %v310 = vpack.c.b16 %v300, %v299
  %v311 = vpack.c.b16 %v302, %v301
  %v312 = vpack.c.b16 %v304, %v303
  %321 = vmatprep.subr.bf16.mxu0 0
  %322 = vmatpush1.bf16.msra.mxu0 %v305
  %323 = vmatprep.subr.bf16.mxu0 0
  %324 = vmatpush1.bf16.msra.mxu0 %v306
  %325 = vmatprep.subr.bf16.mxu0 0
  %326 = vmatpush1.bf16.msra.mxu0 %v307
  %327 = vmatprep.subr.bf16.mxu0 0
  %328 = vmatpush1.bf16.msra.mxu0 %v308
  %329 = vmatprep.subr.bf16.mxu0 0
  %330 = vmatpush1.bf16.msra.mxu0 %v309
  %331 = vmatprep.subr.bf16.mxu0 0
  %332 = vmatpush1.bf16.msra.mxu0 %v310
  %333 = vmatprep.subr.bf16.mxu0 0
  %334 = vmatpush1.bf16.msra.mxu0 %v311
  %335 = vmatprep.subr.bf16.mxu0 0
  %336 = vmatpush1.bf16.msra.mxu0 %v312
  %337 = vmatprep.subr.bf16.mxu0 0
  %338 = vmatpush1.bf16.msra.mxu0 0
  %339 = vmatprep.subr.bf16.mxu0 0
  %340 = vmatpush1.bf16.msra.mxu0 0
  %341 = vmatprep.subr.bf16.mxu0 0
  %342 = vmatpush1.bf16.msra.mxu0 0
  %343 = vmatprep.subr.bf16.mxu0 0
  %344 = vmatpush1.bf16.msra.mxu0 0
  %345 = vmatprep.subr.bf16.mxu0 0
  %346 = vmatpush1.bf16.msra.mxu0 0
  %347 = vmatprep.subr.bf16.mxu0 0
  %348 = vmatpush1.bf16.msra.mxu0 0
  %349 = vmatprep.subr.bf16.mxu0 0
  %350 = vmatpush1.bf16.msra.mxu0 0
  %351 = vmatprep.subr.bf16.mxu0 0
  %352 = vmatpush1.bf16.msra.mxu0 0
  %353 = vmatprep.mubr.bf16.mxu0 0
  %354 = vmatmul.mubr.bf16.gmra.mrb[0].mxu0 %v253
  %v355 = vpop.f32.mrb[0].mxu0
  %v356 = vadd.f32 %v215, %v355
  %v357 = vpop.f32.mrb[0].mxu0
  %v358 = vpop.f32.mrb[0].mxu0
  %v359 = vadd.f32 %v218, %v358
  %v360 = vpop.f32.mrb[0].mxu0
  %361 = vmatprep.mubr.bf16.mxu0 0
  %362 = vmatmul.mubr.bf16.gmra.mrb[0].mxu0 %v270
  %v363 = vpop.f32.mrb[0].mxu0
  %v364 = vadd.f32 %v223, %v363
  %v365 = vpop.f32.mrb[0].mxu0
  %v366 = vpop.f32.mrb[0].mxu0
  %v367 = vadd.f32 %v226, %v366
  %v368 = vpop.f32.mrb[0].mxu0
  %369 = vdwg.mxu0
  %v370 = vld [vmem:[%s35] sm:$0x7]
  %v371 = vld [vmem:[%s35 + $0x4] sm:$0x7]
  %v372 = vld [vmem:[%s35 + $0x8] sm:$0x7]
  %v373 = vld [vmem:[%s35 + $0xc] sm:$0x7]
  %v374 = vld [vmem:[%s35 + $0x14] sm:$0x7]
  %v375 = vld [vmem:[%s35 + $0x18] sm:$0x7]
  %v376 = vld [vmem:[%s35 + $0x1c] sm:$0x7]
  %v377 = vld [vmem:[%s35 + $0x20] sm:$0x7]
  %v387 = vunpack.c.l.s4 1983009808
  %v388 = vunpack.c.0.s8 %v387
  %v389 = vlaneseq
  %v390 = vshrl.u32 %v389, 7
  %v391 = vsub.s32 %v388, %v390
  %v392 = vrot.slane %v370, %v391
  %v393 = vcombine.high %v392, %v392
  %v395 = vunpack.c.l.s4 1983009808
  %v396 = vunpack.c.0.s8 %v395
  %v397 = vlaneseq
  %v398 = vshrl.u32 %v397, 7
  %v399 = vsub.s32 %v396, %v398
  %v400 = vrot.slane %v371, %v399
  %v401 = vcombine.high %v400, %v400
  %v403 = vunpack.c.l.s4 1983009808
  %v404 = vunpack.c.0.s8 %v403
  %v405 = vlaneseq
  %v406 = vshrl.u32 %v405, 7
  %v407 = vsub.s32 %v404, %v406
  %v408 = vrot.slane %v372, %v407
  %v409 = vcombine.high %v408, %v408
  %v411 = vunpack.c.l.s4 1983009808
  %v412 = vunpack.c.0.s8 %v411
  %v413 = vlaneseq
  %v414 = vshrl.u32 %v413, 7
  %v415 = vsub.s32 %v412, %v414
  %v416 = vrot.slane %v373, %v415
  %v417 = vcombine.high %v416, %v416
  %v419 = vunpack.c.l.s4 1983009808
  %v420 = vunpack.c.0.s8 %v419
  %v421 = vlaneseq
  %v422 = vshrl.u32 %v421, 7
  %v423 = vsub.s32 %v420, %v422
  %v424 = vrot.slane %v374, %v423
  %v425 = vcombine.high %v424, %v424
  %v427 = vunpack.c.l.s4 1983009808
  %v428 = vunpack.c.0.s8 %v427
  %v429 = vlaneseq
  %v430 = vshrl.u32 %v429, 7
  %v431 = vsub.s32 %v428, %v430
  %v432 = vrot.slane %v375, %v431
  %v433 = vcombine.high %v432, %v432
  %v435 = vunpack.c.l.s4 1983009808
  %v436 = vunpack.c.0.s8 %v435
  %v437 = vlaneseq
  %v438 = vshrl.u32 %v437, 7
  %v439 = vsub.s32 %v436, %v438
  %v440 = vrot.slane %v376, %v439
  %v441 = vcombine.high %v440, %v440
  %v443 = vunpack.c.l.s4 1983009808
  %v444 = vunpack.c.0.s8 %v443
  %v445 = vlaneseq
  %v446 = vshrl.u32 %v445, 7
  %v447 = vsub.s32 %v444, %v446
  %v448 = vrot.slane %v377, %v447
  %v449 = vcombine.high %v448, %v448
  %vm450 = vsmask.f32 1280
  %vm451 = vsmask.f32 3336
  %vm452 = vmor %vm450, %vm451
  %vm453 = vsmask.f32 5392
  %vm454 = vmor %vm452, %vm453
  %vm455 = vsmask.f32 7448
  %vm456 = vmor %vm454, %vm455
  %v458 = vshrl.u32 %v392, 16
  %v460 = vrot.slane %v458, 6
  %v461 = vshll.u32 %v392, 16
  %v463 = vrot.slane %v461, 7
  %v464 = vor.u32 %v460, %v463
  %v465 = vrot.slane %v464, 2
  %v467 = vshll.u32 %v393, 16
  %v469 = vrot.slane %v467, 7
  %v470 = vsel %vm456, %v465, %v469
  %v472 = vshrl.u32 %v400, 16
  %v474 = vrot.slane %v472, 6
  %v475 = vshll.u32 %v400, 16
  %v477 = vrot.slane %v475, 7
  %v478 = vor.u32 %v474, %v477
  %v479 = vrot.slane %v478, 2
  %v481 = vshll.u32 %v401, 16
  %v483 = vrot.slane %v481, 7
  %v484 = vsel %vm456, %v479, %v483
  %v486 = vshrl.u32 %v408, 16
  %v488 = vrot.slane %v486, 6
  %v489 = vshll.u32 %v408, 16
  %v491 = vrot.slane %v489, 7
  %v492 = vor.u32 %v488, %v491
  %v493 = vrot.slane %v492, 2
  %v495 = vshll.u32 %v409, 16
  %v497 = vrot.slane %v495, 7
  %v498 = vsel %vm456, %v493, %v497
  %v500 = vshrl.u32 %v416, 16
  %v502 = vrot.slane %v500, 6
  %v503 = vshll.u32 %v416, 16
  %v505 = vrot.slane %v503, 7
  %v506 = vor.u32 %v502, %v505
  %v507 = vrot.slane %v506, 2
  %v509 = vshll.u32 %v417, 16
  %v511 = vrot.slane %v509, 7
  %v512 = vsel %vm456, %v507, %v511
  %v514 = vshrl.u32 %v424, 16
  %v516 = vrot.slane %v514, 6
  %v517 = vshll.u32 %v424, 16
  %v519 = vrot.slane %v517, 7
  %v520 = vor.u32 %v516, %v519
  %v521 = vrot.slane %v520, 2
  %v523 = vshll.u32 %v425, 16
  %v525 = vrot.slane %v523, 7
  %v526 = vsel %vm456, %v521, %v525
  %v528 = vshrl.u32 %v432, 16
  %v530 = vrot.slane %v528, 6
  %v531 = vshll.u32 %v432, 16
  %v533 = vrot.slane %v531, 7
  %v534 = vor.u32 %v530, %v533
  %v535 = vrot.slane %v534, 2
  %v537 = vshll.u32 %v433, 16
  %v539 = vrot.slane %v537, 7
  %v540 = vsel %vm456, %v535, %v539
  %v542 = vshrl.u32 %v440, 16
  %v544 = vrot.slane %v542, 6
  %v545 = vshll.u32 %v440, 16
  %v547 = vrot.slane %v545, 7
  %v548 = vor.u32 %v544, %v547
  %v549 = vrot.slane %v548, 2
  %v551 = vshll.u32 %v441, 16
  %v553 = vrot.slane %v551, 7
  %v554 = vsel %vm456, %v549, %v553
  %v556 = vshrl.u32 %v448, 16
  %v558 = vrot.slane %v556, 6
  %v559 = vshll.u32 %v448, 16
  %v561 = vrot.slane %v559, 7
  %v562 = vor.u32 %v558, %v561
  %v563 = vrot.slane %v562, 2
  %v565 = vshll.u32 %v449, 16
  %v567 = vrot.slane %v565, 7
  %v568 = vsel %vm456, %v563, %v567
  %s569 = scalar_lea.vmem %s1, 128
  %v570 = vld [vmem:[%s569] sm:$0xf]
  %v571 = vld [vmem:[%s569 + $0x4] sm:$0xf]
  %v572 = vld [vmem:[%s569 + $0x8] sm:$0xf]
  %v573 = vld [vmem:[%s569 + $0xc] sm:$0xf]
  %v574 = vld [vmem:[%s569 + $0x10] sm:$0xf]
  %v575 = vld [vmem:[%s569 + $0x14] sm:$0xf]
  %v576 = vld [vmem:[%s569 + $0x18] sm:$0xf]
  %v577 = vld [vmem:[%s569 + $0x1c] sm:$0xf]
  %v578 = vld [vmem:[%s569 + $0x20] sm:$0xf]
  %v579 = vld [vmem:[%s569 + $0x24] sm:$0xf]
  %v580 = vld [vmem:[%s569 + $0x28] sm:$0xf]
  %v581 = vld [vmem:[%s569 + $0x2c] sm:$0xf]
  %v582 = vld [vmem:[%s569 + $0x30] sm:$0xf]
  %v583 = vld [vmem:[%s569 + $0x34] sm:$0xf]
  %v584 = vld [vmem:[%s569 + $0x38] sm:$0xf]
  %v585 = vld [vmem:[%s569 + $0x3c] sm:$0xf]
  %v586 = vcombine.low %v470, %v484
  %v587 = vcombine.low %v498, %v512
  %v589 = vunpack.c.l.s4 1983009808
  %v590 = vunpack.c.0.s8 %v589
  %v591 = vlaneseq
  %v592 = vshrl.u32 %v591, 7
  %v593 = vsub.s32 %v590, %v592
  %v594 = vrot.slane %v586, %v593
  %v596 = vunpack.c.l.s4 1983009808
  %v597 = vunpack.c.0.s8 %v596
  %v598 = vlaneseq
  %v599 = vshrl.u32 %v598, 7
  %v600 = vsub.s32 %v597, %v599
  %v601 = vrot.slane %v587, %v600
  %v602 = vcombine.low %v594, %v601
  %v603 = vcombine.low %v526, %v540
  %v604 = vcombine.low %v554, %v568
  %v606 = vunpack.c.l.s4 1983009808
  %v607 = vunpack.c.0.s8 %v606
  %v608 = vlaneseq
  %v609 = vshrl.u32 %v608, 7
  %v610 = vsub.s32 %v607, %v609
  %v611 = vrot.slane %v603, %v610
  %v613 = vunpack.c.l.s4 1983009808
  %v614 = vunpack.c.0.s8 %v613
  %v615 = vlaneseq
  %v616 = vshrl.u32 %v615, 7
  %v617 = vsub.s32 %v614, %v616
  %v618 = vrot.slane %v604, %v617
  %v619 = vcombine.low %v611, %v618
  %v638 = vunpack.c.l.b16 %v570
  %v639 = vunpack.c.l.b16 %v571
  %v640 = vunpack.c.l.b16 %v572
  %v641 = vunpack.c.l.b16 %v573
  %v642 = vunpack.c.l.b16 %v574
  %v643 = vunpack.c.l.b16 %v575
  %v644 = vunpack.c.l.b16 %v576
  %v645 = vunpack.c.l.b16 %v577
  %v646 = vunpack.c.l.b16 %v578
  %v647 = vunpack.c.l.b16 %v579
  %v648 = vunpack.c.l.b16 %v580
  %v649 = vunpack.c.l.b16 %v581
  %v650 = vunpack.c.l.b16 %v582
  %v651 = vunpack.c.l.b16 %v583
  %v652 = vunpack.c.l.b16 %v584
  %v653 = vunpack.c.l.b16 %v585
  %v654 = vpack.c.b16 %v639, %v638
  %v655 = vpack.c.b16 %v641, %v640
  %v656 = vpack.c.b16 %v643, %v642
  %v657 = vpack.c.b16 %v645, %v644
  %v658 = vpack.c.b16 %v647, %v646
  %v659 = vpack.c.b16 %v649, %v648
  %v660 = vpack.c.b16 %v651, %v650
  %v661 = vpack.c.b16 %v653, %v652
  %670 = vmatprep.subr.bf16.mxu0 0
  %671 = vmatpush1.bf16.msra.mxu0 %v654
  %672 = vmatprep.subr.bf16.mxu0 0
  %673 = vmatpush1.bf16.msra.mxu0 %v655
  %674 = vmatprep.subr.bf16.mxu0 0
  %675 = vmatpush1.bf16.msra.mxu0 %v656
  %676 = vmatprep.subr.bf16.mxu0 0
  %677 = vmatpush1.bf16.msra.mxu0 %v657
  %678 = vmatprep.subr.bf16.mxu0 0
  %679 = vmatpush1.bf16.msra.mxu0 %v658
  %680 = vmatprep.subr.bf16.mxu0 0
  %681 = vmatpush1.bf16.msra.mxu0 %v659
  %682 = vmatprep.subr.bf16.mxu0 0
  %683 = vmatpush1.bf16.msra.mxu0 %v660
  %684 = vmatprep.subr.bf16.mxu0 0
  %685 = vmatpush1.bf16.msra.mxu0 %v661
  %686 = vmatprep.subr.bf16.mxu0 0
  %687 = vmatpush1.bf16.msra.mxu0 0
  %688 = vmatprep.subr.bf16.mxu0 0
  %689 = vmatpush1.bf16.msra.mxu0 0
  %690 = vmatprep.subr.bf16.mxu0 0
  %691 = vmatpush1.bf16.msra.mxu0 0
  %692 = vmatprep.subr.bf16.mxu0 0
  %693 = vmatpush1.bf16.msra.mxu0 0
  %694 = vmatprep.subr.bf16.mxu0 0
  %695 = vmatpush1.bf16.msra.mxu0 0
  %696 = vmatprep.subr.bf16.mxu0 0
  %697 = vmatpush1.bf16.msra.mxu0 0
  %698 = vmatprep.subr.bf16.mxu0 0
  %699 = vmatpush1.bf16.msra.mxu0 0
  %700 = vmatprep.subr.bf16.mxu0 0
  %701 = vmatpush1.bf16.msra.mxu0 0
  %702 = vmatprep.mubr.bf16.mxu0 0
  %703 = vmatmul.mubr.bf16.gmra.mrb[0].mxu0 %v602
  %v704 = vpop.f32.mrb[0].mxu0
  %v705 = vadd.f32 0.0, %v704
  %v706 = vpop.f32.mrb[0].mxu0
  %v707 = vpop.f32.mrb[0].mxu0
  %v708 = vadd.f32 0.0, %v707
  %v709 = vpop.f32.mrb[0].mxu0
  %710 = vmatprep.mubr.bf16.mxu0 0
  %711 = vmatmul.mubr.bf16.gmra.mrb[0].mxu0 %v619
  %v712 = vpop.f32.mrb[0].mxu0
  %v713 = vadd.f32 0.0, %v712
  %v714 = vpop.f32.mrb[0].mxu0
  %v715 = vpop.f32.mrb[0].mxu0
  %v716 = vadd.f32 0.0, %v715
  %v717 = vpop.f32.mrb[0].mxu0
  %718 = vdwg.mxu0
  %v719 = vadd.f32 %v356, %v705
  %v720 = vadd.f32 %v359, %v708
  %v721 = vadd.f32 %v364, %v713
  %v722 = vadd.f32 %v367, %v716
  %v723 = vld [vmem:[%s62] sm:$0x7]
  %v724 = vld [vmem:[%s62 + $0x4] sm:$0x7]
  %v725 = vld [vmem:[%s62 + $0x8] sm:$0x7]
  %v726 = vld [vmem:[%s62 + $0xc] sm:$0x7]
  %v727 = vld [vmem:[%s62 + $0x14] sm:$0x7]
  %v728 = vld [vmem:[%s62 + $0x18] sm:$0x7]
  %v729 = vld [vmem:[%s62 + $0x1c] sm:$0x7]
  %v730 = vld [vmem:[%s62 + $0x20] sm:$0x7]
  %v740 = vunpack.c.l.s4 1983009808
  %v741 = vunpack.c.0.s8 %v740
  %v742 = vlaneseq
  %v743 = vshrl.u32 %v742, 7
  %v744 = vsub.s32 %v741, %v743
  %v745 = vrot.slane %v723, %v744
  %v746 = vcombine.high %v745, %v745
  %v748 = vunpack.c.l.s4 1983009808
  %v749 = vunpack.c.0.s8 %v748
  %v750 = vlaneseq
  %v751 = vshrl.u32 %v750, 7
  %v752 = vsub.s32 %v749, %v751
  %v753 = vrot.slane %v724, %v752
  %v754 = vcombine.high %v753, %v753
  %v756 = vunpack.c.l.s4 1983009808
  %v757 = vunpack.c.0.s8 %v756
  %v758 = vlaneseq
  %v759 = vshrl.u32 %v758, 7
  %v760 = vsub.s32 %v757, %v759
  %v761 = vrot.slane %v725, %v760
  %v762 = vcombine.high %v761, %v761
  %v764 = vunpack.c.l.s4 1983009808
  %v765 = vunpack.c.0.s8 %v764
  %v766 = vlaneseq
  %v767 = vshrl.u32 %v766, 7
  %v768 = vsub.s32 %v765, %v767
  %v769 = vrot.slane %v726, %v768
  %v770 = vcombine.high %v769, %v769
  %v772 = vunpack.c.l.s4 1983009808
  %v773 = vunpack.c.0.s8 %v772
  %v774 = vlaneseq
  %v775 = vshrl.u32 %v774, 7
  %v776 = vsub.s32 %v773, %v775
  %v777 = vrot.slane %v727, %v776
  %v778 = vcombine.high %v777, %v777
  %v780 = vunpack.c.l.s4 1983009808
  %v781 = vunpack.c.0.s8 %v780
  %v782 = vlaneseq
  %v783 = vshrl.u32 %v782, 7
  %v784 = vsub.s32 %v781, %v783
  %v785 = vrot.slane %v728, %v784
  %v786 = vcombine.high %v785, %v785
  %v788 = vunpack.c.l.s4 1983009808
  %v789 = vunpack.c.0.s8 %v788
  %v790 = vlaneseq
  %v791 = vshrl.u32 %v790, 7
  %v792 = vsub.s32 %v789, %v791
  %v793 = vrot.slane %v729, %v792
  %v794 = vcombine.high %v793, %v793
  %v796 = vunpack.c.l.s4 1983009808
  %v797 = vunpack.c.0.s8 %v796
  %v798 = vlaneseq
  %v799 = vshrl.u32 %v798, 7
  %v800 = vsub.s32 %v797, %v799
  %v801 = vrot.slane %v730, %v800
  %v802 = vcombine.high %v801, %v801
  %v804 = vshrl.u32 %v745, 16
  %v806 = vrot.slane %v804, 6
  %v807 = vshll.u32 %v745, 16
  %v809 = vrot.slane %v807, 7
  %v810 = vor.u32 %v806, %v809
  %v811 = vrot.slane %v810, 2
  %v813 = vshll.u32 %v746, 16
  %v815 = vrot.slane %v813, 7
  %v816 = vsel %vm456, %v811, %v815
  %v818 = vshrl.u32 %v753, 16
  %v820 = vrot.slane %v818, 6
  %v821 = vshll.u32 %v753, 16
  %v823 = vrot.slane %v821, 7
  %v824 = vor.u32 %v820, %v823
  %v825 = vrot.slane %v824, 2
  %v827 = vshll.u32 %v754, 16
  %v829 = vrot.slane %v827, 7
  %v830 = vsel %vm456, %v825, %v829
  %v832 = vshrl.u32 %v761, 16
  %v834 = vrot.slane %v832, 6
  %v835 = vshll.u32 %v761, 16
  %v837 = vrot.slane %v835, 7
  %v838 = vor.u32 %v834, %v837
  %v839 = vrot.slane %v838, 2
  %v841 = vshll.u32 %v762, 16
  %v843 = vrot.slane %v841, 7
  %v844 = vsel %vm456, %v839, %v843
  %v846 = vshrl.u32 %v769, 16
  %v848 = vrot.slane %v846, 6
  %v849 = vshll.u32 %v769, 16
  %v851 = vrot.slane %v849, 7
  %v852 = vor.u32 %v848, %v851
  %v853 = vrot.slane %v852, 2
  %v855 = vshll.u32 %v770, 16
  %v857 = vrot.slane %v855, 7
  %v858 = vsel %vm456, %v853, %v857
  %v860 = vshrl.u32 %v777, 16
  %v862 = vrot.slane %v860, 6
  %v863 = vshll.u32 %v777, 16
  %v865 = vrot.slane %v863, 7
  %v866 = vor.u32 %v862, %v865
  %v867 = vrot.slane %v866, 2
  %v869 = vshll.u32 %v778, 16
  %v871 = vrot.slane %v869, 7
  %v872 = vsel %vm456, %v867, %v871
  %v874 = vshrl.u32 %v785, 16
  %v876 = vrot.slane %v874, 6
  %v877 = vshll.u32 %v785, 16
  %v879 = vrot.slane %v877, 7
  %v880 = vor.u32 %v876, %v879
  %v881 = vrot.slane %v880, 2
  %v883 = vshll.u32 %v786, 16
  %v885 = vrot.slane %v883, 7
  %v886 = vsel %vm456, %v881, %v885
  %v888 = vshrl.u32 %v793, 16
  %v890 = vrot.slane %v888, 6
  %v891 = vshll.u32 %v793, 16
  %v893 = vrot.slane %v891, 7
  %v894 = vor.u32 %v890, %v893
  %v895 = vrot.slane %v894, 2
  %v897 = vshll.u32 %v794, 16
  %v899 = vrot.slane %v897, 7
  %v900 = vsel %vm456, %v895, %v899
  %v902 = vshrl.u32 %v801, 16
  %v904 = vrot.slane %v902, 6
  %v905 = vshll.u32 %v801, 16
  %v907 = vrot.slane %v905, 7
  %v908 = vor.u32 %v904, %v907
  %v909 = vrot.slane %v908, 2
  %v911 = vshll.u32 %v802, 16
  %v913 = vrot.slane %v911, 7
  %v914 = vsel %vm456, %v909, %v913
  %s915 = scalar_lea.vmem %s1, 192
  %v916 = vld [vmem:[%s915] sm:$0xf]
  %v917 = vld [vmem:[%s915 + $0x4] sm:$0xf]
  %v918 = vld [vmem:[%s915 + $0x8] sm:$0xf]
  %v919 = vld [vmem:[%s915 + $0xc] sm:$0xf]
  %v920 = vld [vmem:[%s915 + $0x10] sm:$0xf]
  %v921 = vld [vmem:[%s915 + $0x14] sm:$0xf]
  %v922 = vld [vmem:[%s915 + $0x18] sm:$0xf]
  %v923 = vld [vmem:[%s915 + $0x1c] sm:$0xf]
  %v924 = vld [vmem:[%s915 + $0x20] sm:$0xf]
  %v925 = vld [vmem:[%s915 + $0x24] sm:$0xf]
  %v926 = vld [vmem:[%s915 + $0x28] sm:$0xf]
  %v927 = vld [vmem:[%s915 + $0x2c] sm:$0xf]
  %v928 = vld [vmem:[%s915 + $0x30] sm:$0xf]
  %v929 = vld [vmem:[%s915 + $0x34] sm:$0xf]
  %v930 = vld [vmem:[%s915 + $0x38] sm:$0xf]
  %v931 = vld [vmem:[%s915 + $0x3c] sm:$0xf]
  %v932 = vcombine.low %v816, %v830
  %v933 = vcombine.low %v844, %v858
  %v935 = vunpack.c.l.s4 1983009808
  %v936 = vunpack.c.0.s8 %v935
  %v937 = vlaneseq
  %v938 = vshrl.u32 %v937, 7
  %v939 = vsub.s32 %v936, %v938
  %v940 = vrot.slane %v932, %v939
  %v942 = vunpack.c.l.s4 1983009808
  %v943 = vunpack.c.0.s8 %v942
  %v944 = vlaneseq
  %v945 = vshrl.u32 %v944, 7
  %v946 = vsub.s32 %v943, %v945
  %v947 = vrot.slane %v933, %v946
  %v948 = vcombine.low %v940, %v947
  %v949 = vcombine.low %v872, %v886
  %v950 = vcombine.low %v900, %v914
  %v952 = vunpack.c.l.s4 1983009808
  %v953 = vunpack.c.0.s8 %v952
  %v954 = vlaneseq
  %v955 = vshrl.u32 %v954, 7
  %v956 = vsub.s32 %v953, %v955
  %v957 = vrot.slane %v949, %v956
  %v959 = vunpack.c.l.s4 1983009808
  %v960 = vunpack.c.0.s8 %v959
  %v961 = vlaneseq
  %v962 = vshrl.u32 %v961, 7
  %v963 = vsub.s32 %v960, %v962
  %v964 = vrot.slane %v950, %v963
  %v965 = vcombine.low %v957, %v964
  %v984 = vunpack.c.l.b16 %v916
  %v985 = vunpack.c.l.b16 %v917
  %v986 = vunpack.c.l.b16 %v918
  %v987 = vunpack.c.l.b16 %v919
  %v988 = vunpack.c.l.b16 %v920
  %v989 = vunpack.c.l.b16 %v921
  %v990 = vunpack.c.l.b16 %v922
  %v991 = vunpack.c.l.b16 %v923
  %v992 = vunpack.c.l.b16 %v924
  %v993 = vunpack.c.l.b16 %v925
  %v994 = vunpack.c.l.b16 %v926
  %v995 = vunpack.c.l.b16 %v927
  %v996 = vunpack.c.l.b16 %v928
  %v997 = vunpack.c.l.b16 %v929
  %v998 = vunpack.c.l.b16 %v930
  %v999 = vunpack.c.l.b16 %v931
  %v1000 = vpack.c.b16 %v985, %v984
  %v1001 = vpack.c.b16 %v987, %v986
  %v1002 = vpack.c.b16 %v989, %v988
  %v1003 = vpack.c.b16 %v991, %v990
  %v1004 = vpack.c.b16 %v993, %v992
  %v1005 = vpack.c.b16 %v995, %v994
  %v1006 = vpack.c.b16 %v997, %v996
  %v1007 = vpack.c.b16 %v999, %v998
  %1016 = vmatprep.subr.bf16.mxu0 0
  %1017 = vmatpush1.bf16.msra.mxu0 %v1000
  %1018 = vmatprep.subr.bf16.mxu0 0
  %1019 = vmatpush1.bf16.msra.mxu0 %v1001
  %1020 = vmatprep.subr.bf16.mxu0 0
  %1021 = vmatpush1.bf16.msra.mxu0 %v1002
  %1022 = vmatprep.subr.bf16.mxu0 0
  %1023 = vmatpush1.bf16.msra.mxu0 %v1003
  %1024 = vmatprep.subr.bf16.mxu0 0
  %1025 = vmatpush1.bf16.msra.mxu0 %v1004
  %1026 = vmatprep.subr.bf16.mxu0 0
  %1027 = vmatpush1.bf16.msra.mxu0 %v1005
  %1028 = vmatprep.subr.bf16.mxu0 0
  %1029 = vmatpush1.bf16.msra.mxu0 %v1006
  %1030 = vmatprep.subr.bf16.mxu0 0
  %1031 = vmatpush1.bf16.msra.mxu0 %v1007
  %1032 = vmatprep.subr.bf16.mxu0 0
  %1033 = vmatpush1.bf16.msra.mxu0 0
  %1034 = vmatprep.subr.bf16.mxu0 0
  %1035 = vmatpush1.bf16.msra.mxu0 0
  %1036 = vmatprep.subr.bf16.mxu0 0
  %1037 = vmatpush1.bf16.msra.mxu0 0
  %1038 = vmatprep.subr.bf16.mxu0 0
  %1039 = vmatpush1.bf16.msra.mxu0 0
  %1040 = vmatprep.subr.bf16.mxu0 0
  %1041 = vmatpush1.bf16.msra.mxu0 0
  %1042 = vmatprep.subr.bf16.mxu0 0
  %1043 = vmatpush1.bf16.msra.mxu0 0
  %1044 = vmatprep.subr.bf16.mxu0 0
  %1045 = vmatpush1.bf16.msra.mxu0 0
  %1046 = vmatprep.subr.bf16.mxu0 0
  %1047 = vmatpush1.bf16.msra.mxu0 0
  %1048 = vmatprep.mubr.bf16.mxu0 0
  %1049 = vmatmul.mubr.bf16.gmra.mrb[0].mxu0 %v948
  %v1050 = vpop.f32.mrb[0].mxu0
  %v1051 = vadd.f32 0.0, %v1050
  %v1052 = vpop.f32.mrb[0].mxu0
  %v1053 = vpop.f32.mrb[0].mxu0
  %v1054 = vadd.f32 0.0, %v1053
  %v1055 = vpop.f32.mrb[0].mxu0
  %1056 = vmatprep.mubr.bf16.mxu0 0
  %1057 = vmatmul.mubr.bf16.gmra.mrb[0].mxu0 %v965
  %v1058 = vpop.f32.mrb[0].mxu0
  %v1059 = vadd.f32 0.0, %v1058
  %v1060 = vpop.f32.mrb[0].mxu0
  %v1061 = vpop.f32.mrb[0].mxu0
  %v1062 = vadd.f32 0.0, %v1061
  %v1063 = vpop.f32.mrb[0].mxu0
  %1064 = vdwg.mxu0
  %v1065 = vadd.f32 %v719, %v1051
  %v1066 = vadd.f32 %v720, %v1054
  %v1067 = vadd.f32 %v721, %v1059
  %v1068 = vadd.f32 %v722, %v1062
  %s1069 = scalar_lea.vmem %s35, 80
  %v1070 = vld [vmem:[%s1069] sm:$0x3]
  %v1071 = vld [vmem:[%s1069 + $0x4] sm:$0x3]
  %v1072 = vld [vmem:[%s1069 + $0x8] sm:$0x3]
  %v1073 = vld [vmem:[%s1069 + $0xc] sm:$0x3]
  %v1074 = vld [vmem:[%s1069 + $0x14] sm:$0x3]
  %v1075 = vld [vmem:[%s1069 + $0x18] sm:$0x3]
  %v1076 = vld [vmem:[%s1069 + $0x1c] sm:$0x3]
  %v1077 = vld [vmem:[%s1069 + $0x20] sm:$0x3]
  %s1078 = scalar_lea.vmem %s1, 256
  %v1079 = vld [vmem:[%s1078] sm:$0xf]
  %v1080 = vld [vmem:[%s1078 + $0x4] sm:$0xf]
  %v1081 = vld [vmem:[%s1078 + $0x8] sm:$0xf]
  %v1082 = vld [vmem:[%s1078 + $0xc] sm:$0xf]
  %v1083 = vld [vmem:[%s1078 + $0x10] sm:$0xf]
  %v1084 = vld [vmem:[%s1078 + $0x14] sm:$0xf]
  %v1085 = vld [vmem:[%s1078 + $0x18] sm:$0xf]
  %v1086 = vld [vmem:[%s1078 + $0x1c] sm:$0xf]
  %v1087 = vld [vmem:[%s1078 + $0x20] sm:$0xf]
  %v1088 = vld [vmem:[%s1078 + $0x24] sm:$0xf]
  %v1089 = vld [vmem:[%s1078 + $0x28] sm:$0xf]
  %v1090 = vld [vmem:[%s1078 + $0x2c] sm:$0xf]
  %v1091 = vld [vmem:[%s1078 + $0x30] sm:$0xf]
  %v1092 = vld [vmem:[%s1078 + $0x34] sm:$0xf]
  %v1093 = vld [vmem:[%s1078 + $0x38] sm:$0xf]
  %v1094 = vld [vmem:[%s1078 + $0x3c] sm:$0xf]
  %v1103 = vcombine.low %v1070, %v1071
  %v1104 = vcombine.low %v1072, %v1073
  %v1106 = vunpack.c.l.s4 1983009808
  %v1107 = vunpack.c.0.s8 %v1106
  %v1108 = vlaneseq
  %v1109 = vshrl.u32 %v1108, 7
  %v1110 = vsub.s32 %v1107, %v1109
  %v1111 = vrot.slane %v1103, %v1110
  %v1113 = vunpack.c.l.s4 1983009808
  %v1114 = vunpack.c.0.s8 %v1113
  %v1115 = vlaneseq
  %v1116 = vshrl.u32 %v1115, 7
  %v1117 = vsub.s32 %v1114, %v1116
  %v1118 = vrot.slane %v1104, %v1117
  %v1119 = vcombine.low %v1111, %v1118
  %v1120 = vcombine.low %v1074, %v1075
  %v1121 = vcombine.low %v1076, %v1077
  %v1123 = vunpack.c.l.s4 1983009808
  %v1124 = vunpack.c.0.s8 %v1123
  %v1125 = vlaneseq
  %v1126 = vshrl.u32 %v1125, 7
  %v1127 = vsub.s32 %v1124, %v1126
  %v1128 = vrot.slane %v1120, %v1127
  %v1130 = vunpack.c.l.s4 1983009808
  %v1131 = vunpack.c.0.s8 %v1130
  %v1132 = vlaneseq
  %v1133 = vshrl.u32 %v1132, 7
  %v1134 = vsub.s32 %v1131, %v1133
  %v1135 = vrot.slane %v1121, %v1134
  %v1136 = vcombine.low %v1128, %v1135
  %v1155 = vunpack.c.l.b16 %v1079
  %v1156 = vunpack.c.l.b16 %v1080
  %v1157 = vunpack.c.l.b16 %v1081
  %v1158 = vunpack.c.l.b16 %v1082
  %v1159 = vunpack.c.l.b16 %v1083
  %v1160 = vunpack.c.l.b16 %v1084
  %v1161 = vunpack.c.l.b16 %v1085
  %v1162 = vunpack.c.l.b16 %v1086
  %v1163 = vunpack.c.l.b16 %v1087
  %v1164 = vunpack.c.l.b16 %v1088
  %v1165 = vunpack.c.l.b16 %v1089
  %v1166 = vunpack.c.l.b16 %v1090
  %v1167 = vunpack.c.l.b16 %v1091
  %v1168 = vunpack.c.l.b16 %v1092
  %v1169 = vunpack.c.l.b16 %v1093
  %v1170 = vunpack.c.l.b16 %v1094
  %v1171 = vpack.c.b16 %v1156, %v1155
  %v1172 = vpack.c.b16 %v1158, %v1157
  %v1173 = vpack.c.b16 %v1160, %v1159
  %v1174 = vpack.c.b16 %v1162, %v1161
  %v1175 = vpack.c.b16 %v1164, %v1163
  %v1176 = vpack.c.b16 %v1166, %v1165
  %v1177 = vpack.c.b16 %v1168, %v1167
  %v1178 = vpack.c.b16 %v1170, %v1169
  %1187 = vmatprep.subr.bf16.mxu0 0
  %1188 = vmatpush1.bf16.msra.mxu0 %v1171
  %1189 = vmatprep.subr.bf16.mxu0 0
  %1190 = vmatpush1.bf16.msra.mxu0 %v1172
  %1191 = vmatprep.subr.bf16.mxu0 0
  %1192 = vmatpush1.bf16.msra.mxu0 %v1173
  %1193 = vmatprep.subr.bf16.mxu0 0
  %1194 = vmatpush1.bf16.msra.mxu0 %v1174
  %1195 = vmatprep.subr.bf16.mxu0 0
  %1196 = vmatpush1.bf16.msra.mxu0 %v1175
  %1197 = vmatprep.subr.bf16.mxu0 0
  %1198 = vmatpush1.bf16.msra.mxu0 %v1176
  %1199 = vmatprep.subr.bf16.mxu0 0
  %1200 = vmatpush1.bf16.msra.mxu0 %v1177
  %1201 = vmatprep.subr.bf16.mxu0 0
  %1202 = vmatpush1.bf16.msra.mxu0 %v1178
  %1203 = vmatprep.subr.bf16.mxu0 0
  %1204 = vmatpush1.bf16.msra.mxu0 0
  %1205 = vmatprep.subr.bf16.mxu0 0
  %1206 = vmatpush1.bf16.msra.mxu0 0
  %1207 = vmatprep.subr.bf16.mxu0 0
  %1208 = vmatpush1.bf16.msra.mxu0 0
  %1209 = vmatprep.subr.bf16.mxu0 0
  %1210 = vmatpush1.bf16.msra.mxu0 0
  %1211 = vmatprep.subr.bf16.mxu0 0
  %1212 = vmatpush1.bf16.msra.mxu0 0
  %1213 = vmatprep.subr.bf16.mxu0 0
  %1214 = vmatpush1.bf16.msra.mxu0 0
  %1215 = vmatprep.subr.bf16.mxu0 0
  %1216 = vmatpush1.bf16.msra.mxu0 0
  %1217 = vmatprep.subr.bf16.mxu0 0
  %1218 = vmatpush1.bf16.msra.mxu0 0
  %1219 = vmatprep.mubr.bf16.mxu0 0
  %1220 = vmatmul.mubr.bf16.gmra.mrb[0].mxu0 %v1119
  %v1221 = vpop.f32.mrb[0].mxu0
  %v1222 = vadd.f32 0.0, %v1221
  %v1223 = vpop.f32.mrb[0].mxu0
  %v1224 = vpop.f32.mrb[0].mxu0
  %v1225 = vadd.f32 0.0, %v1224
  %v1226 = vpop.f32.mrb[0].mxu0
  %1227 = vmatprep.mubr.bf16.mxu0 0
  %1228 = vmatmul.mubr.bf16.gmra.mrb[0].mxu0 %v1136
  %v1229 = vpop.f32.mrb[0].mxu0
  %v1230 = vadd.f32 0.0, %v1229
  %v1231 = vpop.f32.mrb[0].mxu0
  %v1232 = vpop.f32.mrb[0].mxu0
  %v1233 = vadd.f32 0.0, %v1232
  %v1234 = vpop.f32.mrb[0].mxu0
  %1235 = vdwg.mxu0
  %v1236 = vadd.f32 %v1065, %v1222
  %v1237 = vadd.f32 %v1066, %v1225
  %v1238 = vadd.f32 %v1067, %v1230
  %v1239 = vadd.f32 %v1068, %v1233
  %s1240 = scalar_lea.vmem %s35, 120
  %v1241 = vld [vmem:[%s1240] sm:$0x3]
  %v1242 = vld [vmem:[%s1240 + $0x4] sm:$0x3]
  %v1243 = vld [vmem:[%s1240 + $0x8] sm:$0x3]
  %v1244 = vld [vmem:[%s1240 + $0xc] sm:$0x3]
  %v1245 = vld [vmem:[%s1240 + $0x14] sm:$0x3]
  %v1246 = vld [vmem:[%s1240 + $0x18] sm:$0x3]
  %v1247 = vld [vmem:[%s1240 + $0x1c] sm:$0x3]
  %v1248 = vld [vmem:[%s1240 + $0x20] sm:$0x3]
  %s1249 = scalar_lea.vmem %s1, 320
  %v1250 = vld [vmem:[%s1249] sm:$0xf]
  %v1251 = vld [vmem:[%s1249 + $0x4] sm:$0xf]
  %v1252 = vld [vmem:[%s1249 + $0x8] sm:$0xf]
  %v1253 = vld [vmem:[%s1249 + $0xc] sm:$0xf]
  %v1254 = vld [vmem:[%s1249 + $0x10] sm:$0xf]
  %v1255 = vld [vmem:[%s1249 + $0x14] sm:$0xf]
  %v1256 = vld [vmem:[%s1249 + $0x18] sm:$0xf]
  %v1257 = vld [vmem:[%s1249 + $0x1c] sm:$0xf]
  %v1258 = vld [vmem:[%s1249 + $0x20] sm:$0xf]
  %v1259 = vld [vmem:[%s1249 + $0x24] sm:$0xf]
  %v1260 = vld [vmem:[%s1249 + $0x28] sm:$0xf]
  %v1261 = vld [vmem:[%s1249 + $0x2c] sm:$0xf]
  %v1262 = vld [vmem:[%s1249 + $0x30] sm:$0xf]
  %v1263 = vld [vmem:[%s1249 + $0x34] sm:$0xf]
  %v1264 = vld [vmem:[%s1249 + $0x38] sm:$0xf]
  %v1265 = vld [vmem:[%s1249 + $0x3c] sm:$0xf]
  %v1274 = vcombine.low %v1241, %v1242
  %v1275 = vcombine.low %v1243, %v1244
  %v1277 = vunpack.c.l.s4 1983009808
  %v1278 = vunpack.c.0.s8 %v1277
  %v1279 = vlaneseq
  %v1280 = vshrl.u32 %v1279, 7
  %v1281 = vsub.s32 %v1278, %v1280
  %v1282 = vrot.slane %v1274, %v1281
  %v1284 = vunpack.c.l.s4 1983009808
  %v1285 = vunpack.c.0.s8 %v1284
  %v1286 = vlaneseq
  %v1287 = vshrl.u32 %v1286, 7
  %v1288 = vsub.s32 %v1285, %v1287
  %v1289 = vrot.slane %v1275, %v1288
  %v1290 = vcombine.low %v1282, %v1289
  %v1291 = vcombine.low %v1245, %v1246
  %v1292 = vcombine.low %v1247, %v1248
  %v1294 = vunpack.c.l.s4 1983009808
  %v1295 = vunpack.c.0.s8 %v1294
  %v1296 = vlaneseq
  %v1297 = vshrl.u32 %v1296, 7
  %v1298 = vsub.s32 %v1295, %v1297
  %v1299 = vrot.slane %v1291, %v1298
  %v1301 = vunpack.c.l.s4 1983009808
  %v1302 = vunpack.c.0.s8 %v1301
  %v1303 = vlaneseq
  %v1304 = vshrl.u32 %v1303, 7
  %v1305 = vsub.s32 %v1302, %v1304
  %v1306 = vrot.slane %v1292, %v1305
  %v1307 = vcombine.low %v1299, %v1306
  %v1326 = vunpack.c.l.b16 %v1250
  %v1327 = vunpack.c.l.b16 %v1251
  %v1328 = vunpack.c.l.b16 %v1252
  %v1329 = vunpack.c.l.b16 %v1253
  %v1330 = vunpack.c.l.b16 %v1254
  %v1331 = vunpack.c.l.b16 %v1255
  %v1332 = vunpack.c.l.b16 %v1256
  %v1333 = vunpack.c.l.b16 %v1257
  %v1334 = vunpack.c.l.b16 %v1258
  %v1335 = vunpack.c.l.b16 %v1259
  %v1336 = vunpack.c.l.b16 %v1260
  %v1337 = vunpack.c.l.b16 %v1261
  %v1338 = vunpack.c.l.b16 %v1262
  %v1339 = vunpack.c.l.b16 %v1263
  %v1340 = vunpack.c.l.b16 %v1264
  %v1341 = vunpack.c.l.b16 %v1265
  %v1342 = vpack.c.b16 %v1327, %v1326
  %v1343 = vpack.c.b16 %v1329, %v1328
  %v1344 = vpack.c.b16 %v1331, %v1330
  %v1345 = vpack.c.b16 %v1333, %v1332
  %v1346 = vpack.c.b16 %v1335, %v1334
  %v1347 = vpack.c.b16 %v1337, %v1336
  %v1348 = vpack.c.b16 %v1339, %v1338
  %v1349 = vpack.c.b16 %v1341, %v1340
  %1358 = vmatprep.subr.bf16.mxu0 0
  %1359 = vmatpush1.bf16.msra.mxu0 %v1342
  %1360 = vmatprep.subr.bf16.mxu0 0
  %1361 = vmatpush1.bf16.msra.mxu0 %v1343
  %1362 = vmatprep.subr.bf16.mxu0 0
  %1363 = vmatpush1.bf16.msra.mxu0 %v1344
  %1364 = vmatprep.subr.bf16.mxu0 0
  %1365 = vmatpush1.bf16.msra.mxu0 %v1345
  %1366 = vmatprep.subr.bf16.mxu0 0
  %1367 = vmatpush1.bf16.msra.mxu0 %v1346
  %1368 = vmatprep.subr.bf16.mxu0 0
  %1369 = vmatpush1.bf16.msra.mxu0 %v1347
  %1370 = vmatprep.subr.bf16.mxu0 0
  %1371 = vmatpush1.bf16.msra.mxu0 %v1348
  %1372 = vmatprep.subr.bf16.mxu0 0
  %1373 = vmatpush1.bf16.msra.mxu0 %v1349
  %1374 = vmatprep.subr.bf16.mxu0 0
  %1375 = vmatpush1.bf16.msra.mxu0 0
  %1376 = vmatprep.subr.bf16.mxu0 0
  %1377 = vmatpush1.bf16.msra.mxu0 0
  %1378 = vmatprep.subr.bf16.mxu0 0
  %1379 = vmatpush1.bf16.msra.mxu0 0
  %1380 = vmatprep.subr.bf16.mxu0 0
  %1381 = vmatpush1.bf16.msra.mxu0 0
  %1382 = vmatprep.subr.bf16.mxu0 0
  %1383 = vmatpush1.bf16.msra.mxu0 0
  %1384 = vmatprep.subr.bf16.mxu0 0
  %1385 = vmatpush1.bf16.msra.mxu0 0
  %1386 = vmatprep.subr.bf16.mxu0 0
  %1387 = vmatpush1.bf16.msra.mxu0 0
  %1388 = vmatprep.subr.bf16.mxu0 0
  %1389 = vmatpush1.bf16.msra.mxu0 0
  %1390 = vmatprep.mubr.bf16.mxu0 0
  %1391 = vmatmul.mubr.bf16.gmra.mrb[0].mxu0 %v1290
  %v1392 = vpop.f32.mrb[0].mxu0
  %v1393 = vadd.f32 0.0, %v1392
  %v1394 = vpop.f32.mrb[0].mxu0
  %v1395 = vpop.f32.mrb[0].mxu0
  %v1396 = vadd.f32 0.0, %v1395
  %v1397 = vpop.f32.mrb[0].mxu0
  %1398 = vmatprep.mubr.bf16.mxu0 0
  %1399 = vmatmul.mubr.bf16.gmra.mrb[0].mxu0 %v1307
  %v1400 = vpop.f32.mrb[0].mxu0
  %v1401 = vadd.f32 0.0, %v1400
  %v1402 = vpop.f32.mrb[0].mxu0
  %v1403 = vpop.f32.mrb[0].mxu0
  %v1404 = vadd.f32 0.0, %v1403
  %v1405 = vpop.f32.mrb[0].mxu0
  %1406 = vdwg.mxu0
  %v1407 = vadd.f32 %v1236, %v1393
  %v1408 = vadd.f32 %v1237, %v1396
  %v1409 = vadd.f32 %v1238, %v1401
  %v1410 = vadd.f32 %v1239, %v1404
  %v1411 = vld [vmem:[%s1069] sm:$0x7]
  %v1412 = vld [vmem:[%s1069 + $0x4] sm:$0x7]
  %v1413 = vld [vmem:[%s1069 + $0x8] sm:$0x7]
  %v1414 = vld [vmem:[%s1069 + $0xc] sm:$0x7]
  %v1415 = vld [vmem:[%s1069 + $0x14] sm:$0x7]
  %v1416 = vld [vmem:[%s1069 + $0x18] sm:$0x7]
  %v1417 = vld [vmem:[%s1069 + $0x1c] sm:$0x7]
  %v1418 = vld [vmem:[%s1069 + $0x20] sm:$0x7]
  %v1428 = vunpack.c.l.s4 1983009808
  %v1429 = vunpack.c.0.s8 %v1428
  %v1430 = vlaneseq
  %v1431 = vshrl.u32 %v1430, 7
  %v1432 = vsub.s32 %v1429, %v1431
  %v1433 = vrot.slane %v1411, %v1432
  %v1434 = vcombine.high %v1433, %v1433
  %v1436 = vunpack.c.l.s4 1983009808
  %v1437 = vunpack.c.0.s8 %v1436
  %v1438 = vlaneseq
  %v1439 = vshrl.u32 %v1438, 7
  %v1440 = vsub.s32 %v1437, %v1439
  %v1441 = vrot.slane %v1412, %v1440
  %v1442 = vcombine.high %v1441, %v1441
  %v1444 = vunpack.c.l.s4 1983009808
  %v1445 = vunpack.c.0.s8 %v1444
  %v1446 = vlaneseq
  %v1447 = vshrl.u32 %v1446, 7
  %v1448 = vsub.s32 %v1445, %v1447
  %v1449 = vrot.slane %v1413, %v1448
  %v1450 = vcombine.high %v1449, %v1449
  %v1452 = vunpack.c.l.s4 1983009808
  %v1453 = vunpack.c.0.s8 %v1452
  %v1454 = vlaneseq
  %v1455 = vshrl.u32 %v1454, 7
  %v1456 = vsub.s32 %v1453, %v1455
  %v1457 = vrot.slane %v1414, %v1456
  %v1458 = vcombine.high %v1457, %v1457
  %v1460 = vunpack.c.l.s4 1983009808
  %v1461 = vunpack.c.0.s8 %v1460
  %v1462 = vlaneseq
  %v1463 = vshrl.u32 %v1462, 7
  %v1464 = vsub.s32 %v1461, %v1463
  %v1465 = vrot.slane %v1415, %v1464
  %v1466 = vcombine.high %v1465, %v1465
  %v1468 = vunpack.c.l.s4 1983009808
  %v1469 = vunpack.c.0.s8 %v1468
  %v1470 = vlaneseq
  %v1471 = vshrl.u32 %v1470, 7
  %v1472 = vsub.s32 %v1469, %v1471
  %v1473 = vrot.slane %v1416, %v1472
  %v1474 = vcombine.high %v1473, %v1473
  %v1476 = vunpack.c.l.s4 1983009808
  %v1477 = vunpack.c.0.s8 %v1476
  %v1478 = vlaneseq
  %v1479 = vshrl.u32 %v1478, 7
  %v1480 = vsub.s32 %v1477, %v1479
  %v1481 = vrot.slane %v1417, %v1480
  %v1482 = vcombine.high %v1481, %v1481
  %v1484 = vunpack.c.l.s4 1983009808
  %v1485 = vunpack.c.0.s8 %v1484
  %v1486 = vlaneseq
  %v1487 = vshrl.u32 %v1486, 7
  %v1488 = vsub.s32 %v1485, %v1487
  %v1489 = vrot.slane %v1418, %v1488
  %v1490 = vcombine.high %v1489, %v1489
  %v1492 = vshrl.u32 %v1433, 16
  %v1494 = vrot.slane %v1492, 6
  %v1495 = vshll.u32 %v1433, 16
  %v1497 = vrot.slane %v1495, 7
  %v1498 = vor.u32 %v1494, %v1497
  %v1499 = vrot.slane %v1498, 2
  %v1501 = vshll.u32 %v1434, 16
  %v1503 = vrot.slane %v1501, 7
  %v1504 = vsel %vm456, %v1499, %v1503
  %v1506 = vshrl.u32 %v1441, 16
  %v1508 = vrot.slane %v1506, 6
  %v1509 = vshll.u32 %v1441, 16
  %v1511 = vrot.slane %v1509, 7
  %v1512 = vor.u32 %v1508, %v1511
  %v1513 = vrot.slane %v1512, 2
  %v1515 = vshll.u32 %v1442, 16
  %v1517 = vrot.slane %v1515, 7
  %v1518 = vsel %vm456, %v1513, %v1517
  %v1520 = vshrl.u32 %v1449, 16
  %v1522 = vrot.slane %v1520, 6
  %v1523 = vshll.u32 %v1449, 16
  %v1525 = vrot.slane %v1523, 7
  %v1526 = vor.u32 %v1522, %v1525
  %v1527 = vrot.slane %v1526, 2
  %v1529 = vshll.u32 %v1450, 16
  %v1531 = vrot.slane %v1529, 7
  %v1532 = vsel %vm456, %v1527, %v1531
  %v1534 = vshrl.u32 %v1457, 16
  %v1536 = vrot.slane %v1534, 6
  %v1537 = vshll.u32 %v1457, 16
  %v1539 = vrot.slane %v1537, 7
  %v1540 = vor.u32 %v1536, %v1539
  %v1541 = vrot.slane %v1540, 2
  %v1543 = vshll.u32 %v1458, 16
  %v1545 = vrot.slane %v1543, 7
  %v1546 = vsel %vm456, %v1541, %v1545
  %v1548 = vshrl.u32 %v1465, 16
  %v1550 = vrot.slane %v1548, 6
  %v1551 = vshll.u32 %v1465, 16
  %v1553 = vrot.slane %v1551, 7
  %v1554 = vor.u32 %v1550, %v1553
  %v1555 = vrot.slane %v1554, 2
  %v1557 = vshll.u32 %v1466, 16
  %v1559 = vrot.slane %v1557, 7
  %v1560 = vsel %vm456, %v1555, %v1559
  %v1562 = vshrl.u32 %v1473, 16
  %v1564 = vrot.slane %v1562, 6
  %v1565 = vshll.u32 %v1473, 16
  %v1567 = vrot.slane %v1565, 7
  %v1568 = vor.u32 %v1564, %v1567
  %v1569 = vrot.slane %v1568, 2
  %v1571 = vshll.u32 %v1474, 16
  %v1573 = vrot.slane %v1571, 7
  %v1574 = vsel %vm456, %v1569, %v1573
  %v1576 = vshrl.u32 %v1481, 16
  %v1578 = vrot.slane %v1576, 6
  %v1579 = vshll.u32 %v1481, 16
  %v1581 = vrot.slane %v1579, 7
  %v1582 = vor.u32 %v1578, %v1581
  %v1583 = vrot.slane %v1582, 2
  %v1585 = vshll.u32 %v1482, 16
  %v1587 = vrot.slane %v1585, 7
  %v1588 = vsel %vm456, %v1583, %v1587
  %v1590 = vshrl.u32 %v1489, 16
  %v1592 = vrot.slane %v1590, 6
  %v1593 = vshll.u32 %v1489, 16
  %v1595 = vrot.slane %v1593, 7
  %v1596 = vor.u32 %v1592, %v1595
  %v1597 = vrot.slane %v1596, 2
  %v1599 = vshll.u32 %v1490, 16
  %v1601 = vrot.slane %v1599, 7
  %v1602 = vsel %vm456, %v1597, %v1601
  %s1603 = scalar_lea.vmem %s1, 384
  %v1604 = vld [vmem:[%s1603] sm:$0xf]
  %v1605 = vld [vmem:[%s1603 + $0x4] sm:$0xf]
  %v1606 = vld [vmem:[%s1603 + $0x8] sm:$0xf]
  %v1607 = vld [vmem:[%s1603 + $0xc] sm:$0xf]
  %v1608 = vld [vmem:[%s1603 + $0x10] sm:$0xf]
  %v1609 = vld [vmem:[%s1603 + $0x14] sm:$0xf]
  %v1610 = vld [vmem:[%s1603 + $0x18] sm:$0xf]
  %v1611 = vld [vmem:[%s1603 + $0x1c] sm:$0xf]
  %v1612 = vld [vmem:[%s1603 + $0x20] sm:$0xf]
  %v1613 = vld [vmem:[%s1603 + $0x24] sm:$0xf]
  %v1614 = vld [vmem:[%s1603 + $0x28] sm:$0xf]
  %v1615 = vld [vmem:[%s1603 + $0x2c] sm:$0xf]
  %v1616 = vld [vmem:[%s1603 + $0x30] sm:$0xf]
  %v1617 = vld [vmem:[%s1603 + $0x34] sm:$0xf]
  %v1618 = vld [vmem:[%s1603 + $0x38] sm:$0xf]
  %v1619 = vld [vmem:[%s1603 + $0x3c] sm:$0xf]
  %v1620 = vcombine.low %v1504, %v1518
  %v1621 = vcombine.low %v1532, %v1546
  %v1623 = vunpack.c.l.s4 1983009808
  %v1624 = vunpack.c.0.s8 %v1623
  %v1625 = vlaneseq
  %v1626 = vshrl.u32 %v1625, 7
  %v1627 = vsub.s32 %v1624, %v1626
  %v1628 = vrot.slane %v1620, %v1627
  %v1630 = vunpack.c.l.s4 1983009808
  %v1631 = vunpack.c.0.s8 %v1630
  %v1632 = vlaneseq
  %v1633 = vshrl.u32 %v1632, 7
  %v1634 = vsub.s32 %v1631, %v1633
  %v1635 = vrot.slane %v1621, %v1634
  %v1636 = vcombine.low %v1628, %v1635
  %v1637 = vcombine.low %v1560, %v1574
  %v1638 = vcombine.low %v1588, %v1602
  %v1640 = vunpack.c.l.s4 1983009808
  %v1641 = vunpack.c.0.s8 %v1640
  %v1642 = vlaneseq
  %v1643 = vshrl.u32 %v1642, 7
  %v1644 = vsub.s32 %v1641, %v1643
  %v1645 = vrot.slane %v1637, %v1644
  %v1647 = vunpack.c.l.s4 1983009808
  %v1648 = vunpack.c.0.s8 %v1647
  %v1649 = vlaneseq
  %v1650 = vshrl.u32 %v1649, 7
  %v1651 = vsub.s32 %v1648, %v1650
  %v1652 = vrot.slane %v1638, %v1651
  %v1653 = vcombine.low %v1645, %v1652
  %v1672 = vunpack.c.l.b16 %v1604
  %v1673 = vunpack.c.l.b16 %v1605
  %v1674 = vunpack.c.l.b16 %v1606
  %v1675 = vunpack.c.l.b16 %v1607
  %v1676 = vunpack.c.l.b16 %v1608
  %v1677 = vunpack.c.l.b16 %v1609
  %v1678 = vunpack.c.l.b16 %v1610
  %v1679 = vunpack.c.l.b16 %v1611
  %v1680 = vunpack.c.l.b16 %v1612
  %v1681 = vunpack.c.l.b16 %v1613
  %v1682 = vunpack.c.l.b16 %v1614
  %v1683 = vunpack.c.l.b16 %v1615
  %v1684 = vunpack.c.l.b16 %v1616
  %v1685 = vunpack.c.l.b16 %v1617
  %v1686 = vunpack.c.l.b16 %v1618
  %v1687 = vunpack.c.l.b16 %v1619
  %v1688 = vpack.c.b16 %v1673, %v1672
  %v1689 = vpack.c.b16 %v1675, %v1674
  %v1690 = vpack.c.b16 %v1677, %v1676
  %v1691 = vpack.c.b16 %v1679, %v1678
  %v1692 = vpack.c.b16 %v1681, %v1680
  %v1693 = vpack.c.b16 %v1683, %v1682
  %v1694 = vpack.c.b16 %v1685, %v1684
  %v1695 = vpack.c.b16 %v1687, %v1686
  %1704 = vmatprep.subr.bf16.mxu0 0
  %1705 = vmatpush1.bf16.msra.mxu0 %v1688
  %1706 = vmatprep.subr.bf16.mxu0 0
  %1707 = vmatpush1.bf16.msra.mxu0 %v1689
  %1708 = vmatprep.subr.bf16.mxu0 0
  %1709 = vmatpush1.bf16.msra.mxu0 %v1690
  %1710 = vmatprep.subr.bf16.mxu0 0
  %1711 = vmatpush1.bf16.msra.mxu0 %v1691
  %1712 = vmatprep.subr.bf16.mxu0 0
  %1713 = vmatpush1.bf16.msra.mxu0 %v1692
  %1714 = vmatprep.subr.bf16.mxu0 0
  %1715 = vmatpush1.bf16.msra.mxu0 %v1693
  %1716 = vmatprep.subr.bf16.mxu0 0
  %1717 = vmatpush1.bf16.msra.mxu0 %v1694
  %1718 = vmatprep.subr.bf16.mxu0 0
  %1719 = vmatpush1.bf16.msra.mxu0 %v1695
  %1720 = vmatprep.subr.bf16.mxu0 0
  %1721 = vmatpush1.bf16.msra.mxu0 0
  %1722 = vmatprep.subr.bf16.mxu0 0
  %1723 = vmatpush1.bf16.msra.mxu0 0
  %1724 = vmatprep.subr.bf16.mxu0 0
  %1725 = vmatpush1.bf16.msra.mxu0 0
  %1726 = vmatprep.subr.bf16.mxu0 0
  %1727 = vmatpush1.bf16.msra.mxu0 0
  %1728 = vmatprep.subr.bf16.mxu0 0
  %1729 = vmatpush1.bf16.msra.mxu0 0
  %1730 = vmatprep.subr.bf16.mxu0 0
  %1731 = vmatpush1.bf16.msra.mxu0 0
  %1732 = vmatprep.subr.bf16.mxu0 0
  %1733 = vmatpush1.bf16.msra.mxu0 0
  %1734 = vmatprep.subr.bf16.mxu0 0
  %1735 = vmatpush1.bf16.msra.mxu0 0
  %1736 = vmatprep.mubr.bf16.mxu0 0
  %1737 = vmatmul.mubr.bf16.gmra.mrb[0].mxu0 %v1636
  %v1738 = vpop.f32.mrb[0].mxu0
  %v1739 = vadd.f32 0.0, %v1738
  %v1740 = vpop.f32.mrb[0].mxu0
  %v1741 = vpop.f32.mrb[0].mxu0
  %v1742 = vadd.f32 0.0, %v1741
  %v1743 = vpop.f32.mrb[0].mxu0
  %1744 = vmatprep.mubr.bf16.mxu0 0
  %1745 = vmatmul.mubr.bf16.gmra.mrb[0].mxu0 %v1653
  %v1746 = vpop.f32.mrb[0].mxu0
  %v1747 = vadd.f32 0.0, %v1746
  %v1748 = vpop.f32.mrb[0].mxu0
  %v1749 = vpop.f32.mrb[0].mxu0
  %v1750 = vadd.f32 0.0, %v1749
  %v1751 = vpop.f32.mrb[0].mxu0
  %1752 = vdwg.mxu0
  %v1753 = vadd.f32 %v1407, %v1739
  %v1754 = vadd.f32 %v1408, %v1742
  %v1755 = vadd.f32 %v1409, %v1747
  %v1756 = vadd.f32 %v1410, %v1750
  %v1757 = vld [vmem:[%s1240] sm:$0x7]
  %v1758 = vld [vmem:[%s1240 + $0x4] sm:$0x7]
  %v1759 = vld [vmem:[%s1240 + $0x8] sm:$0x7]
  %v1760 = vld [vmem:[%s1240 + $0xc] sm:$0x7]
  %v1761 = vld [vmem:[%s1240 + $0x14] sm:$0x7]
  %v1762 = vld [vmem:[%s1240 + $0x18] sm:$0x7]
  %v1763 = vld [vmem:[%s1240 + $0x1c] sm:$0x7]
  %v1764 = vld [vmem:[%s1240 + $0x20] sm:$0x7]
  %v1774 = vunpack.c.l.s4 1983009808
  %v1775 = vunpack.c.0.s8 %v1774
  %v1776 = vlaneseq
  %v1777 = vshrl.u32 %v1776, 7
  %v1778 = vsub.s32 %v1775, %v1777
  %v1779 = vrot.slane %v1757, %v1778
  %v1780 = vcombine.high %v1779, %v1779
  %v1782 = vunpack.c.l.s4 1983009808
  %v1783 = vunpack.c.0.s8 %v1782
  %v1784 = vlaneseq
  %v1785 = vshrl.u32 %v1784, 7
  %v1786 = vsub.s32 %v1783, %v1785
  %v1787 = vrot.slane %v1758, %v1786
  %v1788 = vcombine.high %v1787, %v1787
  %v1790 = vunpack.c.l.s4 1983009808
  %v1791 = vunpack.c.0.s8 %v1790
  %v1792 = vlaneseq
  %v1793 = vshrl.u32 %v1792, 7
  %v1794 = vsub.s32 %v1791, %v1793
  %v1795 = vrot.slane %v1759, %v1794
  %v1796 = vcombine.high %v1795, %v1795
  %v1798 = vunpack.c.l.s4 1983009808
  %v1799 = vunpack.c.0.s8 %v1798
  %v1800 = vlaneseq
  %v1801 = vshrl.u32 %v1800, 7
  %v1802 = vsub.s32 %v1799, %v1801
  %v1803 = vrot.slane %v1760, %v1802
  %v1804 = vcombine.high %v1803, %v1803
  %v1806 = vunpack.c.l.s4 1983009808
  %v1807 = vunpack.c.0.s8 %v1806
  %v1808 = vlaneseq
  %v1809 = vshrl.u32 %v1808, 7
  %v1810 = vsub.s32 %v1807, %v1809
  %v1811 = vrot.slane %v1761, %v1810
  %v1812 = vcombine.high %v1811, %v1811
  %v1814 = vunpack.c.l.s4 1983009808
  %v1815 = vunpack.c.0.s8 %v1814
  %v1816 = vlaneseq
  %v1817 = vshrl.u32 %v1816, 7
  %v1818 = vsub.s32 %v1815, %v1817
  %v1819 = vrot.slane %v1762, %v1818
  %v1820 = vcombine.high %v1819, %v1819
  %v1822 = vunpack.c.l.s4 1983009808
  %v1823 = vunpack.c.0.s8 %v1822
  %v1824 = vlaneseq
  %v1825 = vshrl.u32 %v1824, 7
  %v1826 = vsub.s32 %v1823, %v1825
  %v1827 = vrot.slane %v1763, %v1826
  %v1828 = vcombine.high %v1827, %v1827
  %v1830 = vunpack.c.l.s4 1983009808
  %v1831 = vunpack.c.0.s8 %v1830
  %v1832 = vlaneseq
  %v1833 = vshrl.u32 %v1832, 7
  %v1834 = vsub.s32 %v1831, %v1833
  %v1835 = vrot.slane %v1764, %v1834
  %v1836 = vcombine.high %v1835, %v1835
  %v1838 = vshrl.u32 %v1779, 16
  %v1840 = vrot.slane %v1838, 6
  %v1841 = vshll.u32 %v1779, 16
  %v1843 = vrot.slane %v1841, 7
  %v1844 = vor.u32 %v1840, %v1843
  %v1845 = vrot.slane %v1844, 2
  %v1847 = vshll.u32 %v1780, 16
  %v1849 = vrot.slane %v1847, 7
  %v1850 = vsel %vm456, %v1845, %v1849
  %v1852 = vshrl.u32 %v1787, 16
  %v1854 = vrot.slane %v1852, 6
  %v1855 = vshll.u32 %v1787, 16
  %v1857 = vrot.slane %v1855, 7
  %v1858 = vor.u32 %v1854, %v1857
  %v1859 = vrot.slane %v1858, 2
  %v1861 = vshll.u32 %v1788, 16
  %v1863 = vrot.slane %v1861, 7
  %v1864 = vsel %vm456, %v1859, %v1863
  %v1866 = vshrl.u32 %v1795, 16
  %v1868 = vrot.slane %v1866, 6
  %v1869 = vshll.u32 %v1795, 16
  %v1871 = vrot.slane %v1869, 7
  %v1872 = vor.u32 %v1868, %v1871
  %v1873 = vrot.slane %v1872, 2
  %v1875 = vshll.u32 %v1796, 16
  %v1877 = vrot.slane %v1875, 7
  %v1878 = vsel %vm456, %v1873, %v1877
  %v1880 = vshrl.u32 %v1803, 16
  %v1882 = vrot.slane %v1880, 6
  %v1883 = vshll.u32 %v1803, 16
  %v1885 = vrot.slane %v1883, 7
  %v1886 = vor.u32 %v1882, %v1885
  %v1887 = vrot.slane %v1886, 2
  %v1889 = vshll.u32 %v1804, 16
  %v1891 = vrot.slane %v1889, 7
  %v1892 = vsel %vm456, %v1887, %v1891
  %v1894 = vshrl.u32 %v1811, 16
  %v1896 = vrot.slane %v1894, 6
  %v1897 = vshll.u32 %v1811, 16
  %v1899 = vrot.slane %v1897, 7
  %v1900 = vor.u32 %v1896, %v1899
  %v1901 = vrot.slane %v1900, 2
  %v1903 = vshll.u32 %v1812, 16
  %v1905 = vrot.slane %v1903, 7
  %v1906 = vsel %vm456, %v1901, %v1905
  %v1908 = vshrl.u32 %v1819, 16
  %v1910 = vrot.slane %v1908, 6
  %v1911 = vshll.u32 %v1819, 16
  %v1913 = vrot.slane %v1911, 7
  %v1914 = vor.u32 %v1910, %v1913
  %v1915 = vrot.slane %v1914, 2
  %v1917 = vshll.u32 %v1820, 16
  %v1919 = vrot.slane %v1917, 7
  %v1920 = vsel %vm456, %v1915, %v1919
  %v1922 = vshrl.u32 %v1827, 16
  %v1924 = vrot.slane %v1922, 6
  %v1925 = vshll.u32 %v1827, 16
  %v1927 = vrot.slane %v1925, 7
  %v1928 = vor.u32 %v1924, %v1927
  %v1929 = vrot.slane %v1928, 2
  %v1931 = vshll.u32 %v1828, 16
  %v1933 = vrot.slane %v1931, 7
  %v1934 = vsel %vm456, %v1929, %v1933
  %v1936 = vshrl.u32 %v1835, 16
  %v1938 = vrot.slane %v1936, 6
  %v1939 = vshll.u32 %v1835, 16
  %v1941 = vrot.slane %v1939, 7
  %v1942 = vor.u32 %v1938, %v1941
  %v1943 = vrot.slane %v1942, 2
  %v1945 = vshll.u32 %v1836, 16
  %v1947 = vrot.slane %v1945, 7
  %v1948 = vsel %vm456, %v1943, %v1947
  %s1949 = scalar_lea.vmem %s1, 448
  %v1950 = vld [vmem:[%s1949] sm:$0xf]
  %v1951 = vld [vmem:[%s1949 + $0x4] sm:$0xf]
  %v1952 = vld [vmem:[%s1949 + $0x8] sm:$0xf]
  %v1953 = vld [vmem:[%s1949 + $0xc] sm:$0xf]
  %v1954 = vld [vmem:[%s1949 + $0x10] sm:$0xf]
  %v1955 = vld [vmem:[%s1949 + $0x14] sm:$0xf]
  %v1956 = vld [vmem:[%s1949 + $0x18] sm:$0xf]
  %v1957 = vld [vmem:[%s1949 + $0x1c] sm:$0xf]
  %v1958 = vld [vmem:[%s1949 + $0x20] sm:$0xf]
  %v1959 = vld [vmem:[%s1949 + $0x24] sm:$0xf]
  %v1960 = vld [vmem:[%s1949 + $0x28] sm:$0xf]
  %v1961 = vld [vmem:[%s1949 + $0x2c] sm:$0xf]
  %v1962 = vld [vmem:[%s1949 + $0x30] sm:$0xf]
  %v1963 = vld [vmem:[%s1949 + $0x34] sm:$0xf]
  %v1964 = vld [vmem:[%s1949 + $0x38] sm:$0xf]
  %v1965 = vld [vmem:[%s1949 + $0x3c] sm:$0xf]
  %v1966 = vcombine.low %v1850, %v1864
  %v1967 = vcombine.low %v1878, %v1892
  %v1969 = vunpack.c.l.s4 1983009808
  %v1970 = vunpack.c.0.s8 %v1969
  %v1971 = vlaneseq
  %v1972 = vshrl.u32 %v1971, 7
  %v1973 = vsub.s32 %v1970, %v1972
  %v1974 = vrot.slane %v1966, %v1973
  %v1976 = vunpack.c.l.s4 1983009808
  %v1977 = vunpack.c.0.s8 %v1976
  %v1978 = vlaneseq
  %v1979 = vshrl.u32 %v1978, 7
  %v1980 = vsub.s32 %v1977, %v1979
  %v1981 = vrot.slane %v1967, %v1980
  %v1982 = vcombine.low %v1974, %v1981
  %v1983 = vcombine.low %v1906, %v1920
  %v1984 = vcombine.low %v1934, %v1948
  %v1986 = vunpack.c.l.s4 1983009808
  %v1987 = vunpack.c.0.s8 %v1986
  %v1988 = vlaneseq
  %v1989 = vshrl.u32 %v1988, 7
  %v1990 = vsub.s32 %v1987, %v1989
  %v1991 = vrot.slane %v1983, %v1990
  %v1993 = vunpack.c.l.s4 1983009808
  %v1994 = vunpack.c.0.s8 %v1993
  %v1995 = vlaneseq
  %v1996 = vshrl.u32 %v1995, 7
  %v1997 = vsub.s32 %v1994, %v1996
  %v1998 = vrot.slane %v1984, %v1997
  %v1999 = vcombine.low %v1991, %v1998
  %v2018 = vunpack.c.l.b16 %v1950
  %v2019 = vunpack.c.l.b16 %v1951
  %v2020 = vunpack.c.l.b16 %v1952
  %v2021 = vunpack.c.l.b16 %v1953
  %v2022 = vunpack.c.l.b16 %v1954
  %v2023 = vunpack.c.l.b16 %v1955
  %v2024 = vunpack.c.l.b16 %v1956
  %v2025 = vunpack.c.l.b16 %v1957
  %v2026 = vunpack.c.l.b16 %v1958
  %v2027 = vunpack.c.l.b16 %v1959
  %v2028 = vunpack.c.l.b16 %v1960
  %v2029 = vunpack.c.l.b16 %v1961
  %v2030 = vunpack.c.l.b16 %v1962
  %v2031 = vunpack.c.l.b16 %v1963
  %v2032 = vunpack.c.l.b16 %v1964
  %v2033 = vunpack.c.l.b16 %v1965
  %v2034 = vpack.c.b16 %v2019, %v2018
  %v2035 = vpack.c.b16 %v2021, %v2020
  %v2036 = vpack.c.b16 %v2023, %v2022
  %v2037 = vpack.c.b16 %v2025, %v2024
  %v2038 = vpack.c.b16 %v2027, %v2026
  %v2039 = vpack.c.b16 %v2029, %v2028
  %v2040 = vpack.c.b16 %v2031, %v2030
  %v2041 = vpack.c.b16 %v2033, %v2032
  %2050 = vmatprep.subr.bf16.mxu0 0
  %2051 = vmatpush1.bf16.msra.mxu0 %v2034
  %2052 = vmatprep.subr.bf16.mxu0 0
  %2053 = vmatpush1.bf16.msra.mxu0 %v2035
  %2054 = vmatprep.subr.bf16.mxu0 0
  %2055 = vmatpush1.bf16.msra.mxu0 %v2036
  %2056 = vmatprep.subr.bf16.mxu0 0
  %2057 = vmatpush1.bf16.msra.mxu0 %v2037
  %2058 = vmatprep.subr.bf16.mxu0 0
  %2059 = vmatpush1.bf16.msra.mxu0 %v2038
  %2060 = vmatprep.subr.bf16.mxu0 0
  %2061 = vmatpush1.bf16.msra.mxu0 %v2039
  %2062 = vmatprep.subr.bf16.mxu0 0
  %2063 = vmatpush1.bf16.msra.mxu0 %v2040
  %2064 = vmatprep.subr.bf16.mxu0 0
  %2065 = vmatpush1.bf16.msra.mxu0 %v2041
  %2066 = vmatprep.subr.bf16.mxu0 0
  %2067 = vmatpush1.bf16.msra.mxu0 0
  %2068 = vmatprep.subr.bf16.mxu0 0
  %2069 = vmatpush1.bf16.msra.mxu0 0
  %2070 = vmatprep.subr.bf16.mxu0 0
  %2071 = vmatpush1.bf16.msra.mxu0 0
  %2072 = vmatprep.subr.bf16.mxu0 0
  %2073 = vmatpush1.bf16.msra.mxu0 0
  %2074 = vmatprep.subr.bf16.mxu0 0
  %2075 = vmatpush1.bf16.msra.mxu0 0
  %2076 = vmatprep.subr.bf16.mxu0 0
  %2077 = vmatpush1.bf16.msra.mxu0 0
  %2078 = vmatprep.subr.bf16.mxu0 0
  %2079 = vmatpush1.bf16.msra.mxu0 0
  %2080 = vmatprep.subr.bf16.mxu0 0
  %2081 = vmatpush1.bf16.msra.mxu0 0
  %2082 = vmatprep.mubr.bf16.mxu0 0
  %2083 = vmatmul.mubr.bf16.gmra.mrb[0].mxu0 %v1982
  %v2084 = vpop.f32.mrb[0].mxu0
  %v2085 = vadd.f32 0.0, %v2084
  %v2086 = vpop.f32.mrb[0].mxu0
  %v2087 = vpop.f32.mrb[0].mxu0
  %v2088 = vadd.f32 0.0, %v2087
  %v2089 = vpop.f32.mrb[0].mxu0
  %2090 = vmatprep.mubr.bf16.mxu0 0
  %2091 = vmatmul.mubr.bf16.gmra.mrb[0].mxu0 %v1999
  %v2092 = vpop.f32.mrb[0].mxu0
  %v2093 = vadd.f32 0.0, %v2092
  %v2094 = vpop.f32.mrb[0].mxu0
  %v2095 = vpop.f32.mrb[0].mxu0
  %v2096 = vadd.f32 0.0, %v2095
  %v2097 = vpop.f32.mrb[0].mxu0
  %2098 = vdwg.mxu0
  %v2099 = vadd.f32 %v1753, %v2085
  %v2100 = vadd.f32 %v1754, %v2088
  %v2101 = vadd.f32 %v1755, %v2093
  %v2102 = vadd.f32 %v1756, %v2096
  %s2103 = scalar_lea.vmem %s35, 4
  %v2104 = vld [vmem:[%s2103] sm:$0x3]
  %v2105 = vld [vmem:[%s2103 + $0x4] sm:$0x3]
  %v2106 = vld [vmem:[%s2103 + $0x8] sm:$0x3]
  %v2107 = vld [vmem:[%s2103 + $0xc] sm:$0x3]
  %v2108 = vld [vmem:[%s2103 + $0x14] sm:$0x3]
  %v2109 = vld [vmem:[%s2103 + $0x18] sm:$0x3]
  %v2110 = vld [vmem:[%s2103 + $0x1c] sm:$0x3]
  %v2111 = vld [vmem:[%s2103 + $0x20] sm:$0x3]
  %s2112 = scalar_lea.vmem %s1, 512
  %v2113 = vld [vmem:[%s2112] sm:$0xf]
  %v2114 = vld [vmem:[%s2112 + $0x4] sm:$0xf]
  %v2115 = vld [vmem:[%s2112 + $0x8] sm:$0xf]
  %v2116 = vld [vmem:[%s2112 + $0xc] sm:$0xf]
  %v2117 = vld [vmem:[%s2112 + $0x10] sm:$0xf]
  %v2118 = vld [vmem:[%s2112 + $0x14] sm:$0xf]
  %v2119 = vld [vmem:[%s2112 + $0x18] sm:$0xf]
  %v2120 = vld [vmem:[%s2112 + $0x1c] sm:$0xf]
  %v2121 = vld [vmem:[%s2112 + $0x20] sm:$0xf]
  %v2122 = vld [vmem:[%s2112 + $0x24] sm:$0xf]
  %v2123 = vld [vmem:[%s2112 + $0x28] sm:$0xf]
  %v2124 = vld [vmem:[%s2112 + $0x2c] sm:$0xf]
  %v2125 = vld [vmem:[%s2112 + $0x30] sm:$0xf]
  %v2126 = vld [vmem:[%s2112 + $0x34] sm:$0xf]
  %v2127 = vld [vmem:[%s2112 + $0x38] sm:$0xf]
  %v2128 = vld [vmem:[%s2112 + $0x3c] sm:$0xf]
  %v2137 = vcombine.low %v2104, %v2105
  %v2138 = vcombine.low %v2106, %v2107
  %v2140 = vunpack.c.l.s4 1983009808
  %v2141 = vunpack.c.0.s8 %v2140
  %v2142 = vlaneseq
  %v2143 = vshrl.u32 %v2142, 7
  %v2144 = vsub.s32 %v2141, %v2143
  %v2145 = vrot.slane %v2137, %v2144
  %v2147 = vunpack.c.l.s4 1983009808
  %v2148 = vunpack.c.0.s8 %v2147
  %v2149 = vlaneseq
  %v2150 = vshrl.u32 %v2149, 7
  %v2151 = vsub.s32 %v2148, %v2150
  %v2152 = vrot.slane %v2138, %v2151
  %v2153 = vcombine.low %v2145, %v2152
  %v2154 = vcombine.low %v2108, %v2109
  %v2155 = vcombine.low %v2110, %v2111
  %v2157 = vunpack.c.l.s4 1983009808
  %v2158 = vunpack.c.0.s8 %v2157
  %v2159 = vlaneseq
  %v2160 = vshrl.u32 %v2159, 7
  %v2161 = vsub.s32 %v2158, %v2160
  %v2162 = vrot.slane %v2154, %v2161
  %v2164 = vunpack.c.l.s4 1983009808
  %v2165 = vunpack.c.0.s8 %v2164
  %v2166 = vlaneseq
  %v2167 = vshrl.u32 %v2166, 7
  %v2168 = vsub.s32 %v2165, %v2167
  %v2169 = vrot.slane %v2155, %v2168
  %v2170 = vcombine.low %v2162, %v2169
  %v2189 = vunpack.c.l.b16 %v2113
  %v2190 = vunpack.c.l.b16 %v2114
  %v2191 = vunpack.c.l.b16 %v2115
  %v2192 = vunpack.c.l.b16 %v2116
  %v2193 = vunpack.c.l.b16 %v2117
  %v2194 = vunpack.c.l.b16 %v2118
  %v2195 = vunpack.c.l.b16 %v2119
  %v2196 = vunpack.c.l.b16 %v2120
  %v2197 = vunpack.c.l.b16 %v2121
  %v2198 = vunpack.c.l.b16 %v2122
  %v2199 = vunpack.c.l.b16 %v2123
  %v2200 = vunpack.c.l.b16 %v2124
  %v2201 = vunpack.c.l.b16 %v2125
  %v2202 = vunpack.c.l.b16 %v2126
  %v2203 = vunpack.c.l.b16 %v2127
  %v2204 = vunpack.c.l.b16 %v2128
  %v2205 = vpack.c.b16 %v2190, %v2189
  %v2206 = vpack.c.b16 %v2192, %v2191
  %v2207 = vpack.c.b16 %v2194, %v2193
  %v2208 = vpack.c.b16 %v2196, %v2195
  %v2209 = vpack.c.b16 %v2198, %v2197
  %v2210 = vpack.c.b16 %v2200, %v2199
  %v2211 = vpack.c.b16 %v2202, %v2201
  %v2212 = vpack.c.b16 %v2204, %v2203
  %2221 = vmatprep.subr.bf16.mxu0 0
  %2222 = vmatpush1.bf16.msra.mxu0 %v2205
  %2223 = vmatprep.subr.bf16.mxu0 0
  %2224 = vmatpush1.bf16.msra.mxu0 %v2206
  %2225 = vmatprep.subr.bf16.mxu0 0
  %2226 = vmatpush1.bf16.msra.mxu0 %v2207
  %2227 = vmatprep.subr.bf16.mxu0 0
  %2228 = vmatpush1.bf16.msra.mxu0 %v2208
  %2229 = vmatprep.subr.bf16.mxu0 0
  %2230 = vmatpush1.bf16.msra.mxu0 %v2209
  %2231 = vmatprep.subr.bf16.mxu0 0
  %2232 = vmatpush1.bf16.msra.mxu0 %v2210
  %2233 = vmatprep.subr.bf16.mxu0 0
  %2234 = vmatpush1.bf16.msra.mxu0 %v2211
  %2235 = vmatprep.subr.bf16.mxu0 0
  %2236 = vmatpush1.bf16.msra.mxu0 %v2212
  %2237 = vmatprep.subr.bf16.mxu0 0
  %2238 = vmatpush1.bf16.msra.mxu0 0
  %2239 = vmatprep.subr.bf16.mxu0 0
  %2240 = vmatpush1.bf16.msra.mxu0 0
  %2241 = vmatprep.subr.bf16.mxu0 0
  %2242 = vmatpush1.bf16.msra.mxu0 0
  %2243 = vmatprep.subr.bf16.mxu0 0
  %2244 = vmatpush1.bf16.msra.mxu0 0
  %2245 = vmatprep.subr.bf16.mxu0 0
  %2246 = vmatpush1.bf16.msra.mxu0 0
  %2247 = vmatprep.subr.bf16.mxu0 0
  %2248 = vmatpush1.bf16.msra.mxu0 0
  %2249 = vmatprep.subr.bf16.mxu0 0
  %2250 = vmatpush1.bf16.msra.mxu0 0
  %2251 = vmatprep.subr.bf16.mxu0 0
  %2252 = vmatpush1.bf16.msra.mxu0 0
  %2253 = vmatprep.mubr.bf16.mxu0 0
  %2254 = vmatmul.mubr.bf16.gmra.mrb[0].mxu0 %v2153
  %v2255 = vpop.f32.mrb[0].mxu0
  %v2256 = vadd.f32 0.0, %v2255
  %v2257 = vpop.f32.mrb[0].mxu0
  %v2258 = vpop.f32.mrb[0].mxu0
  %v2259 = vadd.f32 0.0, %v2258
  %v2260 = vpop.f32.mrb[0].mxu0
  %2261 = vmatprep.mubr.bf16.mxu0 0
  %2262 = vmatmul.mubr.bf16.gmra.mrb[0].mxu0 %v2170
  %v2263 = vpop.f32.mrb[0].mxu0
  %v2264 = vadd.f32 0.0, %v2263
  %v2265 = vpop.f32.mrb[0].mxu0
  %v2266 = vpop.f32.mrb[0].mxu0
  %v2267 = vadd.f32 0.0, %v2266
  %v2268 = vpop.f32.mrb[0].mxu0
  %2269 = vdwg.mxu0
  %v2270 = vadd.f32 %v2099, %v2256
  %v2271 = vadd.f32 %v2100, %v2259
  %v2272 = vadd.f32 %v2101, %v2264
  %v2273 = vadd.f32 %v2102, %v2267
  %s2274 = scalar_lea.vmem %s35, 44
  %v2275 = vld [vmem:[%s2274] sm:$0x3]
  %v2276 = vld [vmem:[%s2274 + $0x4] sm:$0x3]
  %v2277 = vld [vmem:[%s2274 + $0x8] sm:$0x3]
  %v2278 = vld [vmem:[%s2274 + $0xc] sm:$0x3]
  %v2279 = vld [vmem:[%s2274 + $0x14] sm:$0x3]
  %v2280 = vld [vmem:[%s2274 + $0x18] sm:$0x3]
  %v2281 = vld [vmem:[%s2274 + $0x1c] sm:$0x3]
  %v2282 = vld [vmem:[%s2274 + $0x20] sm:$0x3]
  %s2283 = scalar_lea.vmem %s1, 576
  %v2284 = vld [vmem:[%s2283] sm:$0xf]
  %v2285 = vld [vmem:[%s2283 + $0x4] sm:$0xf]
  %v2286 = vld [vmem:[%s2283 + $0x8] sm:$0xf]
  %v2287 = vld [vmem:[%s2283 + $0xc] sm:$0xf]
  %v2288 = vld [vmem:[%s2283 + $0x10] sm:$0xf]
  %v2289 = vld [vmem:[%s2283 + $0x14] sm:$0xf]
  %v2290 = vld [vmem:[%s2283 + $0x18] sm:$0xf]
  %v2291 = vld [vmem:[%s2283 + $0x1c] sm:$0xf]
  %v2292 = vld [vmem:[%s2283 + $0x20] sm:$0xf]
  %v2293 = vld [vmem:[%s2283 + $0x24] sm:$0xf]
  %v2294 = vld [vmem:[%s2283 + $0x28] sm:$0xf]
  %v2295 = vld [vmem:[%s2283 + $0x2c] sm:$0xf]
  %v2296 = vld [vmem:[%s2283 + $0x30] sm:$0xf]
  %v2297 = vld [vmem:[%s2283 + $0x34] sm:$0xf]
  %v2298 = vld [vmem:[%s2283 + $0x38] sm:$0xf]
  %v2299 = vld [vmem:[%s2283 + $0x3c] sm:$0xf]
  %v2308 = vcombine.low %v2275, %v2276
  %v2309 = vcombine.low %v2277, %v2278
  %v2311 = vunpack.c.l.s4 1983009808
  %v2312 = vunpack.c.0.s8 %v2311
  %v2313 = vlaneseq
  %v2314 = vshrl.u32 %v2313, 7
  %v2315 = vsub.s32 %v2312, %v2314
  %v2316 = vrot.slane %v2308, %v2315
  %v2318 = vunpack.c.l.s4 1983009808
  %v2319 = vunpack.c.0.s8 %v2318
  %v2320 = vlaneseq
  %v2321 = vshrl.u32 %v2320, 7
  %v2322 = vsub.s32 %v2319, %v2321
  %v2323 = vrot.slane %v2309, %v2322
  %v2324 = vcombine.low %v2316, %v2323
  %v2325 = vcombine.low %v2279, %v2280
  %v2326 = vcombine.low %v2281, %v2282
  %v2328 = vunpack.c.l.s4 1983009808
  %v2329 = vunpack.c.0.s8 %v2328
  %v2330 = vlaneseq
  %v2331 = vshrl.u32 %v2330, 7
  %v2332 = vsub.s32 %v2329, %v2331
  %v2333 = vrot.slane %v2325, %v2332
  %v2335 = vunpack.c.l.s4 1983009808
  %v2336 = vunpack.c.0.s8 %v2335
  %v2337 = vlaneseq
  %v2338 = vshrl.u32 %v2337, 7
  %v2339 = vsub.s32 %v2336, %v2338
  %v2340 = vrot.slane %v2326, %v2339
  %v2341 = vcombine.low %v2333, %v2340
  %v2360 = vunpack.c.l.b16 %v2284
  %v2361 = vunpack.c.l.b16 %v2285
  %v2362 = vunpack.c.l.b16 %v2286
  %v2363 = vunpack.c.l.b16 %v2287
  %v2364 = vunpack.c.l.b16 %v2288
  %v2365 = vunpack.c.l.b16 %v2289
  %v2366 = vunpack.c.l.b16 %v2290
  %v2367 = vunpack.c.l.b16 %v2291
  %v2368 = vunpack.c.l.b16 %v2292
  %v2369 = vunpack.c.l.b16 %v2293
  %v2370 = vunpack.c.l.b16 %v2294
  %v2371 = vunpack.c.l.b16 %v2295
  %v2372 = vunpack.c.l.b16 %v2296
  %v2373 = vunpack.c.l.b16 %v2297
  %v2374 = vunpack.c.l.b16 %v2298
  %v2375 = vunpack.c.l.b16 %v2299
  %v2376 = vpack.c.b16 %v2361, %v2360
  %v2377 = vpack.c.b16 %v2363, %v2362
  %v2378 = vpack.c.b16 %v2365, %v2364
  %v2379 = vpack.c.b16 %v2367, %v2366
  %v2380 = vpack.c.b16 %v2369, %v2368
  %v2381 = vpack.c.b16 %v2371, %v2370
  %v2382 = vpack.c.b16 %v2373, %v2372
  %v2383 = vpack.c.b16 %v2375, %v2374
  %2392 = vmatprep.subr.bf16.mxu0 0
  %2393 = vmatpush1.bf16.msra.mxu0 %v2376
  %2394 = vmatprep.subr.bf16.mxu0 0
  %2395 = vmatpush1.bf16.msra.mxu0 %v2377
  %2396 = vmatprep.subr.bf16.mxu0 0
  %2397 = vmatpush1.bf16.msra.mxu0 %v2378
  %2398 = vmatprep.subr.bf16.mxu0 0
  %2399 = vmatpush1.bf16.msra.mxu0 %v2379
  %2400 = vmatprep.subr.bf16.mxu0 0
  %2401 = vmatpush1.bf16.msra.mxu0 %v2380
  %2402 = vmatprep.subr.bf16.mxu0 0
  %2403 = vmatpush1.bf16.msra.mxu0 %v2381
  %2404 = vmatprep.subr.bf16.mxu0 0
  %2405 = vmatpush1.bf16.msra.mxu0 %v2382
  %2406 = vmatprep.subr.bf16.mxu0 0
  %2407 = vmatpush1.bf16.msra.mxu0 %v2383
  %2408 = vmatprep.subr.bf16.mxu0 0
  %2409 = vmatpush1.bf16.msra.mxu0 0
  %2410 = vmatprep.subr.bf16.mxu0 0
  %2411 = vmatpush1.bf16.msra.mxu0 0
  %2412 = vmatprep.subr.bf16.mxu0 0
  %2413 = vmatpush1.bf16.msra.mxu0 0
  %2414 = vmatprep.subr.bf16.mxu0 0
  %2415 = vmatpush1.bf16.msra.mxu0 0
  %2416 = vmatprep.subr.bf16.mxu0 0
  %2417 = vmatpush1.bf16.msra.mxu0 0
  %2418 = vmatprep.subr.bf16.mxu0 0
  %2419 = vmatpush1.bf16.msra.mxu0 0
  %2420 = vmatprep.subr.bf16.mxu0 0
  %2421 = vmatpush1.bf16.msra.mxu0 0
  %2422 = vmatprep.subr.bf16.mxu0 0
  %2423 = vmatpush1.bf16.msra.mxu0 0
  %2424 = vmatprep.mubr.bf16.mxu0 0
  %2425 = vmatmul.mubr.bf16.gmra.mrb[0].mxu0 %v2324
  %v2426 = vpop.f32.mrb[0].mxu0
  %v2427 = vadd.f32 0.0, %v2426
  %v2428 = vpop.f32.mrb[0].mxu0
  %v2429 = vpop.f32.mrb[0].mxu0
  %v2430 = vadd.f32 0.0, %v2429
  %v2431 = vpop.f32.mrb[0].mxu0
  %2432 = vmatprep.mubr.bf16.mxu0 0
  %2433 = vmatmul.mubr.bf16.gmra.mrb[0].mxu0 %v2341
  %v2434 = vpop.f32.mrb[0].mxu0
  %v2435 = vadd.f32 0.0, %v2434
  %v2436 = vpop.f32.mrb[0].mxu0
  %v2437 = vpop.f32.mrb[0].mxu0
  %v2438 = vadd.f32 0.0, %v2437
  %v2439 = vpop.f32.mrb[0].mxu0
  %2440 = vdwg.mxu0
  %v2441 = vadd.f32 %v2270, %v2427
  %v2442 = vadd.f32 %v2271, %v2430
  %v2443 = vadd.f32 %v2272, %v2435
  %v2444 = vadd.f32 %v2273, %v2438
  %v2445 = vld [vmem:[%s2103] sm:$0x7]
  %v2446 = vld [vmem:[%s2103 + $0x4] sm:$0x7]
  %v2447 = vld [vmem:[%s2103 + $0x8] sm:$0x7]
  %v2448 = vld [vmem:[%s2103 + $0xc] sm:$0x7]
  %v2449 = vld [vmem:[%s2103 + $0x14] sm:$0x7]
  %v2450 = vld [vmem:[%s2103 + $0x18] sm:$0x7]
  %v2451 = vld [vmem:[%s2103 + $0x1c] sm:$0x7]
  %v2452 = vld [vmem:[%s2103 + $0x20] sm:$0x7]
  %v2462 = vunpack.c.l.s4 1983009808
  %v2463 = vunpack.c.0.s8 %v2462
  %v2464 = vlaneseq
  %v2465 = vshrl.u32 %v2464, 7
  %v2466 = vsub.s32 %v2463, %v2465
  %v2467 = vrot.slane %v2445, %v2466
  %v2468 = vcombine.high %v2467, %v2467
  %v2470 = vunpack.c.l.s4 1983009808
  %v2471 = vunpack.c.0.s8 %v2470
  %v2472 = vlaneseq
  %v2473 = vshrl.u32 %v2472, 7
  %v2474 = vsub.s32 %v2471, %v2473
  %v2475 = vrot.slane %v2446, %v2474
  %v2476 = vcombine.high %v2475, %v2475
  %v2478 = vunpack.c.l.s4 1983009808
  %v2479 = vunpack.c.0.s8 %v2478
  %v2480 = vlaneseq
  %v2481 = vshrl.u32 %v2480, 7
  %v2482 = vsub.s32 %v2479, %v2481
  %v2483 = vrot.slane %v2447, %v2482
  %v2484 = vcombine.high %v2483, %v2483
  %v2486 = vunpack.c.l.s4 1983009808
  %v2487 = vunpack.c.0.s8 %v2486
  %v2488 = vlaneseq
  %v2489 = vshrl.u32 %v2488, 7
  %v2490 = vsub.s32 %v2487, %v2489
  %v2491 = vrot.slane %v2448, %v2490
  %v2492 = vcombine.high %v2491, %v2491
  %v2494 = vunpack.c.l.s4 1983009808
  %v2495 = vunpack.c.0.s8 %v2494
  %v2496 = vlaneseq
  %v2497 = vshrl.u32 %v2496, 7
  %v2498 = vsub.s32 %v2495, %v2497
  %v2499 = vrot.slane %v2449, %v2498
  %v2500 = vcombine.high %v2499, %v2499
  %v2502 = vunpack.c.l.s4 1983009808
  %v2503 = vunpack.c.0.s8 %v2502
  %v2504 = vlaneseq
  %v2505 = vshrl.u32 %v2504, 7
  %v2506 = vsub.s32 %v2503, %v2505
  %v2507 = vrot.slane %v2450, %v2506
  %v2508 = vcombine.high %v2507, %v2507
  %v2510 = vunpack.c.l.s4 1983009808
  %v2511 = vunpack.c.0.s8 %v2510
  %v2512 = vlaneseq
  %v2513 = vshrl.u32 %v2512, 7
  %v2514 = vsub.s32 %v2511, %v2513
  %v2515 = vrot.slane %v2451, %v2514
  %v2516 = vcombine.high %v2515, %v2515
  %v2518 = vunpack.c.l.s4 1983009808
  %v2519 = vunpack.c.0.s8 %v2518
  %v2520 = vlaneseq
  %v2521 = vshrl.u32 %v2520, 7
  %v2522 = vsub.s32 %v2519, %v2521
  %v2523 = vrot.slane %v2452, %v2522
  %v2524 = vcombine.high %v2523, %v2523
  %v2526 = vshrl.u32 %v2467, 16
  %v2528 = vrot.slane %v2526, 6
  %v2529 = vshll.u32 %v2467, 16
  %v2531 = vrot.slane %v2529, 7
  %v2532 = vor.u32 %v2528, %v2531
  %v2533 = vrot.slane %v2532, 2
  %v2535 = vshll.u32 %v2468, 16
  %v2537 = vrot.slane %v2535, 7
  %v2538 = vsel %vm456, %v2533, %v2537
  %v2540 = vshrl.u32 %v2475, 16
  %v2542 = vrot.slane %v2540, 6
  %v2543 = vshll.u32 %v2475, 16
  %v2545 = vrot.slane %v2543, 7
  %v2546 = vor.u32 %v2542, %v2545
  %v2547 = vrot.slane %v2546, 2
  %v2549 = vshll.u32 %v2476, 16
  %v2551 = vrot.slane %v2549, 7
  %v2552 = vsel %vm456, %v2547, %v2551
  %v2554 = vshrl.u32 %v2483, 16
  %v2556 = vrot.slane %v2554, 6
  %v2557 = vshll.u32 %v2483, 16
  %v2559 = vrot.slane %v2557, 7
  %v2560 = vor.u32 %v2556, %v2559
  %v2561 = vrot.slane %v2560, 2
  %v2563 = vshll.u32 %v2484, 16
  %v2565 = vrot.slane %v2563, 7
  %v2566 = vsel %vm456, %v2561, %v2565
  %v2568 = vshrl.u32 %v2491, 16
  %v2570 = vrot.slane %v2568, 6
  %v2571 = vshll.u32 %v2491, 16
  %v2573 = vrot.slane %v2571, 7
  %v2574 = vor.u32 %v2570, %v2573
  %v2575 = vrot.slane %v2574, 2
  %v2577 = vshll.u32 %v2492, 16
  %v2579 = vrot.slane %v2577, 7
  %v2580 = vsel %vm456, %v2575, %v2579
  %v2582 = vshrl.u32 %v2499, 16
  %v2584 = vrot.slane %v2582, 6
  %v2585 = vshll.u32 %v2499, 16
  %v2587 = vrot.slane %v2585, 7
  %v2588 = vor.u32 %v2584, %v2587
  %v2589 = vrot.slane %v2588, 2
  %v2591 = vshll.u32 %v2500, 16
  %v2593 = vrot.slane %v2591, 7
  %v2594 = vsel %vm456, %v2589, %v2593
  %v2596 = vshrl.u32 %v2507, 16
  %v2598 = vrot.slane %v2596, 6
  %v2599 = vshll.u32 %v2507, 16
  %v2601 = vrot.slane %v2599, 7
  %v2602 = vor.u32 %v2598, %v2601
  %v2603 = vrot.slane %v2602, 2
  %v2605 = vshll.u32 %v2508, 16
  %v2607 = vrot.slane %v2605, 7
  %v2608 = vsel %vm456, %v2603, %v2607
  %v2610 = vshrl.u32 %v2515, 16
  %v2612 = vrot.slane %v2610, 6
  %v2613 = vshll.u32 %v2515, 16
  %v2615 = vrot.slane %v2613, 7
  %v2616 = vor.u32 %v2612, %v2615
  %v2617 = vrot.slane %v2616, 2
  %v2619 = vshll.u32 %v2516, 16
  %v2621 = vrot.slane %v2619, 7
  %v2622 = vsel %vm456, %v2617, %v2621
  %v2624 = vshrl.u32 %v2523, 16
  %v2626 = vrot.slane %v2624, 6
  %v2627 = vshll.u32 %v2523, 16
  %v2629 = vrot.slane %v2627, 7
  %v2630 = vor.u32 %v2626, %v2629
  %v2631 = vrot.slane %v2630, 2
  %v2633 = vshll.u32 %v2524, 16
  %v2635 = vrot.slane %v2633, 7
  %v2636 = vsel %vm456, %v2631, %v2635
  %s2637 = scalar_lea.vmem %s1, 640
  %v2638 = vld [vmem:[%s2637] sm:$0xf]
  %v2639 = vld [vmem:[%s2637 + $0x4] sm:$0xf]
  %v2640 = vld [vmem:[%s2637 + $0x8] sm:$0xf]
  %v2641 = vld [vmem:[%s2637 + $0xc] sm:$0xf]
  %v2642 = vld [vmem:[%s2637 + $0x10] sm:$0xf]
  %v2643 = vld [vmem:[%s2637 + $0x14] sm:$0xf]
  %v2644 = vld [vmem:[%s2637 + $0x18] sm:$0xf]
  %v2645 = vld [vmem:[%s2637 + $0x1c] sm:$0xf]
  %v2646 = vld [vmem:[%s2637 + $0x20] sm:$0xf]
  %v2647 = vld [vmem:[%s2637 + $0x24] sm:$0xf]
  %v2648 = vld [vmem:[%s2637 + $0x28] sm:$0xf]
  %v2649 = vld [vmem:[%s2637 + $0x2c] sm:$0xf]
  %v2650 = vld [vmem:[%s2637 + $0x30] sm:$0xf]
  %v2651 = vld [vmem:[%s2637 + $0x34] sm:$0xf]
  %v2652 = vld [vmem:[%s2637 + $0x38] sm:$0xf]
  %v2653 = vld [vmem:[%s2637 + $0x3c] sm:$0xf]
  %v2654 = vcombine.low %v2538, %v2552
  %v2655 = vcombine.low %v2566, %v2580
  %v2657 = vunpack.c.l.s4 1983009808
  %v2658 = vunpack.c.0.s8 %v2657
  %v2659 = vlaneseq
  %v2660 = vshrl.u32 %v2659, 7
  %v2661 = vsub.s32 %v2658, %v2660
  %v2662 = vrot.slane %v2654, %v2661
  %v2664 = vunpack.c.l.s4 1983009808
  %v2665 = vunpack.c.0.s8 %v2664
  %v2666 = vlaneseq
  %v2667 = vshrl.u32 %v2666, 7
  %v2668 = vsub.s32 %v2665, %v2667
  %v2669 = vrot.slane %v2655, %v2668
  %v2670 = vcombine.low %v2662, %v2669
  %v2671 = vcombine.low %v2594, %v2608
  %v2672 = vcombine.low %v2622, %v2636
  %v2674 = vunpack.c.l.s4 1983009808
  %v2675 = vunpack.c.0.s8 %v2674
  %v2676 = vlaneseq
  %v2677 = vshrl.u32 %v2676, 7
  %v2678 = vsub.s32 %v2675, %v2677
  %v2679 = vrot.slane %v2671, %v2678
  %v2681 = vunpack.c.l.s4 1983009808
  %v2682 = vunpack.c.0.s8 %v2681
  %v2683 = vlaneseq
  %v2684 = vshrl.u32 %v2683, 7
  %v2685 = vsub.s32 %v2682, %v2684
  %v2686 = vrot.slane %v2672, %v2685
  %v2687 = vcombine.low %v2679, %v2686
  %v2706 = vunpack.c.l.b16 %v2638
  %v2707 = vunpack.c.l.b16 %v2639
  %v2708 = vunpack.c.l.b16 %v2640
  %v2709 = vunpack.c.l.b16 %v2641
  %v2710 = vunpack.c.l.b16 %v2642
  %v2711 = vunpack.c.l.b16 %v2643
  %v2712 = vunpack.c.l.b16 %v2644
  %v2713 = vunpack.c.l.b16 %v2645
  %v2714 = vunpack.c.l.b16 %v2646
  %v2715 = vunpack.c.l.b16 %v2647
  %v2716 = vunpack.c.l.b16 %v2648
  %v2717 = vunpack.c.l.b16 %v2649
  %v2718 = vunpack.c.l.b16 %v2650
  %v2719 = vunpack.c.l.b16 %v2651
  %v2720 = vunpack.c.l.b16 %v2652
  %v2721 = vunpack.c.l.b16 %v2653
  %v2722 = vpack.c.b16 %v2707, %v2706
  %v2723 = vpack.c.b16 %v2709, %v2708
  %v2724 = vpack.c.b16 %v2711, %v2710
  %v2725 = vpack.c.b16 %v2713, %v2712
  %v2726 = vpack.c.b16 %v2715, %v2714
  %v2727 = vpack.c.b16 %v2717, %v2716
  %v2728 = vpack.c.b16 %v2719, %v2718
  %v2729 = vpack.c.b16 %v2721, %v2720
  %2738 = vmatprep.subr.bf16.mxu0 0
  %2739 = vmatpush1.bf16.msra.mxu0 %v2722
  %2740 = vmatprep.subr.bf16.mxu0 0
  %2741 = vmatpush1.bf16.msra.mxu0 %v2723
  %2742 = vmatprep.subr.bf16.mxu0 0
  %2743 = vmatpush1.bf16.msra.mxu0 %v2724
  %2744 = vmatprep.subr.bf16.mxu0 0
  %2745 = vmatpush1.bf16.msra.mxu0 %v2725
  %2746 = vmatprep.subr.bf16.mxu0 0
  %2747 = vmatpush1.bf16.msra.mxu0 %v2726
  %2748 = vmatprep.subr.bf16.mxu0 0
  %2749 = vmatpush1.bf16.msra.mxu0 %v2727
  %2750 = vmatprep.subr.bf16.mxu0 0
  %2751 = vmatpush1.bf16.msra.mxu0 %v2728
  %2752 = vmatprep.subr.bf16.mxu0 0
  %2753 = vmatpush1.bf16.msra.mxu0 %v2729
  %2754 = vmatprep.subr.bf16.mxu0 0
  %2755 = vmatpush1.bf16.msra.mxu0 0
  %2756 = vmatprep.subr.bf16.mxu0 0
  %2757 = vmatpush1.bf16.msra.mxu0 0
  %2758 = vmatprep.subr.bf16.mxu0 0
  %2759 = vmatpush1.bf16.msra.mxu0 0
  %2760 = vmatprep.subr.bf16.mxu0 0
  %2761 = vmatpush1.bf16.msra.mxu0 0
  %2762 = vmatprep.subr.bf16.mxu0 0
  %2763 = vmatpush1.bf16.msra.mxu0 0
  %2764 = vmatprep.subr.bf16.mxu0 0
  %2765 = vmatpush1.bf16.msra.mxu0 0
  %2766 = vmatprep.subr.bf16.mxu0 0
  %2767 = vmatpush1.bf16.msra.mxu0 0
  %2768 = vmatprep.subr.bf16.mxu0 0
  %2769 = vmatpush1.bf16.msra.mxu0 0
  %2770 = vmatprep.mubr.bf16.mxu0 0
  %2771 = vmatmul.mubr.bf16.gmra.mrb[0].mxu0 %v2670
  %v2772 = vpop.f32.mrb[0].mxu0
  %v2773 = vadd.f32 0.0, %v2772
  %v2774 = vpop.f32.mrb[0].mxu0
  %v2775 = vpop.f32.mrb[0].mxu0
  %v2776 = vadd.f32 0.0, %v2775
  %v2777 = vpop.f32.mrb[0].mxu0
  %2778 = vmatprep.mubr.bf16.mxu0 0
  %2779 = vmatmul.mubr.bf16.gmra.mrb[0].mxu0 %v2687
  %v2780 = vpop.f32.mrb[0].mxu0
  %v2781 = vadd.f32 0.0, %v2780
  %v2782 = vpop.f32.mrb[0].mxu0
  %v2783 = vpop.f32.mrb[0].mxu0
  %v2784 = vadd.f32 0.0, %v2783
  %v2785 = vpop.f32.mrb[0].mxu0
  %2786 = vdwg.mxu0
  %v2787 = vadd.f32 %v2441, %v2773
  %v2788 = vadd.f32 %v2442, %v2776
  %v2789 = vadd.f32 %v2443, %v2781
  %v2790 = vadd.f32 %v2444, %v2784
  %v2791 = vld [vmem:[%s2274] sm:$0x7]
  %v2792 = vld [vmem:[%s2274 + $0x4] sm:$0x7]
  %v2793 = vld [vmem:[%s2274 + $0x8] sm:$0x7]
  %v2794 = vld [vmem:[%s2274 + $0xc] sm:$0x7]
  %v2795 = vld [vmem:[%s2274 + $0x14] sm:$0x7]
  %v2796 = vld [vmem:[%s2274 + $0x18] sm:$0x7]
  %v2797 = vld [vmem:[%s2274 + $0x1c] sm:$0x7]
  %v2798 = vld [vmem:[%s2274 + $0x20] sm:$0x7]
  %v2808 = vunpack.c.l.s4 1983009808
  %v2809 = vunpack.c.0.s8 %v2808
  %v2810 = vlaneseq
  %v2811 = vshrl.u32 %v2810, 7
  %v2812 = vsub.s32 %v2809, %v2811
  %v2813 = vrot.slane %v2791, %v2812
  %v2814 = vcombine.high %v2813, %v2813
  %v2816 = vunpack.c.l.s4 1983009808
  %v2817 = vunpack.c.0.s8 %v2816
  %v2818 = vlaneseq
  %v2819 = vshrl.u32 %v2818, 7
  %v2820 = vsub.s32 %v2817, %v2819
  %v2821 = vrot.slane %v2792, %v2820
  %v2822 = vcombine.high %v2821, %v2821
  %v2824 = vunpack.c.l.s4 1983009808
  %v2825 = vunpack.c.0.s8 %v2824
  %v2826 = vlaneseq
  %v2827 = vshrl.u32 %v2826, 7
  %v2828 = vsub.s32 %v2825, %v2827
  %v2829 = vrot.slane %v2793, %v2828
  %v2830 = vcombine.high %v2829, %v2829
  %v2832 = vunpack.c.l.s4 1983009808
  %v2833 = vunpack.c.0.s8 %v2832
  %v2834 = vlaneseq
  %v2835 = vshrl.u32 %v2834, 7
  %v2836 = vsub.s32 %v2833, %v2835
  %v2837 = vrot.slane %v2794, %v2836
  %v2838 = vcombine.high %v2837, %v2837
  %v2840 = vunpack.c.l.s4 1983009808
  %v2841 = vunpack.c.0.s8 %v2840
  %v2842 = vlaneseq
  %v2843 = vshrl.u32 %v2842, 7
  %v2844 = vsub.s32 %v2841, %v2843
  %v2845 = vrot.slane %v2795, %v2844
  %v2846 = vcombine.high %v2845, %v2845
  %v2848 = vunpack.c.l.s4 1983009808
  %v2849 = vunpack.c.0.s8 %v2848
  %v2850 = vlaneseq
  %v2851 = vshrl.u32 %v2850, 7
  %v2852 = vsub.s32 %v2849, %v2851
  %v2853 = vrot.slane %v2796, %v2852
  %v2854 = vcombine.high %v2853, %v2853
  %v2856 = vunpack.c.l.s4 1983009808
  %v2857 = vunpack.c.0.s8 %v2856
  %v2858 = vlaneseq
  %v2859 = vshrl.u32 %v2858, 7
  %v2860 = vsub.s32 %v2857, %v2859
  %v2861 = vrot.slane %v2797, %v2860
  %v2862 = vcombine.high %v2861, %v2861
  %v2864 = vunpack.c.l.s4 1983009808
  %v2865 = vunpack.c.0.s8 %v2864
  %v2866 = vlaneseq
  %v2867 = vshrl.u32 %v2866, 7
  %v2868 = vsub.s32 %v2865, %v2867
  %v2869 = vrot.slane %v2798, %v2868
  %v2870 = vcombine.high %v2869, %v2869
  %v2872 = vshrl.u32 %v2813, 16
  %v2874 = vrot.slane %v2872, 6
  %v2875 = vshll.u32 %v2813, 16
  %v2877 = vrot.slane %v2875, 7
  %v2878 = vor.u32 %v2874, %v2877
  %v2879 = vrot.slane %v2878, 2
  %v2881 = vshll.u32 %v2814, 16
  %v2883 = vrot.slane %v2881, 7
  %v2884 = vsel %vm456, %v2879, %v2883
  %v2886 = vshrl.u32 %v2821, 16
  %v2888 = vrot.slane %v2886, 6
  %v2889 = vshll.u32 %v2821, 16
  %v2891 = vrot.slane %v2889, 7
  %v2892 = vor.u32 %v2888, %v2891
  %v2893 = vrot.slane %v2892, 2
  %v2895 = vshll.u32 %v2822, 16
  %v2897 = vrot.slane %v2895, 7
  %v2898 = vsel %vm456, %v2893, %v2897
  %v2900 = vshrl.u32 %v2829, 16
  %v2902 = vrot.slane %v2900, 6
  %v2903 = vshll.u32 %v2829, 16
  %v2905 = vrot.slane %v2903, 7
  %v2906 = vor.u32 %v2902, %v2905
  %v2907 = vrot.slane %v2906, 2
  %v2909 = vshll.u32 %v2830, 16
  %v2911 = vrot.slane %v2909, 7
  %v2912 = vsel %vm456, %v2907, %v2911
  %v2914 = vshrl.u32 %v2837, 16
  %v2916 = vrot.slane %v2914, 6
  %v2917 = vshll.u32 %v2837, 16
  %v2919 = vrot.slane %v2917, 7
  %v2920 = vor.u32 %v2916, %v2919
  %v2921 = vrot.slane %v2920, 2
  %v2923 = vshll.u32 %v2838, 16
  %v2925 = vrot.slane %v2923, 7
  %v2926 = vsel %vm456, %v2921, %v2925
  %v2928 = vshrl.u32 %v2845, 16
  %v2930 = vrot.slane %v2928, 6
  %v2931 = vshll.u32 %v2845, 16
  %v2933 = vrot.slane %v2931, 7
  %v2934 = vor.u32 %v2930, %v2933
  %v2935 = vrot.slane %v2934, 2
  %v2937 = vshll.u32 %v2846, 16
  %v2939 = vrot.slane %v2937, 7
  %v2940 = vsel %vm456, %v2935, %v2939
  %v2942 = vshrl.u32 %v2853, 16
  %v2944 = vrot.slane %v2942, 6
  %v2945 = vshll.u32 %v2853, 16
  %v2947 = vrot.slane %v2945, 7
  %v2948 = vor.u32 %v2944, %v2947
  %v2949 = vrot.slane %v2948, 2
  %v2951 = vshll.u32 %v2854, 16
  %v2953 = vrot.slane %v2951, 7
  %v2954 = vsel %vm456, %v2949, %v2953
  %v2956 = vshrl.u32 %v2861, 16
  %v2958 = vrot.slane %v2956, 6
  %v2959 = vshll.u32 %v2861, 16
  %v2961 = vrot.slane %v2959, 7
  %v2962 = vor.u32 %v2958, %v2961
  %v2963 = vrot.slane %v2962, 2
  %v2965 = vshll.u32 %v2862, 16
  %v2967 = vrot.slane %v2965, 7
  %v2968 = vsel %vm456, %v2963, %v2967
  %v2970 = vshrl.u32 %v2869, 16
  %v2972 = vrot.slane %v2970, 6
  %v2973 = vshll.u32 %v2869, 16
  %v2975 = vrot.slane %v2973, 7
  %v2976 = vor.u32 %v2972, %v2975
  %v2977 = vrot.slane %v2976, 2
  %v2979 = vshll.u32 %v2870, 16
  %v2981 = vrot.slane %v2979, 7
  %v2982 = vsel %vm456, %v2977, %v2981
  %s2983 = scalar_lea.vmem %s1, 704
  %v2984 = vld [vmem:[%s2983] sm:$0xf]
  %v2985 = vld [vmem:[%s2983 + $0x4] sm:$0xf]
  %v2986 = vld [vmem:[%s2983 + $0x8] sm:$0xf]
  %v2987 = vld [vmem:[%s2983 + $0xc] sm:$0xf]
  %v2988 = vld [vmem:[%s2983 + $0x10] sm:$0xf]
  %v2989 = vld [vmem:[%s2983 + $0x14] sm:$0xf]
  %v2990 = vld [vmem:[%s2983 + $0x18] sm:$0xf]
  %v2991 = vld [vmem:[%s2983 + $0x1c] sm:$0xf]
  %v2992 = vld [vmem:[%s2983 + $0x20] sm:$0xf]
  %v2993 = vld [vmem:[%s2983 + $0x24] sm:$0xf]
  %v2994 = vld [vmem:[%s2983 + $0x28] sm:$0xf]
  %v2995 = vld [vmem:[%s2983 + $0x2c] sm:$0xf]
  %v2996 = vld [vmem:[%s2983 + $0x30] sm:$0xf]
  %v2997 = vld [vmem:[%s2983 + $0x34] sm:$0xf]
  %v2998 = vld [vmem:[%s2983 + $0x38] sm:$0xf]
  %v2999 = vld [vmem:[%s2983 + $0x3c] sm:$0xf]
  %v3000 = vcombine.low %v2884, %v2898
  %v3001 = vcombine.low %v2912, %v2926
  %v3003 = vunpack.c.l.s4 1983009808
  %v3004 = vunpack.c.0.s8 %v3003
  %v3005 = vlaneseq
  %v3006 = vshrl.u32 %v3005, 7
  %v3007 = vsub.s32 %v3004, %v3006
  %v3008 = vrot.slane %v3000, %v3007
  %v3010 = vunpack.c.l.s4 1983009808
  %v3011 = vunpack.c.0.s8 %v3010
  %v3012 = vlaneseq
  %v3013 = vshrl.u32 %v3012, 7
  %v3014 = vsub.s32 %v3011, %v3013
  %v3015 = vrot.slane %v3001, %v3014
  %v3016 = vcombine.low %v3008, %v3015
  %v3017 = vcombine.low %v2940, %v2954
  %v3018 = vcombine.low %v2968, %v2982
  %v3020 = vunpack.c.l.s4 1983009808
  %v3021 = vunpack.c.0.s8 %v3020
  %v3022 = vlaneseq
  %v3023 = vshrl.u32 %v3022, 7
  %v3024 = vsub.s32 %v3021, %v3023
  %v3025 = vrot.slane %v3017, %v3024
  %v3027 = vunpack.c.l.s4 1983009808
  %v3028 = vunpack.c.0.s8 %v3027
  %v3029 = vlaneseq
  %v3030 = vshrl.u32 %v3029, 7
  %v3031 = vsub.s32 %v3028, %v3030
  %v3032 = vrot.slane %v3018, %v3031
  %v3033 = vcombine.low %v3025, %v3032
  %v3052 = vunpack.c.l.b16 %v2984
  %v3053 = vunpack.c.l.b16 %v2985
  %v3054 = vunpack.c.l.b16 %v2986
  %v3055 = vunpack.c.l.b16 %v2987
  %v3056 = vunpack.c.l.b16 %v2988
  %v3057 = vunpack.c.l.b16 %v2989
  %v3058 = vunpack.c.l.b16 %v2990
  %v3059 = vunpack.c.l.b16 %v2991
  %v3060 = vunpack.c.l.b16 %v2992
  %v3061 = vunpack.c.l.b16 %v2993
  %v3062 = vunpack.c.l.b16 %v2994
  %v3063 = vunpack.c.l.b16 %v2995
  %v3064 = vunpack.c.l.b16 %v2996
  %v3065 = vunpack.c.l.b16 %v2997
  %v3066 = vunpack.c.l.b16 %v2998
  %v3067 = vunpack.c.l.b16 %v2999
  %v3068 = vpack.c.b16 %v3053, %v3052
  %v3069 = vpack.c.b16 %v3055, %v3054
  %v3070 = vpack.c.b16 %v3057, %v3056
  %v3071 = vpack.c.b16 %v3059, %v3058
  %v3072 = vpack.c.b16 %v3061, %v3060
  %v3073 = vpack.c.b16 %v3063, %v3062
  %v3074 = vpack.c.b16 %v3065, %v3064
  %v3075 = vpack.c.b16 %v3067, %v3066
  %3084 = vmatprep.subr.bf16.mxu0 0
  %3085 = vmatpush1.bf16.msra.mxu0 %v3068
  %3086 = vmatprep.subr.bf16.mxu0 0
  %3087 = vmatpush1.bf16.msra.mxu0 %v3069
  %3088 = vmatprep.subr.bf16.mxu0 0
  %3089 = vmatpush1.bf16.msra.mxu0 %v3070
  %3090 = vmatprep.subr.bf16.mxu0 0
  %3091 = vmatpush1.bf16.msra.mxu0 %v3071
  %3092 = vmatprep.subr.bf16.mxu0 0
  %3093 = vmatpush1.bf16.msra.mxu0 %v3072
  %3094 = vmatprep.subr.bf16.mxu0 0
  %3095 = vmatpush1.bf16.msra.mxu0 %v3073
  %3096 = vmatprep.subr.bf16.mxu0 0
  %3097 = vmatpush1.bf16.msra.mxu0 %v3074
  %3098 = vmatprep.subr.bf16.mxu0 0
  %3099 = vmatpush1.bf16.msra.mxu0 %v3075
  %3100 = vmatprep.subr.bf16.mxu0 0
  %3101 = vmatpush1.bf16.msra.mxu0 0
  %3102 = vmatprep.subr.bf16.mxu0 0
  %3103 = vmatpush1.bf16.msra.mxu0 0
  %3104 = vmatprep.subr.bf16.mxu0 0
  %3105 = vmatpush1.bf16.msra.mxu0 0
  %3106 = vmatprep.subr.bf16.mxu0 0
  %3107 = vmatpush1.bf16.msra.mxu0 0
  %3108 = vmatprep.subr.bf16.mxu0 0
  %3109 = vmatpush1.bf16.msra.mxu0 0
  %3110 = vmatprep.subr.bf16.mxu0 0
  %3111 = vmatpush1.bf16.msra.mxu0 0
  %3112 = vmatprep.subr.bf16.mxu0 0
  %3113 = vmatpush1.bf16.msra.mxu0 0
  %3114 = vmatprep.subr.bf16.mxu0 0
  %3115 = vmatpush1.bf16.msra.mxu0 0
  %3116 = vmatprep.mubr.bf16.mxu0 0
  %3117 = vmatmul.mubr.bf16.gmra.mrb[0].mxu0 %v3016
  %v3118 = vpop.f32.mrb[0].mxu0
  %v3119 = vadd.f32 0.0, %v3118
  %v3120 = vpop.f32.mrb[0].mxu0
  %v3121 = vpop.f32.mrb[0].mxu0
  %v3122 = vadd.f32 0.0, %v3121
  %v3123 = vpop.f32.mrb[0].mxu0
  %3124 = vmatprep.mubr.bf16.mxu0 0
  %3125 = vmatmul.mubr.bf16.gmra.mrb[0].mxu0 %v3033
  %v3126 = vpop.f32.mrb[0].mxu0
  %v3127 = vadd.f32 0.0, %v3126
  %v3128 = vpop.f32.mrb[0].mxu0
  %v3129 = vpop.f32.mrb[0].mxu0
  %v3130 = vadd.f32 0.0, %v3129
  %v3131 = vpop.f32.mrb[0].mxu0
  %3132 = vdwg.mxu0
  %v3133 = vadd.f32 %v2787, %v3119
  %v3134 = vadd.f32 %v2788, %v3122
  %v3135 = vadd.f32 %v2789, %v3127
  %v3136 = vadd.f32 %v2790, %v3130
  %s3137 = scalar_lea.vmem %s35, 84
  %v3138 = vld [vmem:[%s3137] sm:$0x3]
  %v3139 = vld [vmem:[%s3137 + $0x4] sm:$0x3]
  %v3140 = vld [vmem:[%s3137 + $0x8] sm:$0x3]
  %v3141 = vld [vmem:[%s3137 + $0xc] sm:$0x3]
  %v3142 = vld [vmem:[%s3137 + $0x14] sm:$0x3]
  %v3143 = vld [vmem:[%s3137 + $0x18] sm:$0x3]
  %v3144 = vld [vmem:[%s3137 + $0x1c] sm:$0x3]
  %v3145 = vld [vmem:[%s3137 + $0x20] sm:$0x3]
  %s3146 = scalar_lea.vmem %s1, 768
  %v3147 = vld [vmem:[%s3146] sm:$0xf]
  %v3148 = vld [vmem:[%s3146 + $0x4] sm:$0xf]
  %v3149 = vld [vmem:[%s3146 + $0x8] sm:$0xf]
  %v3150 = vld [vmem:[%s3146 + $0xc] sm:$0xf]
  %v3151 = vld [vmem:[%s3146 + $0x10] sm:$0xf]
  %v3152 = vld [vmem:[%s3146 + $0x14] sm:$0xf]
  %v3153 = vld [vmem:[%s3146 + $0x18] sm:$0xf]
  %v3154 = vld [vmem:[%s3146 + $0x1c] sm:$0xf]
  %v3155 = vld [vmem:[%s3146 + $0x20] sm:$0xf]
  %v3156 = vld [vmem:[%s3146 + $0x24] sm:$0xf]
  %v3157 = vld [vmem:[%s3146 + $0x28] sm:$0xf]
  %v3158 = vld [vmem:[%s3146 + $0x2c] sm:$0xf]
  %v3159 = vld [vmem:[%s3146 + $0x30] sm:$0xf]
  %v3160 = vld [vmem:[%s3146 + $0x34] sm:$0xf]
  %v3161 = vld [vmem:[%s3146 + $0x38] sm:$0xf]
  %v3162 = vld [vmem:[%s3146 + $0x3c] sm:$0xf]
  %v3171 = vcombine.low %v3138, %v3139
  %v3172 = vcombine.low %v3140, %v3141
  %v3174 = vunpack.c.l.s4 1983009808
  %v3175 = vunpack.c.0.s8 %v3174
  %v3176 = vlaneseq
  %v3177 = vshrl.u32 %v3176, 7
  %v3178 = vsub.s32 %v3175, %v3177
  %v3179 = vrot.slane %v3171, %v3178
  %v3181 = vunpack.c.l.s4 1983009808
  %v3182 = vunpack.c.0.s8 %v3181
  %v3183 = vlaneseq
  %v3184 = vshrl.u32 %v3183, 7
  %v3185 = vsub.s32 %v3182, %v3184
  %v3186 = vrot.slane %v3172, %v3185
  %v3187 = vcombine.low %v3179, %v3186
  %v3188 = vcombine.low %v3142, %v3143
  %v3189 = vcombine.low %v3144, %v3145
  %v3191 = vunpack.c.l.s4 1983009808
  %v3192 = vunpack.c.0.s8 %v3191
  %v3193 = vlaneseq
  %v3194 = vshrl.u32 %v3193, 7
  %v3195 = vsub.s32 %v3192, %v3194
  %v3196 = vrot.slane %v3188, %v3195
  %v3198 = vunpack.c.l.s4 1983009808
  %v3199 = vunpack.c.0.s8 %v3198
  %v3200 = vlaneseq
  %v3201 = vshrl.u32 %v3200, 7
  %v3202 = vsub.s32 %v3199, %v3201
  %v3203 = vrot.slane %v3189, %v3202
  %v3204 = vcombine.low %v3196, %v3203
  %v3223 = vunpack.c.l.b16 %v3147
  %v3224 = vunpack.c.l.b16 %v3148
  %v3225 = vunpack.c.l.b16 %v3149
  %v3226 = vunpack.c.l.b16 %v3150
  %v3227 = vunpack.c.l.b16 %v3151
  %v3228 = vunpack.c.l.b16 %v3152
  %v3229 = vunpack.c.l.b16 %v3153
  %v3230 = vunpack.c.l.b16 %v3154
  %v3231 = vunpack.c.l.b16 %v3155
  %v3232 = vunpack.c.l.b16 %v3156
  %v3233 = vunpack.c.l.b16 %v3157
  %v3234 = vunpack.c.l.b16 %v3158
  %v3235 = vunpack.c.l.b16 %v3159
  %v3236 = vunpack.c.l.b16 %v3160
  %v3237 = vunpack.c.l.b16 %v3161
  %v3238 = vunpack.c.l.b16 %v3162
  %v3239 = vpack.c.b16 %v3224, %v3223
  %v3240 = vpack.c.b16 %v3226, %v3225
  %v3241 = vpack.c.b16 %v3228, %v3227
  %v3242 = vpack.c.b16 %v3230, %v3229
  %v3243 = vpack.c.b16 %v3232, %v3231
  %v3244 = vpack.c.b16 %v3234, %v3233
  %v3245 = vpack.c.b16 %v3236, %v3235
  %v3246 = vpack.c.b16 %v3238, %v3237
  %3255 = vmatprep.subr.bf16.mxu0 0
  %3256 = vmatpush1.bf16.msra.mxu0 %v3239
  %3257 = vmatprep.subr.bf16.mxu0 0
  %3258 = vmatpush1.bf16.msra.mxu0 %v3240
  %3259 = vmatprep.subr.bf16.mxu0 0
  %3260 = vmatpush1.bf16.msra.mxu0 %v3241
  %3261 = vmatprep.subr.bf16.mxu0 0
  %3262 = vmatpush1.bf16.msra.mxu0 %v3242
  %3263 = vmatprep.subr.bf16.mxu0 0
  %3264 = vmatpush1.bf16.msra.mxu0 %v3243
  %3265 = vmatprep.subr.bf16.mxu0 0
  %3266 = vmatpush1.bf16.msra.mxu0 %v3244
  %3267 = vmatprep.subr.bf16.mxu0 0
  %3268 = vmatpush1.bf16.msra.mxu0 %v3245
  %3269 = vmatprep.subr.bf16.mxu0 0
  %3270 = vmatpush1.bf16.msra.mxu0 %v3246
  %3271 = vmatprep.subr.bf16.mxu0 0
  %3272 = vmatpush1.bf16.msra.mxu0 0
  %3273 = vmatprep.subr.bf16.mxu0 0
  %3274 = vmatpush1.bf16.msra.mxu0 0
  %3275 = vmatprep.subr.bf16.mxu0 0
  %3276 = vmatpush1.bf16.msra.mxu0 0
  %3277 = vmatprep.subr.bf16.mxu0 0
  %3278 = vmatpush1.bf16.msra.mxu0 0
  %3279 = vmatprep.subr.bf16.mxu0 0
  %3280 = vmatpush1.bf16.msra.mxu0 0
  %3281 = vmatprep.subr.bf16.mxu0 0
  %3282 = vmatpush1.bf16.msra.mxu0 0
  %3283 = vmatprep.subr.bf16.mxu0 0
  %3284 = vmatpush1.bf16.msra.mxu0 0
  %3285 = vmatprep.subr.bf16.mxu0 0
  %3286 = vmatpush1.bf16.msra.mxu0 0
  %3287 = vmatprep.mubr.bf16.mxu0 0
  %3288 = vmatmul.mubr.bf16.gmra.mrb[0].mxu0 %v3187
  %v3289 = vpop.f32.mrb[0].mxu0
  %v3290 = vadd.f32 0.0, %v3289
  %v3291 = vpop.f32.mrb[0].mxu0
  %v3292 = vpop.f32.mrb[0].mxu0
  %v3293 = vadd.f32 0.0, %v3292
  %v3294 = vpop.f32.mrb[0].mxu0
  %3295 = vmatprep.mubr.bf16.mxu0 0
  %3296 = vmatmul.mubr.bf16.gmra.mrb[0].mxu0 %v3204
  %v3297 = vpop.f32.mrb[0].mxu0
  %v3298 = vadd.f32 0.0, %v3297
  %v3299 = vpop.f32.mrb[0].mxu0
  %v3300 = vpop.f32.mrb[0].mxu0
  %v3301 = vadd.f32 0.0, %v3300
  %v3302 = vpop.f32.mrb[0].mxu0
  %3303 = vdwg.mxu0
  %v3304 = vadd.f32 %v3133, %v3290
  %v3305 = vadd.f32 %v3134, %v3293
  %v3306 = vadd.f32 %v3135, %v3298
  %v3307 = vadd.f32 %v3136, %v3301
  %s3308 = scalar_lea.vmem %s35, 124
  %v3309 = vld [vmem:[%s3308] sm:$0x3]
  %v3310 = vld [vmem:[%s3308 + $0x4] sm:$0x3]
  %v3311 = vld [vmem:[%s3308 + $0x8] sm:$0x3]
  %v3312 = vld [vmem:[%s3308 + $0xc] sm:$0x3]
  %v3313 = vld [vmem:[%s3308 + $0x14] sm:$0x3]
  %v3314 = vld [vmem:[%s3308 + $0x18] sm:$0x3]
  %v3315 = vld [vmem:[%s3308 + $0x1c] sm:$0x3]
  %v3316 = vld [vmem:[%s3308 + $0x20] sm:$0x3]
  %s3317 = scalar_lea.vmem %s1, 832
  %v3318 = vld [vmem:[%s3317] sm:$0xf]
  %v3319 = vld [vmem:[%s3317 + $0x4] sm:$0xf]
  %v3320 = vld [vmem:[%s3317 + $0x8] sm:$0xf]
  %v3321 = vld [vmem:[%s3317 + $0xc] sm:$0xf]
  %v3322 = vld [vmem:[%s3317 + $0x10] sm:$0xf]
  %v3323 = vld [vmem:[%s3317 + $0x14] sm:$0xf]
  %v3324 = vld [vmem:[%s3317 + $0x18] sm:$0xf]
  %v3325 = vld [vmem:[%s3317 + $0x1c] sm:$0xf]
  %v3326 = vld [vmem:[%s3317 + $0x20] sm:$0xf]
  %v3327 = vld [vmem:[%s3317 + $0x24] sm:$0xf]
  %v3328 = vld [vmem:[%s3317 + $0x28] sm:$0xf]
  %v3329 = vld [vmem:[%s3317 + $0x2c] sm:$0xf]
  %v3330 = vld [vmem:[%s3317 + $0x30] sm:$0xf]
  %v3331 = vld [vmem:[%s3317 + $0x34] sm:$0xf]
  %v3332 = vld [vmem:[%s3317 + $0x38] sm:$0xf]
  %v3333 = vld [vmem:[%s3317 + $0x3c] sm:$0xf]
  %v3342 = vcombine.low %v3309, %v3310
  %v3343 = vcombine.low %v3311, %v3312
  %v3345 = vunpack.c.l.s4 1983009808
  %v3346 = vunpack.c.0.s8 %v3345
  %v3347 = vlaneseq
  %v3348 = vshrl.u32 %v3347, 7
  %v3349 = vsub.s32 %v3346, %v3348
  %v3350 = vrot.slane %v3342, %v3349
  %v3352 = vunpack.c.l.s4 1983009808
  %v3353 = vunpack.c.0.s8 %v3352
  %v3354 = vlaneseq
  %v3355 = vshrl.u32 %v3354, 7
  %v3356 = vsub.s32 %v3353, %v3355
  %v3357 = vrot.slane %v3343, %v3356
  %v3358 = vcombine.low %v3350, %v3357
  %v3359 = vcombine.low %v3313, %v3314
  %v3360 = vcombine.low %v3315, %v3316
  %v3362 = vunpack.c.l.s4 1983009808
  %v3363 = vunpack.c.0.s8 %v3362
  %v3364 = vlaneseq
  %v3365 = vshrl.u32 %v3364, 7
  %v3366 = vsub.s32 %v3363, %v3365
  %v3367 = vrot.slane %v3359, %v3366
  %v3369 = vunpack.c.l.s4 1983009808
  %v3370 = vunpack.c.0.s8 %v3369
  %v3371 = vlaneseq
  %v3372 = vshrl.u32 %v3371, 7
  %v3373 = vsub.s32 %v3370, %v3372
  %v3374 = vrot.slane %v3360, %v3373
  %v3375 = vcombine.low %v3367, %v3374
  %v3394 = vunpack.c.l.b16 %v3318
  %v3395 = vunpack.c.l.b16 %v3319
  %v3396 = vunpack.c.l.b16 %v3320
  %v3397 = vunpack.c.l.b16 %v3321
  %v3398 = vunpack.c.l.b16 %v3322
  %v3399 = vunpack.c.l.b16 %v3323
  %v3400 = vunpack.c.l.b16 %v3324
  %v3401 = vunpack.c.l.b16 %v3325
  %v3402 = vunpack.c.l.b16 %v3326
  %v3403 = vunpack.c.l.b16 %v3327
  %v3404 = vunpack.c.l.b16 %v3328
  %v3405 = vunpack.c.l.b16 %v3329
  %v3406 = vunpack.c.l.b16 %v3330
  %v3407 = vunpack.c.l.b16 %v3331
  %v3408 = vunpack.c.l.b16 %v3332
  %v3409 = vunpack.c.l.b16 %v3333
  %v3410 = vpack.c.b16 %v3395, %v3394
  %v3411 = vpack.c.b16 %v3397, %v3396
  %v3412 = vpack.c.b16 %v3399, %v3398
  %v3413 = vpack.c.b16 %v3401, %v3400
  %v3414 = vpack.c.b16 %v3403, %v3402
  %v3415 = vpack.c.b16 %v3405, %v3404
  %v3416 = vpack.c.b16 %v3407, %v3406
  %v3417 = vpack.c.b16 %v3409, %v3408
  %3426 = vmatprep.subr.bf16.mxu0 0
  %3427 = vmatpush1.bf16.msra.mxu0 %v3410
  %3428 = vmatprep.subr.bf16.mxu0 0
  %3429 = vmatpush1.bf16.msra.mxu0 %v3411
  %3430 = vmatprep.subr.bf16.mxu0 0
  %3431 = vmatpush1.bf16.msra.mxu0 %v3412
  %3432 = vmatprep.subr.bf16.mxu0 0
  %3433 = vmatpush1.bf16.msra.mxu0 %v3413
  %3434 = vmatprep.subr.bf16.mxu0 0
  %3435 = vmatpush1.bf16.msra.mxu0 %v3414
  %3436 = vmatprep.subr.bf16.mxu0 0
  %3437 = vmatpush1.bf16.msra.mxu0 %v3415
  %3438 = vmatprep.subr.bf16.mxu0 0
  %3439 = vmatpush1.bf16.msra.mxu0 %v3416
  %3440 = vmatprep.subr.bf16.mxu0 0
  %3441 = vmatpush1.bf16.msra.mxu0 %v3417
  %3442 = vmatprep.subr.bf16.mxu0 0
  %3443 = vmatpush1.bf16.msra.mxu0 0
  %3444 = vmatprep.subr.bf16.mxu0 0
  %3445 = vmatpush1.bf16.msra.mxu0 0
  %3446 = vmatprep.subr.bf16.mxu0 0
  %3447 = vmatpush1.bf16.msra.mxu0 0
  %3448 = vmatprep.subr.bf16.mxu0 0
  %3449 = vmatpush1.bf16.msra.mxu0 0
  %3450 = vmatprep.subr.bf16.mxu0 0
  %3451 = vmatpush1.bf16.msra.mxu0 0
  %3452 = vmatprep.subr.bf16.mxu0 0
  %3453 = vmatpush1.bf16.msra.mxu0 0
  %3454 = vmatprep.subr.bf16.mxu0 0
  %3455 = vmatpush1.bf16.msra.mxu0 0
  %3456 = vmatprep.subr.bf16.mxu0 0
  %3457 = vmatpush1.bf16.msra.mxu0 0
  %3458 = vmatprep.mubr.bf16.mxu0 0
  %3459 = vmatmul.mubr.bf16.gmra.mrb[0].mxu0 %v3358
  %v3460 = vpop.f32.mrb[0].mxu0
  %v3461 = vadd.f32 0.0, %v3460
  %v3462 = vpop.f32.mrb[0].mxu0
  %v3463 = vpop.f32.mrb[0].mxu0
  %v3464 = vadd.f32 0.0, %v3463
  %v3465 = vpop.f32.mrb[0].mxu0
  %3466 = vmatprep.mubr.bf16.mxu0 0
  %3467 = vmatmul.mubr.bf16.gmra.mrb[0].mxu0 %v3375
  %v3468 = vpop.f32.mrb[0].mxu0
  %v3469 = vadd.f32 0.0, %v3468
  %v3470 = vpop.f32.mrb[0].mxu0
  %v3471 = vpop.f32.mrb[0].mxu0
  %v3472 = vadd.f32 0.0, %v3471
  %v3473 = vpop.f32.mrb[0].mxu0
  %3474 = vdwg.mxu0
  %v3475 = vadd.f32 %v3304, %v3461
  %v3476 = vadd.f32 %v3305, %v3464
  %v3477 = vadd.f32 %v3306, %v3469
  %v3478 = vadd.f32 %v3307, %v3472
  %v3479 = vld [vmem:[%s3137] sm:$0x7]
  %v3480 = vld [vmem:[%s3137 + $0x4] sm:$0x7]
  %v3481 = vld [vmem:[%s3137 + $0x8] sm:$0x7]
  %v3482 = vld [vmem:[%s3137 + $0xc] sm:$0x7]
  %v3483 = vld [vmem:[%s3137 + $0x14] sm:$0x7]
  %v3484 = vld [vmem:[%s3137 + $0x18] sm:$0x7]
  %v3485 = vld [vmem:[%s3137 + $0x1c] sm:$0x7]
  %v3486 = vld [vmem:[%s3137 + $0x20] sm:$0x7]
  %v3496 = vunpack.c.l.s4 1983009808
  %v3497 = vunpack.c.0.s8 %v3496
  %v3498 = vlaneseq
  %v3499 = vshrl.u32 %v3498, 7
  %v3500 = vsub.s32 %v3497, %v3499
  %v3501 = vrot.slane %v3479, %v3500
  %v3502 = vcombine.high %v3501, %v3501
  %v3504 = vunpack.c.l.s4 1983009808
  %v3505 = vunpack.c.0.s8 %v3504
  %v3506 = vlaneseq
  %v3507 = vshrl.u32 %v3506, 7
  %v3508 = vsub.s32 %v3505, %v3507
  %v3509 = vrot.slane %v3480, %v3508
  %v3510 = vcombine.high %v3509, %v3509
  %v3512 = vunpack.c.l.s4 1983009808
  %v3513 = vunpack.c.0.s8 %v3512
  %v3514 = vlaneseq
  %v3515 = vshrl.u32 %v3514, 7
  %v3516 = vsub.s32 %v3513, %v3515
  %v3517 = vrot.slane %v3481, %v3516
  %v3518 = vcombine.high %v3517, %v3517
  %v3520 = vunpack.c.l.s4 1983009808
  %v3521 = vunpack.c.0.s8 %v3520
  %v3522 = vlaneseq
  %v3523 = vshrl.u32 %v3522, 7
  %v3524 = vsub.s32 %v3521, %v3523
  %v3525 = vrot.slane %v3482, %v3524
  %v3526 = vcombine.high %v3525, %v3525
  %v3528 = vunpack.c.l.s4 1983009808
  %v3529 = vunpack.c.0.s8 %v3528
  %v3530 = vlaneseq
  %v3531 = vshrl.u32 %v3530, 7
  %v3532 = vsub.s32 %v3529, %v3531
  %v3533 = vrot.slane %v3483, %v3532
  %v3534 = vcombine.high %v3533, %v3533
  %v3536 = vunpack.c.l.s4 1983009808
  %v3537 = vunpack.c.0.s8 %v3536
  %v3538 = vlaneseq
  %v3539 = vshrl.u32 %v3538, 7
  %v3540 = vsub.s32 %v3537, %v3539
  %v3541 = vrot.slane %v3484, %v3540
  %v3542 = vcombine.high %v3541, %v3541
  %v3544 = vunpack.c.l.s4 1983009808
  %v3545 = vunpack.c.0.s8 %v3544
  %v3546 = vlaneseq
  %v3547 = vshrl.u32 %v3546, 7
  %v3548 = vsub.s32 %v3545, %v3547
  %v3549 = vrot.slane %v3485, %v3548
  %v3550 = vcombine.high %v3549, %v3549
  %v3552 = vunpack.c.l.s4 1983009808
  %v3553 = vunpack.c.0.s8 %v3552
  %v3554 = vlaneseq
  %v3555 = vshrl.u32 %v3554, 7
  %v3556 = vsub.s32 %v3553, %v3555
  %v3557 = vrot.slane %v3486, %v3556
  %v3558 = vcombine.high %v3557, %v3557
  %v3560 = vshrl.u32 %v3501, 16
  %v3562 = vrot.slane %v3560, 6
  %v3563 = vshll.u32 %v3501, 16
  %v3565 = vrot.slane %v3563, 7
  %v3566 = vor.u32 %v3562, %v3565
  %v3567 = vrot.slane %v3566, 2
  %v3569 = vshll.u32 %v3502, 16
  %v3571 = vrot.slane %v3569, 7
  %v3572 = vsel %vm456, %v3567, %v3571
  %v3574 = vshrl.u32 %v3509, 16
  %v3576 = vrot.slane %v3574, 6
  %v3577 = vshll.u32 %v3509, 16
  %v3579 = vrot.slane %v3577, 7
  %v3580 = vor.u32 %v3576, %v3579
  %v3581 = vrot.slane %v3580, 2
  %v3583 = vshll.u32 %v3510, 16
  %v3585 = vrot.slane %v3583, 7
  %v3586 = vsel %vm456, %v3581, %v3585
  %v3588 = vshrl.u32 %v3517, 16
  %v3590 = vrot.slane %v3588, 6
  %v3591 = vshll.u32 %v3517, 16
  %v3593 = vrot.slane %v3591, 7
  %v3594 = vor.u32 %v3590, %v3593
  %v3595 = vrot.slane %v3594, 2
  %v3597 = vshll.u32 %v3518, 16
  %v3599 = vrot.slane %v3597, 7
  %v3600 = vsel %vm456, %v3595, %v3599
  %v3602 = vshrl.u32 %v3525, 16
  %v3604 = vrot.slane %v3602, 6
  %v3605 = vshll.u32 %v3525, 16
  %v3607 = vrot.slane %v3605, 7
  %v3608 = vor.u32 %v3604, %v3607
  %v3609 = vrot.slane %v3608, 2
  %v3611 = vshll.u32 %v3526, 16
  %v3613 = vrot.slane %v3611, 7
  %v3614 = vsel %vm456, %v3609, %v3613
  %v3616 = vshrl.u32 %v3533, 16
  %v3618 = vrot.slane %v3616, 6
  %v3619 = vshll.u32 %v3533, 16
  %v3621 = vrot.slane %v3619, 7
  %v3622 = vor.u32 %v3618, %v3621
  %v3623 = vrot.slane %v3622, 2
  %v3625 = vshll.u32 %v3534, 16
  %v3627 = vrot.slane %v3625, 7
  %v3628 = vsel %vm456, %v3623, %v3627
  %v3630 = vshrl.u32 %v3541, 16
  %v3632 = vrot.slane %v3630, 6
  %v3633 = vshll.u32 %v3541, 16
  %v3635 = vrot.slane %v3633, 7
  %v3636 = vor.u32 %v3632, %v3635
  %v3637 = vrot.slane %v3636, 2
  %v3639 = vshll.u32 %v3542, 16
  %v3641 = vrot.slane %v3639, 7
  %v3642 = vsel %vm456, %v3637, %v3641
  %v3644 = vshrl.u32 %v3549, 16
  %v3646 = vrot.slane %v3644, 6
  %v3647 = vshll.u32 %v3549, 16
  %v3649 = vrot.slane %v3647, 7
  %v3650 = vor.u32 %v3646, %v3649
  %v3651 = vrot.slane %v3650, 2
  %v3653 = vshll.u32 %v3550, 16
  %v3655 = vrot.slane %v3653, 7
  %v3656 = vsel %vm456, %v3651, %v3655
  %v3658 = vshrl.u32 %v3557, 16
  %v3660 = vrot.slane %v3658, 6
  %v3661 = vshll.u32 %v3557, 16
  %v3663 = vrot.slane %v3661, 7
  %v3664 = vor.u32 %v3660, %v3663
  %v3665 = vrot.slane %v3664, 2
  %v3667 = vshll.u32 %v3558, 16
  %v3669 = vrot.slane %v3667, 7
  %v3670 = vsel %vm456, %v3665, %v3669
  %s3671 = scalar_lea.vmem %s1, 896
  %v3672 = vld [vmem:[%s3671] sm:$0xf]
  %v3673 = vld [vmem:[%s3671 + $0x4] sm:$0xf]
  %v3674 = vld [vmem:[%s3671 + $0x8] sm:$0xf]
  %v3675 = vld [vmem:[%s3671 + $0xc] sm:$0xf]
  %v3676 = vld [vmem:[%s3671 + $0x10] sm:$0xf]
  %v3677 = vld [vmem:[%s3671 + $0x14] sm:$0xf]
  %v3678 = vld [vmem:[%s3671 + $0x18] sm:$0xf]
  %v3679 = vld [vmem:[%s3671 + $0x1c] sm:$0xf]
  %v3680 = vld [vmem:[%s3671 + $0x20] sm:$0xf]
  %v3681 = vld [vmem:[%s3671 + $0x24] sm:$0xf]
  %v3682 = vld [vmem:[%s3671 + $0x28] sm:$0xf]
  %v3683 = vld [vmem:[%s3671 + $0x2c] sm:$0xf]
  %v3684 = vld [vmem:[%s3671 + $0x30] sm:$0xf]
  %v3685 = vld [vmem:[%s3671 + $0x34] sm:$0xf]
  %v3686 = vld [vmem:[%s3671 + $0x38] sm:$0xf]
  %v3687 = vld [vmem:[%s3671 + $0x3c] sm:$0xf]
  %v3688 = vcombine.low %v3572, %v3586
  %v3689 = vcombine.low %v3600, %v3614
  %v3691 = vunpack.c.l.s4 1983009808
  %v3692 = vunpack.c.0.s8 %v3691
  %v3693 = vlaneseq
  %v3694 = vshrl.u32 %v3693, 7
  %v3695 = vsub.s32 %v3692, %v3694
  %v3696 = vrot.slane %v3688, %v3695
  %v3698 = vunpack.c.l.s4 1983009808
  %v3699 = vunpack.c.0.s8 %v3698
  %v3700 = vlaneseq
  %v3701 = vshrl.u32 %v3700, 7
  %v3702 = vsub.s32 %v3699, %v3701
  %v3703 = vrot.slane %v3689, %v3702
  %v3704 = vcombine.low %v3696, %v3703
  %v3705 = vcombine.low %v3628, %v3642
  %v3706 = vcombine.low %v3656, %v3670
  %v3708 = vunpack.c.l.s4 1983009808
  %v3709 = vunpack.c.0.s8 %v3708
  %v3710 = vlaneseq
  %v3711 = vshrl.u32 %v3710, 7
  %v3712 = vsub.s32 %v3709, %v3711
  %v3713 = vrot.slane %v3705, %v3712
  %v3715 = vunpack.c.l.s4 1983009808
  %v3716 = vunpack.c.0.s8 %v3715
  %v3717 = vlaneseq
  %v3718 = vshrl.u32 %v3717, 7
  %v3719 = vsub.s32 %v3716, %v3718
  %v3720 = vrot.slane %v3706, %v3719
  %v3721 = vcombine.low %v3713, %v3720
  %v3740 = vunpack.c.l.b16 %v3672
  %v3741 = vunpack.c.l.b16 %v3673
  %v3742 = vunpack.c.l.b16 %v3674
  %v3743 = vunpack.c.l.b16 %v3675
  %v3744 = vunpack.c.l.b16 %v3676
  %v3745 = vunpack.c.l.b16 %v3677
  %v3746 = vunpack.c.l.b16 %v3678
  %v3747 = vunpack.c.l.b16 %v3679
  %v3748 = vunpack.c.l.b16 %v3680
  %v3749 = vunpack.c.l.b16 %v3681
  %v3750 = vunpack.c.l.b16 %v3682
  %v3751 = vunpack.c.l.b16 %v3683
  %v3752 = vunpack.c.l.b16 %v3684
  %v3753 = vunpack.c.l.b16 %v3685
  %v3754 = vunpack.c.l.b16 %v3686
  %v3755 = vunpack.c.l.b16 %v3687
  %v3756 = vpack.c.b16 %v3741, %v3740
  %v3757 = vpack.c.b16 %v3743, %v3742
  %v3758 = vpack.c.b16 %v3745, %v3744
  %v3759 = vpack.c.b16 %v3747, %v3746
  %v3760 = vpack.c.b16 %v3749, %v3748
  %v3761 = vpack.c.b16 %v3751, %v3750
  %v3762 = vpack.c.b16 %v3753, %v3752
  %v3763 = vpack.c.b16 %v3755, %v3754
  %3772 = vmatprep.subr.bf16.mxu0 0
  %3773 = vmatpush1.bf16.msra.mxu0 %v3756
  %3774 = vmatprep.subr.bf16.mxu0 0
  %3775 = vmatpush1.bf16.msra.mxu0 %v3757
  %3776 = vmatprep.subr.bf16.mxu0 0
  %3777 = vmatpush1.bf16.msra.mxu0 %v3758
  %3778 = vmatprep.subr.bf16.mxu0 0
  %3779 = vmatpush1.bf16.msra.mxu0 %v3759
  %3780 = vmatprep.subr.bf16.mxu0 0
  %3781 = vmatpush1.bf16.msra.mxu0 %v3760
  %3782 = vmatprep.subr.bf16.mxu0 0
  %3783 = vmatpush1.bf16.msra.mxu0 %v3761
  %3784 = vmatprep.subr.bf16.mxu0 0
  %3785 = vmatpush1.bf16.msra.mxu0 %v3762
  %3786 = vmatprep.subr.bf16.mxu0 0
  %3787 = vmatpush1.bf16.msra.mxu0 %v3763
  %3788 = vmatprep.subr.bf16.mxu0 0
  %3789 = vmatpush1.bf16.msra.mxu0 0
  %3790 = vmatprep.subr.bf16.mxu0 0
  %3791 = vmatpush1.bf16.msra.mxu0 0
  %3792 = vmatprep.subr.bf16.mxu0 0
  %3793 = vmatpush1.bf16.msra.mxu0 0
  %3794 = vmatprep.subr.bf16.mxu0 0
  %3795 = vmatpush1.bf16.msra.mxu0 0
  %3796 = vmatprep.subr.bf16.mxu0 0
  %3797 = vmatpush1.bf16.msra.mxu0 0
  %3798 = vmatprep.subr.bf16.mxu0 0
  %3799 = vmatpush1.bf16.msra.mxu0 0
  %3800 = vmatprep.subr.bf16.mxu0 0
  %3801 = vmatpush1.bf16.msra.mxu0 0
  %3802 = vmatprep.subr.bf16.mxu0 0
  %3803 = vmatpush1.bf16.msra.mxu0 0
  %3804 = vmatprep.mubr.bf16.mxu0 0
  %3805 = vmatmul.mubr.bf16.gmra.mrb[0].mxu0 %v3704
  %v3806 = vpop.f32.mrb[0].mxu0
  %v3807 = vadd.f32 0.0, %v3806
  %v3808 = vpop.f32.mrb[0].mxu0
  %v3809 = vpop.f32.mrb[0].mxu0
  %v3810 = vadd.f32 0.0, %v3809
  %v3811 = vpop.f32.mrb[0].mxu0
  %3812 = vmatprep.mubr.bf16.mxu0 0
  %3813 = vmatmul.mubr.bf16.gmra.mrb[0].mxu0 %v3721
  %v3814 = vpop.f32.mrb[0].mxu0
  %v3815 = vadd.f32 0.0, %v3814
  %v3816 = vpop.f32.mrb[0].mxu0
  %v3817 = vpop.f32.mrb[0].mxu0
  %v3818 = vadd.f32 0.0, %v3817
  %v3819 = vpop.f32.mrb[0].mxu0
  %3820 = vdwg.mxu0
  %v3821 = vadd.f32 %v3475, %v3807
  %v3822 = vadd.f32 %v3476, %v3810
  %v3823 = vadd.f32 %v3477, %v3815
  %v3824 = vadd.f32 %v3478, %v3818
  %v3825 = vld [vmem:[%s3308] sm:$0x7]
  %v3826 = vld [vmem:[%s3308 + $0x4] sm:$0x7]
  %v3827 = vld [vmem:[%s3308 + $0x8] sm:$0x7]
  %v3828 = vld [vmem:[%s3308 + $0xc] sm:$0x7]
  %v3829 = vld [vmem:[%s3308 + $0x14] sm:$0x7]
  %v3830 = vld [vmem:[%s3308 + $0x18] sm:$0x7]
  %v3831 = vld [vmem:[%s3308 + $0x1c] sm:$0x7]
  %v3832 = vld [vmem:[%s3308 + $0x20] sm:$0x7]
  %v3842 = vunpack.c.l.s4 1983009808
  %v3843 = vunpack.c.0.s8 %v3842
  %v3844 = vlaneseq
  %v3845 = vshrl.u32 %v3844, 7
  %v3846 = vsub.s32 %v3843, %v3845
  %v3847 = vrot.slane %v3825, %v3846
  %v3848 = vcombine.high %v3847, %v3847
  %v3850 = vunpack.c.l.s4 1983009808
  %v3851 = vunpack.c.0.s8 %v3850
  %v3852 = vlaneseq
  %v3853 = vshrl.u32 %v3852, 7
  %v3854 = vsub.s32 %v3851, %v3853
  %v3855 = vrot.slane %v3826, %v3854
  %v3856 = vcombine.high %v3855, %v3855
  %v3858 = vunpack.c.l.s4 1983009808
  %v3859 = vunpack.c.0.s8 %v3858
  %v3860 = vlaneseq
  %v3861 = vshrl.u32 %v3860, 7
  %v3862 = vsub.s32 %v3859, %v3861
  %v3863 = vrot.slane %v3827, %v3862
  %v3864 = vcombine.high %v3863, %v3863
  %v3866 = vunpack.c.l.s4 1983009808
  %v3867 = vunpack.c.0.s8 %v3866
  %v3868 = vlaneseq
  %v3869 = vshrl.u32 %v3868, 7
  %v3870 = vsub.s32 %v3867, %v3869
  %v3871 = vrot.slane %v3828, %v3870
  %v3872 = vcombine.high %v3871, %v3871
  %v3874 = vunpack.c.l.s4 1983009808
  %v3875 = vunpack.c.0.s8 %v3874
  %v3876 = vlaneseq
  %v3877 = vshrl.u32 %v3876, 7
  %v3878 = vsub.s32 %v3875, %v3877
  %v3879 = vrot.slane %v3829, %v3878
  %v3880 = vcombine.high %v3879, %v3879
  %v3882 = vunpack.c.l.s4 1983009808
  %v3883 = vunpack.c.0.s8 %v3882
  %v3884 = vlaneseq
  %v3885 = vshrl.u32 %v3884, 7
  %v3886 = vsub.s32 %v3883, %v3885
  %v3887 = vrot.slane %v3830, %v3886
  %v3888 = vcombine.high %v3887, %v3887
  %v3890 = vunpack.c.l.s4 1983009808
  %v3891 = vunpack.c.0.s8 %v3890
  %v3892 = vlaneseq
  %v3893 = vshrl.u32 %v3892, 7
  %v3894 = vsub.s32 %v3891, %v3893
  %v3895 = vrot.slane %v3831, %v3894
  %v3896 = vcombine.high %v3895, %v3895
  %v3898 = vunpack.c.l.s4 1983009808
  %v3899 = vunpack.c.0.s8 %v3898
  %v3900 = vlaneseq
  %v3901 = vshrl.u32 %v3900, 7
  %v3902 = vsub.s32 %v3899, %v3901
  %v3903 = vrot.slane %v3832, %v3902
  %v3904 = vcombine.high %v3903, %v3903
  %v3906 = vshrl.u32 %v3847, 16
  %v3908 = vrot.slane %v3906, 6
  %v3909 = vshll.u32 %v3847, 16
  %v3911 = vrot.slane %v3909, 7
  %v3912 = vor.u32 %v3908, %v3911
  %v3913 = vrot.slane %v3912, 2
  %v3915 = vshll.u32 %v3848, 16
  %v3917 = vrot.slane %v3915, 7
  %v3918 = vsel %vm456, %v3913, %v3917
  %v3920 = vshrl.u32 %v3855, 16
  %v3922 = vrot.slane %v3920, 6
  %v3923 = vshll.u32 %v3855, 16
  %v3925 = vrot.slane %v3923, 7
  %v3926 = vor.u32 %v3922, %v3925
  %v3927 = vrot.slane %v3926, 2
  %v3929 = vshll.u32 %v3856, 16
  %v3931 = vrot.slane %v3929, 7
  %v3932 = vsel %vm456, %v3927, %v3931
  %v3934 = vshrl.u32 %v3863, 16
  %v3936 = vrot.slane %v3934, 6
  %v3937 = vshll.u32 %v3863, 16
  %v3939 = vrot.slane %v3937, 7
  %v3940 = vor.u32 %v3936, %v3939
  %v3941 = vrot.slane %v3940, 2
  %v3943 = vshll.u32 %v3864, 16
  %v3945 = vrot.slane %v3943, 7
  %v3946 = vsel %vm456, %v3941, %v3945
  %v3948 = vshrl.u32 %v3871, 16
  %v3950 = vrot.slane %v3948, 6
  %v3951 = vshll.u32 %v3871, 16
  %v3953 = vrot.slane %v3951, 7
  %v3954 = vor.u32 %v3950, %v3953
  %v3955 = vrot.slane %v3954, 2
  %v3957 = vshll.u32 %v3872, 16
  %v3959 = vrot.slane %v3957, 7
  %v3960 = vsel %vm456, %v3955, %v3959
  %v3962 = vshrl.u32 %v3879, 16
  %v3964 = vrot.slane %v3962, 6
  %v3965 = vshll.u32 %v3879, 16
  %v3967 = vrot.slane %v3965, 7
  %v3968 = vor.u32 %v3964, %v3967
  %v3969 = vrot.slane %v3968, 2
  %v3971 = vshll.u32 %v3880, 16
  %v3973 = vrot.slane %v3971, 7
  %v3974 = vsel %vm456, %v3969, %v3973
  %v3976 = vshrl.u32 %v3887, 16
  %v3978 = vrot.slane %v3976, 6
  %v3979 = vshll.u32 %v3887, 16
  %v3981 = vrot.slane %v3979, 7
  %v3982 = vor.u32 %v3978, %v3981
  %v3983 = vrot.slane %v3982, 2
  %v3985 = vshll.u32 %v3888, 16
  %v3987 = vrot.slane %v3985, 7
  %v3988 = vsel %vm456, %v3983, %v3987
  %v3990 = vshrl.u32 %v3895, 16
  %v3992 = vrot.slane %v3990, 6
  %v3993 = vshll.u32 %v3895, 16
  %v3995 = vrot.slane %v3993, 7
  %v3996 = vor.u32 %v3992, %v3995
  %v3997 = vrot.slane %v3996, 2
  %v3999 = vshll.u32 %v3896, 16
  %v4001 = vrot.slane %v3999, 7
  %v4002 = vsel %vm456, %v3997, %v4001
  %v4004 = vshrl.u32 %v3903, 16
  %v4006 = vrot.slane %v4004, 6
  %v4007 = vshll.u32 %v3903, 16
  %v4009 = vrot.slane %v4007, 7
  %v4010 = vor.u32 %v4006, %v4009
  %v4011 = vrot.slane %v4010, 2
  %v4013 = vshll.u32 %v3904, 16
  %v4015 = vrot.slane %v4013, 7
  %v4016 = vsel %vm456, %v4011, %v4015
  %s4017 = scalar_lea.vmem %s1, 960
  %v4018 = vld [vmem:[%s4017] sm:$0xf]
  %v4019 = vld [vmem:[%s4017 + $0x4] sm:$0xf]
  %v4020 = vld [vmem:[%s4017 + $0x8] sm:$0xf]
  %v4021 = vld [vmem:[%s4017 + $0xc] sm:$0xf]
  %v4022 = vld [vmem:[%s4017 + $0x10] sm:$0xf]
  %v4023 = vld [vmem:[%s4017 + $0x14] sm:$0xf]
  %v4024 = vld [vmem:[%s4017 + $0x18] sm:$0xf]
  %v4025 = vld [vmem:[%s4017 + $0x1c] sm:$0xf]
  %v4026 = vld [vmem:[%s4017 + $0x20] sm:$0xf]
  %v4027 = vld [vmem:[%s4017 + $0x24] sm:$0xf]
  %v4028 = vld [vmem:[%s4017 + $0x28] sm:$0xf]
  %v4029 = vld [vmem:[%s4017 + $0x2c] sm:$0xf]
  %v4030 = vld [vmem:[%s4017 + $0x30] sm:$0xf]
  %v4031 = vld [vmem:[%s4017 + $0x34] sm:$0xf]
  %v4032 = vld [vmem:[%s4017 + $0x38] sm:$0xf]
  %v4033 = vld [vmem:[%s4017 + $0x3c] sm:$0xf]
  %v4034 = vcombine.low %v3918, %v3932
  %v4035 = vcombine.low %v3946, %v3960
  %v4037 = vunpack.c.l.s4 1983009808
  %v4038 = vunpack.c.0.s8 %v4037
  %v4039 = vlaneseq
  %v4040 = vshrl.u32 %v4039, 7
  %v4041 = vsub.s32 %v4038, %v4040
  %v4042 = vrot.slane %v4034, %v4041
  %v4044 = vunpack.c.l.s4 1983009808
  %v4045 = vunpack.c.0.s8 %v4044
  %v4046 = vlaneseq
  %v4047 = vshrl.u32 %v4046, 7
  %v4048 = vsub.s32 %v4045, %v4047
  %v4049 = vrot.slane %v4035, %v4048
  %v4050 = vcombine.low %v4042, %v4049
  %v4051 = vcombine.low %v3974, %v3988
  %v4052 = vcombine.low %v4002, %v4016
  %v4054 = vunpack.c.l.s4 1983009808
  %v4055 = vunpack.c.0.s8 %v4054
  %v4056 = vlaneseq
  %v4057 = vshrl.u32 %v4056, 7
  %v4058 = vsub.s32 %v4055, %v4057
  %v4059 = vrot.slane %v4051, %v4058
  %v4061 = vunpack.c.l.s4 1983009808
  %v4062 = vunpack.c.0.s8 %v4061
  %v4063 = vlaneseq
  %v4064 = vshrl.u32 %v4063, 7
  %v4065 = vsub.s32 %v4062, %v4064
  %v4066 = vrot.slane %v4052, %v4065
  %v4067 = vcombine.low %v4059, %v4066
  %v4086 = vunpack.c.l.b16 %v4018
  %v4087 = vunpack.c.l.b16 %v4019
  %v4088 = vunpack.c.l.b16 %v4020
  %v4089 = vunpack.c.l.b16 %v4021
  %v4090 = vunpack.c.l.b16 %v4022
  %v4091 = vunpack.c.l.b16 %v4023
  %v4092 = vunpack.c.l.b16 %v4024
  %v4093 = vunpack.c.l.b16 %v4025
  %v4094 = vunpack.c.l.b16 %v4026
  %v4095 = vunpack.c.l.b16 %v4027
  %v4096 = vunpack.c.l.b16 %v4028
  %v4097 = vunpack.c.l.b16 %v4029
  %v4098 = vunpack.c.l.b16 %v4030
  %v4099 = vunpack.c.l.b16 %v4031
  %v4100 = vunpack.c.l.b16 %v4032
  %v4101 = vunpack.c.l.b16 %v4033
  %v4102 = vpack.c.b16 %v4087, %v4086
  %v4103 = vpack.c.b16 %v4089, %v4088
  %v4104 = vpack.c.b16 %v4091, %v4090
  %v4105 = vpack.c.b16 %v4093, %v4092
  %v4106 = vpack.c.b16 %v4095, %v4094
  %v4107 = vpack.c.b16 %v4097, %v4096
  %v4108 = vpack.c.b16 %v4099, %v4098
  %v4109 = vpack.c.b16 %v4101, %v4100
  %4118 = vmatprep.subr.bf16.mxu0 0
  %4119 = vmatpush1.bf16.msra.mxu0 %v4102
  %4120 = vmatprep.subr.bf16.mxu0 0
  %4121 = vmatpush1.bf16.msra.mxu0 %v4103
  %4122 = vmatprep.subr.bf16.mxu0 0
  %4123 = vmatpush1.bf16.msra.mxu0 %v4104
  %4124 = vmatprep.subr.bf16.mxu0 0
  %4125 = vmatpush1.bf16.msra.mxu0 %v4105
  %4126 = vmatprep.subr.bf16.mxu0 0
  %4127 = vmatpush1.bf16.msra.mxu0 %v4106
  %4128 = vmatprep.subr.bf16.mxu0 0
  %4129 = vmatpush1.bf16.msra.mxu0 %v4107
  %4130 = vmatprep.subr.bf16.mxu0 0
  %4131 = vmatpush1.bf16.msra.mxu0 %v4108
  %4132 = vmatprep.subr.bf16.mxu0 0
  %4133 = vmatpush1.bf16.msra.mxu0 %v4109
  %4134 = vmatprep.subr.bf16.mxu0 0
  %4135 = vmatpush1.bf16.msra.mxu0 0
  %4136 = vmatprep.subr.bf16.mxu0 0
  %4137 = vmatpush1.bf16.msra.mxu0 0
  %4138 = vmatprep.subr.bf16.mxu0 0
  %4139 = vmatpush1.bf16.msra.mxu0 0
  %4140 = vmatprep.subr.bf16.mxu0 0
  %4141 = vmatpush1.bf16.msra.mxu0 0
  %4142 = vmatprep.subr.bf16.mxu0 0
  %4143 = vmatpush1.bf16.msra.mxu0 0
  %4144 = vmatprep.subr.bf16.mxu0 0
  %4145 = vmatpush1.bf16.msra.mxu0 0
  %4146 = vmatprep.subr.bf16.mxu0 0
  %4147 = vmatpush1.bf16.msra.mxu0 0
  %4148 = vmatprep.subr.bf16.mxu0 0
  %4149 = vmatpush1.bf16.msra.mxu0 0
  %4150 = vmatprep.mubr.bf16.mxu0 0
  %4151 = vmatmul.mubr.bf16.gmra.mrb[0].mxu0 %v4050
  %v4152 = vpop.f32.mrb[0].mxu0
  %v4153 = vadd.f32 0.0, %v4152
  %v4154 = vpop.f32.mrb[0].mxu0
  %v4155 = vpop.f32.mrb[0].mxu0
  %v4156 = vadd.f32 0.0, %v4155
  %v4157 = vpop.f32.mrb[0].mxu0
  %4158 = vmatprep.mubr.bf16.mxu0 0
  %4159 = vmatmul.mubr.bf16.gmra.mrb[0].mxu0 %v4067
  %v4160 = vpop.f32.mrb[0].mxu0
  %v4161 = vadd.f32 0.0, %v4160
  %v4162 = vpop.f32.mrb[0].mxu0
  %v4163 = vpop.f32.mrb[0].mxu0
  %v4164 = vadd.f32 0.0, %v4163
  %v4165 = vpop.f32.mrb[0].mxu0
  %4166 = vdwg.mxu0
  %v4167 = vadd.f32 %v3821, %v4153
  %v4168 = vadd.f32 %v3822, %v4156
  %v4169 = vadd.f32 %v3823, %v4161
  %v4170 = vadd.f32 %v3824, %v4164
  %v4171 = vld [vmem:[%s2] sm:$0x1]
  %v4173 = vlaneseq
  %v4174 = vshrl.u32 %v4173, 7
  %v4175 = vsub.s32 0, %v4174
  %v4176 = vrot.slane %v4171, %v4175
  %v4178 = vadd.f32 %v4167, %v4176
  %v4179 = vadd.f32 %v4168, %v4176
  %v4180 = vadd.f32 %v4169, %v4176
  %v4181 = vadd.f32 %v4170, %v4176
  %v4186 = vcombine.high %v4178, %v4178
  %v4187 = vcombine.high %v4179, %v4179
  %v4188 = vcombine.high %v4180, %v4180
  %v4189 = vcombine.high %v4181, %v4181
  %v4194 = vpack.c.bf16 %v4178, %v4178
  %v4195 = vpack.c.bf16 %v4186, %v4186
  %v4196 = vpack.c.bf16 %v4179, %v4179
  %v4197 = vpack.c.bf16 %v4187, %v4187
  %v4198 = vpack.c.bf16 %v4180, %v4180
  %v4199 = vpack.c.bf16 %v4188, %v4188
  %v4200 = vpack.c.bf16 %v4181, %v4181
  %v4201 = vpack.c.bf16 %v4189, %v4189
  %4202 = vst [vmem:[%s3] sm:$0x3] %v4194
  %4203 = vst [vmem:[%s3 + $0x2] sm:$0x3] %v4195
  %4204 = vst [vmem:[%s3 + $0x4] sm:$0x3] %v4196
  %4205 = vst [vmem:[%s3 + $0x6] sm:$0x3] %v4197
  %4206 = vst [vmem:[%s3 + $0x8] sm:$0x3] %v4198
  %4207 = vst [vmem:[%s3 + $0xa] sm:$0x3] %v4199
  %4208 = vst [vmem:[%s3 + $0xc] sm:$0x3] %v4200
  %4209 = vst [vmem:[%s3 + $0xe] sm:$0x3] %v4201
  %v4210 = vadd.f32 %v4178, %v4179
  %v4211 = vadd.f32 %v4210, %v4180
  %v4212 = vadd.f32 %v4211, %v4181
  %v4213 = vrot.slane %v4212, 4
  %v4214 = vadd.f32 %v4212, %v4213
  %v4215 = vrot.slane %v4214, 2
  %v4216 = vadd.f32 %v4214, %v4215
  %v4217 = vrot.slane %v4216, 1
  %v4218 = vadd.f32 %v4216, %v4217
  %4219 = vst [vmem:[%s4] sm:$0x1] %v4218
  %v4220 = vmul.f32 %v4178, %v4178
  %v4221 = vmul.f32 %v4179, %v4179
  %v4222 = vmul.f32 %v4180, %v4180
  %v4223 = vmul.f32 %v4181, %v4181
  %v4224 = vadd.f32 %v4220, %v4221
  %v4225 = vadd.f32 %v4224, %v4222
  %v4226 = vadd.f32 %v4225, %v4223
  %v4227 = vrot.slane %v4226, 4
  %v4228 = vadd.f32 %v4226, %v4227
  %v4229 = vrot.slane %v4228, 2
  %v4230 = vadd.f32 %v4228, %v4229
  %v4231 = vrot.slane %v4230, 1
  %v4232 = vadd.f32 %v4230, %v4231
  %4233 = vst [vmem:[%s5] sm:$0x1] %v4232
  // Predicated region
  $region14: #{encoder_apply.6} parent=0 // pred_check
    _
  $region15: #{encoder_apply.6} parent=0 // pred_check_branch
    %4235 = sbr.rel (0) target = $region17
  $region16: #{encoder_apply.6} parent=0 // pred_region
    _
  $region17: #{encoder_apply.6} parent=0 // pred_fallthru
    _
  // Predicated region
  $region18: #{encoder_apply.6} parent=0 // pred_check
    _
  $region19: #{encoder_apply.6} parent=0 // pred_check_branch
    %4237 = sbr.rel (0) target = $region21
  $region20: #{encoder_apply.6} parent=0 // pred_region
    _
  $region21: #{encoder_apply.6} parent=0 // pred_fallthru
    _
  // Predicated region
  $region22: #{encoder_apply.6} parent=0 // pred_check
    _
  $region23: #{encoder_apply.6} parent=0 // pred_check_branch
    %4239 = sbr.rel (0) target = $region25
  $region24: #{encoder_apply.6} parent=0 // pred_region
    _
  $region25: #{encoder_apply.6} parent=0 // pred_fallthru
    _
  // Predicated region
  $region26: #{encoder_apply.6} parent=0 // pred_check
    _
  $region27: #{encoder_apply.6} parent=0 // pred_check_branch
    %4241 = sbr.rel (0) target = $region29
  $region28: #{encoder_apply.6} parent=0 // pred_region
    _
  $region29: #{encoder_apply.6} parent=0 // pred_fallthru
    _
  // Predicated region
  $region30: #{encoder_apply.6} parent=0 // pred_check
    _
  $region31: #{encoder_apply.6} parent=0 // pred_check_branch
    %4243 = sbr.rel (0) target = $region33
  $region32: #{encoder_apply.6} parent=0 // pred_region
    _
  $region33: #{encoder_apply.6} parent=0 // pred_fallthru
    _
  // Predicated region
  $region34: #{encoder_apply.6} parent=0 // pred_check
    _
  $region35: #{encoder_apply.6} parent=0 // pred_check_branch
    %4245 = sbr.rel (0) target = $region37
  $region36: #{encoder_apply.6} parent=0 // pred_region
    _
  $region37: #{encoder_apply.6} parent=0 // pred_fallthru
    _

// kernel: encoder_apply.8
$region0: #{encoder_apply.8}
  #allocation0 [shape = 'u32[]', space=smem, size = 0x4, offset = 0x4, fixed_abs, tag = 'smem constant byte address 0x4 - core index']
  #allocation1 [shape = 'u32[144,128]{1,0:T(1,128)}', space=vmem, size = 0x12000, scoped, tag = 'internal scratch']
  %s0 = inlined_call_operand.vmem [shape: bf16[1,8,3,3,128], index: 0, kind: input, shape index: {}]
  %s1 = inlined_call_operand.vmem [shape: bf16[16,128,128], index: 1, kind: input, shape index: {}]
  %s2 = inlined_call_operand.vmem [shape: f32[1,128], index: 2, kind: input, shape index: {}]
  %s3 = inlined_call_operand.vmem [shape: bf16[2,2,2,128], index: 3, kind: output, shape index: {0}]
  %s4 = inlined_call_operand.vmem [shape: f32[1,1,1,128], index: 4, kind: output, shape index: {1}]
  %s5 = inlined_call_operand.vmem [shape: f32[1,1,1,128], index: 5, kind: output, shape index: {2}]
  %6 = xla_tuple %s3, %s4, %s5
  %s7 = sld [smem:[#allocation0]]
  $region38: #{encoder_apply.8} parent=0
    _
  %s9 = ssub.s32 1, %s7
  %s10 = scalar_select 0, %s9, %s7
  // Predicated region
  $region2: #{encoder_apply.8} parent=0 // pred_check
    _
  $region3: #{encoder_apply.8} parent=0 // pred_check_branch
    %12 = sbr.rel (0) target = $region5
  $region4: #{encoder_apply.8} parent=0 // pred_region
    %s13 = sadd.s32 0, 0
    %p14 = scmp.lt.s32.totalorder %s13, 0
    %s15 = scalar_select %p14, %s13, 0
    %s16 = smul.addr %s15, 24
    %s17 = smul.addr %s16, 2
    %s18 = scalar_lea.vmem %s0, %s17
    %s19 = sadd.s32 0, 0
  $region5: #{encoder_apply.8} parent=0 // pred_fallthru
    _
  // Predicated region
  $region6: #{encoder_apply.8} parent=0 // pred_check
    _
  $region7: #{encoder_apply.8} parent=0 // pred_check_branch
    %21 = sbr.rel (0) target = $region9
  $region8: #{encoder_apply.8} parent=0 // pred_region
    _
  $region9: #{encoder_apply.8} parent=0 // pred_fallthru
    _
  // Predicated region
  $region10: #{encoder_apply.8} parent=0 // pred_check
    _
  $region11: #{encoder_apply.8} parent=0 // pred_check_branch
    %23 = sbr.rel (0) target = $region13
  $region12: #{encoder_apply.8} parent=0 // pred_region
    _
  $region13: #{encoder_apply.8} parent=0 // pred_fallthru
    _
  %s24 = sadd.s32 0, 0
  %p25 = scmp.lt.s32.totalorder %s24, 0
  %s26 = scalar_select %p25, %s24, 0
  %s27 = smul.addr %s26, 24
  %s28 = smul.addr %s27, 2
  %s29 = scalar_lea.vmem %s0, %s28
  %s30 = sadd.s32 0, 0
  %p31 = scmp.lt.s32.totalorder %s30, 0
  %s32 = scalar_select %p31, %s30, 0
  %s33 = smul.addr %s32, 24
  %s34 = smul.addr %s33, 2
  %s35 = scalar_lea.vmem %s0, %s34
  %s36 = sadd.s32 0, 0
  %v38 = vld [vmem:[%s35] sm:$0x1]
  %v39 = vld [vmem:[%s35 + $0x2] sm:$0x1]
  %v40 = vld [vmem:[%s35 + $0x6] sm:$0x1]
  %v41 = vld [vmem:[%s35 + $0x8] sm:$0x1]
  %v42 = vld [vmem:[%s1] sm:$0xf]
  %v43 = vld [vmem:[%s1 + $0x4] sm:$0xf]
  %v44 = vld [vmem:[%s1 + $0x8] sm:$0xf]
  %v45 = vld [vmem:[%s1 + $0xc] sm:$0xf]
  %v46 = vld [vmem:[%s1 + $0x10] sm:$0xf]
  %v47 = vld [vmem:[%s1 + $0x14] sm:$0xf]
  %v48 = vld [vmem:[%s1 + $0x18] sm:$0xf]
  %v49 = vld [vmem:[%s1 + $0x1c] sm:$0xf]
  %v50 = vld [vmem:[%s1 + $0x20] sm:$0xf]
  %v51 = vld [vmem:[%s1 + $0x24] sm:$0xf]
  %v52 = vld [vmem:[%s1 + $0x28] sm:$0xf]
  %v53 = vld [vmem:[%s1 + $0x2c] sm:$0xf]
  %v54 = vld [vmem:[%s1 + $0x30] sm:$0xf]
  %v55 = vld [vmem:[%s1 + $0x34] sm:$0xf]
  %v56 = vld [vmem:[%s1 + $0x38] sm:$0xf]
  %v57 = vld [vmem:[%s1 + $0x3c] sm:$0xf]
  %s58 = scalar_lea.vmem %s35, 12
  %v59 = vld [vmem:[%s58] sm:$0x1]
  %v60 = vld [vmem:[%s58 + $0x2] sm:$0x1]
  %v61 = vld [vmem:[%s58 + $0x6] sm:$0x1]
  %v62 = vld [vmem:[%s58 + $0x8] sm:$0x1]
  %s63 = scalar_lea.vmem %s1, 64
  %v64 = vld [vmem:[%s63] sm:$0xf]
  %v65 = vld [vmem:[%s63 + $0x4] sm:$0xf]
  %v66 = vld [vmem:[%s63 + $0x8] sm:$0xf]
  %v67 = vld [vmem:[%s63 + $0xc] sm:$0xf]
  %v68 = vld [vmem:[%s63 + $0x10] sm:$0xf]
  %v69 = vld [vmem:[%s63 + $0x14] sm:$0xf]
  %v70 = vld [vmem:[%s63 + $0x18] sm:$0xf]
  %v71 = vld [vmem:[%s63 + $0x1c] sm:$0xf]
  %v72 = vld [vmem:[%s63 + $0x20] sm:$0xf]
  %v73 = vld [vmem:[%s63 + $0x24] sm:$0xf]
  %v74 = vld [vmem:[%s63 + $0x28] sm:$0xf]
  %v75 = vld [vmem:[%s63 + $0x2c] sm:$0xf]
  %v76 = vld [vmem:[%s63 + $0x30] sm:$0xf]
  %v77 = vld [vmem:[%s63 + $0x34] sm:$0xf]
  %v78 = vld [vmem:[%s63 + $0x38] sm:$0xf]
  %v79 = vld [vmem:[%s63 + $0x3c] sm:$0xf]
  %v84 = vcombine.low %v59, %v60
  %v85 = vcombine.low %v61, %v62
  %v87 = vunpack.c.l.s4 1966171168
  %v88 = vunpack.c.0.s8 %v87
  %v89 = vlaneseq
  %v90 = vshrl.u32 %v89, 7
  %v91 = vsub.s32 %v88, %v90
  %v92 = vrot.slane %v84, %v91
  %v94 = vunpack.c.l.s4 1966171168
  %v95 = vunpack.c.0.s8 %v94
  %v96 = vlaneseq
  %v97 = vshrl.u32 %v96, 7
  %v98 = vsub.s32 %v95, %v97
  %v99 = vrot.slane %v85, %v98
  %v100 = vcombine.low %v92, %v99
  %v102 = vunpack.c.l.s4 1966171168
  %v103 = vunpack.c.0.s8 %v102
  %v104 = vlaneseq
  %v105 = vshrl.u32 %v104, 7
  %v106 = vsub.s32 %v103, %v105
  %v107 = vrot.slane %v100, %v106
  %v125 = vunpack.c.l.b16 %v64
  %v126 = vunpack.c.l.b16 %v65
  %v127 = vunpack.c.l.b16 %v66
  %v128 = vunpack.c.l.b16 %v67
  %v129 = vunpack.c.l.b16 %v68
  %v130 = vunpack.c.l.b16 %v69
  %v131 = vunpack.c.l.b16 %v70
  %v132 = vunpack.c.l.b16 %v71
  %v133 = vunpack.c.l.b16 %v72
  %v134 = vunpack.c.l.b16 %v73
  %v135 = vunpack.c.l.b16 %v74
  %v136 = vunpack.c.l.b16 %v75
  %v137 = vunpack.c.l.b16 %v76
  %v138 = vunpack.c.l.b16 %v77
  %v139 = vunpack.c.l.b16 %v78
  %v140 = vunpack.c.l.b16 %v79
  %v141 = vpack.c.b16 %v126, %v125
  %v142 = vpack.c.b16 %v128, %v127
  %v143 = vpack.c.b16 %v130, %v129
  %v144 = vpack.c.b16 %v132, %v131
  %v145 = vpack.c.b16 %v134, %v133
  %v146 = vpack.c.b16 %v136, %v135
  %v147 = vpack.c.b16 %v138, %v137
  %v148 = vpack.c.b16 %v140, %v139
  %157 = vmatprep.subr.bf16.mxu0 0
  %158 = vmatpush1.bf16.msra.mxu0 %v141
  %159 = vmatprep.subr.bf16.mxu0 0
  %160 = vmatpush1.bf16.msra.mxu0 %v142
  %161 = vmatprep.subr.bf16.mxu0 0
  %162 = vmatpush1.bf16.msra.mxu0 %v143
  %163 = vmatprep.subr.bf16.mxu0 0
  %164 = vmatpush1.bf16.msra.mxu0 %v144
  %165 = vmatprep.subr.bf16.mxu0 0
  %166 = vmatpush1.bf16.msra.mxu0 %v145
  %167 = vmatprep.subr.bf16.mxu0 0
  %168 = vmatpush1.bf16.msra.mxu0 %v146
  %169 = vmatprep.subr.bf16.mxu0 0
  %170 = vmatpush1.bf16.msra.mxu0 %v147
  %171 = vmatprep.subr.bf16.mxu0 0
  %172 = vmatpush1.bf16.msra.mxu0 %v148
  %173 = vmatprep.subr.bf16.mxu0 0
  %174 = vmatpush1.bf16.msra.mxu0 0
  %175 = vmatprep.subr.bf16.mxu0 0
  %176 = vmatpush1.bf16.msra.mxu0 0
  %177 = vmatprep.subr.bf16.mxu0 0
  %178 = vmatpush1.bf16.msra.mxu0 0
  %179 = vmatprep.subr.bf16.mxu0 0
  %180 = vmatpush1.bf16.msra.mxu0 0
  %181 = vmatprep.subr.bf16.mxu0 0
  %182 = vmatpush1.bf16.msra.mxu0 0
  %183 = vmatprep.subr.bf16.mxu0 0
  %184 = vmatpush1.bf16.msra.mxu0 0
  %185 = vmatprep.subr.bf16.mxu0 0
  %186 = vmatpush1.bf16.msra.mxu0 0
  %187 = vmatprep.subr.bf16.mxu0 0
  %188 = vmatpush1.bf16.msra.mxu0 0
  %189 = vmatprep.mubr.bf16.mxu0 0
  %190 = vmatmul.mubr.bf16.gmra.mrb[0].mxu0 %v107
  %v191 = vpop.f32.mrb[0].mxu0
  %v192 = vadd.f32 0.0, %v191
  %v193 = vpop.f32.mrb[0].mxu0
  %v194 = vpop.f32.mrb[0].mxu0
  %v195 = vpop.f32.mrb[0].mxu0
  %196 = vdwg.mxu0
  %v201 = vcombine.low %v38, %v39
  %v202 = vcombine.low %v40, %v41
  %v204 = vunpack.c.l.s4 1966171168
  %v205 = vunpack.c.0.s8 %v204
  %v206 = vlaneseq
  %v207 = vshrl.u32 %v206, 7
  %v208 = vsub.s32 %v205, %v207
  %v209 = vrot.slane %v201, %v208
  %v211 = vunpack.c.l.s4 1966171168
  %v212 = vunpack.c.0.s8 %v211
  %v213 = vlaneseq
  %v214 = vshrl.u32 %v213, 7
  %v215 = vsub.s32 %v212, %v214
  %v216 = vrot.slane %v202, %v215
  %v217 = vcombine.low %v209, %v216
  %v219 = vunpack.c.l.s4 1966171168
  %v220 = vunpack.c.0.s8 %v219
  %v221 = vlaneseq
  %v222 = vshrl.u32 %v221, 7
  %v223 = vsub.s32 %v220, %v222
  %v224 = vrot.slane %v217, %v223
  %v242 = vunpack.c.l.b16 %v42
  %v243 = vunpack.c.l.b16 %v43
  %v244 = vunpack.c.l.b16 %v44
  %v245 = vunpack.c.l.b16 %v45
  %v246 = vunpack.c.l.b16 %v46
  %v247 = vunpack.c.l.b16 %v47
  %v248 = vunpack.c.l.b16 %v48
  %v249 = vunpack.c.l.b16 %v49
  %v250 = vunpack.c.l.b16 %v50
  %v251 = vunpack.c.l.b16 %v51
  %v252 = vunpack.c.l.b16 %v52
  %v253 = vunpack.c.l.b16 %v53
  %v254 = vunpack.c.l.b16 %v54
  %v255 = vunpack.c.l.b16 %v55
  %v256 = vunpack.c.l.b16 %v56
  %v257 = vunpack.c.l.b16 %v57
  %v258 = vpack.c.b16 %v243, %v242
  %v259 = vpack.c.b16 %v245, %v244
  %v260 = vpack.c.b16 %v247, %v246
  %v261 = vpack.c.b16 %v249, %v248
  %v262 = vpack.c.b16 %v251, %v250
  %v263 = vpack.c.b16 %v253, %v252
  %v264 = vpack.c.b16 %v255, %v254
  %v265 = vpack.c.b16 %v257, %v256
  %274 = vmatprep.subr.bf16.mxu0 0
  %275 = vmatpush1.bf16.msra.mxu0 %v258
  %276 = vmatprep.subr.bf16.mxu0 0
  %277 = vmatpush1.bf16.msra.mxu0 %v259
  %278 = vmatprep.subr.bf16.mxu0 0
  %279 = vmatpush1.bf16.msra.mxu0 %v260
  %280 = vmatprep.subr.bf16.mxu0 0
  %281 = vmatpush1.bf16.msra.mxu0 %v261
  %282 = vmatprep.subr.bf16.mxu0 0
  %283 = vmatpush1.bf16.msra.mxu0 %v262
  %284 = vmatprep.subr.bf16.mxu0 0
  %285 = vmatpush1.bf16.msra.mxu0 %v263
  %286 = vmatprep.subr.bf16.mxu0 0
  %287 = vmatpush1.bf16.msra.mxu0 %v264
  %288 = vmatprep.subr.bf16.mxu0 0
  %289 = vmatpush1.bf16.msra.mxu0 %v265
  %290 = vmatprep.subr.bf16.mxu0 0
  %291 = vmatpush1.bf16.msra.mxu0 0
  %292 = vmatprep.subr.bf16.mxu0 0
  %293 = vmatpush1.bf16.msra.mxu0 0
  %294 = vmatprep.subr.bf16.mxu0 0
  %295 = vmatpush1.bf16.msra.mxu0 0
  %296 = vmatprep.subr.bf16.mxu0 0
  %297 = vmatpush1.bf16.msra.mxu0 0
  %298 = vmatprep.subr.bf16.mxu0 0
  %299 = vmatpush1.bf16.msra.mxu0 0
  %300 = vmatprep.subr.bf16.mxu0 0
  %301 = vmatpush1.bf16.msra.mxu0 0
  %302 = vmatprep.subr.bf16.mxu0 0
  %303 = vmatpush1.bf16.msra.mxu0 0
  %304 = vmatprep.subr.bf16.mxu0 0
  %305 = vmatpush1.bf16.msra.mxu0 0
  %306 = vmatprep.mubr.bf16.mxu0 0
  %307 = vmatmul.mubr.bf16.gmra.mrb[0].mxu0 %v224
  %v308 = vpop.f32.mrb[0].mxu0
  %v309 = vadd.f32 %v192, %v308
  %v310 = vpop.f32.mrb[0].mxu0
  %v311 = vpop.f32.mrb[0].mxu0
  %v312 = vpop.f32.mrb[0].mxu0
  %313 = vdwg.mxu0
  %v314 = vld [vmem:[%s35] sm:$0x3]
  %v315 = vld [vmem:[%s35 + $0x2] sm:$0x3]
  %v316 = vld [vmem:[%s35 + $0x6] sm:$0x3]
  %v317 = vld [vmem:[%s35 + $0x8] sm:$0x3]
  %v323 = vunpack.c.l.s4 1966171168
  %v324 = vunpack.c.0.s8 %v323
  %v325 = vlaneseq
  %v326 = vshrl.u32 %v325, 7
  %v327 = vsub.s32 %v324, %v326
  %v328 = vrot.slane %v314, %v327
  %v329 = vcombine.high %v328, %v328
  %v331 = vunpack.c.l.s4 1966171168
  %v332 = vunpack.c.0.s8 %v331
  %v333 = vlaneseq
  %v334 = vshrl.u32 %v333, 7
  %v335 = vsub.s32 %v332, %v334
  %v336 = vrot.slane %v315, %v335
  %v337 = vcombine.high %v336, %v336
  %v339 = vunpack.c.l.s4 1966171168
  %v340 = vunpack.c.0.s8 %v339
  %v341 = vlaneseq
  %v342 = vshrl.u32 %v341, 7
  %v343 = vsub.s32 %v340, %v342
  %v344 = vrot.slane %v316, %v343
  %v345 = vcombine.high %v344, %v344
  %v347 = vunpack.c.l.s4 1966171168
  %v348 = vunpack.c.0.s8 %v347
  %v349 = vlaneseq
  %v350 = vshrl.u32 %v349, 7
  %v351 = vsub.s32 %v348, %v350
  %v352 = vrot.slane %v317, %v351
  %v353 = vcombine.high %v352, %v352
  %vm354 = vsmask.f32 256
  %vm355 = vsmask.f32 1284
  %vm356 = vmor %vm354, %vm355
  %vm357 = vsmask.f32 2312
  %vm358 = vmor %vm356, %vm357
  %vm359 = vsmask.f32 3340
  %vm360 = vmor %vm358, %vm359
  %vm361 = vsmask.f32 4368
  %vm362 = vmor %vm360, %vm361
  %vm363 = vsmask.f32 5396
  %vm364 = vmor %vm362, %vm363
  %vm365 = vsmask.f32 6424
  %vm366 = vmor %vm364, %vm365
  %vm367 = vsmask.f32 7452
  %vm368 = vmor %vm366, %vm367
  %v370 = vshrl.u32 %v328, 16
  %v372 = vrot.slane %v370, 7
  %v373 = vrot.slane %v372, 1
  %v375 = vshll.u32 %v329, 16
  %v377 = vsel %vm368, %v373, %v375
  %v379 = vshrl.u32 %v336, 16
  %v381 = vrot.slane %v379, 7
  %v382 = vrot.slane %v381, 1
  %v384 = vshll.u32 %v337, 16
  %v386 = vsel %vm368, %v382, %v384
  %v388 = vshrl.u32 %v344, 16
  %v390 = vrot.slane %v388, 7
  %v391 = vrot.slane %v390, 1
  %v393 = vshll.u32 %v345, 16
  %v395 = vsel %vm368, %v391, %v393
  %v397 = vshrl.u32 %v352, 16
  %v399 = vrot.slane %v397, 7
  %v400 = vrot.slane %v399, 1
  %v402 = vshll.u32 %v353, 16
  %v404 = vsel %vm368, %v400, %v402
  %s405 = scalar_lea.vmem %s1, 128
  %v406 = vld [vmem:[%s405] sm:$0xf]
  %v407 = vld [vmem:[%s405 + $0x4] sm:$0xf]
  %v408 = vld [vmem:[%s405 + $0x8] sm:$0xf]
  %v409 = vld [vmem:[%s405 + $0xc] sm:$0xf]
  %v410 = vld [vmem:[%s405 + $0x10] sm:$0xf]
  %v411 = vld [vmem:[%s405 + $0x14] sm:$0xf]
  %v412 = vld [vmem:[%s405 + $0x18] sm:$0xf]
  %v413 = vld [vmem:[%s405 + $0x1c] sm:$0xf]
  %v414 = vld [vmem:[%s405 + $0x20] sm:$0xf]
  %v415 = vld [vmem:[%s405 + $0x24] sm:$0xf]
  %v416 = vld [vmem:[%s405 + $0x28] sm:$0xf]
  %v417 = vld [vmem:[%s405 + $0x2c] sm:$0xf]
  %v418 = vld [vmem:[%s405 + $0x30] sm:$0xf]
  %v419 = vld [vmem:[%s405 + $0x34] sm:$0xf]
  %v420 = vld [vmem:[%s405 + $0x38] sm:$0xf]
  %v421 = vld [vmem:[%s405 + $0x3c] sm:$0xf]
  %v422 = vcombine.low %v377, %v386
  %v423 = vcombine.low %v395, %v404
  %v425 = vunpack.c.l.s4 1966171168
  %v426 = vunpack.c.0.s8 %v425
  %v427 = vlaneseq
  %v428 = vshrl.u32 %v427, 7
  %v429 = vsub.s32 %v426, %v428
  %v430 = vrot.slane %v422, %v429
  %v432 = vunpack.c.l.s4 1966171168
  %v433 = vunpack.c.0.s8 %v432
  %v434 = vlaneseq
  %v435 = vshrl.u32 %v434, 7
  %v436 = vsub.s32 %v433, %v435
  %v437 = vrot.slane %v423, %v436
  %v438 = vcombine.low %v430, %v437
  %v440 = vunpack.c.l.s4 1966171168
  %v441 = vunpack.c.0.s8 %v440
  %v442 = vlaneseq
  %v443 = vshrl.u32 %v442, 7
  %v444 = vsub.s32 %v441, %v443
  %v445 = vrot.slane %v438, %v444
  %v463 = vunpack.c.l.b16 %v406
  %v464 = vunpack.c.l.b16 %v407
  %v465 = vunpack.c.l.b16 %v408
  %v466 = vunpack.c.l.b16 %v409
  %v467 = vunpack.c.l.b16 %v410
  %v468 = vunpack.c.l.b16 %v411
  %v469 = vunpack.c.l.b16 %v412
  %v470 = vunpack.c.l.b16 %v413
  %v471 = vunpack.c.l.b16 %v414
  %v472 = vunpack.c.l.b16 %v415
  %v473 = vunpack.c.l.b16 %v416
  %v474 = vunpack.c.l.b16 %v417
  %v475 = vunpack.c.l.b16 %v418
  %v476 = vunpack.c.l.b16 %v419
  %v477 = vunpack.c.l.b16 %v420
  %v478 = vunpack.c.l.b16 %v421
  %v479 = vpack.c.b16 %v464, %v463
  %v480 = vpack.c.b16 %v466, %v465
  %v481 = vpack.c.b16 %v468, %v467
  %v482 = vpack.c.b16 %v470, %v469
  %v483 = vpack.c.b16 %v472, %v471
  %v484 = vpack.c.b16 %v474, %v473
  %v485 = vpack.c.b16 %v476, %v475
  %v486 = vpack.c.b16 %v478, %v477
  %495 = vmatprep.subr.bf16.mxu0 0
  %496 = vmatpush1.bf16.msra.mxu0 %v479
  %497 = vmatprep.subr.bf16.mxu0 0
  %498 = vmatpush1.bf16.msra.mxu0 %v480
  %499 = vmatprep.subr.bf16.mxu0 0
  %500 = vmatpush1.bf16.msra.mxu0 %v481
  %501 = vmatprep.subr.bf16.mxu0 0
  %502 = vmatpush1.bf16.msra.mxu0 %v482
  %503 = vmatprep.subr.bf16.mxu0 0
  %504 = vmatpush1.bf16.msra.mxu0 %v483
  %505 = vmatprep.subr.bf16.mxu0 0
  %506 = vmatpush1.bf16.msra.mxu0 %v484
  %507 = vmatprep.subr.bf16.mxu0 0
  %508 = vmatpush1.bf16.msra.mxu0 %v485
  %509 = vmatprep.subr.bf16.mxu0 0
  %510 = vmatpush1.bf16.msra.mxu0 %v486
  %511 = vmatprep.subr.bf16.mxu0 0
  %512 = vmatpush1.bf16.msra.mxu0 0
  %513 = vmatprep.subr.bf16.mxu0 0
  %514 = vmatpush1.bf16.msra.mxu0 0
  %515 = vmatprep.subr.bf16.mxu0 0
  %516 = vmatpush1.bf16.msra.mxu0 0
  %517 = vmatprep.subr.bf16.mxu0 0
  %518 = vmatpush1.bf16.msra.mxu0 0
  %519 = vmatprep.subr.bf16.mxu0 0
  %520 = vmatpush1.bf16.msra.mxu0 0
  %521 = vmatprep.subr.bf16.mxu0 0
  %522 = vmatpush1.bf16.msra.mxu0 0
  %523 = vmatprep.subr.bf16.mxu0 0
  %524 = vmatpush1.bf16.msra.mxu0 0
  %525 = vmatprep.subr.bf16.mxu0 0
  %526 = vmatpush1.bf16.msra.mxu0 0
  %527 = vmatprep.mubr.bf16.mxu0 0
  %528 = vmatmul.mubr.bf16.gmra.mrb[0].mxu0 %v445
  %v529 = vpop.f32.mrb[0].mxu0
  %v530 = vadd.f32 0.0, %v529
  %v531 = vpop.f32.mrb[0].mxu0
  %v532 = vpop.f32.mrb[0].mxu0
  %v533 = vpop.f32.mrb[0].mxu0
  %534 = vdwg.mxu0
  %v535 = vadd.f32 %v309, %v530
  %v536 = vld [vmem:[%s58] sm:$0x3]
  %v537 = vld [vmem:[%s58 + $0x2] sm:$0x3]
  %v538 = vld [vmem:[%s58 + $0x6] sm:$0x3]
  %v539 = vld [vmem:[%s58 + $0x8] sm:$0x3]
  %v545 = vunpack.c.l.s4 1966171168
  %v546 = vunpack.c.0.s8 %v545
  %v547 = vlaneseq
  %v548 = vshrl.u32 %v547, 7
  %v549 = vsub.s32 %v546, %v548
  %v550 = vrot.slane %v536, %v549
  %v551 = vcombine.high %v550, %v550
  %v553 = vunpack.c.l.s4 1966171168
  %v554 = vunpack.c.0.s8 %v553
  %v555 = vlaneseq
  %v556 = vshrl.u32 %v555, 7
  %v557 = vsub.s32 %v554, %v556
  %v558 = vrot.slane %v537, %v557
  %v559 = vcombine.high %v558, %v558
  %v561 = vunpack.c.l.s4 1966171168
  %v562 = vunpack.c.0.s8 %v561
  %v563 = vlaneseq
  %v564 = vshrl.u32 %v563, 7
  %v565 = vsub.s32 %v562, %v564
  %v566 = vrot.slane %v538, %v565
  %v567 = vcombine.high %v566, %v566
  %v569 = vunpack.c.l.s4 1966171168
  %v570 = vunpack.c.0.s8 %v569
  %v571 = vlaneseq
  %v572 = vshrl.u32 %v571, 7
  %v573 = vsub.s32 %v570, %v572
  %v574 = vrot.slane %v539, %v573
  %v575 = vcombine.high %v574, %v574
  %v577 = vshrl.u32 %v550, 16
  %v579 = vrot.slane %v577, 7
  %v580 = vrot.slane %v579, 1
  %v582 = vshll.u32 %v551, 16
  %v584 = vsel %vm368, %v580, %v582
  %v586 = vshrl.u32 %v558, 16
  %v588 = vrot.slane %v586, 7
  %v589 = vrot.slane %v588, 1
  %v591 = vshll.u32 %v559, 16
  %v593 = vsel %vm368, %v589, %v591
  %v595 = vshrl.u32 %v566, 16
  %v597 = vrot.slane %v595, 7
  %v598 = vrot.slane %v597, 1
  %v600 = vshll.u32 %v567, 16
  %v602 = vsel %vm368, %v598, %v600
  %v604 = vshrl.u32 %v574, 16
  %v606 = vrot.slane %v604, 7
  %v607 = vrot.slane %v606, 1
  %v609 = vshll.u32 %v575, 16
  %v611 = vsel %vm368, %v607, %v609
  %s612 = scalar_lea.vmem %s1, 192
  %v613 = vld [vmem:[%s612] sm:$0xf]
  %v614 = vld [vmem:[%s612 + $0x4] sm:$0xf]
  %v615 = vld [vmem:[%s612 + $0x8] sm:$0xf]
  %v616 = vld [vmem:[%s612 + $0xc] sm:$0xf]
  %v617 = vld [vmem:[%s612 + $0x10] sm:$0xf]
  %v618 = vld [vmem:[%s612 + $0x14] sm:$0xf]
  %v619 = vld [vmem:[%s612 + $0x18] sm:$0xf]
  %v620 = vld [vmem:[%s612 + $0x1c] sm:$0xf]
  %v621 = vld [vmem:[%s612 + $0x20] sm:$0xf]
  %v622 = vld [vmem:[%s612 + $0x24] sm:$0xf]
  %v623 = vld [vmem:[%s612 + $0x28] sm:$0xf]
  %v624 = vld [vmem:[%s612 + $0x2c] sm:$0xf]
  %v625 = vld [vmem:[%s612 + $0x30] sm:$0xf]
  %v626 = vld [vmem:[%s612 + $0x34] sm:$0xf]
  %v627 = vld [vmem:[%s612 + $0x38] sm:$0xf]
  %v628 = vld [vmem:[%s612 + $0x3c] sm:$0xf]
  %v629 = vcombine.low %v584, %v593
  %v630 = vcombine.low %v602, %v611
  %v632 = vunpack.c.l.s4 1966171168
  %v633 = vunpack.c.0.s8 %v632
  %v634 = vlaneseq
  %v635 = vshrl.u32 %v634, 7
  %v636 = vsub.s32 %v633, %v635
  %v637 = vrot.slane %v629, %v636
  %v639 = vunpack.c.l.s4 1966171168
  %v640 = vunpack.c.0.s8 %v639
  %v641 = vlaneseq
  %v642 = vshrl.u32 %v641, 7
  %v643 = vsub.s32 %v640, %v642
  %v644 = vrot.slane %v630, %v643
  %v645 = vcombine.low %v637, %v644
  %v647 = vunpack.c.l.s4 1966171168
  %v648 = vunpack.c.0.s8 %v647
  %v649 = vlaneseq
  %v650 = vshrl.u32 %v649, 7
  %v651 = vsub.s32 %v648, %v650
  %v652 = vrot.slane %v645, %v651
  %v670 = vunpack.c.l.b16 %v613
  %v671 = vunpack.c.l.b16 %v614
  %v672 = vunpack.c.l.b16 %v615
  %v673 = vunpack.c.l.b16 %v616
  %v674 = vunpack.c.l.b16 %v617
  %v675 = vunpack.c.l.b16 %v618
  %v676 = vunpack.c.l.b16 %v619
  %v677 = vunpack.c.l.b16 %v620
  %v678 = vunpack.c.l.b16 %v621
  %v679 = vunpack.c.l.b16 %v622
  %v680 = vunpack.c.l.b16 %v623
  %v681 = vunpack.c.l.b16 %v624
  %v682 = vunpack.c.l.b16 %v625
  %v683 = vunpack.c.l.b16 %v626
  %v684 = vunpack.c.l.b16 %v627
  %v685 = vunpack.c.l.b16 %v628
  %v686 = vpack.c.b16 %v671, %v670
  %v687 = vpack.c.b16 %v673, %v672
  %v688 = vpack.c.b16 %v675, %v674
  %v689 = vpack.c.b16 %v677, %v676
  %v690 = vpack.c.b16 %v679, %v678
  %v691 = vpack.c.b16 %v681, %v680
  %v692 = vpack.c.b16 %v683, %v682
  %v693 = vpack.c.b16 %v685, %v684
  %702 = vmatprep.subr.bf16.mxu0 0
  %703 = vmatpush1.bf16.msra.mxu0 %v686
  %704 = vmatprep.subr.bf16.mxu0 0
  %705 = vmatpush1.bf16.msra.mxu0 %v687
  %706 = vmatprep.subr.bf16.mxu0 0
  %707 = vmatpush1.bf16.msra.mxu0 %v688
  %708 = vmatprep.subr.bf16.mxu0 0
  %709 = vmatpush1.bf16.msra.mxu0 %v689
  %710 = vmatprep.subr.bf16.mxu0 0
  %711 = vmatpush1.bf16.msra.mxu0 %v690
  %712 = vmatprep.subr.bf16.mxu0 0
  %713 = vmatpush1.bf16.msra.mxu0 %v691
  %714 = vmatprep.subr.bf16.mxu0 0
  %715 = vmatpush1.bf16.msra.mxu0 %v692
  %716 = vmatprep.subr.bf16.mxu0 0
  %717 = vmatpush1.bf16.msra.mxu0 %v693
  %718 = vmatprep.subr.bf16.mxu0 0
  %719 = vmatpush1.bf16.msra.mxu0 0
  %720 = vmatprep.subr.bf16.mxu0 0
  %721 = vmatpush1.bf16.msra.mxu0 0
  %722 = vmatprep.subr.bf16.mxu0 0
  %723 = vmatpush1.bf16.msra.mxu0 0
  %724 = vmatprep.subr.bf16.mxu0 0
  %725 = vmatpush1.bf16.msra.mxu0 0
  %726 = vmatprep.subr.bf16.mxu0 0
  %727 = vmatpush1.bf16.msra.mxu0 0
  %728 = vmatprep.subr.bf16.mxu0 0
  %729 = vmatpush1.bf16.msra.mxu0 0
  %730 = vmatprep.subr.bf16.mxu0 0
  %731 = vmatpush1.bf16.msra.mxu0 0
  %732 = vmatprep.subr.bf16.mxu0 0
  %733 = vmatpush1.bf16.msra.mxu0 0
  %734 = vmatprep.mubr.bf16.mxu0 0
  %735 = vmatmul.mubr.bf16.gmra.mrb[0].mxu0 %v652
  %v736 = vpop.f32.mrb[0].mxu0
  %v737 = vadd.f32 0.0, %v736
  %v738 = vpop.f32.mrb[0].mxu0
  %v739 = vpop.f32.mrb[0].mxu0
  %v740 = vpop.f32.mrb[0].mxu0
  %741 = vdwg.mxu0
  %v742 = vadd.f32 %v535, %v737
  %s743 = scalar_lea.vmem %s35, 24
  %v744 = vld [vmem:[%s743] sm:$0x1]
  %v745 = vld [vmem:[%s743 + $0x2] sm:$0x1]
  %v746 = vld [vmem:[%s743 + $0x6] sm:$0x1]
  %v747 = vld [vmem:[%s743 + $0x8] sm:$0x1]
  %s748 = scalar_lea.vmem %s1, 256
  %v749 = vld [vmem:[%s748] sm:$0xf]
  %v750 = vld [vmem:[%s748 + $0x4] sm:$0xf]
  %v751 = vld [vmem:[%s748 + $0x8] sm:$0xf]
  %v752 = vld [vmem:[%s748 + $0xc] sm:$0xf]
  %v753 = vld [vmem:[%s748 + $0x10] sm:$0xf]
  %v754 = vld [vmem:[%s748 + $0x14] sm:$0xf]
  %v755 = vld [vmem:[%s748 + $0x18] sm:$0xf]
  %v756 = vld [vmem:[%s748 + $0x1c] sm:$0xf]
  %v757 = vld [vmem:[%s748 + $0x20] sm:$0xf]
  %v758 = vld [vmem:[%s748 + $0x24] sm:$0xf]
  %v759 = vld [vmem:[%s748 + $0x28] sm:$0xf]
  %v760 = vld [vmem:[%s748 + $0x2c] sm:$0xf]
  %v761 = vld [vmem:[%s748 + $0x30] sm:$0xf]
  %v762 = vld [vmem:[%s748 + $0x34] sm:$0xf]
  %v763 = vld [vmem:[%s748 + $0x38] sm:$0xf]
  %v764 = vld [vmem:[%s748 + $0x3c] sm:$0xf]
  %v769 = vcombine.low %v744, %v745
  %v770 = vcombine.low %v746, %v747
  %v772 = vunpack.c.l.s4 1966171168
  %v773 = vunpack.c.0.s8 %v772
  %v774 = vlaneseq
  %v775 = vshrl.u32 %v774, 7
  %v776 = vsub.s32 %v773, %v775
  %v777 = vrot.slane %v769, %v776
  %v779 = vunpack.c.l.s4 1966171168
  %v780 = vunpack.c.0.s8 %v779
  %v781 = vlaneseq
  %v782 = vshrl.u32 %v781, 7
  %v783 = vsub.s32 %v780, %v782
  %v784 = vrot.slane %v770, %v783
  %v785 = vcombine.low %v777, %v784
  %v787 = vunpack.c.l.s4 1966171168
  %v788 = vunpack.c.0.s8 %v787
  %v789 = vlaneseq
  %v790 = vshrl.u32 %v789, 7
  %v791 = vsub.s32 %v788, %v790
  %v792 = vrot.slane %v785, %v791
  %v810 = vunpack.c.l.b16 %v749
  %v811 = vunpack.c.l.b16 %v750
  %v812 = vunpack.c.l.b16 %v751
  %v813 = vunpack.c.l.b16 %v752
  %v814 = vunpack.c.l.b16 %v753
  %v815 = vunpack.c.l.b16 %v754
  %v816 = vunpack.c.l.b16 %v755
  %v817 = vunpack.c.l.b16 %v756
  %v818 = vunpack.c.l.b16 %v757
  %v819 = vunpack.c.l.b16 %v758
  %v820 = vunpack.c.l.b16 %v759
  %v821 = vunpack.c.l.b16 %v760
  %v822 = vunpack.c.l.b16 %v761
  %v823 = vunpack.c.l.b16 %v762
  %v824 = vunpack.c.l.b16 %v763
  %v825 = vunpack.c.l.b16 %v764
  %v826 = vpack.c.b16 %v811, %v810
  %v827 = vpack.c.b16 %v813, %v812
  %v828 = vpack.c.b16 %v815, %v814
  %v829 = vpack.c.b16 %v817, %v816
  %v830 = vpack.c.b16 %v819, %v818
  %v831 = vpack.c.b16 %v821, %v820
  %v832 = vpack.c.b16 %v823, %v822
  %v833 = vpack.c.b16 %v825, %v824
  %842 = vmatprep.subr.bf16.mxu0 0
  %843 = vmatpush1.bf16.msra.mxu0 %v826
  %844 = vmatprep.subr.bf16.mxu0 0
  %845 = vmatpush1.bf16.msra.mxu0 %v827
  %846 = vmatprep.subr.bf16.mxu0 0
  %847 = vmatpush1.bf16.msra.mxu0 %v828
  %848 = vmatprep.subr.bf16.mxu0 0
  %849 = vmatpush1.bf16.msra.mxu0 %v829
  %850 = vmatprep.subr.bf16.mxu0 0
  %851 = vmatpush1.bf16.msra.mxu0 %v830
  %852 = vmatprep.subr.bf16.mxu0 0
  %853 = vmatpush1.bf16.msra.mxu0 %v831
  %854 = vmatprep.subr.bf16.mxu0 0
  %855 = vmatpush1.bf16.msra.mxu0 %v832
  %856 = vmatprep.subr.bf16.mxu0 0
  %857 = vmatpush1.bf16.msra.mxu0 %v833
  %858 = vmatprep.subr.bf16.mxu0 0
  %859 = vmatpush1.bf16.msra.mxu0 0
  %860 = vmatprep.subr.bf16.mxu0 0
  %861 = vmatpush1.bf16.msra.mxu0 0
  %862 = vmatprep.subr.bf16.mxu0 0
  %863 = vmatpush1.bf16.msra.mxu0 0
  %864 = vmatprep.subr.bf16.mxu0 0
  %865 = vmatpush1.bf16.msra.mxu0 0
  %866 = vmatprep.subr.bf16.mxu0 0
  %867 = vmatpush1.bf16.msra.mxu0 0
  %868 = vmatprep.subr.bf16.mxu0 0
  %869 = vmatpush1.bf16.msra.mxu0 0
  %870 = vmatprep.subr.bf16.mxu0 0
  %871 = vmatpush1.bf16.msra.mxu0 0
  %872 = vmatprep.subr.bf16.mxu0 0
  %873 = vmatpush1.bf16.msra.mxu0 0
  %874 = vmatprep.mubr.bf16.mxu0 0
  %875 = vmatmul.mubr.bf16.gmra.mrb[0].mxu0 %v792
  %v876 = vpop.f32.mrb[0].mxu0
  %v877 = vadd.f32 0.0, %v876
  %v878 = vpop.f32.mrb[0].mxu0
  %v879 = vpop.f32.mrb[0].mxu0
  %v880 = vpop.f32.mrb[0].mxu0
  %881 = vdwg.mxu0
  %v882 = vadd.f32 %v742, %v877
  %s883 = scalar_lea.vmem %s35, 36
  %v884 = vld [vmem:[%s883] sm:$0x1]
  %v885 = vld [vmem:[%s883 + $0x2] sm:$0x1]
  %v886 = vld [vmem:[%s883 + $0x6] sm:$0x1]
  %v887 = vld [vmem:[%s883 + $0x8] sm:$0x1]
  %s888 = scalar_lea.vmem %s1, 320
  %v889 = vld [vmem:[%s888] sm:$0xf]
  %v890 = vld [vmem:[%s888 + $0x4] sm:$0xf]
  %v891 = vld [vmem:[%s888 + $0x8] sm:$0xf]
  %v892 = vld [vmem:[%s888 + $0xc] sm:$0xf]
  %v893 = vld [vmem:[%s888 + $0x10] sm:$0xf]
  %v894 = vld [vmem:[%s888 + $0x14] sm:$0xf]
  %v895 = vld [vmem:[%s888 + $0x18] sm:$0xf]
  %v896 = vld [vmem:[%s888 + $0x1c] sm:$0xf]
  %v897 = vld [vmem:[%s888 + $0x20] sm:$0xf]
  %v898 = vld [vmem:[%s888 + $0x24] sm:$0xf]
  %v899 = vld [vmem:[%s888 + $0x28] sm:$0xf]
  %v900 = vld [vmem:[%s888 + $0x2c] sm:$0xf]
  %v901 = vld [vmem:[%s888 + $0x30] sm:$0xf]
  %v902 = vld [vmem:[%s888 + $0x34] sm:$0xf]
  %v903 = vld [vmem:[%s888 + $0x38] sm:$0xf]
  %v904 = vld [vmem:[%s888 + $0x3c] sm:$0xf]
  %v909 = vcombine.low %v884, %v885
  %v910 = vcombine.low %v886, %v887
  %v912 = vunpack.c.l.s4 1966171168
  %v913 = vunpack.c.0.s8 %v912
  %v914 = vlaneseq
  %v915 = vshrl.u32 %v914, 7
  %v916 = vsub.s32 %v913, %v915
  %v917 = vrot.slane %v909, %v916
  %v919 = vunpack.c.l.s4 1966171168
  %v920 = vunpack.c.0.s8 %v919
  %v921 = vlaneseq
  %v922 = vshrl.u32 %v921, 7
  %v923 = vsub.s32 %v920, %v922
  %v924 = vrot.slane %v910, %v923
  %v925 = vcombine.low %v917, %v924
  %v927 = vunpack.c.l.s4 1966171168
  %v928 = vunpack.c.0.s8 %v927
  %v929 = vlaneseq
  %v930 = vshrl.u32 %v929, 7
  %v931 = vsub.s32 %v928, %v930
  %v932 = vrot.slane %v925, %v931
  %v950 = vunpack.c.l.b16 %v889
  %v951 = vunpack.c.l.b16 %v890
  %v952 = vunpack.c.l.b16 %v891
  %v953 = vunpack.c.l.b16 %v892
  %v954 = vunpack.c.l.b16 %v893
  %v955 = vunpack.c.l.b16 %v894
  %v956 = vunpack.c.l.b16 %v895
  %v957 = vunpack.c.l.b16 %v896
  %v958 = vunpack.c.l.b16 %v897
  %v959 = vunpack.c.l.b16 %v898
  %v960 = vunpack.c.l.b16 %v899
  %v961 = vunpack.c.l.b16 %v900
  %v962 = vunpack.c.l.b16 %v901
  %v963 = vunpack.c.l.b16 %v902
  %v964 = vunpack.c.l.b16 %v903
  %v965 = vunpack.c.l.b16 %v904
  %v966 = vpack.c.b16 %v951, %v950
  %v967 = vpack.c.b16 %v953, %v952
  %v968 = vpack.c.b16 %v955, %v954
  %v969 = vpack.c.b16 %v957, %v956
  %v970 = vpack.c.b16 %v959, %v958
  %v971 = vpack.c.b16 %v961, %v960
  %v972 = vpack.c.b16 %v963, %v962
  %v973 = vpack.c.b16 %v965, %v964
  %982 = vmatprep.subr.bf16.mxu0 0
  %983 = vmatpush1.bf16.msra.mxu0 %v966
  %984 = vmatprep.subr.bf16.mxu0 0
  %985 = vmatpush1.bf16.msra.mxu0 %v967
  %986 = vmatprep.subr.bf16.mxu0 0
  %987 = vmatpush1.bf16.msra.mxu0 %v968
  %988 = vmatprep.subr.bf16.mxu0 0
  %989 = vmatpush1.bf16.msra.mxu0 %v969
  %990 = vmatprep.subr.bf16.mxu0 0
  %991 = vmatpush1.bf16.msra.mxu0 %v970
  %992 = vmatprep.subr.bf16.mxu0 0
  %993 = vmatpush1.bf16.msra.mxu0 %v971
  %994 = vmatprep.subr.bf16.mxu0 0
  %995 = vmatpush1.bf16.msra.mxu0 %v972
  %996 = vmatprep.subr.bf16.mxu0 0
  %997 = vmatpush1.bf16.msra.mxu0 %v973
  %998 = vmatprep.subr.bf16.mxu0 0
  %999 = vmatpush1.bf16.msra.mxu0 0
  %1000 = vmatprep.subr.bf16.mxu0 0
  %1001 = vmatpush1.bf16.msra.mxu0 0
  %1002 = vmatprep.subr.bf16.mxu0 0
  %1003 = vmatpush1.bf16.msra.mxu0 0
  %1004 = vmatprep.subr.bf16.mxu0 0
  %1005 = vmatpush1.bf16.msra.mxu0 0
  %1006 = vmatprep.subr.bf16.mxu0 0
  %1007 = vmatpush1.bf16.msra.mxu0 0
  %1008 = vmatprep.subr.bf16.mxu0 0
  %1009 = vmatpush1.bf16.msra.mxu0 0
  %1010 = vmatprep.subr.bf16.mxu0 0
  %1011 = vmatpush1.bf16.msra.mxu0 0
  %1012 = vmatprep.subr.bf16.mxu0 0
  %1013 = vmatpush1.bf16.msra.mxu0 0
  %1014 = vmatprep.mubr.bf16.mxu0 0
  %1015 = vmatmul.mubr.bf16.gmra.mrb[0].mxu0 %v932
  %v1016 = vpop.f32.mrb[0].mxu0
  %v1017 = vadd.f32 0.0, %v1016
  %v1018 = vpop.f32.mrb[0].mxu0
  %v1019 = vpop.f32.mrb[0].mxu0
  %v1020 = vpop.f32.mrb[0].mxu0
  %1021 = vdwg.mxu0
  %v1022 = vadd.f32 %v882, %v1017
  %v1023 = vld [vmem:[%s743] sm:$0x3]
  %v1024 = vld [vmem:[%s743 + $0x2] sm:$0x3]
  %v1025 = vld [vmem:[%s743 + $0x6] sm:$0x3]
  %v1026 = vld [vmem:[%s743 + $0x8] sm:$0x3]
  %v1032 = vunpack.c.l.s4 1966171168
  %v1033 = vunpack.c.0.s8 %v1032
  %v1034 = vlaneseq
  %v1035 = vshrl.u32 %v1034, 7
  %v1036 = vsub.s32 %v1033, %v1035
  %v1037 = vrot.slane %v1023, %v1036
  %v1038 = vcombine.high %v1037, %v1037
  %v1040 = vunpack.c.l.s4 1966171168
  %v1041 = vunpack.c.0.s8 %v1040
  %v1042 = vlaneseq
  %v1043 = vshrl.u32 %v1042, 7
  %v1044 = vsub.s32 %v1041, %v1043
  %v1045 = vrot.slane %v1024, %v1044
  %v1046 = vcombine.high %v1045, %v1045
  %v1048 = vunpack.c.l.s4 1966171168
  %v1049 = vunpack.c.0.s8 %v1048
  %v1050 = vlaneseq
  %v1051 = vshrl.u32 %v1050, 7
  %v1052 = vsub.s32 %v1049, %v1051
  %v1053 = vrot.slane %v1025, %v1052
  %v1054 = vcombine.high %v1053, %v1053
  %v1056 = vunpack.c.l.s4 1966171168
  %v1057 = vunpack.c.0.s8 %v1056
  %v1058 = vlaneseq
  %v1059 = vshrl.u32 %v1058, 7
  %v1060 = vsub.s32 %v1057, %v1059
  %v1061 = vrot.slane %v1026, %v1060
  %v1062 = vcombine.high %v1061, %v1061
  %v1064 = vshrl.u32 %v1037, 16
  %v1066 = vrot.slane %v1064, 7
  %v1067 = vrot.slane %v1066, 1
  %v1069 = vshll.u32 %v1038, 16
  %v1071 = vsel %vm368, %v1067, %v1069
  %v1073 = vshrl.u32 %v1045, 16
  %v1075 = vrot.slane %v1073, 7
  %v1076 = vrot.slane %v1075, 1
  %v1078 = vshll.u32 %v1046, 16
  %v1080 = vsel %vm368, %v1076, %v1078
  %v1082 = vshrl.u32 %v1053, 16
  %v1084 = vrot.slane %v1082, 7
  %v1085 = vrot.slane %v1084, 1
  %v1087 = vshll.u32 %v1054, 16
  %v1089 = vsel %vm368, %v1085, %v1087
  %v1091 = vshrl.u32 %v1061, 16
  %v1093 = vrot.slane %v1091, 7
  %v1094 = vrot.slane %v1093, 1
  %v1096 = vshll.u32 %v1062, 16
  %v1098 = vsel %vm368, %v1094, %v1096
  %s1099 = scalar_lea.vmem %s1, 384
  %v1100 = vld [vmem:[%s1099] sm:$0xf]
  %v1101 = vld [vmem:[%s1099 + $0x4] sm:$0xf]
  %v1102 = vld [vmem:[%s1099 + $0x8] sm:$0xf]
  %v1103 = vld [vmem:[%s1099 + $0xc] sm:$0xf]
  %v1104 = vld [vmem:[%s1099 + $0x10] sm:$0xf]
  %v1105 = vld [vmem:[%s1099 + $0x14] sm:$0xf]
  %v1106 = vld [vmem:[%s1099 + $0x18] sm:$0xf]
  %v1107 = vld [vmem:[%s1099 + $0x1c] sm:$0xf]
  %v1108 = vld [vmem:[%s1099 + $0x20] sm:$0xf]
  %v1109 = vld [vmem:[%s1099 + $0x24] sm:$0xf]
  %v1110 = vld [vmem:[%s1099 + $0x28] sm:$0xf]
  %v1111 = vld [vmem:[%s1099 + $0x2c] sm:$0xf]
  %v1112 = vld [vmem:[%s1099 + $0x30] sm:$0xf]
  %v1113 = vld [vmem:[%s1099 + $0x34] sm:$0xf]
  %v1114 = vld [vmem:[%s1099 + $0x38] sm:$0xf]
  %v1115 = vld [vmem:[%s1099 + $0x3c] sm:$0xf]
  %v1116 = vcombine.low %v1071, %v1080
  %v1117 = vcombine.low %v1089, %v1098
  %v1119 = vunpack.c.l.s4 1966171168
  %v1120 = vunpack.c.0.s8 %v1119
  %v1121 = vlaneseq
  %v1122 = vshrl.u32 %v1121, 7
  %v1123 = vsub.s32 %v1120, %v1122
  %v1124 = vrot.slane %v1116, %v1123
  %v1126 = vunpack.c.l.s4 1966171168
  %v1127 = vunpack.c.0.s8 %v1126
  %v1128 = vlaneseq
  %v1129 = vshrl.u32 %v1128, 7
  %v1130 = vsub.s32 %v1127, %v1129
  %v1131 = vrot.slane %v1117, %v1130
  %v1132 = vcombine.low %v1124, %v1131
  %v1134 = vunpack.c.l.s4 1966171168
  %v1135 = vunpack.c.0.s8 %v1134
  %v1136 = vlaneseq
  %v1137 = vshrl.u32 %v1136, 7
  %v1138 = vsub.s32 %v1135, %v1137
  %v1139 = vrot.slane %v1132, %v1138
  %v1157 = vunpack.c.l.b16 %v1100
  %v1158 = vunpack.c.l.b16 %v1101
  %v1159 = vunpack.c.l.b16 %v1102
  %v1160 = vunpack.c.l.b16 %v1103
  %v1161 = vunpack.c.l.b16 %v1104
  %v1162 = vunpack.c.l.b16 %v1105
  %v1163 = vunpack.c.l.b16 %v1106
  %v1164 = vunpack.c.l.b16 %v1107
  %v1165 = vunpack.c.l.b16 %v1108
  %v1166 = vunpack.c.l.b16 %v1109
  %v1167 = vunpack.c.l.b16 %v1110
  %v1168 = vunpack.c.l.b16 %v1111
  %v1169 = vunpack.c.l.b16 %v1112
  %v1170 = vunpack.c.l.b16 %v1113
  %v1171 = vunpack.c.l.b16 %v1114
  %v1172 = vunpack.c.l.b16 %v1115
  %v1173 = vpack.c.b16 %v1158, %v1157
  %v1174 = vpack.c.b16 %v1160, %v1159
  %v1175 = vpack.c.b16 %v1162, %v1161
  %v1176 = vpack.c.b16 %v1164, %v1163
  %v1177 = vpack.c.b16 %v1166, %v1165
  %v1178 = vpack.c.b16 %v1168, %v1167
  %v1179 = vpack.c.b16 %v1170, %v1169
  %v1180 = vpack.c.b16 %v1172, %v1171
  %1189 = vmatprep.subr.bf16.mxu0 0
  %1190 = vmatpush1.bf16.msra.mxu0 %v1173
  %1191 = vmatprep.subr.bf16.mxu0 0
  %1192 = vmatpush1.bf16.msra.mxu0 %v1174
  %1193 = vmatprep.subr.bf16.mxu0 0
  %1194 = vmatpush1.bf16.msra.mxu0 %v1175
  %1195 = vmatprep.subr.bf16.mxu0 0
  %1196 = vmatpush1.bf16.msra.mxu0 %v1176
  %1197 = vmatprep.subr.bf16.mxu0 0
  %1198 = vmatpush1.bf16.msra.mxu0 %v1177
  %1199 = vmatprep.subr.bf16.mxu0 0
  %1200 = vmatpush1.bf16.msra.mxu0 %v1178
  %1201 = vmatprep.subr.bf16.mxu0 0
  %1202 = vmatpush1.bf16.msra.mxu0 %v1179
  %1203 = vmatprep.subr.bf16.mxu0 0
  %1204 = vmatpush1.bf16.msra.mxu0 %v1180
  %1205 = vmatprep.subr.bf16.mxu0 0
  %1206 = vmatpush1.bf16.msra.mxu0 0
  %1207 = vmatprep.subr.bf16.mxu0 0
  %1208 = vmatpush1.bf16.msra.mxu0 0
  %1209 = vmatprep.subr.bf16.mxu0 0
  %1210 = vmatpush1.bf16.msra.mxu0 0
  %1211 = vmatprep.subr.bf16.mxu0 0
  %1212 = vmatpush1.bf16.msra.mxu0 0
  %1213 = vmatprep.subr.bf16.mxu0 0
  %1214 = vmatpush1.bf16.msra.mxu0 0
  %1215 = vmatprep.subr.bf16.mxu0 0
  %1216 = vmatpush1.bf16.msra.mxu0 0
  %1217 = vmatprep.subr.bf16.mxu0 0
  %1218 = vmatpush1.bf16.msra.mxu0 0
  %1219 = vmatprep.subr.bf16.mxu0 0
  %1220 = vmatpush1.bf16.msra.mxu0 0
  %1221 = vmatprep.mubr.bf16.mxu0 0
  %1222 = vmatmul.mubr.bf16.gmra.mrb[0].mxu0 %v1139
  %v1223 = vpop.f32.mrb[0].mxu0
  %v1224 = vadd.f32 0.0, %v1223
  %v1225 = vpop.f32.mrb[0].mxu0
  %v1226 = vpop.f32.mrb[0].mxu0
  %v1227 = vpop.f32.mrb[0].mxu0
  %1228 = vdwg.mxu0
  %v1229 = vadd.f32 %v1022, %v1224
  %v1230 = vld [vmem:[%s883] sm:$0x3]
  %v1231 = vld [vmem:[%s883 + $0x2] sm:$0x3]
  %v1232 = vld [vmem:[%s883 + $0x6] sm:$0x3]
  %v1233 = vld [vmem:[%s883 + $0x8] sm:$0x3]
  %v1239 = vunpack.c.l.s4 1966171168
  %v1240 = vunpack.c.0.s8 %v1239
  %v1241 = vlaneseq
  %v1242 = vshrl.u32 %v1241, 7
  %v1243 = vsub.s32 %v1240, %v1242
  %v1244 = vrot.slane %v1230, %v1243
  %v1245 = vcombine.high %v1244, %v1244
  %v1247 = vunpack.c.l.s4 1966171168
  %v1248 = vunpack.c.0.s8 %v1247
  %v1249 = vlaneseq
  %v1250 = vshrl.u32 %v1249, 7
  %v1251 = vsub.s32 %v1248, %v1250
  %v1252 = vrot.slane %v1231, %v1251
  %v1253 = vcombine.high %v1252, %v1252
  %v1255 = vunpack.c.l.s4 1966171168
  %v1256 = vunpack.c.0.s8 %v1255
  %v1257 = vlaneseq
  %v1258 = vshrl.u32 %v1257, 7
  %v1259 = vsub.s32 %v1256, %v1258
  %v1260 = vrot.slane %v1232, %v1259
  %v1261 = vcombine.high %v1260, %v1260
  %v1263 = vunpack.c.l.s4 1966171168
  %v1264 = vunpack.c.0.s8 %v1263
  %v1265 = vlaneseq
  %v1266 = vshrl.u32 %v1265, 7
  %v1267 = vsub.s32 %v1264, %v1266
  %v1268 = vrot.slane %v1233, %v1267
  %v1269 = vcombine.high %v1268, %v1268
  %v1271 = vshrl.u32 %v1244, 16
  %v1273 = vrot.slane %v1271, 7
  %v1274 = vrot.slane %v1273, 1
  %v1276 = vshll.u32 %v1245, 16
  %v1278 = vsel %vm368, %v1274, %v1276
  %v1280 = vshrl.u32 %v1252, 16
  %v1282 = vrot.slane %v1280, 7
  %v1283 = vrot.slane %v1282, 1
  %v1285 = vshll.u32 %v1253, 16
  %v1287 = vsel %vm368, %v1283, %v1285
  %v1289 = vshrl.u32 %v1260, 16
  %v1291 = vrot.slane %v1289, 7
  %v1292 = vrot.slane %v1291, 1
  %v1294 = vshll.u32 %v1261, 16
  %v1296 = vsel %vm368, %v1292, %v1294
  %v1298 = vshrl.u32 %v1268, 16
  %v1300 = vrot.slane %v1298, 7
  %v1301 = vrot.slane %v1300, 1
  %v1303 = vshll.u32 %v1269, 16
  %v1305 = vsel %vm368, %v1301, %v1303
  %s1306 = scalar_lea.vmem %s1, 448
  %v1307 = vld [vmem:[%s1306] sm:$0xf]
  %v1308 = vld [vmem:[%s1306 + $0x4] sm:$0xf]
  %v1309 = vld [vmem:[%s1306 + $0x8] sm:$0xf]
  %v1310 = vld [vmem:[%s1306 + $0xc] sm:$0xf]
  %v1311 = vld [vmem:[%s1306 + $0x10] sm:$0xf]
  %v1312 = vld [vmem:[%s1306 + $0x14] sm:$0xf]
  %v1313 = vld [vmem:[%s1306 + $0x18] sm:$0xf]
  %v1314 = vld [vmem:[%s1306 + $0x1c] sm:$0xf]
  %v1315 = vld [vmem:[%s1306 + $0x20] sm:$0xf]
  %v1316 = vld [vmem:[%s1306 + $0x24] sm:$0xf]
  %v1317 = vld [vmem:[%s1306 + $0x28] sm:$0xf]
  %v1318 = vld [vmem:[%s1306 + $0x2c] sm:$0xf]
  %v1319 = vld [vmem:[%s1306 + $0x30] sm:$0xf]
  %v1320 = vld [vmem:[%s1306 + $0x34] sm:$0xf]
  %v1321 = vld [vmem:[%s1306 + $0x38] sm:$0xf]
  %v1322 = vld [vmem:[%s1306 + $0x3c] sm:$0xf]
  %v1323 = vcombine.low %v1278, %v1287
  %v1324 = vcombine.low %v1296, %v1305
  %v1326 = vunpack.c.l.s4 1966171168
  %v1327 = vunpack.c.0.s8 %v1326
  %v1328 = vlaneseq
  %v1329 = vshrl.u32 %v1328, 7
  %v1330 = vsub.s32 %v1327, %v1329
  %v1331 = vrot.slane %v1323, %v1330
  %v1333 = vunpack.c.l.s4 1966171168
  %v1334 = vunpack.c.0.s8 %v1333
  %v1335 = vlaneseq
  %v1336 = vshrl.u32 %v1335, 7
  %v1337 = vsub.s32 %v1334, %v1336
  %v1338 = vrot.slane %v1324, %v1337
  %v1339 = vcombine.low %v1331, %v1338
  %v1341 = vunpack.c.l.s4 1966171168
  %v1342 = vunpack.c.0.s8 %v1341
  %v1343 = vlaneseq
  %v1344 = vshrl.u32 %v1343, 7
  %v1345 = vsub.s32 %v1342, %v1344
  %v1346 = vrot.slane %v1339, %v1345
  %v1364 = vunpack.c.l.b16 %v1307
  %v1365 = vunpack.c.l.b16 %v1308
  %v1366 = vunpack.c.l.b16 %v1309
  %v1367 = vunpack.c.l.b16 %v1310
  %v1368 = vunpack.c.l.b16 %v1311
  %v1369 = vunpack.c.l.b16 %v1312
  %v1370 = vunpack.c.l.b16 %v1313
  %v1371 = vunpack.c.l.b16 %v1314
  %v1372 = vunpack.c.l.b16 %v1315
  %v1373 = vunpack.c.l.b16 %v1316
  %v1374 = vunpack.c.l.b16 %v1317
  %v1375 = vunpack.c.l.b16 %v1318
  %v1376 = vunpack.c.l.b16 %v1319
  %v1377 = vunpack.c.l.b16 %v1320
  %v1378 = vunpack.c.l.b16 %v1321
  %v1379 = vunpack.c.l.b16 %v1322
  %v1380 = vpack.c.b16 %v1365, %v1364
  %v1381 = vpack.c.b16 %v1367, %v1366
  %v1382 = vpack.c.b16 %v1369, %v1368
  %v1383 = vpack.c.b16 %v1371, %v1370
  %v1384 = vpack.c.b16 %v1373, %v1372
  %v1385 = vpack.c.b16 %v1375, %v1374
  %v1386 = vpack.c.b16 %v1377, %v1376
  %v1387 = vpack.c.b16 %v1379, %v1378
  %1396 = vmatprep.subr.bf16.mxu0 0
  %1397 = vmatpush1.bf16.msra.mxu0 %v1380
  %1398 = vmatprep.subr.bf16.mxu0 0
  %1399 = vmatpush1.bf16.msra.mxu0 %v1381
  %1400 = vmatprep.subr.bf16.mxu0 0
  %1401 = vmatpush1.bf16.msra.mxu0 %v1382
  %1402 = vmatprep.subr.bf16.mxu0 0
  %1403 = vmatpush1.bf16.msra.mxu0 %v1383
  %1404 = vmatprep.subr.bf16.mxu0 0
  %1405 = vmatpush1.bf16.msra.mxu0 %v1384
  %1406 = vmatprep.subr.bf16.mxu0 0
  %1407 = vmatpush1.bf16.msra.mxu0 %v1385
  %1408 = vmatprep.subr.bf16.mxu0 0
  %1409 = vmatpush1.bf16.msra.mxu0 %v1386
  %1410 = vmatprep.subr.bf16.mxu0 0
  %1411 = vmatpush1.bf16.msra.mxu0 %v1387
  %1412 = vmatprep.subr.bf16.mxu0 0
  %1413 = vmatpush1.bf16.msra.mxu0 0
  %1414 = vmatprep.subr.bf16.mxu0 0
  %1415 = vmatpush1.bf16.msra.mxu0 0
  %1416 = vmatprep.subr.bf16.mxu0 0
  %1417 = vmatpush1.bf16.msra.mxu0 0
  %1418 = vmatprep.subr.bf16.mxu0 0
  %1419 = vmatpush1.bf16.msra.mxu0 0
  %1420 = vmatprep.subr.bf16.mxu0 0
  %1421 = vmatpush1.bf16.msra.mxu0 0
  %1422 = vmatprep.subr.bf16.mxu0 0
  %1423 = vmatpush1.bf16.msra.mxu0 0
  %1424 = vmatprep.subr.bf16.mxu0 0
  %1425 = vmatpush1.bf16.msra.mxu0 0
  %1426 = vmatprep.subr.bf16.mxu0 0
  %1427 = vmatpush1.bf16.msra.mxu0 0
  %1428 = vmatprep.mubr.bf16.mxu0 0
  %1429 = vmatmul.mubr.bf16.gmra.mrb[0].mxu0 %v1346
  %v1430 = vpop.f32.mrb[0].mxu0
  %v1431 = vadd.f32 0.0, %v1430
  %v1432 = vpop.f32.mrb[0].mxu0
  %v1433 = vpop.f32.mrb[0].mxu0
  %v1434 = vpop.f32.mrb[0].mxu0
  %1435 = vdwg.mxu0
  %v1436 = vadd.f32 %v1229, %v1431
  %s1437 = scalar_lea.vmem %s35, 2
  %v1438 = vld [vmem:[%s1437] sm:$0x1]
  %v1439 = vld [vmem:[%s1437 + $0x2] sm:$0x1]
  %v1440 = vld [vmem:[%s1437 + $0x6] sm:$0x1]
  %v1441 = vld [vmem:[%s1437 + $0x8] sm:$0x1]
  %s1442 = scalar_lea.vmem %s1, 512
  %v1443 = vld [vmem:[%s1442] sm:$0xf]
  %v1444 = vld [vmem:[%s1442 + $0x4] sm:$0xf]
  %v1445 = vld [vmem:[%s1442 + $0x8] sm:$0xf]
  %v1446 = vld [vmem:[%s1442 + $0xc] sm:$0xf]
  %v1447 = vld [vmem:[%s1442 + $0x10] sm:$0xf]
  %v1448 = vld [vmem:[%s1442 + $0x14] sm:$0xf]
  %v1449 = vld [vmem:[%s1442 + $0x18] sm:$0xf]
  %v1450 = vld [vmem:[%s1442 + $0x1c] sm:$0xf]
  %v1451 = vld [vmem:[%s1442 + $0x20] sm:$0xf]
  %v1452 = vld [vmem:[%s1442 + $0x24] sm:$0xf]
  %v1453 = vld [vmem:[%s1442 + $0x28] sm:$0xf]
  %v1454 = vld [vmem:[%s1442 + $0x2c] sm:$0xf]
  %v1455 = vld [vmem:[%s1442 + $0x30] sm:$0xf]
  %v1456 = vld [vmem:[%s1442 + $0x34] sm:$0xf]
  %v1457 = vld [vmem:[%s1442 + $0x38] sm:$0xf]
  %v1458 = vld [vmem:[%s1442 + $0x3c] sm:$0xf]
  %v1463 = vcombine.low %v1438, %v1439
  %v1464 = vcombine.low %v1440, %v1441
  %v1466 = vunpack.c.l.s4 1966171168
  %v1467 = vunpack.c.0.s8 %v1466
  %v1468 = vlaneseq
  %v1469 = vshrl.u32 %v1468, 7
  %v1470 = vsub.s32 %v1467, %v1469
  %v1471 = vrot.slane %v1463, %v1470
  %v1473 = vunpack.c.l.s4 1966171168
  %v1474 = vunpack.c.0.s8 %v1473
  %v1475 = vlaneseq
  %v1476 = vshrl.u32 %v1475, 7
  %v1477 = vsub.s32 %v1474, %v1476
  %v1478 = vrot.slane %v1464, %v1477
  %v1479 = vcombine.low %v1471, %v1478
  %v1481 = vunpack.c.l.s4 1966171168
  %v1482 = vunpack.c.0.s8 %v1481
  %v1483 = vlaneseq
  %v1484 = vshrl.u32 %v1483, 7
  %v1485 = vsub.s32 %v1482, %v1484
  %v1486 = vrot.slane %v1479, %v1485
  %v1504 = vunpack.c.l.b16 %v1443
  %v1505 = vunpack.c.l.b16 %v1444
  %v1506 = vunpack.c.l.b16 %v1445
  %v1507 = vunpack.c.l.b16 %v1446
  %v1508 = vunpack.c.l.b16 %v1447
  %v1509 = vunpack.c.l.b16 %v1448
  %v1510 = vunpack.c.l.b16 %v1449
  %v1511 = vunpack.c.l.b16 %v1450
  %v1512 = vunpack.c.l.b16 %v1451
  %v1513 = vunpack.c.l.b16 %v1452
  %v1514 = vunpack.c.l.b16 %v1453
  %v1515 = vunpack.c.l.b16 %v1454
  %v1516 = vunpack.c.l.b16 %v1455
  %v1517 = vunpack.c.l.b16 %v1456
  %v1518 = vunpack.c.l.b16 %v1457
  %v1519 = vunpack.c.l.b16 %v1458
  %v1520 = vpack.c.b16 %v1505, %v1504
  %v1521 = vpack.c.b16 %v1507, %v1506
  %v1522 = vpack.c.b16 %v1509, %v1508
  %v1523 = vpack.c.b16 %v1511, %v1510
  %v1524 = vpack.c.b16 %v1513, %v1512
  %v1525 = vpack.c.b16 %v1515, %v1514
  %v1526 = vpack.c.b16 %v1517, %v1516
  %v1527 = vpack.c.b16 %v1519, %v1518
  %1536 = vmatprep.subr.bf16.mxu0 0
  %1537 = vmatpush1.bf16.msra.mxu0 %v1520
  %1538 = vmatprep.subr.bf16.mxu0 0
  %1539 = vmatpush1.bf16.msra.mxu0 %v1521
  %1540 = vmatprep.subr.bf16.mxu0 0
  %1541 = vmatpush1.bf16.msra.mxu0 %v1522
  %1542 = vmatprep.subr.bf16.mxu0 0
  %1543 = vmatpush1.bf16.msra.mxu0 %v1523
  %1544 = vmatprep.subr.bf16.mxu0 0
  %1545 = vmatpush1.bf16.msra.mxu0 %v1524
  %1546 = vmatprep.subr.bf16.mxu0 0
  %1547 = vmatpush1.bf16.msra.mxu0 %v1525
  %1548 = vmatprep.subr.bf16.mxu0 0
  %1549 = vmatpush1.bf16.msra.mxu0 %v1526
  %1550 = vmatprep.subr.bf16.mxu0 0
  %1551 = vmatpush1.bf16.msra.mxu0 %v1527
  %1552 = vmatprep.subr.bf16.mxu0 0
  %1553 = vmatpush1.bf16.msra.mxu0 0
  %1554 = vmatprep.subr.bf16.mxu0 0
  %1555 = vmatpush1.bf16.msra.mxu0 0
  %1556 = vmatprep.subr.bf16.mxu0 0
  %1557 = vmatpush1.bf16.msra.mxu0 0
  %1558 = vmatprep.subr.bf16.mxu0 0
  %1559 = vmatpush1.bf16.msra.mxu0 0
  %1560 = vmatprep.subr.bf16.mxu0 0
  %1561 = vmatpush1.bf16.msra.mxu0 0
  %1562 = vmatprep.subr.bf16.mxu0 0
  %1563 = vmatpush1.bf16.msra.mxu0 0
  %1564 = vmatprep.subr.bf16.mxu0 0
  %1565 = vmatpush1.bf16.msra.mxu0 0
  %1566 = vmatprep.subr.bf16.mxu0 0
  %1567 = vmatpush1.bf16.msra.mxu0 0
  %1568 = vmatprep.mubr.bf16.mxu0 0
  %1569 = vmatmul.mubr.bf16.gmra.mrb[0].mxu0 %v1486
  %v1570 = vpop.f32.mrb[0].mxu0
  %v1571 = vadd.f32 0.0, %v1570
  %v1572 = vpop.f32.mrb[0].mxu0
  %v1573 = vpop.f32.mrb[0].mxu0
  %v1574 = vpop.f32.mrb[0].mxu0
  %1575 = vdwg.mxu0
  %v1576 = vadd.f32 %v1436, %v1571
  %s1577 = scalar_lea.vmem %s35, 14
  %v1578 = vld [vmem:[%s1577] sm:$0x1]
  %v1579 = vld [vmem:[%s1577 + $0x2] sm:$0x1]
  %v1580 = vld [vmem:[%s1577 + $0x6] sm:$0x1]
  %v1581 = vld [vmem:[%s1577 + $0x8] sm:$0x1]
  %s1582 = scalar_lea.vmem %s1, 576
  %v1583 = vld [vmem:[%s1582] sm:$0xf]
  %v1584 = vld [vmem:[%s1582 + $0x4] sm:$0xf]
  %v1585 = vld [vmem:[%s1582 + $0x8] sm:$0xf]
  %v1586 = vld [vmem:[%s1582 + $0xc] sm:$0xf]
  %v1587 = vld [vmem:[%s1582 + $0x10] sm:$0xf]
  %v1588 = vld [vmem:[%s1582 + $0x14] sm:$0xf]
  %v1589 = vld [vmem:[%s1582 + $0x18] sm:$0xf]
  %v1590 = vld [vmem:[%s1582 + $0x1c] sm:$0xf]
  %v1591 = vld [vmem:[%s1582 + $0x20] sm:$0xf]
  %v1592 = vld [vmem:[%s1582 + $0x24] sm:$0xf]
  %v1593 = vld [vmem:[%s1582 + $0x28] sm:$0xf]
  %v1594 = vld [vmem:[%s1582 + $0x2c] sm:$0xf]
  %v1595 = vld [vmem:[%s1582 + $0x30] sm:$0xf]
  %v1596 = vld [vmem:[%s1582 + $0x34] sm:$0xf]
  %v1597 = vld [vmem:[%s1582 + $0x38] sm:$0xf]
  %v1598 = vld [vmem:[%s1582 + $0x3c] sm:$0xf]
  %v1603 = vcombine.low %v1578, %v1579
  %v1604 = vcombine.low %v1580, %v1581
  %v1606 = vunpack.c.l.s4 1966171168
  %v1607 = vunpack.c.0.s8 %v1606
  %v1608 = vlaneseq
  %v1609 = vshrl.u32 %v1608, 7
  %v1610 = vsub.s32 %v1607, %v1609
  %v1611 = vrot.slane %v1603, %v1610
  %v1613 = vunpack.c.l.s4 1966171168
  %v1614 = vunpack.c.0.s8 %v1613
  %v1615 = vlaneseq
  %v1616 = vshrl.u32 %v1615, 7
  %v1617 = vsub.s32 %v1614, %v1616
  %v1618 = vrot.slane %v1604, %v1617
  %v1619 = vcombine.low %v1611, %v1618
  %v1621 = vunpack.c.l.s4 1966171168
  %v1622 = vunpack.c.0.s8 %v1621
  %v1623 = vlaneseq
  %v1624 = vshrl.u32 %v1623, 7
  %v1625 = vsub.s32 %v1622, %v1624
  %v1626 = vrot.slane %v1619, %v1625
  %v1644 = vunpack.c.l.b16 %v1583
  %v1645 = vunpack.c.l.b16 %v1584
  %v1646 = vunpack.c.l.b16 %v1585
  %v1647 = vunpack.c.l.b16 %v1586
  %v1648 = vunpack.c.l.b16 %v1587
  %v1649 = vunpack.c.l.b16 %v1588
  %v1650 = vunpack.c.l.b16 %v1589
  %v1651 = vunpack.c.l.b16 %v1590
  %v1652 = vunpack.c.l.b16 %v1591
  %v1653 = vunpack.c.l.b16 %v1592
  %v1654 = vunpack.c.l.b16 %v1593
  %v1655 = vunpack.c.l.b16 %v1594
  %v1656 = vunpack.c.l.b16 %v1595
  %v1657 = vunpack.c.l.b16 %v1596
  %v1658 = vunpack.c.l.b16 %v1597
  %v1659 = vunpack.c.l.b16 %v1598
  %v1660 = vpack.c.b16 %v1645, %v1644
  %v1661 = vpack.c.b16 %v1647, %v1646
  %v1662 = vpack.c.b16 %v1649, %v1648
  %v1663 = vpack.c.b16 %v1651, %v1650
  %v1664 = vpack.c.b16 %v1653, %v1652
  %v1665 = vpack.c.b16 %v1655, %v1654
  %v1666 = vpack.c.b16 %v1657, %v1656
  %v1667 = vpack.c.b16 %v1659, %v1658
  %1676 = vmatprep.subr.bf16.mxu0 0
  %1677 = vmatpush1.bf16.msra.mxu0 %v1660
  %1678 = vmatprep.subr.bf16.mxu0 0
  %1679 = vmatpush1.bf16.msra.mxu0 %v1661
  %1680 = vmatprep.subr.bf16.mxu0 0
  %1681 = vmatpush1.bf16.msra.mxu0 %v1662
  %1682 = vmatprep.subr.bf16.mxu0 0
  %1683 = vmatpush1.bf16.msra.mxu0 %v1663
  %1684 = vmatprep.subr.bf16.mxu0 0
  %1685 = vmatpush1.bf16.msra.mxu0 %v1664
  %1686 = vmatprep.subr.bf16.mxu0 0
  %1687 = vmatpush1.bf16.msra.mxu0 %v1665
  %1688 = vmatprep.subr.bf16.mxu0 0
  %1689 = vmatpush1.bf16.msra.mxu0 %v1666
  %1690 = vmatprep.subr.bf16.mxu0 0
  %1691 = vmatpush1.bf16.msra.mxu0 %v1667
  %1692 = vmatprep.subr.bf16.mxu0 0
  %1693 = vmatpush1.bf16.msra.mxu0 0
  %1694 = vmatprep.subr.bf16.mxu0 0
  %1695 = vmatpush1.bf16.msra.mxu0 0
  %1696 = vmatprep.subr.bf16.mxu0 0
  %1697 = vmatpush1.bf16.msra.mxu0 0
  %1698 = vmatprep.subr.bf16.mxu0 0
  %1699 = vmatpush1.bf16.msra.mxu0 0
  %1700 = vmatprep.subr.bf16.mxu0 0
  %1701 = vmatpush1.bf16.msra.mxu0 0
  %1702 = vmatprep.subr.bf16.mxu0 0
  %1703 = vmatpush1.bf16.msra.mxu0 0
  %1704 = vmatprep.subr.bf16.mxu0 0
  %1705 = vmatpush1.bf16.msra.mxu0 0
  %1706 = vmatprep.subr.bf16.mxu0 0
  %1707 = vmatpush1.bf16.msra.mxu0 0
  %1708 = vmatprep.mubr.bf16.mxu0 0
  %1709 = vmatmul.mubr.bf16.gmra.mrb[0].mxu0 %v1626
  %v1710 = vpop.f32.mrb[0].mxu0
  %v1711 = vadd.f32 0.0, %v1710
  %v1712 = vpop.f32.mrb[0].mxu0
  %v1713 = vpop.f32.mrb[0].mxu0
  %v1714 = vpop.f32.mrb[0].mxu0
  %1715 = vdwg.mxu0
  %v1716 = vadd.f32 %v1576, %v1711
  %v1717 = vld [vmem:[%s1437] sm:$0x3]
  %v1718 = vld [vmem:[%s1437 + $0x2] sm:$0x3]
  %v1719 = vld [vmem:[%s1437 + $0x6] sm:$0x3]
  %v1720 = vld [vmem:[%s1437 + $0x8] sm:$0x3]
  %v1726 = vunpack.c.l.s4 1966171168
  %v1727 = vunpack.c.0.s8 %v1726
  %v1728 = vlaneseq
  %v1729 = vshrl.u32 %v1728, 7
  %v1730 = vsub.s32 %v1727, %v1729
  %v1731 = vrot.slane %v1717, %v1730
  %v1732 = vcombine.high %v1731, %v1731
  %v1734 = vunpack.c.l.s4 1966171168
  %v1735 = vunpack.c.0.s8 %v1734
  %v1736 = vlaneseq
  %v1737 = vshrl.u32 %v1736, 7
  %v1738 = vsub.s32 %v1735, %v1737
  %v1739 = vrot.slane %v1718, %v1738
  %v1740 = vcombine.high %v1739, %v1739
  %v1742 = vunpack.c.l.s4 1966171168
  %v1743 = vunpack.c.0.s8 %v1742
  %v1744 = vlaneseq
  %v1745 = vshrl.u32 %v1744, 7
  %v1746 = vsub.s32 %v1743, %v1745
  %v1747 = vrot.slane %v1719, %v1746
  %v1748 = vcombine.high %v1747, %v1747
  %v1750 = vunpack.c.l.s4 1966171168
  %v1751 = vunpack.c.0.s8 %v1750
  %v1752 = vlaneseq
  %v1753 = vshrl.u32 %v1752, 7
  %v1754 = vsub.s32 %v1751, %v1753
  %v1755 = vrot.slane %v1720, %v1754
  %v1756 = vcombine.high %v1755, %v1755
  %v1758 = vshrl.u32 %v1731, 16
  %v1760 = vrot.slane %v1758, 7
  %v1761 = vrot.slane %v1760, 1
  %v1763 = vshll.u32 %v1732, 16
  %v1765 = vsel %vm368, %v1761, %v1763
  %v1767 = vshrl.u32 %v1739, 16
  %v1769 = vrot.slane %v1767, 7
  %v1770 = vrot.slane %v1769, 1
  %v1772 = vshll.u32 %v1740, 16
  %v1774 = vsel %vm368, %v1770, %v1772
  %v1776 = vshrl.u32 %v1747, 16
  %v1778 = vrot.slane %v1776, 7
  %v1779 = vrot.slane %v1778, 1
  %v1781 = vshll.u32 %v1748, 16
  %v1783 = vsel %vm368, %v1779, %v1781
  %v1785 = vshrl.u32 %v1755, 16
  %v1787 = vrot.slane %v1785, 7
  %v1788 = vrot.slane %v1787, 1
  %v1790 = vshll.u32 %v1756, 16
  %v1792 = vsel %vm368, %v1788, %v1790
  %s1793 = scalar_lea.vmem %s1, 640
  %v1794 = vld [vmem:[%s1793] sm:$0xf]
  %v1795 = vld [vmem:[%s1793 + $0x4] sm:$0xf]
  %v1796 = vld [vmem:[%s1793 + $0x8] sm:$0xf]
  %v1797 = vld [vmem:[%s1793 + $0xc] sm:$0xf]
  %v1798 = vld [vmem:[%s1793 + $0x10] sm:$0xf]
  %v1799 = vld [vmem:[%s1793 + $0x14] sm:$0xf]
  %v1800 = vld [vmem:[%s1793 + $0x18] sm:$0xf]
  %v1801 = vld [vmem:[%s1793 + $0x1c] sm:$0xf]
  %v1802 = vld [vmem:[%s1793 + $0x20] sm:$0xf]
  %v1803 = vld [vmem:[%s1793 + $0x24] sm:$0xf]
  %v1804 = vld [vmem:[%s1793 + $0x28] sm:$0xf]
  %v1805 = vld [vmem:[%s1793 + $0x2c] sm:$0xf]
  %v1806 = vld [vmem:[%s1793 + $0x30] sm:$0xf]
  %v1807 = vld [vmem:[%s1793 + $0x34] sm:$0xf]
  %v1808 = vld [vmem:[%s1793 + $0x38] sm:$0xf]
  %v1809 = vld [vmem:[%s1793 + $0x3c] sm:$0xf]
  %v1810 = vcombine.low %v1765, %v1774
  %v1811 = vcombine.low %v1783, %v1792
  %v1813 = vunpack.c.l.s4 1966171168
  %v1814 = vunpack.c.0.s8 %v1813
  %v1815 = vlaneseq
  %v1816 = vshrl.u32 %v1815, 7
  %v1817 = vsub.s32 %v1814, %v1816
  %v1818 = vrot.slane %v1810, %v1817
  %v1820 = vunpack.c.l.s4 1966171168
  %v1821 = vunpack.c.0.s8 %v1820
  %v1822 = vlaneseq
  %v1823 = vshrl.u32 %v1822, 7
  %v1824 = vsub.s32 %v1821, %v1823
  %v1825 = vrot.slane %v1811, %v1824
  %v1826 = vcombine.low %v1818, %v1825
  %v1828 = vunpack.c.l.s4 1966171168
  %v1829 = vunpack.c.0.s8 %v1828
  %v1830 = vlaneseq
  %v1831 = vshrl.u32 %v1830, 7
  %v1832 = vsub.s32 %v1829, %v1831
  %v1833 = vrot.slane %v1826, %v1832
  %v1851 = vunpack.c.l.b16 %v1794
  %v1852 = vunpack.c.l.b16 %v1795
  %v1853 = vunpack.c.l.b16 %v1796
  %v1854 = vunpack.c.l.b16 %v1797
  %v1855 = vunpack.c.l.b16 %v1798
  %v1856 = vunpack.c.l.b16 %v1799
  %v1857 = vunpack.c.l.b16 %v1800
  %v1858 = vunpack.c.l.b16 %v1801
  %v1859 = vunpack.c.l.b16 %v1802
  %v1860 = vunpack.c.l.b16 %v1803
  %v1861 = vunpack.c.l.b16 %v1804
  %v1862 = vunpack.c.l.b16 %v1805
  %v1863 = vunpack.c.l.b16 %v1806
  %v1864 = vunpack.c.l.b16 %v1807
  %v1865 = vunpack.c.l.b16 %v1808
  %v1866 = vunpack.c.l.b16 %v1809
  %v1867 = vpack.c.b16 %v1852, %v1851
  %v1868 = vpack.c.b16 %v1854, %v1853
  %v1869 = vpack.c.b16 %v1856, %v1855
  %v1870 = vpack.c.b16 %v1858, %v1857
  %v1871 = vpack.c.b16 %v1860, %v1859
  %v1872 = vpack.c.b16 %v1862, %v1861
  %v1873 = vpack.c.b16 %v1864, %v1863
  %v1874 = vpack.c.b16 %v1866, %v1865
  %1883 = vmatprep.subr.bf16.mxu0 0
  %1884 = vmatpush1.bf16.msra.mxu0 %v1867
  %1885 = vmatprep.subr.bf16.mxu0 0
  %1886 = vmatpush1.bf16.msra.mxu0 %v1868
  %1887 = vmatprep.subr.bf16.mxu0 0
  %1888 = vmatpush1.bf16.msra.mxu0 %v1869
  %1889 = vmatprep.subr.bf16.mxu0 0
  %1890 = vmatpush1.bf16.msra.mxu0 %v1870
  %1891 = vmatprep.subr.bf16.mxu0 0
  %1892 = vmatpush1.bf16.msra.mxu0 %v1871
  %1893 = vmatprep.subr.bf16.mxu0 0
  %1894 = vmatpush1.bf16.msra.mxu0 %v1872
  %1895 = vmatprep.subr.bf16.mxu0 0
  %1896 = vmatpush1.bf16.msra.mxu0 %v1873
  %1897 = vmatprep.subr.bf16.mxu0 0
  %1898 = vmatpush1.bf16.msra.mxu0 %v1874
  %1899 = vmatprep.subr.bf16.mxu0 0
  %1900 = vmatpush1.bf16.msra.mxu0 0
  %1901 = vmatprep.subr.bf16.mxu0 0
  %1902 = vmatpush1.bf16.msra.mxu0 0
  %1903 = vmatprep.subr.bf16.mxu0 0
  %1904 = vmatpush1.bf16.msra.mxu0 0
  %1905 = vmatprep.subr.bf16.mxu0 0
  %1906 = vmatpush1.bf16.msra.mxu0 0
  %1907 = vmatprep.subr.bf16.mxu0 0
  %1908 = vmatpush1.bf16.msra.mxu0 0
  %1909 = vmatprep.subr.bf16.mxu0 0
  %1910 = vmatpush1.bf16.msra.mxu0 0
  %1911 = vmatprep.subr.bf16.mxu0 0
  %1912 = vmatpush1.bf16.msra.mxu0 0
  %1913 = vmatprep.subr.bf16.mxu0 0
  %1914 = vmatpush1.bf16.msra.mxu0 0
  %1915 = vmatprep.mubr.bf16.mxu0 0
  %1916 = vmatmul.mubr.bf16.gmra.mrb[0].mxu0 %v1833
  %v1917 = vpop.f32.mrb[0].mxu0
  %v1918 = vadd.f32 0.0, %v1917
  %v1919 = vpop.f32.mrb[0].mxu0
  %v1920 = vpop.f32.mrb[0].mxu0
  %v1921 = vpop.f32.mrb[0].mxu0
  %1922 = vdwg.mxu0
  %v1923 = vadd.f32 %v1716, %v1918
  %v1924 = vld [vmem:[%s1577] sm:$0x3]
  %v1925 = vld [vmem:[%s1577 + $0x2] sm:$0x3]
  %v1926 = vld [vmem:[%s1577 + $0x6] sm:$0x3]
  %v1927 = vld [vmem:[%s1577 + $0x8] sm:$0x3]
  %v1933 = vunpack.c.l.s4 1966171168
  %v1934 = vunpack.c.0.s8 %v1933
  %v1935 = vlaneseq
  %v1936 = vshrl.u32 %v1935, 7
  %v1937 = vsub.s32 %v1934, %v1936
  %v1938 = vrot.slane %v1924, %v1937
  %v1939 = vcombine.high %v1938, %v1938
  %v1941 = vunpack.c.l.s4 1966171168
  %v1942 = vunpack.c.0.s8 %v1941
  %v1943 = vlaneseq
  %v1944 = vshrl.u32 %v1943, 7
  %v1945 = vsub.s32 %v1942, %v1944
  %v1946 = vrot.slane %v1925, %v1945
  %v1947 = vcombine.high %v1946, %v1946
  %v1949 = vunpack.c.l.s4 1966171168
  %v1950 = vunpack.c.0.s8 %v1949
  %v1951 = vlaneseq
  %v1952 = vshrl.u32 %v1951, 7
  %v1953 = vsub.s32 %v1950, %v1952
  %v1954 = vrot.slane %v1926, %v1953
  %v1955 = vcombine.high %v1954, %v1954
  %v1957 = vunpack.c.l.s4 1966171168
  %v1958 = vunpack.c.0.s8 %v1957
  %v1959 = vlaneseq
  %v1960 = vshrl.u32 %v1959, 7
  %v1961 = vsub.s32 %v1958, %v1960
  %v1962 = vrot.slane %v1927, %v1961
  %v1963 = vcombine.high %v1962, %v1962
  %v1965 = vshrl.u32 %v1938, 16
  %v1967 = vrot.slane %v1965, 7
  %v1968 = vrot.slane %v1967, 1
  %v1970 = vshll.u32 %v1939, 16
  %v1972 = vsel %vm368, %v1968, %v1970
  %v1974 = vshrl.u32 %v1946, 16
  %v1976 = vrot.slane %v1974, 7
  %v1977 = vrot.slane %v1976, 1
  %v1979 = vshll.u32 %v1947, 16
  %v1981 = vsel %vm368, %v1977, %v1979
  %v1983 = vshrl.u32 %v1954, 16
  %v1985 = vrot.slane %v1983, 7
  %v1986 = vrot.slane %v1985, 1
  %v1988 = vshll.u32 %v1955, 16
  %v1990 = vsel %vm368, %v1986, %v1988
  %v1992 = vshrl.u32 %v1962, 16
  %v1994 = vrot.slane %v1992, 7
  %v1995 = vrot.slane %v1994, 1
  %v1997 = vshll.u32 %v1963, 16
  %v1999 = vsel %vm368, %v1995, %v1997
  %s2000 = scalar_lea.vmem %s1, 704
  %v2001 = vld [vmem:[%s2000] sm:$0xf]
  %v2002 = vld [vmem:[%s2000 + $0x4] sm:$0xf]
  %v2003 = vld [vmem:[%s2000 + $0x8] sm:$0xf]
  %v2004 = vld [vmem:[%s2000 + $0xc] sm:$0xf]
  %v2005 = vld [vmem:[%s2000 + $0x10] sm:$0xf]
  %v2006 = vld [vmem:[%s2000 + $0x14] sm:$0xf]
  %v2007 = vld [vmem:[%s2000 + $0x18] sm:$0xf]
  %v2008 = vld [vmem:[%s2000 + $0x1c] sm:$0xf]
  %v2009 = vld [vmem:[%s2000 + $0x20] sm:$0xf]
  %v2010 = vld [vmem:[%s2000 + $0x24] sm:$0xf]
  %v2011 = vld [vmem:[%s2000 + $0x28] sm:$0xf]
  %v2012 = vld [vmem:[%s2000 + $0x2c] sm:$0xf]
  %v2013 = vld [vmem:[%s2000 + $0x30] sm:$0xf]
  %v2014 = vld [vmem:[%s2000 + $0x34] sm:$0xf]
  %v2015 = vld [vmem:[%s2000 + $0x38] sm:$0xf]
  %v2016 = vld [vmem:[%s2000 + $0x3c] sm:$0xf]
  %v2017 = vcombine.low %v1972, %v1981
  %v2018 = vcombine.low %v1990, %v1999
  %v2020 = vunpack.c.l.s4 1966171168
  %v2021 = vunpack.c.0.s8 %v2020
  %v2022 = vlaneseq
  %v2023 = vshrl.u32 %v2022, 7
  %v2024 = vsub.s32 %v2021, %v2023
  %v2025 = vrot.slane %v2017, %v2024
  %v2027 = vunpack.c.l.s4 1966171168
  %v2028 = vunpack.c.0.s8 %v2027
  %v2029 = vlaneseq
  %v2030 = vshrl.u32 %v2029, 7
  %v2031 = vsub.s32 %v2028, %v2030
  %v2032 = vrot.slane %v2018, %v2031
  %v2033 = vcombine.low %v2025, %v2032
  %v2035 = vunpack.c.l.s4 1966171168
  %v2036 = vunpack.c.0.s8 %v2035
  %v2037 = vlaneseq
  %v2038 = vshrl.u32 %v2037, 7
  %v2039 = vsub.s32 %v2036, %v2038
  %v2040 = vrot.slane %v2033, %v2039
  %v2058 = vunpack.c.l.b16 %v2001
  %v2059 = vunpack.c.l.b16 %v2002
  %v2060 = vunpack.c.l.b16 %v2003
  %v2061 = vunpack.c.l.b16 %v2004
  %v2062 = vunpack.c.l.b16 %v2005
  %v2063 = vunpack.c.l.b16 %v2006
  %v2064 = vunpack.c.l.b16 %v2007
  %v2065 = vunpack.c.l.b16 %v2008
  %v2066 = vunpack.c.l.b16 %v2009
  %v2067 = vunpack.c.l.b16 %v2010
  %v2068 = vunpack.c.l.b16 %v2011
  %v2069 = vunpack.c.l.b16 %v2012
  %v2070 = vunpack.c.l.b16 %v2013
  %v2071 = vunpack.c.l.b16 %v2014
  %v2072 = vunpack.c.l.b16 %v2015
  %v2073 = vunpack.c.l.b16 %v2016
  %v2074 = vpack.c.b16 %v2059, %v2058
  %v2075 = vpack.c.b16 %v2061, %v2060
  %v2076 = vpack.c.b16 %v2063, %v2062
  %v2077 = vpack.c.b16 %v2065, %v2064
  %v2078 = vpack.c.b16 %v2067, %v2066
  %v2079 = vpack.c.b16 %v2069, %v2068
  %v2080 = vpack.c.b16 %v2071, %v2070
  %v2081 = vpack.c.b16 %v2073, %v2072
  %2090 = vmatprep.subr.bf16.mxu0 0
  %2091 = vmatpush1.bf16.msra.mxu0 %v2074
  %2092 = vmatprep.subr.bf16.mxu0 0
  %2093 = vmatpush1.bf16.msra.mxu0 %v2075
  %2094 = vmatprep.subr.bf16.mxu0 0
  %2095 = vmatpush1.bf16.msra.mxu0 %v2076
  %2096 = vmatprep.subr.bf16.mxu0 0
  %2097 = vmatpush1.bf16.msra.mxu0 %v2077
  %2098 = vmatprep.subr.bf16.mxu0 0
  %2099 = vmatpush1.bf16.msra.mxu0 %v2078
  %2100 = vmatprep.subr.bf16.mxu0 0
  %2101 = vmatpush1.bf16.msra.mxu0 %v2079
  %2102 = vmatprep.subr.bf16.mxu0 0
  %2103 = vmatpush1.bf16.msra.mxu0 %v2080
  %2104 = vmatprep.subr.bf16.mxu0 0
  %2105 = vmatpush1.bf16.msra.mxu0 %v2081
  %2106 = vmatprep.subr.bf16.mxu0 0
  %2107 = vmatpush1.bf16.msra.mxu0 0
  %2108 = vmatprep.subr.bf16.mxu0 0
  %2109 = vmatpush1.bf16.msra.mxu0 0
  %2110 = vmatprep.subr.bf16.mxu0 0
  %2111 = vmatpush1.bf16.msra.mxu0 0
  %2112 = vmatprep.subr.bf16.mxu0 0
  %2113 = vmatpush1.bf16.msra.mxu0 0
  %2114 = vmatprep.subr.bf16.mxu0 0
  %2115 = vmatpush1.bf16.msra.mxu0 0
  %2116 = vmatprep.subr.bf16.mxu0 0
  %2117 = vmatpush1.bf16.msra.mxu0 0
  %2118 = vmatprep.subr.bf16.mxu0 0
  %2119 = vmatpush1.bf16.msra.mxu0 0
  %2120 = vmatprep.subr.bf16.mxu0 0
  %2121 = vmatpush1.bf16.msra.mxu0 0
  %2122 = vmatprep.mubr.bf16.mxu0 0
  %2123 = vmatmul.mubr.bf16.gmra.mrb[0].mxu0 %v2040
  %v2124 = vpop.f32.mrb[0].mxu0
  %v2125 = vadd.f32 0.0, %v2124
  %v2126 = vpop.f32.mrb[0].mxu0
  %v2127 = vpop.f32.mrb[0].mxu0
  %v2128 = vpop.f32.mrb[0].mxu0
  %2129 = vdwg.mxu0
  %v2130 = vadd.f32 %v1923, %v2125
  %s2131 = scalar_lea.vmem %s35, 26
  %v2132 = vld [vmem:[%s2131] sm:$0x1]
  %v2133 = vld [vmem:[%s2131 + $0x2] sm:$0x1]
  %v2134 = vld [vmem:[%s2131 + $0x6] sm:$0x1]
  %v2135 = vld [vmem:[%s2131 + $0x8] sm:$0x1]
  %s2136 = scalar_lea.vmem %s1, 768
  %v2137 = vld [vmem:[%s2136] sm:$0xf]
  %v2138 = vld [vmem:[%s2136 + $0x4] sm:$0xf]
  %v2139 = vld [vmem:[%s2136 + $0x8] sm:$0xf]
  %v2140 = vld [vmem:[%s2136 + $0xc] sm:$0xf]
  %v2141 = vld [vmem:[%s2136 + $0x10] sm:$0xf]
  %v2142 = vld [vmem:[%s2136 + $0x14] sm:$0xf]
  %v2143 = vld [vmem:[%s2136 + $0x18] sm:$0xf]
  %v2144 = vld [vmem:[%s2136 + $0x1c] sm:$0xf]
  %v2145 = vld [vmem:[%s2136 + $0x20] sm:$0xf]
  %v2146 = vld [vmem:[%s2136 + $0x24] sm:$0xf]
  %v2147 = vld [vmem:[%s2136 + $0x28] sm:$0xf]
  %v2148 = vld [vmem:[%s2136 + $0x2c] sm:$0xf]
  %v2149 = vld [vmem:[%s2136 + $0x30] sm:$0xf]
  %v2150 = vld [vmem:[%s2136 + $0x34] sm:$0xf]
  %v2151 = vld [vmem:[%s2136 + $0x38] sm:$0xf]
  %v2152 = vld [vmem:[%s2136 + $0x3c] sm:$0xf]
  %v2157 = vcombine.low %v2132, %v2133
  %v2158 = vcombine.low %v2134, %v2135
  %v2160 = vunpack.c.l.s4 1966171168
  %v2161 = vunpack.c.0.s8 %v2160
  %v2162 = vlaneseq
  %v2163 = vshrl.u32 %v2162, 7
  %v2164 = vsub.s32 %v2161, %v2163
  %v2165 = vrot.slane %v2157, %v2164
  %v2167 = vunpack.c.l.s4 1966171168
  %v2168 = vunpack.c.0.s8 %v2167
  %v2169 = vlaneseq
  %v2170 = vshrl.u32 %v2169, 7
  %v2171 = vsub.s32 %v2168, %v2170
  %v2172 = vrot.slane %v2158, %v2171
  %v2173 = vcombine.low %v2165, %v2172
  %v2175 = vunpack.c.l.s4 1966171168
  %v2176 = vunpack.c.0.s8 %v2175
  %v2177 = vlaneseq
  %v2178 = vshrl.u32 %v2177, 7
  %v2179 = vsub.s32 %v2176, %v2178
  %v2180 = vrot.slane %v2173, %v2179
  %v2198 = vunpack.c.l.b16 %v2137
  %v2199 = vunpack.c.l.b16 %v2138
  %v2200 = vunpack.c.l.b16 %v2139
  %v2201 = vunpack.c.l.b16 %v2140
  %v2202 = vunpack.c.l.b16 %v2141
  %v2203 = vunpack.c.l.b16 %v2142
  %v2204 = vunpack.c.l.b16 %v2143
  %v2205 = vunpack.c.l.b16 %v2144
  %v2206 = vunpack.c.l.b16 %v2145
  %v2207 = vunpack.c.l.b16 %v2146
  %v2208 = vunpack.c.l.b16 %v2147
  %v2209 = vunpack.c.l.b16 %v2148
  %v2210 = vunpack.c.l.b16 %v2149
  %v2211 = vunpack.c.l.b16 %v2150
  %v2212 = vunpack.c.l.b16 %v2151
  %v2213 = vunpack.c.l.b16 %v2152
  %v2214 = vpack.c.b16 %v2199, %v2198
  %v2215 = vpack.c.b16 %v2201, %v2200
  %v2216 = vpack.c.b16 %v2203, %v2202
  %v2217 = vpack.c.b16 %v2205, %v2204
  %v2218 = vpack.c.b16 %v2207, %v2206
  %v2219 = vpack.c.b16 %v2209, %v2208
  %v2220 = vpack.c.b16 %v2211, %v2210
  %v2221 = vpack.c.b16 %v2213, %v2212
  %2230 = vmatprep.subr.bf16.mxu0 0
  %2231 = vmatpush1.bf16.msra.mxu0 %v2214
  %2232 = vmatprep.subr.bf16.mxu0 0
  %2233 = vmatpush1.bf16.msra.mxu0 %v2215
  %2234 = vmatprep.subr.bf16.mxu0 0
  %2235 = vmatpush1.bf16.msra.mxu0 %v2216
  %2236 = vmatprep.subr.bf16.mxu0 0
  %2237 = vmatpush1.bf16.msra.mxu0 %v2217
  %2238 = vmatprep.subr.bf16.mxu0 0
  %2239 = vmatpush1.bf16.msra.mxu0 %v2218
  %2240 = vmatprep.subr.bf16.mxu0 0
  %2241 = vmatpush1.bf16.msra.mxu0 %v2219
  %2242 = vmatprep.subr.bf16.mxu0 0
  %2243 = vmatpush1.bf16.msra.mxu0 %v2220
  %2244 = vmatprep.subr.bf16.mxu0 0
  %2245 = vmatpush1.bf16.msra.mxu0 %v2221
  %2246 = vmatprep.subr.bf16.mxu0 0
  %2247 = vmatpush1.bf16.msra.mxu0 0
  %2248 = vmatprep.subr.bf16.mxu0 0
  %2249 = vmatpush1.bf16.msra.mxu0 0
  %2250 = vmatprep.subr.bf16.mxu0 0
  %2251 = vmatpush1.bf16.msra.mxu0 0
  %2252 = vmatprep.subr.bf16.mxu0 0
  %2253 = vmatpush1.bf16.msra.mxu0 0
  %2254 = vmatprep.subr.bf16.mxu0 0
  %2255 = vmatpush1.bf16.msra.mxu0 0
  %2256 = vmatprep.subr.bf16.mxu0 0
  %2257 = vmatpush1.bf16.msra.mxu0 0
  %2258 = vmatprep.subr.bf16.mxu0 0
  %2259 = vmatpush1.bf16.msra.mxu0 0
  %2260 = vmatprep.subr.bf16.mxu0 0
  %2261 = vmatpush1.bf16.msra.mxu0 0
  %2262 = vmatprep.mubr.bf16.mxu0 0
  %2263 = vmatmul.mubr.bf16.gmra.mrb[0].mxu0 %v2180
  %v2264 = vpop.f32.mrb[0].mxu0
  %v2265 = vadd.f32 0.0, %v2264
  %v2266 = vpop.f32.mrb[0].mxu0
  %v2267 = vpop.f32.mrb[0].mxu0
  %v2268 = vpop.f32.mrb[0].mxu0
  %2269 = vdwg.mxu0
  %v2270 = vadd.f32 %v2130, %v2265
  %s2271 = scalar_lea.vmem %s35, 38
  %v2272 = vld [vmem:[%s2271] sm:$0x1]
  %v2273 = vld [vmem:[%s2271 + $0x2] sm:$0x1]
  %v2274 = vld [vmem:[%s2271 + $0x6] sm:$0x1]
  %v2275 = vld [vmem:[%s2271 + $0x8] sm:$0x1]
  %s2276 = scalar_lea.vmem %s1, 832
  %v2277 = vld [vmem:[%s2276] sm:$0xf]
  %v2278 = vld [vmem:[%s2276 + $0x4] sm:$0xf]
  %v2279 = vld [vmem:[%s2276 + $0x8] sm:$0xf]
  %v2280 = vld [vmem:[%s2276 + $0xc] sm:$0xf]
  %v2281 = vld [vmem:[%s2276 + $0x10] sm:$0xf]
  %v2282 = vld [vmem:[%s2276 + $0x14] sm:$0xf]
  %v2283 = vld [vmem:[%s2276 + $0x18] sm:$0xf]
  %v2284 = vld [vmem:[%s2276 + $0x1c] sm:$0xf]
  %v2285 = vld [vmem:[%s2276 + $0x20] sm:$0xf]
  %v2286 = vld [vmem:[%s2276 + $0x24] sm:$0xf]
  %v2287 = vld [vmem:[%s2276 + $0x28] sm:$0xf]
  %v2288 = vld [vmem:[%s2276 + $0x2c] sm:$0xf]
  %v2289 = vld [vmem:[%s2276 + $0x30] sm:$0xf]
  %v2290 = vld [vmem:[%s2276 + $0x34] sm:$0xf]
  %v2291 = vld [vmem:[%s2276 + $0x38] sm:$0xf]
  %v2292 = vld [vmem:[%s2276 + $0x3c] sm:$0xf]
  %v2297 = vcombine.low %v2272, %v2273
  %v2298 = vcombine.low %v2274, %v2275
  %v2300 = vunpack.c.l.s4 1966171168
  %v2301 = vunpack.c.0.s8 %v2300
  %v2302 = vlaneseq
  %v2303 = vshrl.u32 %v2302, 7
  %v2304 = vsub.s32 %v2301, %v2303
  %v2305 = vrot.slane %v2297, %v2304
  %v2307 = vunpack.c.l.s4 1966171168
  %v2308 = vunpack.c.0.s8 %v2307
  %v2309 = vlaneseq
  %v2310 = vshrl.u32 %v2309, 7
  %v2311 = vsub.s32 %v2308, %v2310
  %v2312 = vrot.slane %v2298, %v2311
  %v2313 = vcombine.low %v2305, %v2312
  %v2315 = vunpack.c.l.s4 1966171168
  %v2316 = vunpack.c.0.s8 %v2315
  %v2317 = vlaneseq
  %v2318 = vshrl.u32 %v2317, 7
  %v2319 = vsub.s32 %v2316, %v2318
  %v2320 = vrot.slane %v2313, %v2319
  %v2338 = vunpack.c.l.b16 %v2277
  %v2339 = vunpack.c.l.b16 %v2278
  %v2340 = vunpack.c.l.b16 %v2279
  %v2341 = vunpack.c.l.b16 %v2280
  %v2342 = vunpack.c.l.b16 %v2281
  %v2343 = vunpack.c.l.b16 %v2282
  %v2344 = vunpack.c.l.b16 %v2283
  %v2345 = vunpack.c.l.b16 %v2284
  %v2346 = vunpack.c.l.b16 %v2285
  %v2347 = vunpack.c.l.b16 %v2286
  %v2348 = vunpack.c.l.b16 %v2287
  %v2349 = vunpack.c.l.b16 %v2288
  %v2350 = vunpack.c.l.b16 %v2289
  %v2351 = vunpack.c.l.b16 %v2290
  %v2352 = vunpack.c.l.b16 %v2291
  %v2353 = vunpack.c.l.b16 %v2292
  %v2354 = vpack.c.b16 %v2339, %v2338
  %v2355 = vpack.c.b16 %v2341, %v2340
  %v2356 = vpack.c.b16 %v2343, %v2342
  %v2357 = vpack.c.b16 %v2345, %v2344
  %v2358 = vpack.c.b16 %v2347, %v2346
  %v2359 = vpack.c.b16 %v2349, %v2348
  %v2360 = vpack.c.b16 %v2351, %v2350
  %v2361 = vpack.c.b16 %v2353, %v2352
  %2370 = vmatprep.subr.bf16.mxu0 0
  %2371 = vmatpush1.bf16.msra.mxu0 %v2354
  %2372 = vmatprep.subr.bf16.mxu0 0
  %2373 = vmatpush1.bf16.msra.mxu0 %v2355
  %2374 = vmatprep.subr.bf16.mxu0 0
  %2375 = vmatpush1.bf16.msra.mxu0 %v2356
  %2376 = vmatprep.subr.bf16.mxu0 0
  %2377 = vmatpush1.bf16.msra.mxu0 %v2357
  %2378 = vmatprep.subr.bf16.mxu0 0
  %2379 = vmatpush1.bf16.msra.mxu0 %v2358
  %2380 = vmatprep.subr.bf16.mxu0 0
  %2381 = vmatpush1.bf16.msra.mxu0 %v2359
  %2382 = vmatprep.subr.bf16.mxu0 0
  %2383 = vmatpush1.bf16.msra.mxu0 %v2360
  %2384 = vmatprep.subr.bf16.mxu0 0
  %2385 = vmatpush1.bf16.msra.mxu0 %v2361
  %2386 = vmatprep.subr.bf16.mxu0 0
  %2387 = vmatpush1.bf16.msra.mxu0 0
  %2388 = vmatprep.subr.bf16.mxu0 0
  %2389 = vmatpush1.bf16.msra.mxu0 0
  %2390 = vmatprep.subr.bf16.mxu0 0
  %2391 = vmatpush1.bf16.msra.mxu0 0
  %2392 = vmatprep.subr.bf16.mxu0 0
  %2393 = vmatpush1.bf16.msra.mxu0 0
  %2394 = vmatprep.subr.bf16.mxu0 0
  %2395 = vmatpush1.bf16.msra.mxu0 0
  %2396 = vmatprep.subr.bf16.mxu0 0
  %2397 = vmatpush1.bf16.msra.mxu0 0
  %2398 = vmatprep.subr.bf16.mxu0 0
  %2399 = vmatpush1.bf16.msra.mxu0 0
  %2400 = vmatprep.subr.bf16.mxu0 0
  %2401 = vmatpush1.bf16.msra.mxu0 0
  %2402 = vmatprep.mubr.bf16.mxu0 0
  %2403 = vmatmul.mubr.bf16.gmra.mrb[0].mxu0 %v2320
  %v2404 = vpop.f32.mrb[0].mxu0
  %v2405 = vadd.f32 0.0, %v2404
  %v2406 = vpop.f32.mrb[0].mxu0
  %v2407 = vpop.f32.mrb[0].mxu0
  %v2408 = vpop.f32.mrb[0].mxu0
  %2409 = vdwg.mxu0
  %v2410 = vadd.f32 %v2270, %v2405
  %v2411 = vld [vmem:[%s2131] sm:$0x3]
  %v2412 = vld [vmem:[%s2131 + $0x2] sm:$0x3]
  %v2413 = vld [vmem:[%s2131 + $0x6] sm:$0x3]
  %v2414 = vld [vmem:[%s2131 + $0x8] sm:$0x3]
  %v2420 = vunpack.c.l.s4 1966171168
  %v2421 = vunpack.c.0.s8 %v2420
  %v2422 = vlaneseq
  %v2423 = vshrl.u32 %v2422, 7
  %v2424 = vsub.s32 %v2421, %v2423
  %v2425 = vrot.slane %v2411, %v2424
  %v2426 = vcombine.high %v2425, %v2425
  %v2428 = vunpack.c.l.s4 1966171168
  %v2429 = vunpack.c.0.s8 %v2428
  %v2430 = vlaneseq
  %v2431 = vshrl.u32 %v2430, 7
  %v2432 = vsub.s32 %v2429, %v2431
  %v2433 = vrot.slane %v2412, %v2432
  %v2434 = vcombine.high %v2433, %v2433
  %v2436 = vunpack.c.l.s4 1966171168
  %v2437 = vunpack.c.0.s8 %v2436
  %v2438 = vlaneseq
  %v2439 = vshrl.u32 %v2438, 7
  %v2440 = vsub.s32 %v2437, %v2439
  %v2441 = vrot.slane %v2413, %v2440
  %v2442 = vcombine.high %v2441, %v2441
  %v2444 = vunpack.c.l.s4 1966171168
  %v2445 = vunpack.c.0.s8 %v2444
  %v2446 = vlaneseq
  %v2447 = vshrl.u32 %v2446, 7
  %v2448 = vsub.s32 %v2445, %v2447
  %v2449 = vrot.slane %v2414, %v2448
  %v2450 = vcombine.high %v2449, %v2449
  %v2452 = vshrl.u32 %v2425, 16
  %v2454 = vrot.slane %v2452, 7
  %v2455 = vrot.slane %v2454, 1
  %v2457 = vshll.u32 %v2426, 16
  %v2459 = vsel %vm368, %v2455, %v2457
  %v2461 = vshrl.u32 %v2433, 16
  %v2463 = vrot.slane %v2461, 7
  %v2464 = vrot.slane %v2463, 1
  %v2466 = vshll.u32 %v2434, 16
  %v2468 = vsel %vm368, %v2464, %v2466
  %v2470 = vshrl.u32 %v2441, 16
  %v2472 = vrot.slane %v2470, 7
  %v2473 = vrot.slane %v2472, 1
  %v2475 = vshll.u32 %v2442, 16
  %v2477 = vsel %vm368, %v2473, %v2475
  %v2479 = vshrl.u32 %v2449, 16
  %v2481 = vrot.slane %v2479, 7
  %v2482 = vrot.slane %v2481, 1
  %v2484 = vshll.u32 %v2450, 16
  %v2486 = vsel %vm368, %v2482, %v2484
  %s2487 = scalar_lea.vmem %s1, 896
  %v2488 = vld [vmem:[%s2487] sm:$0xf]
  %v2489 = vld [vmem:[%s2487 + $0x4] sm:$0xf]
  %v2490 = vld [vmem:[%s2487 + $0x8] sm:$0xf]
  %v2491 = vld [vmem:[%s2487 + $0xc] sm:$0xf]
  %v2492 = vld [vmem:[%s2487 + $0x10] sm:$0xf]
  %v2493 = vld [vmem:[%s2487 + $0x14] sm:$0xf]
  %v2494 = vld [vmem:[%s2487 + $0x18] sm:$0xf]
  %v2495 = vld [vmem:[%s2487 + $0x1c] sm:$0xf]
  %v2496 = vld [vmem:[%s2487 + $0x20] sm:$0xf]
  %v2497 = vld [vmem:[%s2487 + $0x24] sm:$0xf]
  %v2498 = vld [vmem:[%s2487 + $0x28] sm:$0xf]
  %v2499 = vld [vmem:[%s2487 + $0x2c] sm:$0xf]
  %v2500 = vld [vmem:[%s2487 + $0x30] sm:$0xf]
  %v2501 = vld [vmem:[%s2487 + $0x34] sm:$0xf]
  %v2502 = vld [vmem:[%s2487 + $0x38] sm:$0xf]
  %v2503 = vld [vmem:[%s2487 + $0x3c] sm:$0xf]
  %v2504 = vcombine.low %v2459, %v2468
  %v2505 = vcombine.low %v2477, %v2486
  %v2507 = vunpack.c.l.s4 1966171168
  %v2508 = vunpack.c.0.s8 %v2507
  %v2509 = vlaneseq
  %v2510 = vshrl.u32 %v2509, 7
  %v2511 = vsub.s32 %v2508, %v2510
  %v2512 = vrot.slane %v2504, %v2511
  %v2514 = vunpack.c.l.s4 1966171168
  %v2515 = vunpack.c.0.s8 %v2514
  %v2516 = vlaneseq
  %v2517 = vshrl.u32 %v2516, 7
  %v2518 = vsub.s32 %v2515, %v2517
  %v2519 = vrot.slane %v2505, %v2518
  %v2520 = vcombine.low %v2512, %v2519
  %v2522 = vunpack.c.l.s4 1966171168
  %v2523 = vunpack.c.0.s8 %v2522
  %v2524 = vlaneseq
  %v2525 = vshrl.u32 %v2524, 7
  %v2526 = vsub.s32 %v2523, %v2525
  %v2527 = vrot.slane %v2520, %v2526
  %v2545 = vunpack.c.l.b16 %v2488
  %v2546 = vunpack.c.l.b16 %v2489
  %v2547 = vunpack.c.l.b16 %v2490
  %v2548 = vunpack.c.l.b16 %v2491
  %v2549 = vunpack.c.l.b16 %v2492
  %v2550 = vunpack.c.l.b16 %v2493
  %v2551 = vunpack.c.l.b16 %v2494
  %v2552 = vunpack.c.l.b16 %v2495
  %v2553 = vunpack.c.l.b16 %v2496
  %v2554 = vunpack.c.l.b16 %v2497
  %v2555 = vunpack.c.l.b16 %v2498
  %v2556 = vunpack.c.l.b16 %v2499
  %v2557 = vunpack.c.l.b16 %v2500
  %v2558 = vunpack.c.l.b16 %v2501
  %v2559 = vunpack.c.l.b16 %v2502
  %v2560 = vunpack.c.l.b16 %v2503
  %v2561 = vpack.c.b16 %v2546, %v2545
  %v2562 = vpack.c.b16 %v2548, %v2547
  %v2563 = vpack.c.b16 %v2550, %v2549
  %v2564 = vpack.c.b16 %v2552, %v2551
  %v2565 = vpack.c.b16 %v2554, %v2553
  %v2566 = vpack.c.b16 %v2556, %v2555
  %v2567 = vpack.c.b16 %v2558, %v2557
  %v2568 = vpack.c.b16 %v2560, %v2559
  %2577 = vmatprep.subr.bf16.mxu0 0
  %2578 = vmatpush1.bf16.msra.mxu0 %v2561
  %2579 = vmatprep.subr.bf16.mxu0 0
  %2580 = vmatpush1.bf16.msra.mxu0 %v2562
  %2581 = vmatprep.subr.bf16.mxu0 0
  %2582 = vmatpush1.bf16.msra.mxu0 %v2563
  %2583 = vmatprep.subr.bf16.mxu0 0
  %2584 = vmatpush1.bf16.msra.mxu0 %v2564
  %2585 = vmatprep.subr.bf16.mxu0 0
  %2586 = vmatpush1.bf16.msra.mxu0 %v2565
  %2587 = vmatprep.subr.bf16.mxu0 0
  %2588 = vmatpush1.bf16.msra.mxu0 %v2566
  %2589 = vmatprep.subr.bf16.mxu0 0
  %2590 = vmatpush1.bf16.msra.mxu0 %v2567
  %2591 = vmatprep.subr.bf16.mxu0 0
  %2592 = vmatpush1.bf16.msra.mxu0 %v2568
  %2593 = vmatprep.subr.bf16.mxu0 0
  %2594 = vmatpush1.bf16.msra.mxu0 0
  %2595 = vmatprep.subr.bf16.mxu0 0
  %2596 = vmatpush1.bf16.msra.mxu0 0
  %2597 = vmatprep.subr.bf16.mxu0 0
  %2598 = vmatpush1.bf16.msra.mxu0 0
  %2599 = vmatprep.subr.bf16.mxu0 0
  %2600 = vmatpush1.bf16.msra.mxu0 0
  %2601 = vmatprep.subr.bf16.mxu0 0
  %2602 = vmatpush1.bf16.msra.mxu0 0
  %2603 = vmatprep.subr.bf16.mxu0 0
  %2604 = vmatpush1.bf16.msra.mxu0 0
  %2605 = vmatprep.subr.bf16.mxu0 0
  %2606 = vmatpush1.bf16.msra.mxu0 0
  %2607 = vmatprep.subr.bf16.mxu0 0
  %2608 = vmatpush1.bf16.msra.mxu0 0
  %2609 = vmatprep.mubr.bf16.mxu0 0
  %2610 = vmatmul.mubr.bf16.gmra.mrb[0].mxu0 %v2527
  %v2611 = vpop.f32.mrb[0].mxu0
  %v2612 = vadd.f32 0.0, %v2611
  %v2613 = vpop.f32.mrb[0].mxu0
  %v2614 = vpop.f32.mrb[0].mxu0
  %v2615 = vpop.f32.mrb[0].mxu0
  %2616 = vdwg.mxu0
  %v2617 = vadd.f32 %v2410, %v2612
  %v2618 = vld [vmem:[%s2271] sm:$0x3]
  %v2619 = vld [vmem:[%s2271 + $0x2] sm:$0x3]
  %v2620 = vld [vmem:[%s2271 + $0x6] sm:$0x3]
  %v2621 = vld [vmem:[%s2271 + $0x8] sm:$0x3]
  %v2627 = vunpack.c.l.s4 1966171168
  %v2628 = vunpack.c.0.s8 %v2627
  %v2629 = vlaneseq
  %v2630 = vshrl.u32 %v2629, 7
  %v2631 = vsub.s32 %v2628, %v2630
  %v2632 = vrot.slane %v2618, %v2631
  %v2633 = vcombine.high %v2632, %v2632
  %v2635 = vunpack.c.l.s4 1966171168
  %v2636 = vunpack.c.0.s8 %v2635
  %v2637 = vlaneseq
  %v2638 = vshrl.u32 %v2637, 7
  %v2639 = vsub.s32 %v2636, %v2638
  %v2640 = vrot.slane %v2619, %v2639
  %v2641 = vcombine.high %v2640, %v2640
  %v2643 = vunpack.c.l.s4 1966171168
  %v2644 = vunpack.c.0.s8 %v2643
  %v2645 = vlaneseq
  %v2646 = vshrl.u32 %v2645, 7
  %v2647 = vsub.s32 %v2644, %v2646
  %v2648 = vrot.slane %v2620, %v2647
  %v2649 = vcombine.high %v2648, %v2648
  %v2651 = vunpack.c.l.s4 1966171168
  %v2652 = vunpack.c.0.s8 %v2651
  %v2653 = vlaneseq
  %v2654 = vshrl.u32 %v2653, 7
  %v2655 = vsub.s32 %v2652, %v2654
  %v2656 = vrot.slane %v2621, %v2655
  %v2657 = vcombine.high %v2656, %v2656
  %v2659 = vshrl.u32 %v2632, 16
  %v2661 = vrot.slane %v2659, 7
  %v2662 = vrot.slane %v2661, 1
  %v2664 = vshll.u32 %v2633, 16
  %v2666 = vsel %vm368, %v2662, %v2664
  %v2668 = vshrl.u32 %v2640, 16
  %v2670 = vrot.slane %v2668, 7
  %v2671 = vrot.slane %v2670, 1
  %v2673 = vshll.u32 %v2641, 16
  %v2675 = vsel %vm368, %v2671, %v2673
  %v2677 = vshrl.u32 %v2648, 16
  %v2679 = vrot.slane %v2677, 7
  %v2680 = vrot.slane %v2679, 1
  %v2682 = vshll.u32 %v2649, 16
  %v2684 = vsel %vm368, %v2680, %v2682
  %v2686 = vshrl.u32 %v2656, 16
  %v2688 = vrot.slane %v2686, 7
  %v2689 = vrot.slane %v2688, 1
  %v2691 = vshll.u32 %v2657, 16
  %v2693 = vsel %vm368, %v2689, %v2691
  %s2694 = scalar_lea.vmem %s1, 960
  %v2695 = vld [vmem:[%s2694] sm:$0xf]
  %v2696 = vld [vmem:[%s2694 + $0x4] sm:$0xf]
  %v2697 = vld [vmem:[%s2694 + $0x8] sm:$0xf]
  %v2698 = vld [vmem:[%s2694 + $0xc] sm:$0xf]
  %v2699 = vld [vmem:[%s2694 + $0x10] sm:$0xf]
  %v2700 = vld [vmem:[%s2694 + $0x14] sm:$0xf]
  %v2701 = vld [vmem:[%s2694 + $0x18] sm:$0xf]
  %v2702 = vld [vmem:[%s2694 + $0x1c] sm:$0xf]
  %v2703 = vld [vmem:[%s2694 + $0x20] sm:$0xf]
  %v2704 = vld [vmem:[%s2694 + $0x24] sm:$0xf]
  %v2705 = vld [vmem:[%s2694 + $0x28] sm:$0xf]
  %v2706 = vld [vmem:[%s2694 + $0x2c] sm:$0xf]
  %v2707 = vld [vmem:[%s2694 + $0x30] sm:$0xf]
  %v2708 = vld [vmem:[%s2694 + $0x34] sm:$0xf]
  %v2709 = vld [vmem:[%s2694 + $0x38] sm:$0xf]
  %v2710 = vld [vmem:[%s2694 + $0x3c] sm:$0xf]
  %v2711 = vcombine.low %v2666, %v2675
  %v2712 = vcombine.low %v2684, %v2693
  %v2714 = vunpack.c.l.s4 1966171168
  %v2715 = vunpack.c.0.s8 %v2714
  %v2716 = vlaneseq
  %v2717 = vshrl.u32 %v2716, 7
  %v2718 = vsub.s32 %v2715, %v2717
  %v2719 = vrot.slane %v2711, %v2718
  %v2721 = vunpack.c.l.s4 1966171168
  %v2722 = vunpack.c.0.s8 %v2721
  %v2723 = vlaneseq
  %v2724 = vshrl.u32 %v2723, 7
  %v2725 = vsub.s32 %v2722, %v2724
  %v2726 = vrot.slane %v2712, %v2725
  %v2727 = vcombine.low %v2719, %v2726
  %v2729 = vunpack.c.l.s4 1966171168
  %v2730 = vunpack.c.0.s8 %v2729
  %v2731 = vlaneseq
  %v2732 = vshrl.u32 %v2731, 7
  %v2733 = vsub.s32 %v2730, %v2732
  %v2734 = vrot.slane %v2727, %v2733
  %v2752 = vunpack.c.l.b16 %v2695
  %v2753 = vunpack.c.l.b16 %v2696
  %v2754 = vunpack.c.l.b16 %v2697
  %v2755 = vunpack.c.l.b16 %v2698
  %v2756 = vunpack.c.l.b16 %v2699
  %v2757 = vunpack.c.l.b16 %v2700
  %v2758 = vunpack.c.l.b16 %v2701
  %v2759 = vunpack.c.l.b16 %v2702
  %v2760 = vunpack.c.l.b16 %v2703
  %v2761 = vunpack.c.l.b16 %v2704
  %v2762 = vunpack.c.l.b16 %v2705
  %v2763 = vunpack.c.l.b16 %v2706
  %v2764 = vunpack.c.l.b16 %v2707
  %v2765 = vunpack.c.l.b16 %v2708
  %v2766 = vunpack.c.l.b16 %v2709
  %v2767 = vunpack.c.l.b16 %v2710
  %v2768 = vpack.c.b16 %v2753, %v2752
  %v2769 = vpack.c.b16 %v2755, %v2754
  %v2770 = vpack.c.b16 %v2757, %v2756
  %v2771 = vpack.c.b16 %v2759, %v2758
  %v2772 = vpack.c.b16 %v2761, %v2760
  %v2773 = vpack.c.b16 %v2763, %v2762
  %v2774 = vpack.c.b16 %v2765, %v2764
  %v2775 = vpack.c.b16 %v2767, %v2766
  %2784 = vmatprep.subr.bf16.mxu0 0
  %2785 = vmatpush1.bf16.msra.mxu0 %v2768
  %2786 = vmatprep.subr.bf16.mxu0 0
  %2787 = vmatpush1.bf16.msra.mxu0 %v2769
  %2788 = vmatprep.subr.bf16.mxu0 0
  %2789 = vmatpush1.bf16.msra.mxu0 %v2770
  %2790 = vmatprep.subr.bf16.mxu0 0
  %2791 = vmatpush1.bf16.msra.mxu0 %v2771
  %2792 = vmatprep.subr.bf16.mxu0 0
  %2793 = vmatpush1.bf16.msra.mxu0 %v2772
  %2794 = vmatprep.subr.bf16.mxu0 0
  %2795 = vmatpush1.bf16.msra.mxu0 %v2773
  %2796 = vmatprep.subr.bf16.mxu0 0
  %2797 = vmatpush1.bf16.msra.mxu0 %v2774
  %2798 = vmatprep.subr.bf16.mxu0 0
  %2799 = vmatpush1.bf16.msra.mxu0 %v2775
  %2800 = vmatprep.subr.bf16.mxu0 0
  %2801 = vmatpush1.bf16.msra.mxu0 0
  %2802 = vmatprep.subr.bf16.mxu0 0
  %2803 = vmatpush1.bf16.msra.mxu0 0
  %2804 = vmatprep.subr.bf16.mxu0 0
  %2805 = vmatpush1.bf16.msra.mxu0 0
  %2806 = vmatprep.subr.bf16.mxu0 0
  %2807 = vmatpush1.bf16.msra.mxu0 0
  %2808 = vmatprep.subr.bf16.mxu0 0
  %2809 = vmatpush1.bf16.msra.mxu0 0
  %2810 = vmatprep.subr.bf16.mxu0 0
  %2811 = vmatpush1.bf16.msra.mxu0 0
  %2812 = vmatprep.subr.bf16.mxu0 0
  %2813 = vmatpush1.bf16.msra.mxu0 0
  %2814 = vmatprep.subr.bf16.mxu0 0
  %2815 = vmatpush1.bf16.msra.mxu0 0
  %2816 = vmatprep.mubr.bf16.mxu0 0
  %2817 = vmatmul.mubr.bf16.gmra.mrb[0].mxu0 %v2734
  %v2818 = vpop.f32.mrb[0].mxu0
  %v2819 = vadd.f32 0.0, %v2818
  %v2820 = vpop.f32.mrb[0].mxu0
  %v2821 = vpop.f32.mrb[0].mxu0
  %v2822 = vpop.f32.mrb[0].mxu0
  %2823 = vdwg.mxu0
  %v2824 = vadd.f32 %v2617, %v2819
  %v2825 = vld [vmem:[%s2] sm:$0x1]
  %v2827 = vlaneseq
  %v2828 = vshrl.u32 %v2827, 7
  %v2829 = vsub.s32 0, %v2828
  %v2830 = vrot.slane %v2825, %v2829
  %v2832 = vadd.f32 %v2824, %v2830
  %v2834 = vcombine.high %v2832, %v2832
  %v2836 = vunpack.c.l.s4 1983009808
  %v2837 = vunpack.c.0.s8 %v2836
  %v2838 = vlaneseq
  %v2839 = vshrl.u32 %v2838, 7
  %v2840 = vsub.s32 %v2837, %v2839
  %v2841 = vrot.slane %v2832, %v2840
  %v2843 = vunpack.c.l.s4 1983009808
  %v2844 = vunpack.c.0.s8 %v2843
  %v2845 = vlaneseq
  %v2846 = vshrl.u32 %v2845, 7
  %v2847 = vsub.s32 %v2844, %v2846
  %v2848 = vrot.slane %v2834, %v2847
  %v2849 = vcombine.high %v2841, %v2841
  %v2850 = vcombine.high %v2848, %v2848
  %v2855 = vpack.c.bf16 %v2841, %v2841
  %v2856 = vpack.c.bf16 %v2849, %v2849
  %v2857 = vpack.c.bf16 %v2848, %v2848
  %v2858 = vpack.c.bf16 %v2850, %v2850
  %2859 = vst [vmem:[%s3] sm:$0x1] %v2855
  %2860 = vst [vmem:[%s3 + $0x1] sm:$0x1] %v2856
  %2861 = vst [vmem:[%s3 + $0x2] sm:$0x1] %v2857
  %2862 = vst [vmem:[%s3 + $0x3] sm:$0x1] %v2858
  %v2863 = vrot.slane %v2832, 4
  %v2864 = vadd.f32 %v2832, %v2863
  %v2865 = vrot.slane %v2864, 2
  %v2866 = vadd.f32 %v2864, %v2865
  %v2867 = vrot.slane %v2866, 1
  %v2868 = vadd.f32 %v2866, %v2867
  %2869 = vst [vmem:[%s4] sm:$0x1] %v2868
  %v2870 = vmul.f32 %v2832, %v2832
  %v2871 = vrot.slane %v2870, 4
  %v2872 = vadd.f32 %v2870, %v2871
  %v2873 = vrot.slane %v2872, 2
  %v2874 = vadd.f32 %v2872, %v2873
  %v2875 = vrot.slane %v2874, 1
  %v2876 = vadd.f32 %v2874, %v2875
  %2877 = vst [vmem:[%s5] sm:$0x1] %v2876
  // Predicated region
  $region14: #{encoder_apply.8} parent=0 // pred_check
    _
  $region15: #{encoder_apply.8} parent=0 // pred_check_branch
    %2879 = sbr.rel (0) target = $region17
  $region16: #{encoder_apply.8} parent=0 // pred_region
    _
  $region17: #{encoder_apply.8} parent=0 // pred_fallthru
    _
  // Predicated region
  $region18: #{encoder_apply.8} parent=0 // pred_check
    _
  $region19: #{encoder_apply.8} parent=0 // pred_check_branch
    %2881 = sbr.rel (0) target = $region21
  $region20: #{encoder_apply.8} parent=0 // pred_region
    _
  $region21: #{encoder_apply.8} parent=0 // pred_fallthru
    _
  // Predicated region
  $region22: #{encoder_apply.8} parent=0 // pred_check
    _
  $region23: #{encoder_apply.8} parent=0 // pred_check_branch
    %2883 = sbr.rel (0) target = $region25
  $region24: #{encoder_apply.8} parent=0 // pred_region
    _
  $region25: #{encoder_apply.8} parent=0 // pred_fallthru
    _
  // Predicated region
  $region26: #{encoder_apply.8} parent=0 // pred_check
    _
  $region27: #{encoder_apply.8} parent=0 // pred_check_branch
    %2885 = sbr.rel (0) target = $region29
  $region28: #{encoder_apply.8} parent=0 // pred_region
    _
  $region29: #{encoder_apply.8} parent=0 // pred_fallthru
    _
  // Predicated region
  $region30: #{encoder_apply.8} parent=0 // pred_check
    _
  $region31: #{encoder_apply.8} parent=0 // pred_check_branch
    %2887 = sbr.rel (0) target = $region33
  $region32: #{encoder_apply.8} parent=0 // pred_region
    _
  $region33: #{encoder_apply.8} parent=0 // pred_fallthru
    _
  // Predicated region
  $region34: #{encoder_apply.8} parent=0 // pred_check
    _
  $region35: #{encoder_apply.8} parent=0 // pred_check_branch
    %2889 = sbr.rel (0) target = $region37
  $region36: #{encoder_apply.8} parent=0 // pred_region
    _
  $region37: #{encoder_apply.8} parent=0 // pred_fallthru
    _

</llo_original>
